<compile_context>
chip_gen: v6e
topology: v6e:2x2x1
jax: 0.10.0
libtpu: 0.0.40
codegen_flags: <defaults>
</compile_context>

<pallas_src>
import functools

import jax
import jax.numpy as jnp
from jax.experimental import pallas as pl
from jax.experimental.pallas import tpu as pltpu

HIDDEN_DIMS = (1024, 512, 256, 128)
LANE = 128


def _round_up(x, m):
    return (x + m - 1) // m * m


# --------------------------------------------------------------------------- #
# Fused 5-layer MLP kernel
# --------------------------------------------------------------------------- #
def _mlp_kernel(x_ref,
                w1_ref, b1_ref, w2_ref, b2_ref, w3_ref, b3_ref,
                w4_ref, b4_ref, w5_ref, b5_ref,
                out_ref):
    """4 x (bf16 matmul + f32 bias + ReLU) followed by a final bf16 matmul + bias."""
    h = x_ref[...]                      # bf16 tile; first dot needs no cast

    def dense(h, w_ref, b_ref, relu):
        # bf16 operands on the MXU, f32 accumulation; bias/ReLU on the VPU in f32.
        y = jnp.dot(h.astype(w_ref.dtype), w_ref[...],
                    preferred_element_type=jnp.float32) + b_ref[...]
        return jnp.maximum(y, 0.0) if relu else y

    h = dense(h, w1_ref, b1_ref, True)
    h = dense(h, w2_ref, b2_ref, True)
    h = dense(h, w3_ref, b3_ref, True)
    h = dense(h, w4_ref, b4_ref, True)
    out_ref[...] = dense(h, w5_ref, b5_ref, False).astype(out_ref.dtype)


# --------------------------------------------------------------------------- #
# Pallas wrapper for the policy MLP head
# --------------------------------------------------------------------------- #
def _choose_block_b(n_rows):
    """MXU-friendly batch tile; keep >= 2 grid steps when possible (megacore)."""
    if n_rows >= 512:
        return 256
    half = _round_up(max(n_rows // 2, 1), 8)
    return max(8, min(256, half))


@functools.partial(jax.jit,
                   static_argnames=("out_ch", "block_b", "single_buffer_weights"))
def _mlp_forward_padded(x, flat_params, *, out_ch, block_b, single_buffer_weights):
    """Pad batch/feature dims, run the fused Pallas MLP, slice back to real shape."""
    B, in_ch = x.shape
    in_pad = _round_up(in_ch, LANE)
    out_pad = _round_up(out_ch, LANE)
    b_pad = _round_up(B, block_b)

    x_p = jnp.pad(x.astype(jnp.bfloat16), ((0, b_pad - B), (0, in_pad - in_ch)))

    params = [(flat_params[2 * i], flat_params[2 * i + 1]) for i in range(5)]
    (w1, b1), (w2, b2), (w3, b3), (w4, b4), (w5, b5) = params
    w1 = jnp.pad(w1, ((0, in_pad - w1.shape[0]), (0, 0)))    # pad K of first layer
    w5 = jnp.pad(w5, ((0, 0), (0, out_pad - w5.shape[1])))   # lane-pad output dim
    b5 = jnp.pad(b5, ((0, 0), (0, out_pad - b5.shape[1])))
    padded = [(w1, b1), (w2, b2), (w3, b3), (w4, b4), (w5, b5)]

    weight_kwargs = {}
    if single_buffer_weights:
        # Constant index map + single buffer: weights DMA'd once, resident across grid.
        weight_kwargs = dict(pipeline_mode=pl.Buffered(1))

    flat = []
    in_specs = [pl.BlockSpec((block_b, in_pad), lambda i: (i, 0))]
    for w, b in padded:
        flat += [w, b]
        in_specs.append(pl.BlockSpec(w.shape, lambda i: (0, 0), **weight_kwargs))
        in_specs.append(pl.BlockSpec(b.shape, lambda i: (0, 0), **weight_kwargs))

    dims = [in_pad] + [w.shape[1] for w, _ in padded]
    flops = 2 * b_pad * sum(dims[i] * dims[i + 1] for i in range(len(dims) - 1))
    bytes_accessed = (x_p.size * x_p.dtype.itemsize
                      + sum(w.size * w.dtype.itemsize + b.size * b.dtype.itemsize
                            for w, b in padded)
                      + b_pad * out_pad * 4)

    mean_pad = pl.pallas_call(
        _mlp_kernel,
        out_shape=jax.ShapeDtypeStruct((b_pad, out_pad), jnp.float32),
        grid_spec=pltpu.PrefetchScalarGridSpec(
            num_scalar_prefetch=0,
            grid=(b_pad // block_b,),
            in_specs=in_specs,
            out_specs=pl.BlockSpec((block_b, out_pad), lambda i: (i, 0)),
        ),
        compiler_params=pltpu.CompilerParams(
            dimension_semantics=("parallel",),
            vmem_limit_bytes=32 * 1024 * 1024,   # safe on v5e/v6e/v7x (64 MiB phys)
        ),
        cost_estimate=pl.CostEstimate(flops=flops, transcendentals=0,
                                      bytes_accessed=bytes_accessed),
    )(x_p, *flat)

    return mean_pad[:B, :out_ch]


def mlp_action_policy_mean(x, mlp_params, block_b=None):
    """mean = fused_MLP(x). Weights bf16, biases f32, f32 output."""
    out_ch = mlp_params[-1][0].shape[1]
    if block_b is None:
        block_b = _choose_block_b(x.shape[0])
    flat = tuple(t for wb in mlp_params for t in wb)
    try:
        return _mlp_forward_padded(x, flat, out_ch=out_ch, block_b=block_b,
                                   single_buffer_weights=True)
    except Exception:
        # TODO(synk): pl.Buffered(1) single-buffering not supported on this jax
        # build; fall back to default double-buffered weight BlockSpecs.
        return _mlp_forward_padded(x, flat, out_ch=out_ch, block_b=block_b,
                                   single_buffer_weights=False)


# --------------------------------------------------------------------------- #
# ESDistillationPolicy forward (JAX plumbing around the Pallas MLP)
# --------------------------------------------------------------------------- #
def init_es_policy_params(key, policy_state_dim, embodiment_in_dim,
                          embodiment_num_dims, command_n_channels,
                          init_noise_std=0.1):
    """Deterministic synthetic params: stand-in embodiment encoder + MLP policy head."""
    key, ke_w, ke_b = jax.random.split(key, 3)
    enc_w = (jax.random.normal(ke_w, (embodiment_in_dim, embodiment_num_dims),
                               jnp.float32) / jnp.sqrt(float(embodiment_in_dim)))
    enc_b = jax.random.normal(ke_b, (embodiment_num_dims,), jnp.float32) * 0.01
    encoder_params = (enc_w, enc_b)

    in_channels = policy_state_dim + embodiment_num_dims
    dims = (in_channels,) + HIDDEN_DIMS + (command_n_channels,)
    mlp_params = []
    for i in range(len(dims) - 1):
        key, kw, kb = jax.random.split(key, 3)
        scale = 1.0 / jnp.sqrt(float(dims[i]))
        # Weights stored (in_features, out_features) in bf16 for the MXU; bias f32 (1, out).
        w = (jax.random.normal(kw, (dims[i], dims[i + 1]), jnp.float32)
             * scale).astype(jnp.bfloat16)
        b = jax.random.normal(kb, (1, dims[i + 1]), jnp.float32) * 0.01
        mlp_params.append((w, b))
    std = jnp.full((command_n_channels,), init_noise_std, jnp.float32)
    return encoder_params, mlp_params, std


def es_distillation_policy_forward(batch, encoder_params, mlp_params, std):
    """JAX/Pallas equivalent of ESDistillationPolicy.forward."""
    policy_state = batch["policy_state"]          # [B, T, policy_state_dim]
    embodiment = batch["embodiment"]              # [B, embodiment_in_dim]

    # TODO(synk): the real embodiment_encoder is a gin-injected nn.Module; a tiny
    # linear+ReLU stand-in in plain JAX is used here (negligible compute).
    enc_w, enc_b = encoder_params
    enc = jnp.maximum(embodiment @ enc_w + enc_b, 0.0)              # [B, num_dims]
    enc = jnp.repeat(enc[:, None, :], policy_state.shape[1], axis=1)  # repeat over T

    x = jnp.concatenate([policy_state, enc], axis=-1)               # [B, T, D]
    x = x.reshape(-1, x.shape[-1])                                  # pack_sequence_dim

    mean = mlp_action_policy_mean(x, mlp_params)
    return {"mean": mean, "std": std}


# --------------------------------------------------------------------------- #
# Reference (plain JAX, mirrors the kernel's bf16-operand / f32-accum numerics)
# --------------------------------------------------------------------------- #
def _reference(batch, encoder_params, mlp_params, std):
    enc_w, enc_b = encoder_params
    policy_state = batch["policy_state"]
    enc = jnp.maximum(batch["embodiment"] @ enc_w + enc_b, 0.0)
    enc = jnp.repeat(enc[:, None, :], policy_state.shape[1], axis=1)
    x = jnp.concatenate([policy_state, enc], axis=-1)
    x = x.reshape(-1, x.shape[-1]).astype(jnp.float32)

    h = x
    for i, (w, b) in enumerate(mlp_params):
        h = (h.astype(jnp.bfloat16).astype(jnp.float32)
             @ w.astype(jnp.float32) + b.astype(jnp.float32))
        if i < len(mlp_params) - 1:
            h = jnp.maximum(h, 0.0)
    return {"mean": h, "std": std}


if __name__ == "__main__":
    key = jax.random.PRNGKey(0)
    k_state, k_emb, k_params = jax.random.split(key, 3)

    n_envs, seq_len = 2, 8
    policy_state_dim = 32
    embodiment_in_dim = 16
    embodiment_num_dims = 16
    command_n_channels = 16

    batch = {
        "policy_state": jax.random.normal(
            k_state, (n_envs, seq_len, policy_state_dim), jnp.float32),
        "embodiment": jax.random.normal(
            k_emb, (n_envs, embodiment_in_dim), jnp.float32),
    }
    encoder_params, mlp_params, std = init_es_policy_params(
        k_params, policy_state_dim, embodiment_in_dim, embodiment_num_dims,
        command_n_channels, init_noise_std=0.1)

    out = es_distillation_policy_forward(batch, encoder_params, mlp_params, std)
    out = jax.block_until_ready(out)

    ref = _reference(batch, encoder_params, mlp_params, std)
    assert out["mean"].shape == (n_envs * seq_len, command_n_channels)
    assert out["std"].shape == (command_n_channels,)
    err = float(jnp.max(jnp.abs(out["mean"] - ref["mean"])))
    assert jnp.allclose(out["mean"], ref["mean"], atol=1e-2, rtol=1e-2), err
    assert jnp.allclose(out["std"], ref["std"])

    print("KERNEL_OK")
</pallas_src>

<mosaic_0001>
module attributes {stable_mosaic.version = 11 : i64} {
  func.func @_mlp_kernel(%arg0: i32, %arg1: memref<8x128xbf16, #tpu.memory_space<vmem>>, %arg2: memref<128x1024xbf16, #tpu.memory_space<vmem>>, %arg3: memref<1x1024xf32, #tpu.memory_space<vmem>>, %arg4: memref<1024x512xbf16, #tpu.memory_space<vmem>>, %arg5: memref<1x512xf32, #tpu.memory_space<vmem>>, %arg6: memref<512x256xbf16, #tpu.memory_space<vmem>>, %arg7: memref<1x256xf32, #tpu.memory_space<vmem>>, %arg8: memref<256x128xbf16, #tpu.memory_space<vmem>>, %arg9: memref<1x128xf32, #tpu.memory_space<vmem>>, %arg10: memref<128x128xbf16, #tpu.memory_space<vmem>>, %arg11: memref<1x128xf32, #tpu.memory_space<vmem>>, %arg12: memref<8x128xf32, #tpu.memory_space<vmem>>) attributes {dimension_semantics = [#tpu.dimension_semantics<parallel>], iteration_bounds = array<i64: 2>, scalar_prefetch = 0 : i64, scratch_operands = 0 : i64, tpu.core_type = #tpu.core_type<tc>, window_params = [{transform_indices = @transform_0, window_bounds = array<i64: 8, 128>}, {pipeline_mode = #tpu.pipeline_mode<synchronous>, transform_indices = @transform_1, window_bounds = array<i64: 128, 1024>}, {pipeline_mode = #tpu.pipeline_mode<synchronous>, transform_indices = @transform_2, window_bounds = array<i64: 1, 1024>}, {pipeline_mode = #tpu.pipeline_mode<synchronous>, transform_indices = @transform_3, window_bounds = array<i64: 1024, 512>}, {pipeline_mode = #tpu.pipeline_mode<synchronous>, transform_indices = @transform_4, window_bounds = array<i64: 1, 512>}, {pipeline_mode = #tpu.pipeline_mode<synchronous>, transform_indices = @transform_5, window_bounds = array<i64: 512, 256>}, {pipeline_mode = #tpu.pipeline_mode<synchronous>, transform_indices = @transform_6, window_bounds = array<i64: 1, 256>}, {pipeline_mode = #tpu.pipeline_mode<synchronous>, transform_indices = @transform_7, window_bounds = array<i64: 256, 128>}, {pipeline_mode = #tpu.pipeline_mode<synchronous>, transform_indices = @transform_8, window_bounds = array<i64: 1, 128>}, {pipeline_mode = #tpu.pipeline_mode<synchronous>, transform_indices = @transform_9, window_bounds = array<i64: 128, 128>}, {pipeline_mode = #tpu.pipeline_mode<synchronous>, transform_indices = @transform_10, window_bounds = array<i64: 1, 128>}, {transform_indices = @transform_11, window_bounds = array<i64: 8, 128>}]} {
    %c0 = arith.constant 0 : index
    %c0_0 = arith.constant 0 : index
    %0 = vector.load %arg1[%c0, %c0_0] : memref<8x128xbf16, #tpu.memory_space<vmem>>, vector<8x128xbf16>
    %c0_1 = arith.constant 0 : index
    %c0_2 = arith.constant 0 : index
    %1 = vector.load %arg2[%c0_1, %c0_2] : memref<128x1024xbf16, #tpu.memory_space<vmem>>, vector<128x1024xbf16>
    %cst = arith.constant dense<0.000000e+00> : vector<8x1024xf32>
    %2 = tpu.matmul %0, %1, %cst {dimension_numbers = #tpu.dot_dimension_numbers<[1], [0], [0], [1], [0, 0, 1, 1], [], []>} : vector<8x128xbf16>, vector<128x1024xbf16>, vector<8x1024xf32> -> vector<8x1024xf32>
    %c0_3 = arith.constant 0 : index
    %c0_4 = arith.constant 0 : index
    %3 = vector.load %arg3[%c0_3, %c0_4] : memref<1x1024xf32, #tpu.memory_space<vmem>>, vector<1x1024xf32>
    %4 = vector.broadcast %3 : vector<1x1024xf32> to vector<8x1024xf32>
    %5 = arith.addf %2, %4 : vector<8x1024xf32>
    %cst_5 = arith.constant 0.000000e+00 : f32
    %6 = vector.broadcast %cst_5 : f32 to vector<8x1024xf32>
    %7 = arith.maximumf %5, %6 : vector<8x1024xf32>
    %8 = arith.truncf %7 : vector<8x1024xf32> to vector<8x1024xbf16>
    %c0_6 = arith.constant 0 : index
    %c0_7 = arith.constant 0 : index
    %9 = vector.load %arg4[%c0_6, %c0_7] : memref<1024x512xbf16, #tpu.memory_space<vmem>>, vector<1024x512xbf16>
    %cst_8 = arith.constant dense<0.000000e+00> : vector<8x512xf32>
    %10 = tpu.matmul %8, %9, %cst_8 {dimension_numbers = #tpu.dot_dimension_numbers<[1], [0], [0], [1], [0, 0, 1, 1], [], []>} : vector<8x1024xbf16>, vector<1024x512xbf16>, vector<8x512xf32> -> vector<8x512xf32>
    %c0_9 = arith.constant 0 : index
    %c0_10 = arith.constant 0 : index
    %11 = vector.load %arg5[%c0_9, %c0_10] : memref<1x512xf32, #tpu.memory_space<vmem>>, vector<1x512xf32>
    %12 = vector.broadcast %11 : vector<1x512xf32> to vector<8x512xf32>
    %13 = arith.addf %10, %12 : vector<8x512xf32>
    %cst_11 = arith.constant 0.000000e+00 : f32
    %14 = vector.broadcast %cst_11 : f32 to vector<8x512xf32>
    %15 = arith.maximumf %13, %14 : vector<8x512xf32>
    %16 = arith.truncf %15 : vector<8x512xf32> to vector<8x512xbf16>
    %c0_12 = arith.constant 0 : index
    %c0_13 = arith.constant 0 : index
    %17 = vector.load %arg6[%c0_12, %c0_13] : memref<512x256xbf16, #tpu.memory_space<vmem>>, vector<512x256xbf16>
    %cst_14 = arith.constant dense<0.000000e+00> : vector<8x256xf32>
    %18 = tpu.matmul %16, %17, %cst_14 {dimension_numbers = #tpu.dot_dimension_numbers<[1], [0], [0], [1], [0, 0, 1, 1], [], []>} : vector<8x512xbf16>, vector<512x256xbf16>, vector<8x256xf32> -> vector<8x256xf32>
    %c0_15 = arith.constant 0 : index
    %c0_16 = arith.constant 0 : index
    %19 = vector.load %arg7[%c0_15, %c0_16] : memref<1x256xf32, #tpu.memory_space<vmem>>, vector<1x256xf32>
    %20 = vector.broadcast %19 : vector<1x256xf32> to vector<8x256xf32>
    %21 = arith.addf %18, %20 : vector<8x256xf32>
    %cst_17 = arith.constant 0.000000e+00 : f32
    %22 = vector.broadcast %cst_17 : f32 to vector<8x256xf32>
    %23 = arith.maximumf %21, %22 : vector<8x256xf32>
    %24 = arith.truncf %23 : vector<8x256xf32> to vector<8x256xbf16>
    %c0_18 = arith.constant 0 : index
    %c0_19 = arith.constant 0 : index
    %25 = vector.load %arg8[%c0_18, %c0_19] : memref<256x128xbf16, #tpu.memory_space<vmem>>, vector<256x128xbf16>
    %cst_20 = arith.constant dense<0.000000e+00> : vector<8x128xf32>
    %26 = tpu.matmul %24, %25, %cst_20 {dimension_numbers = #tpu.dot_dimension_numbers<[1], [0], [0], [1], [0, 0, 1, 1], [], []>} : vector<8x256xbf16>, vector<256x128xbf16>, vector<8x128xf32> -> vector<8x128xf32>
    %c0_21 = arith.constant 0 : index
    %c0_22 = arith.constant 0 : index
    %27 = vector.load %arg9[%c0_21, %c0_22] : memref<1x128xf32, #tpu.memory_space<vmem>>, vector<1x128xf32>
    %28 = vector.broadcast %27 : vector<1x128xf32> to vector<8x128xf32>
    %29 = arith.addf %26, %28 : vector<8x128xf32>
    %cst_23 = arith.constant 0.000000e+00 : f32
    %30 = vector.broadcast %cst_23 : f32 to vector<8x128xf32>
    %31 = arith.maximumf %29, %30 : vector<8x128xf32>
    %32 = arith.truncf %31 : vector<8x128xf32> to vector<8x128xbf16>
    %c0_24 = arith.constant 0 : index
    %c0_25 = arith.constant 0 : index
    %33 = vector.load %arg10[%c0_24, %c0_25] : memref<128x128xbf16, #tpu.memory_space<vmem>>, vector<128x128xbf16>
    %cst_26 = arith.constant dense<0.000000e+00> : vector<8x128xf32>
    %34 = tpu.matmul %32, %33, %cst_26 {dimension_numbers = #tpu.dot_dimension_numbers<[1], [0], [0], [1], [0, 0, 1, 1], [], []>} : vector<8x128xbf16>, vector<128x128xbf16>, vector<8x128xf32> -> vector<8x128xf32>
    %c0_27 = arith.constant 0 : index
    %c0_28 = arith.constant 0 : index
    %35 = vector.load %arg11[%c0_27, %c0_28] : memref<1x128xf32, #tpu.memory_space<vmem>>, vector<1x128xf32>
    %36 = vector.broadcast %35 : vector<1x128xf32> to vector<8x128xf32>
    %37 = arith.addf %34, %36 : vector<8x128xf32>
    %c0_29 = arith.constant 0 : index
    %c0_30 = arith.constant 0 : index
    %38 = vector.load %arg12[%c0_29, %c0_30] : memref<8x128xf32, #tpu.memory_space<vmem>>, vector<8x128xf32>
    tpu.vector_store %arg12[%c0_29, %c0_30], %37 {strides = array<i32>} : memref<8x128xf32, #tpu.memory_space<vmem>>, vector<8x128xf32>,
    return
  }
  func.func @transform_0(%arg0: i32) -> (i32, i32) {
    %c0_i32 = arith.constant 0 : i32
    %c0_i32_0 = arith.constant 0 : i32
    return %arg0, %c0_i32 : i32, i32
  }
  func.func @transform_1(%arg0: i32) -> (i32, i32) {
    %c0_i32 = arith.constant 0 : i32
    %c0_i32_0 = arith.constant 0 : i32
    %c0_i32_1 = arith.constant 0 : i32
    return %c0_i32, %c0_i32_0 : i32, i32
  }
  func.func @transform_2(%arg0: i32) -> (i32, i32) {
    %c0_i32 = arith.constant 0 : i32
    %c0_i32_0 = arith.constant 0 : i32
    %c0_i32_1 = arith.constant 0 : i32
    return %c0_i32, %c0_i32_0 : i32, i32
  }
  func.func @transform_3(%arg0: i32) -> (i32, i32) {
    %c0_i32 = arith.constant 0 : i32
    %c0_i32_0 = arith.constant 0 : i32
    %c0_i32_1 = arith.constant 0 : i32
    return %c0_i32, %c0_i32_0 : i32, i32
  }
  func.func @transform_4(%arg0: i32) -> (i32, i32) {
    %c0_i32 = arith.constant 0 : i32
    %c0_i32_0 = arith.constant 0 : i32
    %c0_i32_1 = arith.constant 0 : i32
    return %c0_i32, %c0_i32_0 : i32, i32
  }
  func.func @transform_5(%arg0: i32) -> (i32, i32) {
    %c0_i32 = arith.constant 0 : i32
    %c0_i32_0 = arith.constant 0 : i32
    %c0_i32_1 = arith.constant 0 : i32
    return %c0_i32, %c0_i32_0 : i32, i32
  }
  func.func @transform_6(%arg0: i32) -> (i32, i32) {
    %c0_i32 = arith.constant 0 : i32
    %c0_i32_0 = arith.constant 0 : i32
    %c0_i32_1 = arith.constant 0 : i32
    return %c0_i32, %c0_i32_0 : i32, i32
  }
  func.func @transform_7(%arg0: i32) -> (i32, i32) {
    %c0_i32 = arith.constant 0 : i32
    %c0_i32_0 = arith.constant 0 : i32
    %c0_i32_1 = arith.constant 0 : i32
    return %c0_i32, %c0_i32_0 : i32, i32
  }
  func.func @transform_8(%arg0: i32) -> (i32, i32) {
    %c0_i32 = arith.constant 0 : i32
    %c0_i32_0 = arith.constant 0 : i32
    %c0_i32_1 = arith.constant 0 : i32
    return %c0_i32, %c0_i32_0 : i32, i32
  }
  func.func @transform_9(%arg0: i32) -> (i32, i32) {
    %c0_i32 = arith.constant 0 : i32
    %c0_i32_0 = arith.constant 0 : i32
    %c0_i32_1 = arith.constant 0 : i32
    return %c0_i32, %c0_i32_0 : i32, i32
  }
  func.func @transform_10(%arg0: i32) -> (i32, i32) {
    %c0_i32 = arith.constant 0 : i32
    %c0_i32_0 = arith.constant 0 : i32
    %c0_i32_1 = arith.constant 0 : i32
    return %c0_i32, %c0_i32_0 : i32, i32
  }
  func.func @transform_11(%arg0: i32) -> (i32, i32) {
    %c0_i32 = arith.constant 0 : i32
    %c0_i32_0 = arith.constant 0 : i32
    return %arg0, %c0_i32 : i32, i32
  }
}

module attributes {stable_mosaic.version = 11 : i64} {
  func.func @_mlp_kernel(%arg0: i32, %arg1: memref<8x128xbf16, #tpu.memory_space<vmem>>, %arg2: memref<128x1024xbf16, #tpu.memory_space<vmem>>, %arg3: memref<1x1024xf32, #tpu.memory_space<vmem>>, %arg4: memref<1024x512xbf16, #tpu.memory_space<vmem>>, %arg5: memref<1x512xf32, #tpu.memory_space<vmem>>, %arg6: memref<512x256xbf16, #tpu.memory_space<vmem>>, %arg7: memref<1x256xf32, #tpu.memory_space<vmem>>, %arg8: memref<256x128xbf16, #tpu.memory_space<vmem>>, %arg9: memref<1x128xf32, #tpu.memory_space<vmem>>, %arg10: memref<128x128xbf16, #tpu.memory_space<vmem>>, %arg11: memref<1x128xf32, #tpu.memory_space<vmem>>, %arg12: memref<8x128xf32, #tpu.memory_space<vmem>>) attributes {dimension_semantics = [#tpu.dimension_semantics<parallel>], iteration_bounds = array<i64: 2>, scalar_prefetch = 0 : i64, scratch_operands = 0 : i64, tpu.core_type = #tpu.core_type<tc>, window_params = [{transform_indices = @transform_0, window_bounds = array<i64: 8, 128>}, {pipeline_mode = #tpu.pipeline_mode<synchronous>, transform_indices = @transform_1, window_bounds = array<i64: 128, 1024>}, {pipeline_mode = #tpu.pipeline_mode<synchronous>, transform_indices = @transform_2, window_bounds = array<i64: 1, 1024>}, {pipeline_mode = #tpu.pipeline_mode<synchronous>, transform_indices = @transform_3, window_bounds = array<i64: 1024, 512>}, {pipeline_mode = #tpu.pipeline_mode<synchronous>, transform_indices = @transform_4, window_bounds = array<i64: 1, 512>}, {pipeline_mode = #tpu.pipeline_mode<synchronous>, transform_indices = @transform_5, window_bounds = array<i64: 512, 256>}, {pipeline_mode = #tpu.pipeline_mode<synchronous>, transform_indices = @transform_6, window_bounds = array<i64: 1, 256>}, {pipeline_mode = #tpu.pipeline_mode<synchronous>, transform_indices = @transform_7, window_bounds = array<i64: 256, 128>}, {pipeline_mode = #tpu.pipeline_mode<synchronous>, transform_indices = @transform_8, window_bounds = array<i64: 1, 128>}, {pipeline_mode = #tpu.pipeline_mode<synchronous>, transform_indices = @transform_9, window_bounds = array<i64: 128, 128>}, {pipeline_mode = #tpu.pipeline_mode<synchronous>, transform_indices = @transform_10, window_bounds = array<i64: 1, 128>}, {transform_indices = @transform_11, window_bounds = array<i64: 8, 128>}]} {
    %c0 = arith.constant 0 : index
    %c0_0 = arith.constant 0 : index
    %0 = vector.load %arg1[%c0, %c0_0] : memref<8x128xbf16, #tpu.memory_space<vmem>>, vector<8x128xbf16>
    %c0_1 = arith.constant 0 : index
    %c0_2 = arith.constant 0 : index
    %1 = vector.load %arg2[%c0_1, %c0_2] : memref<128x1024xbf16, #tpu.memory_space<vmem>>, vector<128x1024xbf16>
    %cst = arith.constant dense<0.000000e+00> : vector<8x1024xf32>
    %2 = tpu.matmul %0, %1, %cst {dimension_numbers = #tpu.dot_dimension_numbers<[1], [0], [0], [1], [0, 0, 1, 1], [], []>} : vector<8x128xbf16>, vector<128x1024xbf16>, vector<8x1024xf32> -> vector<8x1024xf32>
    %c0_3 = arith.constant 0 : index
    %c0_4 = arith.constant 0 : index
    %3 = vector.load %arg3[%c0_3, %c0_4] : memref<1x1024xf32, #tpu.memory_space<vmem>>, vector<1x1024xf32>
    %4 = vector.broadcast %3 : vector<1x1024xf32> to vector<8x1024xf32>
    %5 = arith.addf %2, %4 : vector<8x1024xf32>
    %cst_5 = arith.constant 0.000000e+00 : f32
    %6 = vector.broadcast %cst_5 : f32 to vector<8x1024xf32>
    %7 = arith.maximumf %5, %6 : vector<8x1024xf32>
    %8 = arith.truncf %7 : vector<8x1024xf32> to vector<8x1024xbf16>
    %c0_6 = arith.constant 0 : index
    %c0_7 = arith.constant 0 : index
    %9 = vector.load %arg4[%c0_6, %c0_7] : memref<1024x512xbf16, #tpu.memory_space<vmem>>, vector<1024x512xbf16>
    %cst_8 = arith.constant dense<0.000000e+00> : vector<8x512xf32>
    %10 = tpu.matmul %8, %9, %cst_8 {dimension_numbers = #tpu.dot_dimension_numbers<[1], [0], [0], [1], [0, 0, 1, 1], [], []>} : vector<8x1024xbf16>, vector<1024x512xbf16>, vector<8x512xf32> -> vector<8x512xf32>
    %c0_9 = arith.constant 0 : index
    %c0_10 = arith.constant 0 : index
    %11 = vector.load %arg5[%c0_9, %c0_10] : memref<1x512xf32, #tpu.memory_space<vmem>>, vector<1x512xf32>
    %12 = vector.broadcast %11 : vector<1x512xf32> to vector<8x512xf32>
    %13 = arith.addf %10, %12 : vector<8x512xf32>
    %cst_11 = arith.constant 0.000000e+00 : f32
    %14 = vector.broadcast %cst_11 : f32 to vector<8x512xf32>
    %15 = arith.maximumf %13, %14 : vector<8x512xf32>
    %16 = arith.truncf %15 : vector<8x512xf32> to vector<8x512xbf16>
    %c0_12 = arith.constant 0 : index
    %c0_13 = arith.constant 0 : index
    %17 = vector.load %arg6[%c0_12, %c0_13] : memref<512x256xbf16, #tpu.memory_space<vmem>>, vector<512x256xbf16>
    %cst_14 = arith.constant dense<0.000000e+00> : vector<8x256xf32>
    %18 = tpu.matmul %16, %17, %cst_14 {dimension_numbers = #tpu.dot_dimension_numbers<[1], [0], [0], [1], [0, 0, 1, 1], [], []>} : vector<8x512xbf16>, vector<512x256xbf16>, vector<8x256xf32> -> vector<8x256xf32>
    %c0_15 = arith.constant 0 : index
    %c0_16 = arith.constant 0 : index
    %19 = vector.load %arg7[%c0_15, %c0_16] : memref<1x256xf32, #tpu.memory_space<vmem>>, vector<1x256xf32>
    %20 = vector.broadcast %19 : vector<1x256xf32> to vector<8x256xf32>
    %21 = arith.addf %18, %20 : vector<8x256xf32>
    %cst_17 = arith.constant 0.000000e+00 : f32
    %22 = vector.broadcast %cst_17 : f32 to vector<8x256xf32>
    %23 = arith.maximumf %21, %22 : vector<8x256xf32>
    %24 = arith.truncf %23 : vector<8x256xf32> to vector<8x256xbf16>
    %c0_18 = arith.constant 0 : index
    %c0_19 = arith.constant 0 : index
    %25 = vector.load %arg8[%c0_18, %c0_19] : memref<256x128xbf16, #tpu.memory_space<vmem>>, vector<256x128xbf16>
    %cst_20 = arith.constant dense<0.000000e+00> : vector<8x128xf32>
    %26 = tpu.matmul %24, %25, %cst_20 {dimension_numbers = #tpu.dot_dimension_numbers<[1], [0], [0], [1], [0, 0, 1, 1], [], []>} : vector<8x256xbf16>, vector<256x128xbf16>, vector<8x128xf32> -> vector<8x128xf32>
    %c0_21 = arith.constant 0 : index
    %c0_22 = arith.constant 0 : index
    %27 = vector.load %arg9[%c0_21, %c0_22] : memref<1x128xf32, #tpu.memory_space<vmem>>, vector<1x128xf32>
    %28 = vector.broadcast %27 : vector<1x128xf32> to vector<8x128xf32>
    %29 = arith.addf %26, %28 : vector<8x128xf32>
    %cst_23 = arith.constant 0.000000e+00 : f32
    %30 = vector.broadcast %cst_23 : f32 to vector<8x128xf32>
    %31 = arith.maximumf %29, %30 : vector<8x128xf32>
    %32 = arith.truncf %31 : vector<8x128xf32> to vector<8x128xbf16>
    %c0_24 = arith.constant 0 : index
    %c0_25 = arith.constant 0 : index
    %33 = vector.load %arg10[%c0_24, %c0_25] : memref<128x128xbf16, #tpu.memory_space<vmem>>, vector<128x128xbf16>
    %cst_26 = arith.constant dense<0.000000e+00> : vector<8x128xf32>
    %34 = tpu.matmul %32, %33, %cst_26 {dimension_numbers = #tpu.dot_dimension_numbers<[1], [0], [0], [1], [0, 0, 1, 1], [], []>} : vector<8x128xbf16>, vector<128x128xbf16>, vector<8x128xf32> -> vector<8x128xf32>
    %c0_27 = arith.constant 0 : index
    %c0_28 = arith.constant 0 : index
    %35 = vector.load %arg11[%c0_27, %c0_28] : memref<1x128xf32, #tpu.memory_space<vmem>>, vector<1x128xf32>
    %36 = vector.broadcast %35 : vector<1x128xf32> to vector<8x128xf32>
    %37 = arith.addf %34, %36 : vector<8x128xf32>
    %c0_29 = arith.constant 0 : index
    %c0_30 = arith.constant 0 : index
    %38 = vector.load %arg12[%c0_29, %c0_30] : memref<8x128xf32, #tpu.memory_space<vmem>>, vector<8x128xf32>
    tpu.vector_store %arg12[%c0_29, %c0_30], %37 {strides = array<i32>} : memref<8x128xf32, #tpu.memory_space<vmem>>, vector<8x128xf32>,
    return
  }
  func.func @transform_0(%arg0: i32) -> (i32, i32) {
    %c0_i32 = arith.constant 0 : i32
    %c0_i32_0 = arith.constant 0 : i32
    return %arg0, %c0_i32 : i32, i32
  }
  func.func @transform_1(%arg0: i32) -> (i32, i32) {
    %c0_i32 = arith.constant 0 : i32
    %c0_i32_0 = arith.constant 0 : i32
    %c0_i32_1 = arith.constant 0 : i32
    return %c0_i32, %c0_i32_0 : i32, i32
  }
  func.func @transform_2(%arg0: i32) -> (i32, i32) {
    %c0_i32 = arith.constant 0 : i32
    %c0_i32_0 = arith.constant 0 : i32
    %c0_i32_1 = arith.constant 0 : i32
    return %c0_i32, %c0_i32_0 : i32, i32
  }
  func.func @transform_3(%arg0: i32) -> (i32, i32) {
    %c0_i32 = arith.constant 0 : i32
    %c0_i32_0 = arith.constant 0 : i32
    %c0_i32_1 = arith.constant 0 : i32
    return %c0_i32, %c0_i32_0 : i32, i32
  }
  func.func @transform_4(%arg0: i32) -> (i32, i32) {
    %c0_i32 = arith.constant 0 : i32
    %c0_i32_0 = arith.constant 0 : i32
    %c0_i32_1 = arith.constant 0 : i32
    return %c0_i32, %c0_i32_0 : i32, i32
  }
  func.func @transform_5(%arg0: i32) -> (i32, i32) {
    %c0_i32 = arith.constant 0 : i32
    %c0_i32_0 = arith.constant 0 : i32
    %c0_i32_1 = arith.constant 0 : i32
    return %c0_i32, %c0_i32_0 : i32, i32
  }
  func.func @transform_6(%arg0: i32) -> (i32, i32) {
    %c0_i32 = arith.constant 0 : i32
    %c0_i32_0 = arith.constant 0 : i32
    %c0_i32_1 = arith.constant 0 : i32
    return %c0_i32, %c0_i32_0 : i32, i32
  }
  func.func @transform_7(%arg0: i32) -> (i32, i32) {
    %c0_i32 = arith.constant 0 : i32
    %c0_i32_0 = arith.constant 0 : i32
    %c0_i32_1 = arith.constant 0 : i32
    return %c0_i32, %c0_i32_0 : i32, i32
  }
  func.func @transform_8(%arg0: i32) -> (i32, i32) {
    %c0_i32 = arith.constant 0 : i32
    %c0_i32_0 = arith.constant 0 : i32
    %c0_i32_1 = arith.constant 0 : i32
    return %c0_i32, %c0_i32_0 : i32, i32
  }
  func.func @transform_9(%arg0: i32) -> (i32, i32) {
    %c0_i32 = arith.constant 0 : i32
    %c0_i32_0 = arith.constant 0 : i32
    %c0_i32_1 = arith.constant 0 : i32
    return %c0_i32, %c0_i32_0 : i32, i32
  }
  func.func @transform_10(%arg0: i32) -> (i32, i32) {
    %c0_i32 = arith.constant 0 : i32
    %c0_i32_0 = arith.constant 0 : i32
    %c0_i32_1 = arith.constant 0 : i32
    return %c0_i32, %c0_i32_0 : i32, i32
  }
  func.func @transform_11(%arg0: i32) -> (i32, i32) {
    %c0_i32 = arith.constant 0 : i32
    %c0_i32_0 = arith.constant 0 : i32
    return %arg0, %c0_i32 : i32, i32
  }
}

</mosaic_0001>

<llo_original>
// kernel: _mlp_forward_padded.1
$region0: #{_mlp_forward_padded.1}
  #allocation0 [shape = 'u32[]', space=smem, size = 0x4, offset = 0x4, fixed_abs, tag = 'smem constant byte address 0x4 - core index']
  #allocation1 [shape = 'u32[144,128]{1,0:T(1,128)}', space=vmem, size = 0x12000, scoped, tag = 'internal scratch']
  %s0 = inlined_call_operand.vmem [shape: bf16[16,128], index: 0, kind: input, shape index: {}]
  %s1 = inlined_call_operand.vmem [shape: bf16[128,1024], index: 1, kind: input, shape index: {}]
  %s2 = inlined_call_operand.vmem [shape: f32[1,1024], index: 2, kind: input, shape index: {}]
  %s3 = inlined_call_operand.hbm [shape: bf16[1024,512], index: 3, kind: input, shape index: {}]
  %s4 = inlined_call_operand.vmem [shape: f32[1,512], index: 4, kind: input, shape index: {}]
  %s5 = inlined_call_operand.vmem [shape: bf16[512,256], index: 5, kind: input, shape index: {}]
  %s6 = inlined_call_operand.vmem [shape: f32[1,256], index: 6, kind: input, shape index: {}]
  %s7 = inlined_call_operand.vmem [shape: bf16[256,128], index: 7, kind: input, shape index: {}]
  %s8 = inlined_call_operand.vmem [shape: f32[1,128], index: 8, kind: input, shape index: {}]
  %s9 = inlined_call_operand.vmem [shape: bf16[128,128], index: 9, kind: input, shape index: {}]
  %s10 = inlined_call_operand.vmem [shape: f32[1,128], index: 10, kind: input, shape index: {}]
  %s11 = inlined_call_operand.hbm [shape: f32[16,128], index: 11, kind: output, shape index: {}]
  %s12 = sld [smem:[#allocation0]]
  $region81: #{_mlp_forward_padded.1} parent=0
    _
  %s14 = ssub.s32 1, %s12
  %s15 = scalar_select 0, %s14, %s12
  $region1: #{_mlp_forward_padded.1} parent=0
    #allocation2 [shape = 'u8[1048576]{0}', space=vmem, size = 0x100000, scoped, tag = 'input window, operand 3, single buffered']
    #allocation3 [shape = 's32[2]{0}', space=sflag, size = 0x8, scoped, tag = 'scoped memory for _mlp_forward_padded.1']
    #allocation4 [shape = 's32[2]{0}', space=sflag, size = 0x8, scoped, tag = 'scoped memory for _mlp_forward_padded.1']
    #allocation5 [shape = 'u8[8192]{0}', space=vmem, size = 0x2000, scoped, tag = 'output window, operand 0']
    %16 = vsyncpa [#allocation3], 0
    %17 = vsyncpa [#allocation4], 0
    %s18 = scalar_lea.sflag [#allocation4], 1
    %19 = vsyncpa %s18, 0
    loop: start=0, step=1, limit=4
    $region2: #{_mlp_forward_padded.1} parent=1 // loop_pre_header
      _
    $region3: #{_mlp_forward_padded.1} parent=1 // loop_header
      %s21 = sphi 0, %s25
      %p22 = scmp.ge.s32.totalorder %s21, 4
      %s31 = sphi 0, %s33
      %s34 = sphi 0, %s31
      %s35 = sphi 0, %s34
      %s51 = sphi 0, %s35
      %s55 = sphi 0, %s55
      %s57 = sphi 0, %s55
      %s58 = sphi 0, %s57
      %s72 = sphi 0, %s58
      %s76 = sphi 0, %s76
      %s78 = sphi 0, %s76
      %s79 = sphi 0, %s78
      %s93 = sphi 0, %s79
      %s97 = sphi 0, %s97
      %s99 = sphi 0, %s97
      %s100 = sphi 0, %s99
      %s114 = sphi 0, %s100
      %s118 = sphi 0, %s118
      %s120 = sphi 0, %s118
      %s121 = sphi 0, %s120
      %s135 = sphi 0, %s121
      %s139 = sphi 0, %s139
      %s141 = sphi 0, %s139
      %s142 = sphi 0, %s141
      %s156 = sphi 0, %s142
      %s160 = sphi 0, %s160
      %s162 = sphi 0, %s160
      %s163 = sphi 0, %s162
      %s177 = sphi 0, %s163
      %s181 = sphi 0, %s181
      %s183 = sphi 0, %s181
      %s184 = sphi 0, %s183
      %s198 = sphi 0, %s184
      %s202 = sphi 0, %s202
      %s204 = sphi 0, %s202
      %s205 = sphi 0, %s204
      %s219 = sphi 0, %s205
      %s223 = sphi 0, %s223
      %s225 = sphi 0, %s223
      %s226 = sphi 0, %s225
      %s240 = sphi 0, %s226
      %s244 = sphi 0, %s244
      %s246 = sphi 0, %s244
      %s247 = sphi 0, %s246
      %s261 = sphi 0, %s247
      %s267 = sphi 0, %s269
      %s270 = sphi 0, %s267
      %s271 = sphi 0, %s270
      %s287 = sphi 0, %s271
    $region4: #{_mlp_forward_padded.1} parent=1 // loop_header_branch
      %24 = sbr.rel (%p22) target = $region8
    $region5: #{_mlp_forward_padded.1} parent=1 // loop_body
      %s26 = ssub.s32 %s21, 1
      %s27 = ssub.s32 %s21, 2
      %s28 = sadd.s32 %s21, 1
      %s29 = ssub.s32 %s21, %s28
      %p30 = scmp.eq.s32.totalorder %s29, 0
      %s32 = sadd.s32 %s31, 1
      %s33 = scalar_select %p30, %s31, %s32
      %p36 = pneg %p30
      %p37 = scmp.eq.s32.totalorder %s21, 1
      %p38 = por %p36, %p37
      %p39 = scmp.ne.s32.totalorder %s31, %s34
      %p40 = scmp.eq.s32.totalorder %s21, 0
      %p41 = por %p39, %p40
      %p42 = scmp.ne.s32.totalorder %s31, %s34
      %p43 = scmp.eq.s32.totalorder %s26, 1
      %p44 = por %p42, %p43
      %p45 = scmp.ne.s32.totalorder %s34, %s35
      %p46 = scmp.eq.s32.totalorder %s26, 0
      %p47 = por %p45, %p46
      %p48 = scmp.ne.s32.totalorder %s34, %s35
      %p49 = scmp.eq.s32.totalorder %s27, 1
      %p50 = por %p48, %p49
      %p52 = scmp.ne.s32.totalorder %s35, %s51
      %p53 = scmp.eq.s32.totalorder %s27, 0
      %p54 = por %p52, %p53
      %s56 = sadd.s32 %s55, 1
      %p59 = scmp.eq.s32.totalorder %s21, 1
      %p60 = scmp.ne.s32.totalorder %s55, %s57
      %p61 = scmp.eq.s32.totalorder %s21, 0
      %p62 = por %p60, %p61
      %p63 = scmp.ne.s32.totalorder %s55, %s57
      %p64 = scmp.eq.s32.totalorder %s26, 1
      %p65 = por %p63, %p64
      %p66 = scmp.ne.s32.totalorder %s57, %s58
      %p67 = scmp.eq.s32.totalorder %s26, 0
      %p68 = por %p66, %p67
      %p69 = scmp.ne.s32.totalorder %s57, %s58
      %p70 = scmp.eq.s32.totalorder %s27, 1
      %p71 = por %p69, %p70
      %p73 = scmp.ne.s32.totalorder %s58, %s72
      %p74 = scmp.eq.s32.totalorder %s27, 0
      %p75 = por %p73, %p74
      %s77 = sadd.s32 %s76, 1
      %p80 = scmp.eq.s32.totalorder %s21, 1
      %p81 = scmp.ne.s32.totalorder %s76, %s78
      %p82 = scmp.eq.s32.totalorder %s21, 0
      %p83 = por %p81, %p82
      %p84 = scmp.ne.s32.totalorder %s76, %s78
      %p85 = scmp.eq.s32.totalorder %s26, 1
      %p86 = por %p84, %p85
      %p87 = scmp.ne.s32.totalorder %s78, %s79
      %p88 = scmp.eq.s32.totalorder %s26, 0
      %p89 = por %p87, %p88
      %p90 = scmp.ne.s32.totalorder %s78, %s79
      %p91 = scmp.eq.s32.totalorder %s27, 1
      %p92 = por %p90, %p91
      %p94 = scmp.ne.s32.totalorder %s79, %s93
      %p95 = scmp.eq.s32.totalorder %s27, 0
      %p96 = por %p94, %p95
      %s98 = sadd.s32 %s97, 1
      %p101 = scmp.eq.s32.totalorder %s21, 1
      %p102 = scmp.ne.s32.totalorder %s97, %s99
      %p103 = scmp.eq.s32.totalorder %s21, 0
      %p104 = por %p102, %p103
      %p105 = scmp.ne.s32.totalorder %s97, %s99
      %p106 = scmp.eq.s32.totalorder %s26, 1
      %p107 = por %p105, %p106
      %p108 = scmp.ne.s32.totalorder %s99, %s100
      %p109 = scmp.eq.s32.totalorder %s26, 0
      %p110 = por %p108, %p109
      %p111 = scmp.ne.s32.totalorder %s99, %s100
      %p112 = scmp.eq.s32.totalorder %s27, 1
      %p113 = por %p111, %p112
      %p115 = scmp.ne.s32.totalorder %s100, %s114
      %p116 = scmp.eq.s32.totalorder %s27, 0
      %p117 = por %p115, %p116
      %s119 = sadd.s32 %s118, 1
      %p122 = scmp.eq.s32.totalorder %s21, 1
      %p123 = scmp.ne.s32.totalorder %s118, %s120
      %p124 = scmp.eq.s32.totalorder %s21, 0
      %p125 = por %p123, %p124
      %p126 = scmp.ne.s32.totalorder %s118, %s120
      %p127 = scmp.eq.s32.totalorder %s26, 1
      %p128 = por %p126, %p127
      %p129 = scmp.ne.s32.totalorder %s120, %s121
      %p130 = scmp.eq.s32.totalorder %s26, 0
      %p131 = por %p129, %p130
      %p132 = scmp.ne.s32.totalorder %s120, %s121
      %p133 = scmp.eq.s32.totalorder %s27, 1
      %p134 = por %p132, %p133
      %p136 = scmp.ne.s32.totalorder %s121, %s135
      %p137 = scmp.eq.s32.totalorder %s27, 0
      %p138 = por %p136, %p137
      %s140 = sadd.s32 %s139, 1
      %p143 = scmp.eq.s32.totalorder %s21, 1
      %p144 = scmp.ne.s32.totalorder %s139, %s141
      %p145 = scmp.eq.s32.totalorder %s21, 0
      %p146 = por %p144, %p145
      %p147 = scmp.ne.s32.totalorder %s139, %s141
      %p148 = scmp.eq.s32.totalorder %s26, 1
      %p149 = por %p147, %p148
      %p150 = scmp.ne.s32.totalorder %s141, %s142
      %p151 = scmp.eq.s32.totalorder %s26, 0
      %p152 = por %p150, %p151
      %p153 = scmp.ne.s32.totalorder %s141, %s142
      %p154 = scmp.eq.s32.totalorder %s27, 1
      %p155 = por %p153, %p154
      %p157 = scmp.ne.s32.totalorder %s142, %s156
      %p158 = scmp.eq.s32.totalorder %s27, 0
      %p159 = por %p157, %p158
      %s161 = sadd.s32 %s160, 1
      %p164 = scmp.eq.s32.totalorder %s21, 1
      %p165 = scmp.ne.s32.totalorder %s160, %s162
      %p166 = scmp.eq.s32.totalorder %s21, 0
      %p167 = por %p165, %p166
      %p168 = scmp.ne.s32.totalorder %s160, %s162
      %p169 = scmp.eq.s32.totalorder %s26, 1
      %p170 = por %p168, %p169
      %p171 = scmp.ne.s32.totalorder %s162, %s163
      %p172 = scmp.eq.s32.totalorder %s26, 0
      %p173 = por %p171, %p172
      %p174 = scmp.ne.s32.totalorder %s162, %s163
      %p175 = scmp.eq.s32.totalorder %s27, 1
      %p176 = por %p174, %p175
      %p178 = scmp.ne.s32.totalorder %s163, %s177
      %p179 = scmp.eq.s32.totalorder %s27, 0
      %p180 = por %p178, %p179
      %s182 = sadd.s32 %s181, 1
      %p185 = scmp.eq.s32.totalorder %s21, 1
      %p186 = scmp.ne.s32.totalorder %s181, %s183
      %p187 = scmp.eq.s32.totalorder %s21, 0
      %p188 = por %p186, %p187
      %p189 = scmp.ne.s32.totalorder %s181, %s183
      %p190 = scmp.eq.s32.totalorder %s26, 1
      %p191 = por %p189, %p190
      %p192 = scmp.ne.s32.totalorder %s183, %s184
      %p193 = scmp.eq.s32.totalorder %s26, 0
      %p194 = por %p192, %p193
      %p195 = scmp.ne.s32.totalorder %s183, %s184
      %p196 = scmp.eq.s32.totalorder %s27, 1
      %p197 = por %p195, %p196
      %p199 = scmp.ne.s32.totalorder %s184, %s198
      %p200 = scmp.eq.s32.totalorder %s27, 0
      %p201 = por %p199, %p200
      %s203 = sadd.s32 %s202, 1
      %p206 = scmp.eq.s32.totalorder %s21, 1
      %p207 = scmp.ne.s32.totalorder %s202, %s204
      %p208 = scmp.eq.s32.totalorder %s21, 0
      %p209 = por %p207, %p208
      %p210 = scmp.ne.s32.totalorder %s202, %s204
      %p211 = scmp.eq.s32.totalorder %s26, 1
      %p212 = por %p210, %p211
      %p213 = scmp.ne.s32.totalorder %s204, %s205
      %p214 = scmp.eq.s32.totalorder %s26, 0
      %p215 = por %p213, %p214
      %p216 = scmp.ne.s32.totalorder %s204, %s205
      %p217 = scmp.eq.s32.totalorder %s27, 1
      %p218 = por %p216, %p217
      %p220 = scmp.ne.s32.totalorder %s205, %s219
      %p221 = scmp.eq.s32.totalorder %s27, 0
      %p222 = por %p220, %p221
      %s224 = sadd.s32 %s223, 1
      %p227 = scmp.eq.s32.totalorder %s21, 1
      %p228 = scmp.ne.s32.totalorder %s223, %s225
      %p229 = scmp.eq.s32.totalorder %s21, 0
      %p230 = por %p228, %p229
      %p231 = scmp.ne.s32.totalorder %s223, %s225
      %p232 = scmp.eq.s32.totalorder %s26, 1
      %p233 = por %p231, %p232
      %p234 = scmp.ne.s32.totalorder %s225, %s226
      %p235 = scmp.eq.s32.totalorder %s26, 0
      %p236 = por %p234, %p235
      %p237 = scmp.ne.s32.totalorder %s225, %s226
      %p238 = scmp.eq.s32.totalorder %s27, 1
      %p239 = por %p237, %p238
      %p241 = scmp.ne.s32.totalorder %s226, %s240
      %p242 = scmp.eq.s32.totalorder %s27, 0
      %p243 = por %p241, %p242
      %s245 = sadd.s32 %s244, 1
      %p248 = scmp.eq.s32.totalorder %s21, 1
      %p249 = scmp.ne.s32.totalorder %s244, %s246
      %p250 = scmp.eq.s32.totalorder %s21, 0
      %p251 = por %p249, %p250
      %p252 = scmp.ne.s32.totalorder %s244, %s246
      %p253 = scmp.eq.s32.totalorder %s26, 1
      %p254 = por %p252, %p253
      %p255 = scmp.ne.s32.totalorder %s246, %s247
      %p256 = scmp.eq.s32.totalorder %s26, 0
      %p257 = por %p255, %p256
      %p258 = scmp.ne.s32.totalorder %s246, %s247
      %p259 = scmp.eq.s32.totalorder %s27, 1
      %p260 = por %p258, %p259
      %p262 = scmp.ne.s32.totalorder %s247, %s261
      %p263 = scmp.eq.s32.totalorder %s27, 0
      %p264 = por %p262, %p263
      %s265 = ssub.s32 %s21, %s28
      %p266 = scmp.eq.s32.totalorder %s265, 0
      %s268 = sadd.s32 %s267, 1
      %s269 = scalar_select %p266, %s267, %s268
      %p272 = pneg %p266
      %p273 = scmp.eq.s32.totalorder %s21, 1
      %p274 = por %p272, %p273
      %p275 = scmp.ne.s32.totalorder %s267, %s270
      %p276 = scmp.eq.s32.totalorder %s21, 0
      %p277 = por %p275, %p276
      %p278 = scmp.ne.s32.totalorder %s267, %s270
      %p279 = scmp.eq.s32.totalorder %s26, 1
      %p280 = por %p278, %p279
      %p281 = scmp.ne.s32.totalorder %s270, %s271
      %p282 = scmp.eq.s32.totalorder %s26, 0
      %p283 = por %p281, %p282
      %p284 = scmp.ne.s32.totalorder %s270, %s271
      %p285 = scmp.eq.s32.totalorder %s27, 1
      %p286 = por %p284, %p285
      %p288 = scmp.ne.s32.totalorder %s271, %s287
      %p289 = scmp.eq.s32.totalorder %s27, 0
      %p290 = por %p288, %p289
      %p291 = scmp.le.s32.totalorder 1, %s21
      %p292 = scmp.lt.s32.totalorder %s21, 3
      %p293 = pnand %p291, %p292
      %p294 = pneg %p293
      // Predicated region
      $region9: #{_mlp_forward_padded.1} parent=5 // pred_check
        _
      $region10: #{_mlp_forward_padded.1} parent=5 // pred_check_branch
        %296 = sbr.rel (%p293) target = $region12
      $region11: #{_mlp_forward_padded.1} parent=5 // pred_region
        %s297 = ssub.s32 %s21, 1
        // Predicated region
        $region13: #{_mlp_forward_padded.1} parent=11 // pred_check
          %p298 = pneg %p68
        $region14: #{_mlp_forward_padded.1} parent=11 // pred_check_branch
          %300 = sbr.rel (%p298) target = $region16
        $region15: #{_mlp_forward_padded.1} parent=11 // pred_region
          _
        $region16: #{_mlp_forward_padded.1} parent=11 // pred_fallthru
          _
        // Predicated region
        $region17: #{_mlp_forward_padded.1} parent=11 // pred_check
          %p301 = pneg %p89
        $region18: #{_mlp_forward_padded.1} parent=11 // pred_check_branch
          %303 = sbr.rel (%p301) target = $region20
        $region19: #{_mlp_forward_padded.1} parent=11 // pred_region
          _
        $region20: #{_mlp_forward_padded.1} parent=11 // pred_fallthru
          _
        // Predicated region
        $region21: #{_mlp_forward_padded.1} parent=11 // pred_check
          %p304 = pneg %p110
        $region22: #{_mlp_forward_padded.1} parent=11 // pred_check_branch
          %306 = sbr.rel (%p304) target = $region24
        $region23: #{_mlp_forward_padded.1} parent=11 // pred_region
          %s308 = ssub.s32 32768, 32768
          %309 = vsyncadd [#allocation3], %s308
          %s310 = sshll.u32 [#allocation2], 4
          %s311 = int_to_ptr.vmem [resolvable:$true] %s310
          %316 = dma.hbm_to_vmem [thread:$0]  %s3, 32768, %s311, [#allocation3], 256, 256, 16
        $region24: #{_mlp_forward_padded.1} parent=11 // pred_fallthru
          _
        // Predicated region
        $region25: #{_mlp_forward_padded.1} parent=11 // pred_check
          %p317 = pneg %p131
        $region26: #{_mlp_forward_padded.1} parent=11 // pred_check_branch
          %319 = sbr.rel (%p317) target = $region28
        $region27: #{_mlp_forward_padded.1} parent=11 // pred_region
          _
        $region28: #{_mlp_forward_padded.1} parent=11 // pred_fallthru
          _
        // Predicated region
        $region29: #{_mlp_forward_padded.1} parent=11 // pred_check
          %p320 = pneg %p152
        $region30: #{_mlp_forward_padded.1} parent=11 // pred_check_branch
          %322 = sbr.rel (%p320) target = $region32
        $region31: #{_mlp_forward_padded.1} parent=11 // pred_region
          _
        $region32: #{_mlp_forward_padded.1} parent=11 // pred_fallthru
          _
        // Predicated region
        $region33: #{_mlp_forward_padded.1} parent=11 // pred_check
          %p323 = pneg %p173
        $region34: #{_mlp_forward_padded.1} parent=11 // pred_check_branch
          %325 = sbr.rel (%p323) target = $region36
        $region35: #{_mlp_forward_padded.1} parent=11 // pred_region
          _
        $region36: #{_mlp_forward_padded.1} parent=11 // pred_fallthru
          _
        // Predicated region
        $region37: #{_mlp_forward_padded.1} parent=11 // pred_check
          %p326 = pneg %p194
        $region38: #{_mlp_forward_padded.1} parent=11 // pred_check_branch
          %328 = sbr.rel (%p326) target = $region40
        $region39: #{_mlp_forward_padded.1} parent=11 // pred_region
          _
        $region40: #{_mlp_forward_padded.1} parent=11 // pred_fallthru
          _
        // Predicated region
        $region41: #{_mlp_forward_padded.1} parent=11 // pred_check
          %p329 = pneg %p215
        $region42: #{_mlp_forward_padded.1} parent=11 // pred_check_branch
          %331 = sbr.rel (%p329) target = $region44
        $region43: #{_mlp_forward_padded.1} parent=11 // pred_region
          _
        $region44: #{_mlp_forward_padded.1} parent=11 // pred_fallthru
          _
        // Predicated region
        $region45: #{_mlp_forward_padded.1} parent=11 // pred_check
          %p332 = pneg %p236
        $region46: #{_mlp_forward_padded.1} parent=11 // pred_check_branch
          %334 = sbr.rel (%p332) target = $region48
        $region47: #{_mlp_forward_padded.1} parent=11 // pred_region
          _
        $region48: #{_mlp_forward_padded.1} parent=11 // pred_fallthru
          _
        // Predicated region
        $region49: #{_mlp_forward_padded.1} parent=11 // pred_check
          %p335 = pneg %p257
        $region50: #{_mlp_forward_padded.1} parent=11 // pred_check_branch
          %337 = sbr.rel (%p335) target = $region52
        $region51: #{_mlp_forward_padded.1} parent=11 // pred_region
          _
        $region52: #{_mlp_forward_padded.1} parent=11 // pred_fallthru
          _
      $region12: #{_mlp_forward_padded.1} parent=5 // pred_fallthru
        _
      %p338 = scmp.lt.s32.totalorder %s21, 2
      // Predicated region
      $region53: #{_mlp_forward_padded.1} parent=5 // pred_check
        %p339 = pneg %p338
      $region54: #{_mlp_forward_padded.1} parent=5 // pred_check_branch
        %341 = sbr.rel (%p339) target = $region56
      $region55: #{_mlp_forward_padded.1} parent=5 // pred_region
        // Predicated region
        $region57: #{_mlp_forward_padded.1} parent=55 // pred_check
          %p342 = pneg %p41
        $region58: #{_mlp_forward_padded.1} parent=55 // pred_check_branch
          %344 = sbr.rel (%p342) target = $region60
        $region59: #{_mlp_forward_padded.1} parent=55 // pred_region
          %p345 = scmp.lt.s32.totalorder %s21, 1
          %s346 = scalar_select %p345, %s21, 1
          %s347 = smul.addr %s346, 4
          %s348 = scalar_lea.vmem %s0, %s347
        $region60: #{_mlp_forward_padded.1} parent=55 // pred_fallthru
          _
      $region56: #{_mlp_forward_padded.1} parent=5 // pred_fallthru
        _
      %p349 = scmp.le.s32.totalorder 1, %s21
      %p350 = scmp.lt.s32.totalorder %s21, 3
      %p351 = pnand %p349, %p350
      %p352 = pneg %p351
      // Predicated region
      $region61: #{_mlp_forward_padded.1} parent=5 // pred_check
        _
      $region62: #{_mlp_forward_padded.1} parent=5 // pred_check_branch
        %354 = sbr.rel (%p351) target = $region64
      $region63: #{_mlp_forward_padded.1} parent=5 // pred_region
        %s355 = ssub.s32 %s21, 1
        // Predicated region
        $region65: #{_mlp_forward_padded.1} parent=63 // pred_check
          %p356 = pneg %p110
        $region66: #{_mlp_forward_padded.1} parent=63 // pred_check_branch
          %358 = sbr.rel (%p356) target = $region68
        $region67: #{_mlp_forward_padded.1} parent=63 // pred_region
          %359 = dma.done [#allocation3], 32768
        $region68: #{_mlp_forward_padded.1} parent=63 // pred_fallthru
          _
        %p360 = scmp.lt.s32.totalorder %s26, 1
        %s361 = scalar_select %p360, %s26, 1
        %s362 = smul.addr %s361, 4
        %s363 = scalar_lea.vmem %s0, %s362
        %p364 = pneg %p47
        %p365 = pneg %p44
        %p366 = pneg %p68
        %p367 = pneg %p65
        %p368 = pneg %p89
        %p369 = pneg %p86
        %p370 = pneg %p110
        %p371 = pneg %p107
        %p372 = pneg %p131
        %p373 = pneg %p128
        %p374 = pneg %p152
        %p375 = pneg %p149
        %p376 = pneg %p173
        %p377 = pneg %p170
        %p378 = pneg %p194
        %p379 = pneg %p191
        %p380 = pneg %p215
        %p381 = pneg %p212
        %p382 = pneg %p236
        %p383 = pneg %p233
        %p384 = pneg %p257
        %p385 = pneg %p254
        %p386 = pneg %p283
        %p387 = pneg %p280
        %s388 = sand.u32 %s270, 1
        %s389 = scalar_lea.sflag [#allocation4], %s388
        %s390 = sand.u32 %s270, 1
        %s391 = smul.addr %s390, 8
        %s392 = scalar_lea.vmem [#allocation5], %s391
        %p393 = scmp.lt.s32.totalorder %s26, 1
        %s394 = scalar_select %p393, %s26, 1
        %s395 = smul.addr %s394, 4
        %s396 = scalar_lea.vmem %s0, %s395
        %v398 = vld [vmem:[%s396] sm:$0xf]
        %v399 = vld [vmem:[%s1] sm:$0xff]
        %v400 = vld [vmem:[%s1 + $0x8] sm:$0xff]
        %v401 = vld [vmem:[%s1 + $0x10] sm:$0xff]
        %v402 = vld [vmem:[%s1 + $0x18] sm:$0xff]
        %v403 = vld [vmem:[%s1 + $0x20] sm:$0xff]
        %v404 = vld [vmem:[%s1 + $0x28] sm:$0xff]
        %v405 = vld [vmem:[%s1 + $0x30] sm:$0xff]
        %v406 = vld [vmem:[%s1 + $0x38] sm:$0xff]
        %v407 = vld [vmem:[%s1 + $0x40] sm:$0xff]
        %v408 = vld [vmem:[%s1 + $0x48] sm:$0xff]
        %v409 = vld [vmem:[%s1 + $0x50] sm:$0xff]
        %v410 = vld [vmem:[%s1 + $0x58] sm:$0xff]
        %v411 = vld [vmem:[%s1 + $0x60] sm:$0xff]
        %v412 = vld [vmem:[%s1 + $0x68] sm:$0xff]
        %v413 = vld [vmem:[%s1 + $0x70] sm:$0xff]
        %v414 = vld [vmem:[%s1 + $0x78] sm:$0xff]
        %v415 = vld [vmem:[%s1 + $0x80] sm:$0xff]
        %v416 = vld [vmem:[%s1 + $0x88] sm:$0xff]
        %v417 = vld [vmem:[%s1 + $0x90] sm:$0xff]
        %v418 = vld [vmem:[%s1 + $0x98] sm:$0xff]
        %v419 = vld [vmem:[%s1 + $0xa0] sm:$0xff]
        %v420 = vld [vmem:[%s1 + $0xa8] sm:$0xff]
        %v421 = vld [vmem:[%s1 + $0xb0] sm:$0xff]
        %v422 = vld [vmem:[%s1 + $0xb8] sm:$0xff]
        %v423 = vld [vmem:[%s1 + $0xc0] sm:$0xff]
        %v424 = vld [vmem:[%s1 + $0xc8] sm:$0xff]
        %v425 = vld [vmem:[%s1 + $0xd0] sm:$0xff]
        %v426 = vld [vmem:[%s1 + $0xd8] sm:$0xff]
        %v427 = vld [vmem:[%s1 + $0xe0] sm:$0xff]
        %v428 = vld [vmem:[%s1 + $0xe8] sm:$0xff]
        %v429 = vld [vmem:[%s1 + $0xf0] sm:$0xff]
        %v430 = vld [vmem:[%s1 + $0xf8] sm:$0xff]
        %v431 = vld [vmem:[%s1 + $0x100] sm:$0xff]
        %v432 = vld [vmem:[%s1 + $0x108] sm:$0xff]
        %v433 = vld [vmem:[%s1 + $0x110] sm:$0xff]
        %v434 = vld [vmem:[%s1 + $0x118] sm:$0xff]
        %v435 = vld [vmem:[%s1 + $0x120] sm:$0xff]
        %v436 = vld [vmem:[%s1 + $0x128] sm:$0xff]
        %v437 = vld [vmem:[%s1 + $0x130] sm:$0xff]
        %v438 = vld [vmem:[%s1 + $0x138] sm:$0xff]
        %v439 = vld [vmem:[%s1 + $0x140] sm:$0xff]
        %v440 = vld [vmem:[%s1 + $0x148] sm:$0xff]
        %v441 = vld [vmem:[%s1 + $0x150] sm:$0xff]
        %v442 = vld [vmem:[%s1 + $0x158] sm:$0xff]
        %v443 = vld [vmem:[%s1 + $0x160] sm:$0xff]
        %v444 = vld [vmem:[%s1 + $0x168] sm:$0xff]
        %v445 = vld [vmem:[%s1 + $0x170] sm:$0xff]
        %v446 = vld [vmem:[%s1 + $0x178] sm:$0xff]
        %v447 = vld [vmem:[%s1 + $0x180] sm:$0xff]
        %v448 = vld [vmem:[%s1 + $0x188] sm:$0xff]
        %v449 = vld [vmem:[%s1 + $0x190] sm:$0xff]
        %v450 = vld [vmem:[%s1 + $0x198] sm:$0xff]
        %v451 = vld [vmem:[%s1 + $0x1a0] sm:$0xff]
        %v452 = vld [vmem:[%s1 + $0x1a8] sm:$0xff]
        %v453 = vld [vmem:[%s1 + $0x1b0] sm:$0xff]
        %v454 = vld [vmem:[%s1 + $0x1b8] sm:$0xff]
        %v455 = vld [vmem:[%s1 + $0x1c0] sm:$0xff]
        %v456 = vld [vmem:[%s1 + $0x1c8] sm:$0xff]
        %v457 = vld [vmem:[%s1 + $0x1d0] sm:$0xff]
        %v458 = vld [vmem:[%s1 + $0x1d8] sm:$0xff]
        %v459 = vld [vmem:[%s1 + $0x1e0] sm:$0xff]
        %v460 = vld [vmem:[%s1 + $0x1e8] sm:$0xff]
        %v461 = vld [vmem:[%s1 + $0x1f0] sm:$0xff]
        %v462 = vld [vmem:[%s1 + $0x1f8] sm:$0xff]
        %v463 = vld [vmem:[%s2] sm:$0xff]
        %v465 = vlaneseq
        %v466 = vshrl.u32 %v465, 7
        %v467 = vsub.s32 0, %v466
        %v468 = vrot.slane %v463, %v467
        %v469 = vlaneseq
        %v470 = vshrl.u32 %v469, 7
        %v471 = vsub.s32 1, %v470
        %v472 = vrot.slane %v463, %v471
        %v473 = vlaneseq
        %v474 = vshrl.u32 %v473, 7
        %v475 = vsub.s32 2, %v474
        %v476 = vrot.slane %v463, %v475
        %v477 = vlaneseq
        %v478 = vshrl.u32 %v477, 7
        %v479 = vsub.s32 3, %v478
        %v480 = vrot.slane %v463, %v479
        %v481 = vlaneseq
        %v482 = vshrl.u32 %v481, 7
        %v483 = vsub.s32 4, %v482
        %v484 = vrot.slane %v463, %v483
        %v485 = vlaneseq
        %v486 = vshrl.u32 %v485, 7
        %v487 = vsub.s32 5, %v486
        %v488 = vrot.slane %v463, %v487
        %v489 = vlaneseq
        %v490 = vshrl.u32 %v489, 7
        %v491 = vsub.s32 6, %v490
        %v492 = vrot.slane %v463, %v491
        %v493 = vlaneseq
        %v494 = vshrl.u32 %v493, 7
        %v495 = vsub.s32 7, %v494
        %v496 = vrot.slane %v463, %v495
        %v569 = vunpack.c.l.b16 %v399
        %v570 = vunpack.c.h.b16 %v399
        %v571 = vunpack.c.l.b16 %v400
        %v572 = vunpack.c.h.b16 %v400
        %v573 = vunpack.c.l.b16 %v401
        %v574 = vunpack.c.h.b16 %v401
        %v575 = vunpack.c.l.b16 %v402
        %v576 = vunpack.c.h.b16 %v402
        %v577 = vunpack.c.l.b16 %v403
        %v578 = vunpack.c.h.b16 %v403
        %v579 = vunpack.c.l.b16 %v404
        %v580 = vunpack.c.h.b16 %v404
        %v581 = vunpack.c.l.b16 %v405
        %v582 = vunpack.c.h.b16 %v405
        %v583 = vunpack.c.l.b16 %v406
        %v584 = vunpack.c.h.b16 %v406
        %v585 = vunpack.c.l.b16 %v407
        %v586 = vunpack.c.h.b16 %v407
        %v587 = vunpack.c.l.b16 %v408
        %v588 = vunpack.c.h.b16 %v408
        %v589 = vunpack.c.l.b16 %v409
        %v590 = vunpack.c.h.b16 %v409
        %v591 = vunpack.c.l.b16 %v410
        %v592 = vunpack.c.h.b16 %v410
        %v593 = vunpack.c.l.b16 %v411
        %v594 = vunpack.c.h.b16 %v411
        %v595 = vunpack.c.l.b16 %v412
        %v596 = vunpack.c.h.b16 %v412
        %v597 = vunpack.c.l.b16 %v413
        %v598 = vunpack.c.h.b16 %v413
        %v599 = vunpack.c.l.b16 %v414
        %v600 = vunpack.c.h.b16 %v414
        %v601 = vunpack.c.l.b16 %v415
        %v602 = vunpack.c.h.b16 %v415
        %v603 = vunpack.c.l.b16 %v416
        %v604 = vunpack.c.h.b16 %v416
        %v605 = vunpack.c.l.b16 %v417
        %v606 = vunpack.c.h.b16 %v417
        %v607 = vunpack.c.l.b16 %v418
        %v608 = vunpack.c.h.b16 %v418
        %v609 = vunpack.c.l.b16 %v419
        %v610 = vunpack.c.h.b16 %v419
        %v611 = vunpack.c.l.b16 %v420
        %v612 = vunpack.c.h.b16 %v420
        %v613 = vunpack.c.l.b16 %v421
        %v614 = vunpack.c.h.b16 %v421
        %v615 = vunpack.c.l.b16 %v422
        %v616 = vunpack.c.h.b16 %v422
        %v617 = vunpack.c.l.b16 %v423
        %v618 = vunpack.c.h.b16 %v423
        %v619 = vunpack.c.l.b16 %v424
        %v620 = vunpack.c.h.b16 %v424
        %v621 = vunpack.c.l.b16 %v425
        %v622 = vunpack.c.h.b16 %v425
        %v623 = vunpack.c.l.b16 %v426
        %v624 = vunpack.c.h.b16 %v426
        %v625 = vunpack.c.l.b16 %v427
        %v626 = vunpack.c.h.b16 %v427
        %v627 = vunpack.c.l.b16 %v428
        %v628 = vunpack.c.h.b16 %v428
        %v629 = vunpack.c.l.b16 %v429
        %v630 = vunpack.c.h.b16 %v429
        %v631 = vunpack.c.l.b16 %v430
        %v632 = vunpack.c.h.b16 %v430
        %v633 = vunpack.c.l.b16 %v431
        %v634 = vunpack.c.h.b16 %v431
        %v635 = vunpack.c.l.b16 %v432
        %v636 = vunpack.c.h.b16 %v432
        %v637 = vunpack.c.l.b16 %v433
        %v638 = vunpack.c.h.b16 %v433
        %v639 = vunpack.c.l.b16 %v434
        %v640 = vunpack.c.h.b16 %v434
        %v641 = vunpack.c.l.b16 %v435
        %v642 = vunpack.c.h.b16 %v435
        %v643 = vunpack.c.l.b16 %v436
        %v644 = vunpack.c.h.b16 %v436
        %v645 = vunpack.c.l.b16 %v437
        %v646 = vunpack.c.h.b16 %v437
        %v647 = vunpack.c.l.b16 %v438
        %v648 = vunpack.c.h.b16 %v438
        %v649 = vunpack.c.l.b16 %v439
        %v650 = vunpack.c.h.b16 %v439
        %v651 = vunpack.c.l.b16 %v440
        %v652 = vunpack.c.h.b16 %v440
        %v653 = vunpack.c.l.b16 %v441
        %v654 = vunpack.c.h.b16 %v441
        %v655 = vunpack.c.l.b16 %v442
        %v656 = vunpack.c.h.b16 %v442
        %v657 = vunpack.c.l.b16 %v443
        %v658 = vunpack.c.h.b16 %v443
        %v659 = vunpack.c.l.b16 %v444
        %v660 = vunpack.c.h.b16 %v444
        %v661 = vunpack.c.l.b16 %v445
        %v662 = vunpack.c.h.b16 %v445
        %v663 = vunpack.c.l.b16 %v446
        %v664 = vunpack.c.h.b16 %v446
        %v665 = vunpack.c.l.b16 %v447
        %v666 = vunpack.c.h.b16 %v447
        %v667 = vunpack.c.l.b16 %v448
        %v668 = vunpack.c.h.b16 %v448
        %v669 = vunpack.c.l.b16 %v449
        %v670 = vunpack.c.h.b16 %v449
        %v671 = vunpack.c.l.b16 %v450
        %v672 = vunpack.c.h.b16 %v450
        %v673 = vunpack.c.l.b16 %v451
        %v674 = vunpack.c.h.b16 %v451
        %v675 = vunpack.c.l.b16 %v452
        %v676 = vunpack.c.h.b16 %v452
        %v677 = vunpack.c.l.b16 %v453
        %v678 = vunpack.c.h.b16 %v453
        %v679 = vunpack.c.l.b16 %v454
        %v680 = vunpack.c.h.b16 %v454
        %v681 = vunpack.c.l.b16 %v455
        %v682 = vunpack.c.h.b16 %v455
        %v683 = vunpack.c.l.b16 %v456
        %v684 = vunpack.c.h.b16 %v456
        %v685 = vunpack.c.l.b16 %v457
        %v686 = vunpack.c.h.b16 %v457
        %v687 = vunpack.c.l.b16 %v458
        %v688 = vunpack.c.h.b16 %v458
        %v689 = vunpack.c.l.b16 %v459
        %v690 = vunpack.c.h.b16 %v459
        %v691 = vunpack.c.l.b16 %v460
        %v692 = vunpack.c.h.b16 %v460
        %v693 = vunpack.c.l.b16 %v461
        %v694 = vunpack.c.h.b16 %v461
        %v695 = vunpack.c.l.b16 %v462
        %v696 = vunpack.c.h.b16 %v462
        %v697 = vpack.c.b16 %v577, %v569
        %v698 = vpack.c.b16 %v578, %v570
        %v699 = vpack.c.b16 %v579, %v571
        %v700 = vpack.c.b16 %v580, %v572
        %v701 = vpack.c.b16 %v581, %v573
        %v702 = vpack.c.b16 %v582, %v574
        %v703 = vpack.c.b16 %v583, %v575
        %v704 = vpack.c.b16 %v584, %v576
        %v705 = vpack.c.b16 %v593, %v585
        %v706 = vpack.c.b16 %v594, %v586
        %v707 = vpack.c.b16 %v595, %v587
        %v708 = vpack.c.b16 %v596, %v588
        %v709 = vpack.c.b16 %v597, %v589
        %v710 = vpack.c.b16 %v598, %v590
        %v711 = vpack.c.b16 %v599, %v591
        %v712 = vpack.c.b16 %v600, %v592
        %v713 = vpack.c.b16 %v609, %v601
        %v714 = vpack.c.b16 %v610, %v602
        %v715 = vpack.c.b16 %v611, %v603
        %v716 = vpack.c.b16 %v612, %v604
        %v717 = vpack.c.b16 %v613, %v605
        %v718 = vpack.c.b16 %v614, %v606
        %v719 = vpack.c.b16 %v615, %v607
        %v720 = vpack.c.b16 %v616, %v608
        %v721 = vpack.c.b16 %v625, %v617
        %v722 = vpack.c.b16 %v626, %v618
        %v723 = vpack.c.b16 %v627, %v619
        %v724 = vpack.c.b16 %v628, %v620
        %v725 = vpack.c.b16 %v629, %v621
        %v726 = vpack.c.b16 %v630, %v622
        %v727 = vpack.c.b16 %v631, %v623
        %v728 = vpack.c.b16 %v632, %v624
        %v729 = vpack.c.b16 %v641, %v633
        %v730 = vpack.c.b16 %v642, %v634
        %v731 = vpack.c.b16 %v643, %v635
        %v732 = vpack.c.b16 %v644, %v636
        %v733 = vpack.c.b16 %v645, %v637
        %v734 = vpack.c.b16 %v646, %v638
        %v735 = vpack.c.b16 %v647, %v639
        %v736 = vpack.c.b16 %v648, %v640
        %v737 = vpack.c.b16 %v657, %v649
        %v738 = vpack.c.b16 %v658, %v650
        %v739 = vpack.c.b16 %v659, %v651
        %v740 = vpack.c.b16 %v660, %v652
        %v741 = vpack.c.b16 %v661, %v653
        %v742 = vpack.c.b16 %v662, %v654
        %v743 = vpack.c.b16 %v663, %v655
        %v744 = vpack.c.b16 %v664, %v656
        %v745 = vpack.c.b16 %v673, %v665
        %v746 = vpack.c.b16 %v674, %v666
        %v747 = vpack.c.b16 %v675, %v667
        %v748 = vpack.c.b16 %v676, %v668
        %v749 = vpack.c.b16 %v677, %v669
        %v750 = vpack.c.b16 %v678, %v670
        %v751 = vpack.c.b16 %v679, %v671
        %v752 = vpack.c.b16 %v680, %v672
        %v753 = vpack.c.b16 %v689, %v681
        %v754 = vpack.c.b16 %v690, %v682
        %v755 = vpack.c.b16 %v691, %v683
        %v756 = vpack.c.b16 %v692, %v684
        %v757 = vpack.c.b16 %v693, %v685
        %v758 = vpack.c.b16 %v694, %v686
        %v759 = vpack.c.b16 %v695, %v687
        %v760 = vpack.c.b16 %v696, %v688
        %825 = vmatprep.subr.bf16.mxu0 %v754
        %826 = vmatpush1.bf16.msra.mxu0 %v753
        %827 = vmatprep.subr.bf16.mxu0 %v746
        %828 = vmatpush1.bf16.msra.mxu0 %v745
        %829 = vmatprep.subr.bf16.mxu0 %v738
        %830 = vmatpush1.bf16.msra.mxu0 %v737
        %831 = vmatprep.subr.bf16.mxu0 %v730
        %832 = vmatpush1.bf16.msra.mxu0 %v729
        %833 = vmatprep.subr.bf16.mxu0 %v722
        %834 = vmatpush1.bf16.msra.mxu0 %v721
        %835 = vmatprep.subr.bf16.mxu0 %v714
        %836 = vmatpush1.bf16.msra.mxu0 %v713
        %837 = vmatprep.subr.bf16.mxu0 %v706
        %838 = vmatpush1.bf16.msra.mxu0 %v705
        %839 = vmatprep.subr.bf16.mxu0 %v698
        %840 = vmatpush1.bf16.msra.mxu0 %v697
        %841 = vmatprep.subr.bf16.mxu0 0
        %842 = vmatpush2.bf16.msra.mxu0 0
        %843 = vmatprep.subr.bf16.mxu0 0
        %844 = vmatpush2.bf16.msra.mxu0 0
        %845 = vmatprep.subr.bf16.mxu0 0
        %846 = vmatpush2.bf16.msra.mxu0 0
        %847 = vmatprep.subr.bf16.mxu0 0
        %848 = vmatpush2.bf16.msra.mxu0 0
        %849 = vmatprep.subr.bf16.mxu0 0
        %850 = vmatpush2.bf16.msra.mxu0 0
        %851 = vmatprep.subr.bf16.mxu0 0
        %852 = vmatpush2.bf16.msra.mxu0 0
        %853 = vmatprep.subr.bf16.mxu0 0
        %854 = vmatpush2.bf16.msra.mxu0 0
        %855 = vmatprep.subr.bf16.mxu0 0
        %856 = vmatpush2.bf16.msra.mxu0 0
        %857 = vmatprep.mubr.bf16.mxu0 0
        %858 = vmatmul.mubr.bf16.gmra.mxu0 %v398
        %v859 = vpop.f32.mrf.mxu0
        %v860 = vadd.f32 %v468, %v859
        %v861 = vpop.f32.mrf.mxu0
        %v862 = vadd.f32 %v472, %v861
        %v863 = vpop.f32.mrf.mxu0
        %v864 = vpop.f32.mrf.mxu0
        %865 = vdwg.mxu0
        %866 = vmatprep.subr.bf16.mxu0 %v756
        %867 = vmatpush1.bf16.msra.mxu0 %v755
        %868 = vmatprep.subr.bf16.mxu0 %v748
        %869 = vmatpush1.bf16.msra.mxu0 %v747
        %870 = vmatprep.subr.bf16.mxu0 %v740
        %871 = vmatpush1.bf16.msra.mxu0 %v739
        %872 = vmatprep.subr.bf16.mxu0 %v732
        %873 = vmatpush1.bf16.msra.mxu0 %v731
        %874 = vmatprep.subr.bf16.mxu0 %v724
        %875 = vmatpush1.bf16.msra.mxu0 %v723
        %876 = vmatprep.subr.bf16.mxu0 %v716
        %877 = vmatpush1.bf16.msra.mxu0 %v715
        %878 = vmatprep.subr.bf16.mxu0 %v708
        %879 = vmatpush1.bf16.msra.mxu0 %v707
        %880 = vmatprep.subr.bf16.mxu0 %v700
        %881 = vmatpush1.bf16.msra.mxu0 %v699
        %882 = vmatprep.subr.bf16.mxu0 0
        %883 = vmatpush2.bf16.msra.mxu0 0
        %884 = vmatprep.subr.bf16.mxu0 0
        %885 = vmatpush2.bf16.msra.mxu0 0
        %886 = vmatprep.subr.bf16.mxu0 0
        %887 = vmatpush2.bf16.msra.mxu0 0
        %888 = vmatprep.subr.bf16.mxu0 0
        %889 = vmatpush2.bf16.msra.mxu0 0
        %890 = vmatprep.subr.bf16.mxu0 0
        %891 = vmatpush2.bf16.msra.mxu0 0
        %892 = vmatprep.subr.bf16.mxu0 0
        %893 = vmatpush2.bf16.msra.mxu0 0
        %894 = vmatprep.subr.bf16.mxu0 0
        %895 = vmatpush2.bf16.msra.mxu0 0
        %896 = vmatprep.subr.bf16.mxu0 0
        %897 = vmatpush2.bf16.msra.mxu0 0
        %898 = vmatprep.mubr.bf16.mxu0 0
        %899 = vmatmul.mubr.bf16.gmra.mxu0 %v398
        %v900 = vpop.f32.mrf.mxu0
        %v901 = vadd.f32 %v476, %v900
        %v902 = vpop.f32.mrf.mxu0
        %v903 = vadd.f32 %v480, %v902
        %v904 = vpop.f32.mrf.mxu0
        %v905 = vpop.f32.mrf.mxu0
        %906 = vdwg.mxu0
        %907 = vmatprep.subr.bf16.mxu0 %v758
        %908 = vmatpush1.bf16.msra.mxu0 %v757
        %909 = vmatprep.subr.bf16.mxu0 %v750
        %910 = vmatpush1.bf16.msra.mxu0 %v749
        %911 = vmatprep.subr.bf16.mxu0 %v742
        %912 = vmatpush1.bf16.msra.mxu0 %v741
        %913 = vmatprep.subr.bf16.mxu0 %v734
        %914 = vmatpush1.bf16.msra.mxu0 %v733
        %915 = vmatprep.subr.bf16.mxu0 %v726
        %916 = vmatpush1.bf16.msra.mxu0 %v725
        %917 = vmatprep.subr.bf16.mxu0 %v718
        %918 = vmatpush1.bf16.msra.mxu0 %v717
        %919 = vmatprep.subr.bf16.mxu0 %v710
        %920 = vmatpush1.bf16.msra.mxu0 %v709
        %921 = vmatprep.subr.bf16.mxu0 %v702
        %922 = vmatpush1.bf16.msra.mxu0 %v701
        %923 = vmatprep.subr.bf16.mxu0 0
        %924 = vmatpush2.bf16.msra.mxu0 0
        %925 = vmatprep.subr.bf16.mxu0 0
        %926 = vmatpush2.bf16.msra.mxu0 0
        %927 = vmatprep.subr.bf16.mxu0 0
        %928 = vmatpush2.bf16.msra.mxu0 0
        %929 = vmatprep.subr.bf16.mxu0 0
        %930 = vmatpush2.bf16.msra.mxu0 0
        %931 = vmatprep.subr.bf16.mxu0 0
        %932 = vmatpush2.bf16.msra.mxu0 0
        %933 = vmatprep.subr.bf16.mxu0 0
        %934 = vmatpush2.bf16.msra.mxu0 0
        %935 = vmatprep.subr.bf16.mxu0 0
        %936 = vmatpush2.bf16.msra.mxu0 0
        %937 = vmatprep.subr.bf16.mxu0 0
        %938 = vmatpush2.bf16.msra.mxu0 0
        %939 = vmatprep.mubr.bf16.mxu0 0
        %940 = vmatmul.mubr.bf16.gmra.mxu0 %v398
        %v941 = vpop.f32.mrf.mxu0
        %v942 = vadd.f32 %v484, %v941
        %v943 = vpop.f32.mrf.mxu0
        %v944 = vadd.f32 %v488, %v943
        %v945 = vpop.f32.mrf.mxu0
        %v946 = vpop.f32.mrf.mxu0
        %947 = vdwg.mxu0
        %948 = vmatprep.subr.bf16.mxu0 %v760
        %949 = vmatpush1.bf16.msra.mxu0 %v759
        %950 = vmatprep.subr.bf16.mxu0 %v752
        %951 = vmatpush1.bf16.msra.mxu0 %v751
        %952 = vmatprep.subr.bf16.mxu0 %v744
        %953 = vmatpush1.bf16.msra.mxu0 %v743
        %954 = vmatprep.subr.bf16.mxu0 %v736
        %955 = vmatpush1.bf16.msra.mxu0 %v735
        %956 = vmatprep.subr.bf16.mxu0 %v728
        %957 = vmatpush1.bf16.msra.mxu0 %v727
        %958 = vmatprep.subr.bf16.mxu0 %v720
        %959 = vmatpush1.bf16.msra.mxu0 %v719
        %960 = vmatprep.subr.bf16.mxu0 %v712
        %961 = vmatpush1.bf16.msra.mxu0 %v711
        %962 = vmatprep.subr.bf16.mxu0 %v704
        %963 = vmatpush1.bf16.msra.mxu0 %v703
        %964 = vmatprep.subr.bf16.mxu0 0
        %965 = vmatpush2.bf16.msra.mxu0 0
        %966 = vmatprep.subr.bf16.mxu0 0
        %967 = vmatpush2.bf16.msra.mxu0 0
        %968 = vmatprep.subr.bf16.mxu0 0
        %969 = vmatpush2.bf16.msra.mxu0 0
        %970 = vmatprep.subr.bf16.mxu0 0
        %971 = vmatpush2.bf16.msra.mxu0 0
        %972 = vmatprep.subr.bf16.mxu0 0
        %973 = vmatpush2.bf16.msra.mxu0 0
        %974 = vmatprep.subr.bf16.mxu0 0
        %975 = vmatpush2.bf16.msra.mxu0 0
        %976 = vmatprep.subr.bf16.mxu0 0
        %977 = vmatpush2.bf16.msra.mxu0 0
        %978 = vmatprep.subr.bf16.mxu0 0
        %979 = vmatpush2.bf16.msra.mxu0 0
        %980 = vmatprep.mubr.bf16.mxu0 0
        %981 = vmatmul.mubr.bf16.gmra.mxu0 %v398
        %v982 = vpop.f32.mrf.mxu0
        %v983 = vadd.f32 %v492, %v982
        %v984 = vpop.f32.mrf.mxu0
        %v985 = vadd.f32 %v496, %v984
        %v986 = vpop.f32.mrf.mxu0
        %v987 = vpop.f32.mrf.mxu0
        %988 = vdwg.mxu0
        %v989 = vmax.f32 %v860, 0.0
        %v990 = vmax.f32 %v862, 0.0
        %v991 = vmax.f32 %v901, 0.0
        %v992 = vmax.f32 %v903, 0.0
        %v993 = vmax.f32 %v942, 0.0
        %v994 = vmax.f32 %v944, 0.0
        %v995 = vmax.f32 %v983, 0.0
        %v996 = vmax.f32 %v985, 0.0
        %v997 = vpack.c.bf16 %v989, %v989
        %v998 = vpack.c.bf16 %v990, %v990
        %v999 = vpack.c.bf16 %v991, %v991
        %v1000 = vpack.c.bf16 %v992, %v992
        %v1001 = vpack.c.bf16 %v993, %v993
        %v1002 = vpack.c.bf16 %v994, %v994
        %v1003 = vpack.c.bf16 %v995, %v995
        %v1004 = vpack.c.bf16 %v996, %v996
        %v1005 = vld [vmem:[#allocation2] sm:$0xff]
        %v1006 = vld [vmem:[#allocation2 + $0x8] sm:$0xff]
        %v1007 = vld [vmem:[#allocation2 + $0x10] sm:$0xff]
        %v1008 = vld [vmem:[#allocation2 + $0x18] sm:$0xff]
        %v1009 = vld [vmem:[#allocation2 + $0x20] sm:$0xff]
        %v1010 = vld [vmem:[#allocation2 + $0x28] sm:$0xff]
        %v1011 = vld [vmem:[#allocation2 + $0x30] sm:$0xff]
        %v1012 = vld [vmem:[#allocation2 + $0x38] sm:$0xff]
        %v1013 = vld [vmem:[#allocation2 + $0x40] sm:$0xff]
        %v1014 = vld [vmem:[#allocation2 + $0x48] sm:$0xff]
        %v1015 = vld [vmem:[#allocation2 + $0x50] sm:$0xff]
        %v1016 = vld [vmem:[#allocation2 + $0x58] sm:$0xff]
        %v1017 = vld [vmem:[#allocation2 + $0x60] sm:$0xff]
        %v1018 = vld [vmem:[#allocation2 + $0x68] sm:$0xff]
        %v1019 = vld [vmem:[#allocation2 + $0x70] sm:$0xff]
        %v1020 = vld [vmem:[#allocation2 + $0x78] sm:$0xff]
        %v1021 = vld [vmem:[#allocation2 + $0x80] sm:$0xff]
        %v1022 = vld [vmem:[#allocation2 + $0x88] sm:$0xff]
        %v1023 = vld [vmem:[#allocation2 + $0x90] sm:$0xff]
        %v1024 = vld [vmem:[#allocation2 + $0x98] sm:$0xff]
        %v1025 = vld [vmem:[#allocation2 + $0xa0] sm:$0xff]
        %v1026 = vld [vmem:[#allocation2 + $0xa8] sm:$0xff]
        %v1027 = vld [vmem:[#allocation2 + $0xb0] sm:$0xff]
        %v1028 = vld [vmem:[#allocation2 + $0xb8] sm:$0xff]
        %v1029 = vld [vmem:[#allocation2 + $0xc0] sm:$0xff]
        %v1030 = vld [vmem:[#allocation2 + $0xc8] sm:$0xff]
        %v1031 = vld [vmem:[#allocation2 + $0xd0] sm:$0xff]
        %v1032 = vld [vmem:[#allocation2 + $0xd8] sm:$0xff]
        %v1033 = vld [vmem:[#allocation2 + $0xe0] sm:$0xff]
        %v1034 = vld [vmem:[#allocation2 + $0xe8] sm:$0xff]
        %v1035 = vld [vmem:[#allocation2 + $0xf0] sm:$0xff]
        %v1036 = vld [vmem:[#allocation2 + $0xf8] sm:$0xff]
        %v1037 = vld [vmem:[#allocation2 + $0x100] sm:$0xff]
        %v1038 = vld [vmem:[#allocation2 + $0x108] sm:$0xff]
        %v1039 = vld [vmem:[#allocation2 + $0x110] sm:$0xff]
        %v1040 = vld [vmem:[#allocation2 + $0x118] sm:$0xff]
        %v1041 = vld [vmem:[#allocation2 + $0x120] sm:$0xff]
        %v1042 = vld [vmem:[#allocation2 + $0x128] sm:$0xff]
        %v1043 = vld [vmem:[#allocation2 + $0x130] sm:$0xff]
        %v1044 = vld [vmem:[#allocation2 + $0x138] sm:$0xff]
        %v1045 = vld [vmem:[#allocation2 + $0x140] sm:$0xff]
        %v1046 = vld [vmem:[#allocation2 + $0x148] sm:$0xff]
        %v1047 = vld [vmem:[#allocation2 + $0x150] sm:$0xff]
        %v1048 = vld [vmem:[#allocation2 + $0x158] sm:$0xff]
        %v1049 = vld [vmem:[#allocation2 + $0x160] sm:$0xff]
        %v1050 = vld [vmem:[#allocation2 + $0x168] sm:$0xff]
        %v1051 = vld [vmem:[#allocation2 + $0x170] sm:$0xff]
        %v1052 = vld [vmem:[#allocation2 + $0x178] sm:$0xff]
        %v1053 = vld [vmem:[#allocation2 + $0x180] sm:$0xff]
        %v1054 = vld [vmem:[#allocation2 + $0x188] sm:$0xff]
        %v1055 = vld [vmem:[#allocation2 + $0x190] sm:$0xff]
        %v1056 = vld [vmem:[#allocation2 + $0x198] sm:$0xff]
        %v1057 = vld [vmem:[#allocation2 + $0x1a0] sm:$0xff]
        %v1058 = vld [vmem:[#allocation2 + $0x1a8] sm:$0xff]
        %v1059 = vld [vmem:[#allocation2 + $0x1b0] sm:$0xff]
        %v1060 = vld [vmem:[#allocation2 + $0x1b8] sm:$0xff]
        %v1061 = vld [vmem:[#allocation2 + $0x1c0] sm:$0xff]
        %v1062 = vld [vmem:[#allocation2 + $0x1c8] sm:$0xff]
        %v1063 = vld [vmem:[#allocation2 + $0x1d0] sm:$0xff]
        %v1064 = vld [vmem:[#allocation2 + $0x1d8] sm:$0xff]
        %v1065 = vld [vmem:[#allocation2 + $0x1e0] sm:$0xff]
        %v1066 = vld [vmem:[#allocation2 + $0x1e8] sm:$0xff]
        %v1067 = vld [vmem:[#allocation2 + $0x1f0] sm:$0xff]
        %v1068 = vld [vmem:[#allocation2 + $0x1f8] sm:$0xff]
        %v1069 = vld [vmem:[#allocation2 + $0x200] sm:$0xff]
        %v1070 = vld [vmem:[#allocation2 + $0x208] sm:$0xff]
        %v1071 = vld [vmem:[#allocation2 + $0x210] sm:$0xff]
        %v1072 = vld [vmem:[#allocation2 + $0x218] sm:$0xff]
        %v1073 = vld [vmem:[#allocation2 + $0x220] sm:$0xff]
        %v1074 = vld [vmem:[#allocation2 + $0x228] sm:$0xff]
        %v1075 = vld [vmem:[#allocation2 + $0x230] sm:$0xff]
        %v1076 = vld [vmem:[#allocation2 + $0x238] sm:$0xff]
        %v1077 = vld [vmem:[#allocation2 + $0x240] sm:$0xff]
        %v1078 = vld [vmem:[#allocation2 + $0x248] sm:$0xff]
        %v1079 = vld [vmem:[#allocation2 + $0x250] sm:$0xff]
        %v1080 = vld [vmem:[#allocation2 + $0x258] sm:$0xff]
        %v1081 = vld [vmem:[#allocation2 + $0x260] sm:$0xff]
        %v1082 = vld [vmem:[#allocation2 + $0x268] sm:$0xff]
        %v1083 = vld [vmem:[#allocation2 + $0x270] sm:$0xff]
        %v1084 = vld [vmem:[#allocation2 + $0x278] sm:$0xff]
        %v1085 = vld [vmem:[#allocation2 + $0x280] sm:$0xff]
        %v1086 = vld [vmem:[#allocation2 + $0x288] sm:$0xff]
        %v1087 = vld [vmem:[#allocation2 + $0x290] sm:$0xff]
        %v1088 = vld [vmem:[#allocation2 + $0x298] sm:$0xff]
        %v1089 = vld [vmem:[#allocation2 + $0x2a0] sm:$0xff]
        %v1090 = vld [vmem:[#allocation2 + $0x2a8] sm:$0xff]
        %v1091 = vld [vmem:[#allocation2 + $0x2b0] sm:$0xff]
        %v1092 = vld [vmem:[#allocation2 + $0x2b8] sm:$0xff]
        %v1093 = vld [vmem:[#allocation2 + $0x2c0] sm:$0xff]
        %v1094 = vld [vmem:[#allocation2 + $0x2c8] sm:$0xff]
        %v1095 = vld [vmem:[#allocation2 + $0x2d0] sm:$0xff]
        %v1096 = vld [vmem:[#allocation2 + $0x2d8] sm:$0xff]
        %v1097 = vld [vmem:[#allocation2 + $0x2e0] sm:$0xff]
        %v1098 = vld [vmem:[#allocation2 + $0x2e8] sm:$0xff]
        %v1099 = vld [vmem:[#allocation2 + $0x2f0] sm:$0xff]
        %v1100 = vld [vmem:[#allocation2 + $0x2f8] sm:$0xff]
        %v1101 = vld [vmem:[#allocation2 + $0x300] sm:$0xff]
        %v1102 = vld [vmem:[#allocation2 + $0x308] sm:$0xff]
        %v1103 = vld [vmem:[#allocation2 + $0x310] sm:$0xff]
        %v1104 = vld [vmem:[#allocation2 + $0x318] sm:$0xff]
        %v1105 = vld [vmem:[#allocation2 + $0x320] sm:$0xff]
        %v1106 = vld [vmem:[#allocation2 + $0x328] sm:$0xff]
        %v1107 = vld [vmem:[#allocation2 + $0x330] sm:$0xff]
        %v1108 = vld [vmem:[#allocation2 + $0x338] sm:$0xff]
        %v1109 = vld [vmem:[#allocation2 + $0x340] sm:$0xff]
        %v1110 = vld [vmem:[#allocation2 + $0x348] sm:$0xff]
        %v1111 = vld [vmem:[#allocation2 + $0x350] sm:$0xff]
        %v1112 = vld [vmem:[#allocation2 + $0x358] sm:$0xff]
        %v1113 = vld [vmem:[#allocation2 + $0x360] sm:$0xff]
        %v1114 = vld [vmem:[#allocation2 + $0x368] sm:$0xff]
        %v1115 = vld [vmem:[#allocation2 + $0x370] sm:$0xff]
        %v1116 = vld [vmem:[#allocation2 + $0x378] sm:$0xff]
        %v1117 = vld [vmem:[#allocation2 + $0x380] sm:$0xff]
        %v1118 = vld [vmem:[#allocation2 + $0x388] sm:$0xff]
        %v1119 = vld [vmem:[#allocation2 + $0x390] sm:$0xff]
        %v1120 = vld [vmem:[#allocation2 + $0x398] sm:$0xff]
        %v1121 = vld [vmem:[#allocation2 + $0x3a0] sm:$0xff]
        %v1122 = vld [vmem:[#allocation2 + $0x3a8] sm:$0xff]
        %v1123 = vld [vmem:[#allocation2 + $0x3b0] sm:$0xff]
        %v1124 = vld [vmem:[#allocation2 + $0x3b8] sm:$0xff]
        %v1125 = vld [vmem:[#allocation2 + $0x3c0] sm:$0xff]
        %v1126 = vld [vmem:[#allocation2 + $0x3c8] sm:$0xff]
        %v1127 = vld [vmem:[#allocation2 + $0x3d0] sm:$0xff]
        %v1128 = vld [vmem:[#allocation2 + $0x3d8] sm:$0xff]
        %v1129 = vld [vmem:[#allocation2 + $0x3e0] sm:$0xff]
        %v1130 = vld [vmem:[#allocation2 + $0x3e8] sm:$0xff]
        %v1131 = vld [vmem:[#allocation2 + $0x3f0] sm:$0xff]
        %v1132 = vld [vmem:[#allocation2 + $0x3f8] sm:$0xff]
        %v1133 = vld [vmem:[#allocation2 + $0x400] sm:$0xff]
        %v1134 = vld [vmem:[#allocation2 + $0x408] sm:$0xff]
        %v1135 = vld [vmem:[#allocation2 + $0x410] sm:$0xff]
        %v1136 = vld [vmem:[#allocation2 + $0x418] sm:$0xff]
        %v1137 = vld [vmem:[#allocation2 + $0x420] sm:$0xff]
        %v1138 = vld [vmem:[#allocation2 + $0x428] sm:$0xff]
        %v1139 = vld [vmem:[#allocation2 + $0x430] sm:$0xff]
        %v1140 = vld [vmem:[#allocation2 + $0x438] sm:$0xff]
        %v1141 = vld [vmem:[#allocation2 + $0x440] sm:$0xff]
        %v1142 = vld [vmem:[#allocation2 + $0x448] sm:$0xff]
        %v1143 = vld [vmem:[#allocation2 + $0x450] sm:$0xff]
        %v1144 = vld [vmem:[#allocation2 + $0x458] sm:$0xff]
        %v1145 = vld [vmem:[#allocation2 + $0x460] sm:$0xff]
        %v1146 = vld [vmem:[#allocation2 + $0x468] sm:$0xff]
        %v1147 = vld [vmem:[#allocation2 + $0x470] sm:$0xff]
        %v1148 = vld [vmem:[#allocation2 + $0x478] sm:$0xff]
        %v1149 = vld [vmem:[#allocation2 + $0x480] sm:$0xff]
        %v1150 = vld [vmem:[#allocation2 + $0x488] sm:$0xff]
        %v1151 = vld [vmem:[#allocation2 + $0x490] sm:$0xff]
        %v1152 = vld [vmem:[#allocation2 + $0x498] sm:$0xff]
        %v1153 = vld [vmem:[#allocation2 + $0x4a0] sm:$0xff]
        %v1154 = vld [vmem:[#allocation2 + $0x4a8] sm:$0xff]
        %v1155 = vld [vmem:[#allocation2 + $0x4b0] sm:$0xff]
        %v1156 = vld [vmem:[#allocation2 + $0x4b8] sm:$0xff]
        %v1157 = vld [vmem:[#allocation2 + $0x4c0] sm:$0xff]
        %v1158 = vld [vmem:[#allocation2 + $0x4c8] sm:$0xff]
        %v1159 = vld [vmem:[#allocation2 + $0x4d0] sm:$0xff]
        %v1160 = vld [vmem:[#allocation2 + $0x4d8] sm:$0xff]
        %v1161 = vld [vmem:[#allocation2 + $0x4e0] sm:$0xff]
        %v1162 = vld [vmem:[#allocation2 + $0x4e8] sm:$0xff]
        %v1163 = vld [vmem:[#allocation2 + $0x4f0] sm:$0xff]
        %v1164 = vld [vmem:[#allocation2 + $0x4f8] sm:$0xff]
        %v1165 = vld [vmem:[#allocation2 + $0x500] sm:$0xff]
        %v1166 = vld [vmem:[#allocation2 + $0x508] sm:$0xff]
        %v1167 = vld [vmem:[#allocation2 + $0x510] sm:$0xff]
        %v1168 = vld [vmem:[#allocation2 + $0x518] sm:$0xff]
        %v1169 = vld [vmem:[#allocation2 + $0x520] sm:$0xff]
        %v1170 = vld [vmem:[#allocation2 + $0x528] sm:$0xff]
        %v1171 = vld [vmem:[#allocation2 + $0x530] sm:$0xff]
        %v1172 = vld [vmem:[#allocation2 + $0x538] sm:$0xff]
        %v1173 = vld [vmem:[#allocation2 + $0x540] sm:$0xff]
        %v1174 = vld [vmem:[#allocation2 + $0x548] sm:$0xff]
        %v1175 = vld [vmem:[#allocation2 + $0x550] sm:$0xff]
        %v1176 = vld [vmem:[#allocation2 + $0x558] sm:$0xff]
        %v1177 = vld [vmem:[#allocation2 + $0x560] sm:$0xff]
        %v1178 = vld [vmem:[#allocation2 + $0x568] sm:$0xff]
        %v1179 = vld [vmem:[#allocation2 + $0x570] sm:$0xff]
        %v1180 = vld [vmem:[#allocation2 + $0x578] sm:$0xff]
        %v1181 = vld [vmem:[#allocation2 + $0x580] sm:$0xff]
        %v1182 = vld [vmem:[#allocation2 + $0x588] sm:$0xff]
        %v1183 = vld [vmem:[#allocation2 + $0x590] sm:$0xff]
        %v1184 = vld [vmem:[#allocation2 + $0x598] sm:$0xff]
        %v1185 = vld [vmem:[#allocation2 + $0x5a0] sm:$0xff]
        %v1186 = vld [vmem:[#allocation2 + $0x5a8] sm:$0xff]
        %v1187 = vld [vmem:[#allocation2 + $0x5b0] sm:$0xff]
        %v1188 = vld [vmem:[#allocation2 + $0x5b8] sm:$0xff]
        %v1189 = vld [vmem:[#allocation2 + $0x5c0] sm:$0xff]
        %v1190 = vld [vmem:[#allocation2 + $0x5c8] sm:$0xff]
        %v1191 = vld [vmem:[#allocation2 + $0x5d0] sm:$0xff]
        %v1192 = vld [vmem:[#allocation2 + $0x5d8] sm:$0xff]
        %v1193 = vld [vmem:[#allocation2 + $0x5e0] sm:$0xff]
        %v1194 = vld [vmem:[#allocation2 + $0x5e8] sm:$0xff]
        %v1195 = vld [vmem:[#allocation2 + $0x5f0] sm:$0xff]
        %v1196 = vld [vmem:[#allocation2 + $0x5f8] sm:$0xff]
        %v1197 = vld [vmem:[#allocation2 + $0x600] sm:$0xff]
        %v1198 = vld [vmem:[#allocation2 + $0x608] sm:$0xff]
        %v1199 = vld [vmem:[#allocation2 + $0x610] sm:$0xff]
        %v1200 = vld [vmem:[#allocation2 + $0x618] sm:$0xff]
        %v1201 = vld [vmem:[#allocation2 + $0x620] sm:$0xff]
        %v1202 = vld [vmem:[#allocation2 + $0x628] sm:$0xff]
        %v1203 = vld [vmem:[#allocation2 + $0x630] sm:$0xff]
        %v1204 = vld [vmem:[#allocation2 + $0x638] sm:$0xff]
        %v1205 = vld [vmem:[#allocation2 + $0x640] sm:$0xff]
        %v1206 = vld [vmem:[#allocation2 + $0x648] sm:$0xff]
        %v1207 = vld [vmem:[#allocation2 + $0x650] sm:$0xff]
        %v1208 = vld [vmem:[#allocation2 + $0x658] sm:$0xff]
        %v1209 = vld [vmem:[#allocation2 + $0x660] sm:$0xff]
        %v1210 = vld [vmem:[#allocation2 + $0x668] sm:$0xff]
        %v1211 = vld [vmem:[#allocation2 + $0x670] sm:$0xff]
        %v1212 = vld [vmem:[#allocation2 + $0x678] sm:$0xff]
        %v1213 = vld [vmem:[#allocation2 + $0x680] sm:$0xff]
        %v1214 = vld [vmem:[#allocation2 + $0x688] sm:$0xff]
        %v1215 = vld [vmem:[#allocation2 + $0x690] sm:$0xff]
        %v1216 = vld [vmem:[#allocation2 + $0x698] sm:$0xff]
        %v1217 = vld [vmem:[#allocation2 + $0x6a0] sm:$0xff]
        %v1218 = vld [vmem:[#allocation2 + $0x6a8] sm:$0xff]
        %v1219 = vld [vmem:[#allocation2 + $0x6b0] sm:$0xff]
        %v1220 = vld [vmem:[#allocation2 + $0x6b8] sm:$0xff]
        %v1221 = vld [vmem:[#allocation2 + $0x6c0] sm:$0xff]
        %v1222 = vld [vmem:[#allocation2 + $0x6c8] sm:$0xff]
        %v1223 = vld [vmem:[#allocation2 + $0x6d0] sm:$0xff]
        %v1224 = vld [vmem:[#allocation2 + $0x6d8] sm:$0xff]
        %v1225 = vld [vmem:[#allocation2 + $0x6e0] sm:$0xff]
        %v1226 = vld [vmem:[#allocation2 + $0x6e8] sm:$0xff]
        %v1227 = vld [vmem:[#allocation2 + $0x6f0] sm:$0xff]
        %v1228 = vld [vmem:[#allocation2 + $0x6f8] sm:$0xff]
        %v1229 = vld [vmem:[#allocation2 + $0x700] sm:$0xff]
        %v1230 = vld [vmem:[#allocation2 + $0x708] sm:$0xff]
        %v1231 = vld [vmem:[#allocation2 + $0x710] sm:$0xff]
        %v1232 = vld [vmem:[#allocation2 + $0x718] sm:$0xff]
        %v1233 = vld [vmem:[#allocation2 + $0x720] sm:$0xff]
        %v1234 = vld [vmem:[#allocation2 + $0x728] sm:$0xff]
        %v1235 = vld [vmem:[#allocation2 + $0x730] sm:$0xff]
        %v1236 = vld [vmem:[#allocation2 + $0x738] sm:$0xff]
        %v1237 = vld [vmem:[#allocation2 + $0x740] sm:$0xff]
        %v1238 = vld [vmem:[#allocation2 + $0x748] sm:$0xff]
        %v1239 = vld [vmem:[#allocation2 + $0x750] sm:$0xff]
        %v1240 = vld [vmem:[#allocation2 + $0x758] sm:$0xff]
        %v1241 = vld [vmem:[#allocation2 + $0x760] sm:$0xff]
        %v1242 = vld [vmem:[#allocation2 + $0x768] sm:$0xff]
        %v1243 = vld [vmem:[#allocation2 + $0x770] sm:$0xff]
        %v1244 = vld [vmem:[#allocation2 + $0x778] sm:$0xff]
        %v1245 = vld [vmem:[#allocation2 + $0x780] sm:$0xff]
        %v1246 = vld [vmem:[#allocation2 + $0x788] sm:$0xff]
        %v1247 = vld [vmem:[#allocation2 + $0x790] sm:$0xff]
        %v1248 = vld [vmem:[#allocation2 + $0x798] sm:$0xff]
        %v1249 = vld [vmem:[#allocation2 + $0x7a0] sm:$0xff]
        %v1250 = vld [vmem:[#allocation2 + $0x7a8] sm:$0xff]
        %v1251 = vld [vmem:[#allocation2 + $0x7b0] sm:$0xff]
        %v1252 = vld [vmem:[#allocation2 + $0x7b8] sm:$0xff]
        %v1253 = vld [vmem:[#allocation2 + $0x7c0] sm:$0xff]
        %v1254 = vld [vmem:[#allocation2 + $0x7c8] sm:$0xff]
        %v1255 = vld [vmem:[#allocation2 + $0x7d0] sm:$0xff]
        %v1256 = vld [vmem:[#allocation2 + $0x7d8] sm:$0xff]
        %v1257 = vld [vmem:[#allocation2 + $0x7e0] sm:$0xff]
        %v1258 = vld [vmem:[#allocation2 + $0x7e8] sm:$0xff]
        %v1259 = vld [vmem:[#allocation2 + $0x7f0] sm:$0xff]
        %v1260 = vld [vmem:[#allocation2 + $0x7f8] sm:$0xff]
        %v1261 = vld [vmem:[%s4] sm:$0xf]
        %v1263 = vlaneseq
        %v1264 = vshrl.u32 %v1263, 7
        %v1265 = vsub.s32 0, %v1264
        %v1266 = vrot.slane %v1261, %v1265
        %v1267 = vlaneseq
        %v1268 = vshrl.u32 %v1267, 7
        %v1269 = vsub.s32 1, %v1268
        %v1270 = vrot.slane %v1261, %v1269
        %v1271 = vlaneseq
        %v1272 = vshrl.u32 %v1271, 7
        %v1273 = vsub.s32 2, %v1272
        %v1274 = vrot.slane %v1261, %v1273
        %v1275 = vlaneseq
        %v1276 = vshrl.u32 %v1275, 7
        %v1277 = vsub.s32 3, %v1276
        %v1278 = vrot.slane %v1261, %v1277
        %v1539 = vunpack.c.l.b16 %v1005
        %v1540 = vunpack.c.h.b16 %v1005
        %v1541 = vunpack.c.l.b16 %v1006
        %v1542 = vunpack.c.h.b16 %v1006
        %v1543 = vunpack.c.l.b16 %v1007
        %v1544 = vunpack.c.h.b16 %v1007
        %v1545 = vunpack.c.l.b16 %v1008
        %v1546 = vunpack.c.h.b16 %v1008
        %v1547 = vunpack.c.l.b16 %v1009
        %v1548 = vunpack.c.h.b16 %v1009
        %v1549 = vunpack.c.l.b16 %v1010
        %v1550 = vunpack.c.h.b16 %v1010
        %v1551 = vunpack.c.l.b16 %v1011
        %v1552 = vunpack.c.h.b16 %v1011
        %v1553 = vunpack.c.l.b16 %v1012
        %v1554 = vunpack.c.h.b16 %v1012
        %v1555 = vunpack.c.l.b16 %v1013
        %v1556 = vunpack.c.h.b16 %v1013
        %v1557 = vunpack.c.l.b16 %v1014
        %v1558 = vunpack.c.h.b16 %v1014
        %v1559 = vunpack.c.l.b16 %v1015
        %v1560 = vunpack.c.h.b16 %v1015
        %v1561 = vunpack.c.l.b16 %v1016
        %v1562 = vunpack.c.h.b16 %v1016
        %v1563 = vunpack.c.l.b16 %v1017
        %v1564 = vunpack.c.h.b16 %v1017
        %v1565 = vunpack.c.l.b16 %v1018
        %v1566 = vunpack.c.h.b16 %v1018
        %v1567 = vunpack.c.l.b16 %v1019
        %v1568 = vunpack.c.h.b16 %v1019
        %v1569 = vunpack.c.l.b16 %v1020
        %v1570 = vunpack.c.h.b16 %v1020
        %v1571 = vunpack.c.l.b16 %v1021
        %v1572 = vunpack.c.h.b16 %v1021
        %v1573 = vunpack.c.l.b16 %v1022
        %v1574 = vunpack.c.h.b16 %v1022
        %v1575 = vunpack.c.l.b16 %v1023
        %v1576 = vunpack.c.h.b16 %v1023
        %v1577 = vunpack.c.l.b16 %v1024
        %v1578 = vunpack.c.h.b16 %v1024
        %v1579 = vunpack.c.l.b16 %v1025
        %v1580 = vunpack.c.h.b16 %v1025
        %v1581 = vunpack.c.l.b16 %v1026
        %v1582 = vunpack.c.h.b16 %v1026
        %v1583 = vunpack.c.l.b16 %v1027
        %v1584 = vunpack.c.h.b16 %v1027
        %v1585 = vunpack.c.l.b16 %v1028
        %v1586 = vunpack.c.h.b16 %v1028
        %v1587 = vunpack.c.l.b16 %v1029
        %v1588 = vunpack.c.h.b16 %v1029
        %v1589 = vunpack.c.l.b16 %v1030
        %v1590 = vunpack.c.h.b16 %v1030
        %v1591 = vunpack.c.l.b16 %v1031
        %v1592 = vunpack.c.h.b16 %v1031
        %v1593 = vunpack.c.l.b16 %v1032
        %v1594 = vunpack.c.h.b16 %v1032
        %v1595 = vunpack.c.l.b16 %v1033
        %v1596 = vunpack.c.h.b16 %v1033
        %v1597 = vunpack.c.l.b16 %v1034
        %v1598 = vunpack.c.h.b16 %v1034
        %v1599 = vunpack.c.l.b16 %v1035
        %v1600 = vunpack.c.h.b16 %v1035
        %v1601 = vunpack.c.l.b16 %v1036
        %v1602 = vunpack.c.h.b16 %v1036
        %v1603 = vunpack.c.l.b16 %v1037
        %v1604 = vunpack.c.h.b16 %v1037
        %v1605 = vunpack.c.l.b16 %v1038
        %v1606 = vunpack.c.h.b16 %v1038
        %v1607 = vunpack.c.l.b16 %v1039
        %v1608 = vunpack.c.h.b16 %v1039
        %v1609 = vunpack.c.l.b16 %v1040
        %v1610 = vunpack.c.h.b16 %v1040
        %v1611 = vunpack.c.l.b16 %v1041
        %v1612 = vunpack.c.h.b16 %v1041
        %v1613 = vunpack.c.l.b16 %v1042
        %v1614 = vunpack.c.h.b16 %v1042
        %v1615 = vunpack.c.l.b16 %v1043
        %v1616 = vunpack.c.h.b16 %v1043
        %v1617 = vunpack.c.l.b16 %v1044
        %v1618 = vunpack.c.h.b16 %v1044
        %v1619 = vunpack.c.l.b16 %v1045
        %v1620 = vunpack.c.h.b16 %v1045
        %v1621 = vunpack.c.l.b16 %v1046
        %v1622 = vunpack.c.h.b16 %v1046
        %v1623 = vunpack.c.l.b16 %v1047
        %v1624 = vunpack.c.h.b16 %v1047
        %v1625 = vunpack.c.l.b16 %v1048
        %v1626 = vunpack.c.h.b16 %v1048
        %v1627 = vunpack.c.l.b16 %v1049
        %v1628 = vunpack.c.h.b16 %v1049
        %v1629 = vunpack.c.l.b16 %v1050
        %v1630 = vunpack.c.h.b16 %v1050
        %v1631 = vunpack.c.l.b16 %v1051
        %v1632 = vunpack.c.h.b16 %v1051
        %v1633 = vunpack.c.l.b16 %v1052
        %v1634 = vunpack.c.h.b16 %v1052
        %v1635 = vunpack.c.l.b16 %v1053
        %v1636 = vunpack.c.h.b16 %v1053
        %v1637 = vunpack.c.l.b16 %v1054
        %v1638 = vunpack.c.h.b16 %v1054
        %v1639 = vunpack.c.l.b16 %v1055
        %v1640 = vunpack.c.h.b16 %v1055
        %v1641 = vunpack.c.l.b16 %v1056
        %v1642 = vunpack.c.h.b16 %v1056
        %v1643 = vunpack.c.l.b16 %v1057
        %v1644 = vunpack.c.h.b16 %v1057
        %v1645 = vunpack.c.l.b16 %v1058
        %v1646 = vunpack.c.h.b16 %v1058
        %v1647 = vunpack.c.l.b16 %v1059
        %v1648 = vunpack.c.h.b16 %v1059
        %v1649 = vunpack.c.l.b16 %v1060
        %v1650 = vunpack.c.h.b16 %v1060
        %v1651 = vunpack.c.l.b16 %v1061
        %v1652 = vunpack.c.h.b16 %v1061
        %v1653 = vunpack.c.l.b16 %v1062
        %v1654 = vunpack.c.h.b16 %v1062
        %v1655 = vunpack.c.l.b16 %v1063
        %v1656 = vunpack.c.h.b16 %v1063
        %v1657 = vunpack.c.l.b16 %v1064
        %v1658 = vunpack.c.h.b16 %v1064
        %v1659 = vunpack.c.l.b16 %v1065
        %v1660 = vunpack.c.h.b16 %v1065
        %v1661 = vunpack.c.l.b16 %v1066
        %v1662 = vunpack.c.h.b16 %v1066
        %v1663 = vunpack.c.l.b16 %v1067
        %v1664 = vunpack.c.h.b16 %v1067
        %v1665 = vunpack.c.l.b16 %v1068
        %v1666 = vunpack.c.h.b16 %v1068
        %v1667 = vunpack.c.l.b16 %v1069
        %v1668 = vunpack.c.h.b16 %v1069
        %v1669 = vunpack.c.l.b16 %v1070
        %v1670 = vunpack.c.h.b16 %v1070
        %v1671 = vunpack.c.l.b16 %v1071
        %v1672 = vunpack.c.h.b16 %v1071
        %v1673 = vunpack.c.l.b16 %v1072
        %v1674 = vunpack.c.h.b16 %v1072
        %v1675 = vunpack.c.l.b16 %v1073
        %v1676 = vunpack.c.h.b16 %v1073
        %v1677 = vunpack.c.l.b16 %v1074
        %v1678 = vunpack.c.h.b16 %v1074
        %v1679 = vunpack.c.l.b16 %v1075
        %v1680 = vunpack.c.h.b16 %v1075
        %v1681 = vunpack.c.l.b16 %v1076
        %v1682 = vunpack.c.h.b16 %v1076
        %v1683 = vunpack.c.l.b16 %v1077
        %v1684 = vunpack.c.h.b16 %v1077
        %v1685 = vunpack.c.l.b16 %v1078
        %v1686 = vunpack.c.h.b16 %v1078
        %v1687 = vunpack.c.l.b16 %v1079
        %v1688 = vunpack.c.h.b16 %v1079
        %v1689 = vunpack.c.l.b16 %v1080
        %v1690 = vunpack.c.h.b16 %v1080
        %v1691 = vunpack.c.l.b16 %v1081
        %v1692 = vunpack.c.h.b16 %v1081
        %v1693 = vunpack.c.l.b16 %v1082
        %v1694 = vunpack.c.h.b16 %v1082
        %v1695 = vunpack.c.l.b16 %v1083
        %v1696 = vunpack.c.h.b16 %v1083
        %v1697 = vunpack.c.l.b16 %v1084
        %v1698 = vunpack.c.h.b16 %v1084
        %v1699 = vunpack.c.l.b16 %v1085
        %v1700 = vunpack.c.h.b16 %v1085
        %v1701 = vunpack.c.l.b16 %v1086
        %v1702 = vunpack.c.h.b16 %v1086
        %v1703 = vunpack.c.l.b16 %v1087
        %v1704 = vunpack.c.h.b16 %v1087
        %v1705 = vunpack.c.l.b16 %v1088
        %v1706 = vunpack.c.h.b16 %v1088
        %v1707 = vunpack.c.l.b16 %v1089
        %v1708 = vunpack.c.h.b16 %v1089
        %v1709 = vunpack.c.l.b16 %v1090
        %v1710 = vunpack.c.h.b16 %v1090
        %v1711 = vunpack.c.l.b16 %v1091
        %v1712 = vunpack.c.h.b16 %v1091
        %v1713 = vunpack.c.l.b16 %v1092
        %v1714 = vunpack.c.h.b16 %v1092
        %v1715 = vunpack.c.l.b16 %v1093
        %v1716 = vunpack.c.h.b16 %v1093
        %v1717 = vunpack.c.l.b16 %v1094
        %v1718 = vunpack.c.h.b16 %v1094
        %v1719 = vunpack.c.l.b16 %v1095
        %v1720 = vunpack.c.h.b16 %v1095
        %v1721 = vunpack.c.l.b16 %v1096
        %v1722 = vunpack.c.h.b16 %v1096
        %v1723 = vunpack.c.l.b16 %v1097
        %v1724 = vunpack.c.h.b16 %v1097
        %v1725 = vunpack.c.l.b16 %v1098
        %v1726 = vunpack.c.h.b16 %v1098
        %v1727 = vunpack.c.l.b16 %v1099
        %v1728 = vunpack.c.h.b16 %v1099
        %v1729 = vunpack.c.l.b16 %v1100
        %v1730 = vunpack.c.h.b16 %v1100
        %v1731 = vunpack.c.l.b16 %v1101
        %v1732 = vunpack.c.h.b16 %v1101
        %v1733 = vunpack.c.l.b16 %v1102
        %v1734 = vunpack.c.h.b16 %v1102
        %v1735 = vunpack.c.l.b16 %v1103
        %v1736 = vunpack.c.h.b16 %v1103
        %v1737 = vunpack.c.l.b16 %v1104
        %v1738 = vunpack.c.h.b16 %v1104
        %v1739 = vunpack.c.l.b16 %v1105
        %v1740 = vunpack.c.h.b16 %v1105
        %v1741 = vunpack.c.l.b16 %v1106
        %v1742 = vunpack.c.h.b16 %v1106
        %v1743 = vunpack.c.l.b16 %v1107
        %v1744 = vunpack.c.h.b16 %v1107
        %v1745 = vunpack.c.l.b16 %v1108
        %v1746 = vunpack.c.h.b16 %v1108
        %v1747 = vunpack.c.l.b16 %v1109
        %v1748 = vunpack.c.h.b16 %v1109
        %v1749 = vunpack.c.l.b16 %v1110
        %v1750 = vunpack.c.h.b16 %v1110
        %v1751 = vunpack.c.l.b16 %v1111
        %v1752 = vunpack.c.h.b16 %v1111
        %v1753 = vunpack.c.l.b16 %v1112
        %v1754 = vunpack.c.h.b16 %v1112
        %v1755 = vunpack.c.l.b16 %v1113
        %v1756 = vunpack.c.h.b16 %v1113
        %v1757 = vunpack.c.l.b16 %v1114
        %v1758 = vunpack.c.h.b16 %v1114
        %v1759 = vunpack.c.l.b16 %v1115
        %v1760 = vunpack.c.h.b16 %v1115
        %v1761 = vunpack.c.l.b16 %v1116
        %v1762 = vunpack.c.h.b16 %v1116
        %v1763 = vunpack.c.l.b16 %v1117
        %v1764 = vunpack.c.h.b16 %v1117
        %v1765 = vunpack.c.l.b16 %v1118
        %v1766 = vunpack.c.h.b16 %v1118
        %v1767 = vunpack.c.l.b16 %v1119
        %v1768 = vunpack.c.h.b16 %v1119
        %v1769 = vunpack.c.l.b16 %v1120
        %v1770 = vunpack.c.h.b16 %v1120
        %v1771 = vunpack.c.l.b16 %v1121
        %v1772 = vunpack.c.h.b16 %v1121
        %v1773 = vunpack.c.l.b16 %v1122
        %v1774 = vunpack.c.h.b16 %v1122
        %v1775 = vunpack.c.l.b16 %v1123
        %v1776 = vunpack.c.h.b16 %v1123
        %v1777 = vunpack.c.l.b16 %v1124
        %v1778 = vunpack.c.h.b16 %v1124
        %v1779 = vunpack.c.l.b16 %v1125
        %v1780 = vunpack.c.h.b16 %v1125
        %v1781 = vunpack.c.l.b16 %v1126
        %v1782 = vunpack.c.h.b16 %v1126
        %v1783 = vunpack.c.l.b16 %v1127
        %v1784 = vunpack.c.h.b16 %v1127
        %v1785 = vunpack.c.l.b16 %v1128
        %v1786 = vunpack.c.h.b16 %v1128
        %v1787 = vunpack.c.l.b16 %v1129
        %v1788 = vunpack.c.h.b16 %v1129
        %v1789 = vunpack.c.l.b16 %v1130
        %v1790 = vunpack.c.h.b16 %v1130
        %v1791 = vunpack.c.l.b16 %v1131
        %v1792 = vunpack.c.h.b16 %v1131
        %v1793 = vunpack.c.l.b16 %v1132
        %v1794 = vunpack.c.h.b16 %v1132
        %v1795 = vunpack.c.l.b16 %v1133
        %v1796 = vunpack.c.h.b16 %v1133
        %v1797 = vunpack.c.l.b16 %v1134
        %v1798 = vunpack.c.h.b16 %v1134
        %v1799 = vunpack.c.l.b16 %v1135
        %v1800 = vunpack.c.h.b16 %v1135
        %v1801 = vunpack.c.l.b16 %v1136
        %v1802 = vunpack.c.h.b16 %v1136
        %v1803 = vunpack.c.l.b16 %v1137
        %v1804 = vunpack.c.h.b16 %v1137
        %v1805 = vunpack.c.l.b16 %v1138
        %v1806 = vunpack.c.h.b16 %v1138
        %v1807 = vunpack.c.l.b16 %v1139
        %v1808 = vunpack.c.h.b16 %v1139
        %v1809 = vunpack.c.l.b16 %v1140
        %v1810 = vunpack.c.h.b16 %v1140
        %v1811 = vunpack.c.l.b16 %v1141
        %v1812 = vunpack.c.h.b16 %v1141
        %v1813 = vunpack.c.l.b16 %v1142
        %v1814 = vunpack.c.h.b16 %v1142
        %v1815 = vunpack.c.l.b16 %v1143
        %v1816 = vunpack.c.h.b16 %v1143
        %v1817 = vunpack.c.l.b16 %v1144
        %v1818 = vunpack.c.h.b16 %v1144
        %v1819 = vunpack.c.l.b16 %v1145
        %v1820 = vunpack.c.h.b16 %v1145
        %v1821 = vunpack.c.l.b16 %v1146
        %v1822 = vunpack.c.h.b16 %v1146
        %v1823 = vunpack.c.l.b16 %v1147
        %v1824 = vunpack.c.h.b16 %v1147
        %v1825 = vunpack.c.l.b16 %v1148
        %v1826 = vunpack.c.h.b16 %v1148
        %v1827 = vunpack.c.l.b16 %v1149
        %v1828 = vunpack.c.h.b16 %v1149
        %v1829 = vunpack.c.l.b16 %v1150
        %v1830 = vunpack.c.h.b16 %v1150
        %v1831 = vunpack.c.l.b16 %v1151
        %v1832 = vunpack.c.h.b16 %v1151
        %v1833 = vunpack.c.l.b16 %v1152
        %v1834 = vunpack.c.h.b16 %v1152
        %v1835 = vunpack.c.l.b16 %v1153
        %v1836 = vunpack.c.h.b16 %v1153
        %v1837 = vunpack.c.l.b16 %v1154
        %v1838 = vunpack.c.h.b16 %v1154
        %v1839 = vunpack.c.l.b16 %v1155
        %v1840 = vunpack.c.h.b16 %v1155
        %v1841 = vunpack.c.l.b16 %v1156
        %v1842 = vunpack.c.h.b16 %v1156
        %v1843 = vunpack.c.l.b16 %v1157
        %v1844 = vunpack.c.h.b16 %v1157
        %v1845 = vunpack.c.l.b16 %v1158
        %v1846 = vunpack.c.h.b16 %v1158
        %v1847 = vunpack.c.l.b16 %v1159
        %v1848 = vunpack.c.h.b16 %v1159
        %v1849 = vunpack.c.l.b16 %v1160
        %v1850 = vunpack.c.h.b16 %v1160
        %v1851 = vunpack.c.l.b16 %v1161
        %v1852 = vunpack.c.h.b16 %v1161
        %v1853 = vunpack.c.l.b16 %v1162
        %v1854 = vunpack.c.h.b16 %v1162
        %v1855 = vunpack.c.l.b16 %v1163
        %v1856 = vunpack.c.h.b16 %v1163
        %v1857 = vunpack.c.l.b16 %v1164
        %v1858 = vunpack.c.h.b16 %v1164
        %v1859 = vunpack.c.l.b16 %v1165
        %v1860 = vunpack.c.h.b16 %v1165
        %v1861 = vunpack.c.l.b16 %v1166
        %v1862 = vunpack.c.h.b16 %v1166
        %v1863 = vunpack.c.l.b16 %v1167
        %v1864 = vunpack.c.h.b16 %v1167
        %v1865 = vunpack.c.l.b16 %v1168
        %v1866 = vunpack.c.h.b16 %v1168
        %v1867 = vunpack.c.l.b16 %v1169
        %v1868 = vunpack.c.h.b16 %v1169
        %v1869 = vunpack.c.l.b16 %v1170
        %v1870 = vunpack.c.h.b16 %v1170
        %v1871 = vunpack.c.l.b16 %v1171
        %v1872 = vunpack.c.h.b16 %v1171
        %v1873 = vunpack.c.l.b16 %v1172
        %v1874 = vunpack.c.h.b16 %v1172
        %v1875 = vunpack.c.l.b16 %v1173
        %v1876 = vunpack.c.h.b16 %v1173
        %v1877 = vunpack.c.l.b16 %v1174
        %v1878 = vunpack.c.h.b16 %v1174
        %v1879 = vunpack.c.l.b16 %v1175
        %v1880 = vunpack.c.h.b16 %v1175
        %v1881 = vunpack.c.l.b16 %v1176
        %v1882 = vunpack.c.h.b16 %v1176
        %v1883 = vunpack.c.l.b16 %v1177
        %v1884 = vunpack.c.h.b16 %v1177
        %v1885 = vunpack.c.l.b16 %v1178
        %v1886 = vunpack.c.h.b16 %v1178
        %v1887 = vunpack.c.l.b16 %v1179
        %v1888 = vunpack.c.h.b16 %v1179
        %v1889 = vunpack.c.l.b16 %v1180
        %v1890 = vunpack.c.h.b16 %v1180
        %v1891 = vunpack.c.l.b16 %v1181
        %v1892 = vunpack.c.h.b16 %v1181
        %v1893 = vunpack.c.l.b16 %v1182
        %v1894 = vunpack.c.h.b16 %v1182
        %v1895 = vunpack.c.l.b16 %v1183
        %v1896 = vunpack.c.h.b16 %v1183
        %v1897 = vunpack.c.l.b16 %v1184
        %v1898 = vunpack.c.h.b16 %v1184
        %v1899 = vunpack.c.l.b16 %v1185
        %v1900 = vunpack.c.h.b16 %v1185
        %v1901 = vunpack.c.l.b16 %v1186
        %v1902 = vunpack.c.h.b16 %v1186
        %v1903 = vunpack.c.l.b16 %v1187
        %v1904 = vunpack.c.h.b16 %v1187
        %v1905 = vunpack.c.l.b16 %v1188
        %v1906 = vunpack.c.h.b16 %v1188
        %v1907 = vunpack.c.l.b16 %v1189
        %v1908 = vunpack.c.h.b16 %v1189
        %v1909 = vunpack.c.l.b16 %v1190
        %v1910 = vunpack.c.h.b16 %v1190
        %v1911 = vunpack.c.l.b16 %v1191
        %v1912 = vunpack.c.h.b16 %v1191
        %v1913 = vunpack.c.l.b16 %v1192
        %v1914 = vunpack.c.h.b16 %v1192
        %v1915 = vunpack.c.l.b16 %v1193
        %v1916 = vunpack.c.h.b16 %v1193
        %v1917 = vunpack.c.l.b16 %v1194
        %v1918 = vunpack.c.h.b16 %v1194
        %v1919 = vunpack.c.l.b16 %v1195
        %v1920 = vunpack.c.h.b16 %v1195
        %v1921 = vunpack.c.l.b16 %v1196
        %v1922 = vunpack.c.h.b16 %v1196
        %v1923 = vunpack.c.l.b16 %v1197
        %v1924 = vunpack.c.h.b16 %v1197
        %v1925 = vunpack.c.l.b16 %v1198
        %v1926 = vunpack.c.h.b16 %v1198
        %v1927 = vunpack.c.l.b16 %v1199
        %v1928 = vunpack.c.h.b16 %v1199
        %v1929 = vunpack.c.l.b16 %v1200
        %v1930 = vunpack.c.h.b16 %v1200
        %v1931 = vunpack.c.l.b16 %v1201
        %v1932 = vunpack.c.h.b16 %v1201
        %v1933 = vunpack.c.l.b16 %v1202
        %v1934 = vunpack.c.h.b16 %v1202
        %v1935 = vunpack.c.l.b16 %v1203
        %v1936 = vunpack.c.h.b16 %v1203
        %v1937 = vunpack.c.l.b16 %v1204
        %v1938 = vunpack.c.h.b16 %v1204
        %v1939 = vunpack.c.l.b16 %v1205
        %v1940 = vunpack.c.h.b16 %v1205
        %v1941 = vunpack.c.l.b16 %v1206
        %v1942 = vunpack.c.h.b16 %v1206
        %v1943 = vunpack.c.l.b16 %v1207
        %v1944 = vunpack.c.h.b16 %v1207
        %v1945 = vunpack.c.l.b16 %v1208
        %v1946 = vunpack.c.h.b16 %v1208
        %v1947 = vunpack.c.l.b16 %v1209
        %v1948 = vunpack.c.h.b16 %v1209
        %v1949 = vunpack.c.l.b16 %v1210
        %v1950 = vunpack.c.h.b16 %v1210
        %v1951 = vunpack.c.l.b16 %v1211
        %v1952 = vunpack.c.h.b16 %v1211
        %v1953 = vunpack.c.l.b16 %v1212
        %v1954 = vunpack.c.h.b16 %v1212
        %v1955 = vunpack.c.l.b16 %v1213
        %v1956 = vunpack.c.h.b16 %v1213
        %v1957 = vunpack.c.l.b16 %v1214
        %v1958 = vunpack.c.h.b16 %v1214
        %v1959 = vunpack.c.l.b16 %v1215
        %v1960 = vunpack.c.h.b16 %v1215
        %v1961 = vunpack.c.l.b16 %v1216
        %v1962 = vunpack.c.h.b16 %v1216
        %v1963 = vunpack.c.l.b16 %v1217
        %v1964 = vunpack.c.h.b16 %v1217
        %v1965 = vunpack.c.l.b16 %v1218
        %v1966 = vunpack.c.h.b16 %v1218
        %v1967 = vunpack.c.l.b16 %v1219
        %v1968 = vunpack.c.h.b16 %v1219
        %v1969 = vunpack.c.l.b16 %v1220
        %v1970 = vunpack.c.h.b16 %v1220
        %v1971 = vunpack.c.l.b16 %v1221
        %v1972 = vunpack.c.h.b16 %v1221
        %v1973 = vunpack.c.l.b16 %v1222
        %v1974 = vunpack.c.h.b16 %v1222
        %v1975 = vunpack.c.l.b16 %v1223
        %v1976 = vunpack.c.h.b16 %v1223
        %v1977 = vunpack.c.l.b16 %v1224
        %v1978 = vunpack.c.h.b16 %v1224
        %v1979 = vunpack.c.l.b16 %v1225
        %v1980 = vunpack.c.h.b16 %v1225
        %v1981 = vunpack.c.l.b16 %v1226
        %v1982 = vunpack.c.h.b16 %v1226
        %v1983 = vunpack.c.l.b16 %v1227
        %v1984 = vunpack.c.h.b16 %v1227
        %v1985 = vunpack.c.l.b16 %v1228
        %v1986 = vunpack.c.h.b16 %v1228
        %v1987 = vunpack.c.l.b16 %v1229
        %v1988 = vunpack.c.h.b16 %v1229
        %v1989 = vunpack.c.l.b16 %v1230
        %v1990 = vunpack.c.h.b16 %v1230
        %v1991 = vunpack.c.l.b16 %v1231
        %v1992 = vunpack.c.h.b16 %v1231
        %v1993 = vunpack.c.l.b16 %v1232
        %v1994 = vunpack.c.h.b16 %v1232
        %v1995 = vunpack.c.l.b16 %v1233
        %v1996 = vunpack.c.h.b16 %v1233
        %v1997 = vunpack.c.l.b16 %v1234
        %v1998 = vunpack.c.h.b16 %v1234
        %v1999 = vunpack.c.l.b16 %v1235
        %v2000 = vunpack.c.h.b16 %v1235
        %v2001 = vunpack.c.l.b16 %v1236
        %v2002 = vunpack.c.h.b16 %v1236
        %v2003 = vunpack.c.l.b16 %v1237
        %v2004 = vunpack.c.h.b16 %v1237
        %v2005 = vunpack.c.l.b16 %v1238
        %v2006 = vunpack.c.h.b16 %v1238
        %v2007 = vunpack.c.l.b16 %v1239
        %v2008 = vunpack.c.h.b16 %v1239
        %v2009 = vunpack.c.l.b16 %v1240
        %v2010 = vunpack.c.h.b16 %v1240
        %v2011 = vunpack.c.l.b16 %v1241
        %v2012 = vunpack.c.h.b16 %v1241
        %v2013 = vunpack.c.l.b16 %v1242
        %v2014 = vunpack.c.h.b16 %v1242
        %v2015 = vunpack.c.l.b16 %v1243
        %v2016 = vunpack.c.h.b16 %v1243
        %v2017 = vunpack.c.l.b16 %v1244
        %v2018 = vunpack.c.h.b16 %v1244
        %v2019 = vunpack.c.l.b16 %v1245
        %v2020 = vunpack.c.h.b16 %v1245
        %v2021 = vunpack.c.l.b16 %v1246
        %v2022 = vunpack.c.h.b16 %v1246
        %v2023 = vunpack.c.l.b16 %v1247
        %v2024 = vunpack.c.h.b16 %v1247
        %v2025 = vunpack.c.l.b16 %v1248
        %v2026 = vunpack.c.h.b16 %v1248
        %v2027 = vunpack.c.l.b16 %v1249
        %v2028 = vunpack.c.h.b16 %v1249
        %v2029 = vunpack.c.l.b16 %v1250
        %v2030 = vunpack.c.h.b16 %v1250
        %v2031 = vunpack.c.l.b16 %v1251
        %v2032 = vunpack.c.h.b16 %v1251
        %v2033 = vunpack.c.l.b16 %v1252
        %v2034 = vunpack.c.h.b16 %v1252
        %v2035 = vunpack.c.l.b16 %v1253
        %v2036 = vunpack.c.h.b16 %v1253
        %v2037 = vunpack.c.l.b16 %v1254
        %v2038 = vunpack.c.h.b16 %v1254
        %v2039 = vunpack.c.l.b16 %v1255
        %v2040 = vunpack.c.h.b16 %v1255
        %v2041 = vunpack.c.l.b16 %v1256
        %v2042 = vunpack.c.h.b16 %v1256
        %v2043 = vunpack.c.l.b16 %v1257
        %v2044 = vunpack.c.h.b16 %v1257
        %v2045 = vunpack.c.l.b16 %v1258
        %v2046 = vunpack.c.h.b16 %v1258
        %v2047 = vunpack.c.l.b16 %v1259
        %v2048 = vunpack.c.h.b16 %v1259
        %v2049 = vunpack.c.l.b16 %v1260
        %v2050 = vunpack.c.h.b16 %v1260
        %v2051 = vpack.c.b16 %v1543, %v1539
        %v2052 = vpack.c.b16 %v1544, %v1540
        %v2053 = vpack.c.b16 %v1545, %v1541
        %v2054 = vpack.c.b16 %v1546, %v1542
        %v2055 = vpack.c.b16 %v1551, %v1547
        %v2056 = vpack.c.b16 %v1552, %v1548
        %v2057 = vpack.c.b16 %v1553, %v1549
        %v2058 = vpack.c.b16 %v1554, %v1550
        %v2059 = vpack.c.b16 %v1559, %v1555
        %v2060 = vpack.c.b16 %v1560, %v1556
        %v2061 = vpack.c.b16 %v1561, %v1557
        %v2062 = vpack.c.b16 %v1562, %v1558
        %v2063 = vpack.c.b16 %v1567, %v1563
        %v2064 = vpack.c.b16 %v1568, %v1564
        %v2065 = vpack.c.b16 %v1569, %v1565
        %v2066 = vpack.c.b16 %v1570, %v1566
        %v2067 = vpack.c.b16 %v1575, %v1571
        %v2068 = vpack.c.b16 %v1576, %v1572
        %v2069 = vpack.c.b16 %v1577, %v1573
        %v2070 = vpack.c.b16 %v1578, %v1574
        %v2071 = vpack.c.b16 %v1583, %v1579
        %v2072 = vpack.c.b16 %v1584, %v1580
        %v2073 = vpack.c.b16 %v1585, %v1581
        %v2074 = vpack.c.b16 %v1586, %v1582
        %v2075 = vpack.c.b16 %v1591, %v1587
        %v2076 = vpack.c.b16 %v1592, %v1588
        %v2077 = vpack.c.b16 %v1593, %v1589
        %v2078 = vpack.c.b16 %v1594, %v1590
        %v2079 = vpack.c.b16 %v1599, %v1595
        %v2080 = vpack.c.b16 %v1600, %v1596
        %v2081 = vpack.c.b16 %v1601, %v1597
        %v2082 = vpack.c.b16 %v1602, %v1598
        %v2083 = vpack.c.b16 %v1607, %v1603
        %v2084 = vpack.c.b16 %v1608, %v1604
        %v2085 = vpack.c.b16 %v1609, %v1605
        %v2086 = vpack.c.b16 %v1610, %v1606
        %v2087 = vpack.c.b16 %v1615, %v1611
        %v2088 = vpack.c.b16 %v1616, %v1612
        %v2089 = vpack.c.b16 %v1617, %v1613
        %v2090 = vpack.c.b16 %v1618, %v1614
        %v2091 = vpack.c.b16 %v1623, %v1619
        %v2092 = vpack.c.b16 %v1624, %v1620
        %v2093 = vpack.c.b16 %v1625, %v1621
        %v2094 = vpack.c.b16 %v1626, %v1622
        %v2095 = vpack.c.b16 %v1631, %v1627
        %v2096 = vpack.c.b16 %v1632, %v1628
        %v2097 = vpack.c.b16 %v1633, %v1629
        %v2098 = vpack.c.b16 %v1634, %v1630
        %v2099 = vpack.c.b16 %v1639, %v1635
        %v2100 = vpack.c.b16 %v1640, %v1636
        %v2101 = vpack.c.b16 %v1641, %v1637
        %v2102 = vpack.c.b16 %v1642, %v1638
        %v2103 = vpack.c.b16 %v1647, %v1643
        %v2104 = vpack.c.b16 %v1648, %v1644
        %v2105 = vpack.c.b16 %v1649, %v1645
        %v2106 = vpack.c.b16 %v1650, %v1646
        %v2107 = vpack.c.b16 %v1655, %v1651
        %v2108 = vpack.c.b16 %v1656, %v1652
        %v2109 = vpack.c.b16 %v1657, %v1653
        %v2110 = vpack.c.b16 %v1658, %v1654
        %v2111 = vpack.c.b16 %v1663, %v1659
        %v2112 = vpack.c.b16 %v1664, %v1660
        %v2113 = vpack.c.b16 %v1665, %v1661
        %v2114 = vpack.c.b16 %v1666, %v1662
        %v2115 = vpack.c.b16 %v1671, %v1667
        %v2116 = vpack.c.b16 %v1672, %v1668
        %v2117 = vpack.c.b16 %v1673, %v1669
        %v2118 = vpack.c.b16 %v1674, %v1670
        %v2119 = vpack.c.b16 %v1679, %v1675
        %v2120 = vpack.c.b16 %v1680, %v1676
        %v2121 = vpack.c.b16 %v1681, %v1677
        %v2122 = vpack.c.b16 %v1682, %v1678
        %v2123 = vpack.c.b16 %v1687, %v1683
        %v2124 = vpack.c.b16 %v1688, %v1684
        %v2125 = vpack.c.b16 %v1689, %v1685
        %v2126 = vpack.c.b16 %v1690, %v1686
        %v2127 = vpack.c.b16 %v1695, %v1691
        %v2128 = vpack.c.b16 %v1696, %v1692
        %v2129 = vpack.c.b16 %v1697, %v1693
        %v2130 = vpack.c.b16 %v1698, %v1694
        %v2131 = vpack.c.b16 %v1703, %v1699
        %v2132 = vpack.c.b16 %v1704, %v1700
        %v2133 = vpack.c.b16 %v1705, %v1701
        %v2134 = vpack.c.b16 %v1706, %v1702
        %v2135 = vpack.c.b16 %v1711, %v1707
        %v2136 = vpack.c.b16 %v1712, %v1708
        %v2137 = vpack.c.b16 %v1713, %v1709
        %v2138 = vpack.c.b16 %v1714, %v1710
        %v2139 = vpack.c.b16 %v1719, %v1715
        %v2140 = vpack.c.b16 %v1720, %v1716
        %v2141 = vpack.c.b16 %v1721, %v1717
        %v2142 = vpack.c.b16 %v1722, %v1718
        %v2143 = vpack.c.b16 %v1727, %v1723
        %v2144 = vpack.c.b16 %v1728, %v1724
        %v2145 = vpack.c.b16 %v1729, %v1725
        %v2146 = vpack.c.b16 %v1730, %v1726
        %v2147 = vpack.c.b16 %v1735, %v1731
        %v2148 = vpack.c.b16 %v1736, %v1732
        %v2149 = vpack.c.b16 %v1737, %v1733
        %v2150 = vpack.c.b16 %v1738, %v1734
        %v2151 = vpack.c.b16 %v1743, %v1739
        %v2152 = vpack.c.b16 %v1744, %v1740
        %v2153 = vpack.c.b16 %v1745, %v1741
        %v2154 = vpack.c.b16 %v1746, %v1742
        %v2155 = vpack.c.b16 %v1751, %v1747
        %v2156 = vpack.c.b16 %v1752, %v1748
        %v2157 = vpack.c.b16 %v1753, %v1749
        %v2158 = vpack.c.b16 %v1754, %v1750
        %v2159 = vpack.c.b16 %v1759, %v1755
        %v2160 = vpack.c.b16 %v1760, %v1756
        %v2161 = vpack.c.b16 %v1761, %v1757
        %v2162 = vpack.c.b16 %v1762, %v1758
        %v2163 = vpack.c.b16 %v1767, %v1763
        %v2164 = vpack.c.b16 %v1768, %v1764
        %v2165 = vpack.c.b16 %v1769, %v1765
        %v2166 = vpack.c.b16 %v1770, %v1766
        %v2167 = vpack.c.b16 %v1775, %v1771
        %v2168 = vpack.c.b16 %v1776, %v1772
        %v2169 = vpack.c.b16 %v1777, %v1773
        %v2170 = vpack.c.b16 %v1778, %v1774
        %v2171 = vpack.c.b16 %v1783, %v1779
        %v2172 = vpack.c.b16 %v1784, %v1780
        %v2173 = vpack.c.b16 %v1785, %v1781
        %v2174 = vpack.c.b16 %v1786, %v1782
        %v2175 = vpack.c.b16 %v1791, %v1787
        %v2176 = vpack.c.b16 %v1792, %v1788
        %v2177 = vpack.c.b16 %v1793, %v1789
        %v2178 = vpack.c.b16 %v1794, %v1790
        %v2179 = vpack.c.b16 %v1799, %v1795
        %v2180 = vpack.c.b16 %v1800, %v1796
        %v2181 = vpack.c.b16 %v1801, %v1797
        %v2182 = vpack.c.b16 %v1802, %v1798
        %v2183 = vpack.c.b16 %v1807, %v1803
        %v2184 = vpack.c.b16 %v1808, %v1804
        %v2185 = vpack.c.b16 %v1809, %v1805
        %v2186 = vpack.c.b16 %v1810, %v1806
        %v2187 = vpack.c.b16 %v1815, %v1811
        %v2188 = vpack.c.b16 %v1816, %v1812
        %v2189 = vpack.c.b16 %v1817, %v1813
        %v2190 = vpack.c.b16 %v1818, %v1814
        %v2191 = vpack.c.b16 %v1823, %v1819
        %v2192 = vpack.c.b16 %v1824, %v1820
        %v2193 = vpack.c.b16 %v1825, %v1821
        %v2194 = vpack.c.b16 %v1826, %v1822
        %v2195 = vpack.c.b16 %v1831, %v1827
        %v2196 = vpack.c.b16 %v1832, %v1828
        %v2197 = vpack.c.b16 %v1833, %v1829
        %v2198 = vpack.c.b16 %v1834, %v1830
        %v2199 = vpack.c.b16 %v1839, %v1835
        %v2200 = vpack.c.b16 %v1840, %v1836
        %v2201 = vpack.c.b16 %v1841, %v1837
        %v2202 = vpack.c.b16 %v1842, %v1838
        %v2203 = vpack.c.b16 %v1847, %v1843
        %v2204 = vpack.c.b16 %v1848, %v1844
        %v2205 = vpack.c.b16 %v1849, %v1845
        %v2206 = vpack.c.b16 %v1850, %v1846
        %v2207 = vpack.c.b16 %v1855, %v1851
        %v2208 = vpack.c.b16 %v1856, %v1852
        %v2209 = vpack.c.b16 %v1857, %v1853
        %v2210 = vpack.c.b16 %v1858, %v1854
        %v2211 = vpack.c.b16 %v1863, %v1859
        %v2212 = vpack.c.b16 %v1864, %v1860
        %v2213 = vpack.c.b16 %v1865, %v1861
        %v2214 = vpack.c.b16 %v1866, %v1862
        %v2215 = vpack.c.b16 %v1871, %v1867
        %v2216 = vpack.c.b16 %v1872, %v1868
        %v2217 = vpack.c.b16 %v1873, %v1869
        %v2218 = vpack.c.b16 %v1874, %v1870
        %v2219 = vpack.c.b16 %v1879, %v1875
        %v2220 = vpack.c.b16 %v1880, %v1876
        %v2221 = vpack.c.b16 %v1881, %v1877
        %v2222 = vpack.c.b16 %v1882, %v1878
        %v2223 = vpack.c.b16 %v1887, %v1883
        %v2224 = vpack.c.b16 %v1888, %v1884
        %v2225 = vpack.c.b16 %v1889, %v1885
        %v2226 = vpack.c.b16 %v1890, %v1886
        %v2227 = vpack.c.b16 %v1895, %v1891
        %v2228 = vpack.c.b16 %v1896, %v1892
        %v2229 = vpack.c.b16 %v1897, %v1893
        %v2230 = vpack.c.b16 %v1898, %v1894
        %v2231 = vpack.c.b16 %v1903, %v1899
        %v2232 = vpack.c.b16 %v1904, %v1900
        %v2233 = vpack.c.b16 %v1905, %v1901
        %v2234 = vpack.c.b16 %v1906, %v1902
        %v2235 = vpack.c.b16 %v1911, %v1907
        %v2236 = vpack.c.b16 %v1912, %v1908
        %v2237 = vpack.c.b16 %v1913, %v1909
        %v2238 = vpack.c.b16 %v1914, %v1910
        %v2239 = vpack.c.b16 %v1919, %v1915
        %v2240 = vpack.c.b16 %v1920, %v1916
        %v2241 = vpack.c.b16 %v1921, %v1917
        %v2242 = vpack.c.b16 %v1922, %v1918
        %v2243 = vpack.c.b16 %v1927, %v1923
        %v2244 = vpack.c.b16 %v1928, %v1924
        %v2245 = vpack.c.b16 %v1929, %v1925
        %v2246 = vpack.c.b16 %v1930, %v1926
        %v2247 = vpack.c.b16 %v1935, %v1931
        %v2248 = vpack.c.b16 %v1936, %v1932
        %v2249 = vpack.c.b16 %v1937, %v1933
        %v2250 = vpack.c.b16 %v1938, %v1934
        %v2251 = vpack.c.b16 %v1943, %v1939
        %v2252 = vpack.c.b16 %v1944, %v1940
        %v2253 = vpack.c.b16 %v1945, %v1941
        %v2254 = vpack.c.b16 %v1946, %v1942
        %v2255 = vpack.c.b16 %v1951, %v1947
        %v2256 = vpack.c.b16 %v1952, %v1948
        %v2257 = vpack.c.b16 %v1953, %v1949
        %v2258 = vpack.c.b16 %v1954, %v1950
        %v2259 = vpack.c.b16 %v1959, %v1955
        %v2260 = vpack.c.b16 %v1960, %v1956
        %v2261 = vpack.c.b16 %v1961, %v1957
        %v2262 = vpack.c.b16 %v1962, %v1958
        %v2263 = vpack.c.b16 %v1967, %v1963
        %v2264 = vpack.c.b16 %v1968, %v1964
        %v2265 = vpack.c.b16 %v1969, %v1965
        %v2266 = vpack.c.b16 %v1970, %v1966
        %v2267 = vpack.c.b16 %v1975, %v1971
        %v2268 = vpack.c.b16 %v1976, %v1972
        %v2269 = vpack.c.b16 %v1977, %v1973
        %v2270 = vpack.c.b16 %v1978, %v1974
        %v2271 = vpack.c.b16 %v1983, %v1979
        %v2272 = vpack.c.b16 %v1984, %v1980
        %v2273 = vpack.c.b16 %v1985, %v1981
        %v2274 = vpack.c.b16 %v1986, %v1982
        %v2275 = vpack.c.b16 %v1991, %v1987
        %v2276 = vpack.c.b16 %v1992, %v1988
        %v2277 = vpack.c.b16 %v1993, %v1989
        %v2278 = vpack.c.b16 %v1994, %v1990
        %v2279 = vpack.c.b16 %v1999, %v1995
        %v2280 = vpack.c.b16 %v2000, %v1996
        %v2281 = vpack.c.b16 %v2001, %v1997
        %v2282 = vpack.c.b16 %v2002, %v1998
        %v2283 = vpack.c.b16 %v2007, %v2003
        %v2284 = vpack.c.b16 %v2008, %v2004
        %v2285 = vpack.c.b16 %v2009, %v2005
        %v2286 = vpack.c.b16 %v2010, %v2006
        %v2287 = vpack.c.b16 %v2015, %v2011
        %v2288 = vpack.c.b16 %v2016, %v2012
        %v2289 = vpack.c.b16 %v2017, %v2013
        %v2290 = vpack.c.b16 %v2018, %v2014
        %v2291 = vpack.c.b16 %v2023, %v2019
        %v2292 = vpack.c.b16 %v2024, %v2020
        %v2293 = vpack.c.b16 %v2025, %v2021
        %v2294 = vpack.c.b16 %v2026, %v2022
        %v2295 = vpack.c.b16 %v2031, %v2027
        %v2296 = vpack.c.b16 %v2032, %v2028
        %v2297 = vpack.c.b16 %v2033, %v2029
        %v2298 = vpack.c.b16 %v2034, %v2030
        %v2299 = vpack.c.b16 %v2039, %v2035
        %v2300 = vpack.c.b16 %v2040, %v2036
        %v2301 = vpack.c.b16 %v2041, %v2037
        %v2302 = vpack.c.b16 %v2042, %v2038
        %v2303 = vpack.c.b16 %v2047, %v2043
        %v2304 = vpack.c.b16 %v2048, %v2044
        %v2305 = vpack.c.b16 %v2049, %v2045
        %v2306 = vpack.c.b16 %v2050, %v2046
        %2563 = vmatprep.subr.bf16.mxu0 %v2080
        %2564 = vmatpush1.bf16.msra.mxu0 %v2079
        %2565 = vmatprep.subr.bf16.mxu0 %v2076
        %2566 = vmatpush1.bf16.msra.mxu0 %v2075
        %2567 = vmatprep.subr.bf16.mxu0 %v2072
        %2568 = vmatpush1.bf16.msra.mxu0 %v2071
        %2569 = vmatprep.subr.bf16.mxu0 %v2068
        %2570 = vmatpush1.bf16.msra.mxu0 %v2067
        %2571 = vmatprep.subr.bf16.mxu0 %v2064
        %2572 = vmatpush1.bf16.msra.mxu0 %v2063
        %2573 = vmatprep.subr.bf16.mxu0 %v2060
        %2574 = vmatpush1.bf16.msra.mxu0 %v2059
        %2575 = vmatprep.subr.bf16.mxu0 %v2056
        %2576 = vmatpush1.bf16.msra.mxu0 %v2055
        %2577 = vmatprep.subr.bf16.mxu0 %v2052
        %2578 = vmatpush1.bf16.msra.mxu0 %v2051
        %2579 = vmatprep.subr.bf16.mxu0 %v2112
        %2580 = vmatpush2.bf16.msra.mxu0 %v2111
        %2581 = vmatprep.subr.bf16.mxu0 %v2108
        %2582 = vmatpush2.bf16.msra.mxu0 %v2107
        %2583 = vmatprep.subr.bf16.mxu0 %v2104
        %2584 = vmatpush2.bf16.msra.mxu0 %v2103
        %2585 = vmatprep.subr.bf16.mxu0 %v2100
        %2586 = vmatpush2.bf16.msra.mxu0 %v2099
        %2587 = vmatprep.subr.bf16.mxu0 %v2096
        %2588 = vmatpush2.bf16.msra.mxu0 %v2095
        %2589 = vmatprep.subr.bf16.mxu0 %v2092
        %2590 = vmatpush2.bf16.msra.mxu0 %v2091
        %2591 = vmatprep.subr.bf16.mxu0 %v2088
        %2592 = vmatpush2.bf16.msra.mxu0 %v2087
        %2593 = vmatprep.subr.bf16.mxu0 %v2084
        %2594 = vmatpush2.bf16.msra.mxu0 %v2083
        %2595 = vmatprep.mubr.bf16.mxu0 %v998
        %2596 = vmatmul.mubr.bf16.gmra.mxu0 %v997
        %v2597 = vpop.f32.mrf.mxu0
        %v2598 = vadd.f32 %v1266, %v2597
        %v2599 = vpop.f32.mrf.mxu0
        %v2600 = vadd.f32 %v1270, %v2599
        %v2601 = vpop.f32.mrf.mxu0
        %v2602 = vpop.f32.mrf.mxu0
        %2603 = vdwg.mxu0
        %2604 = vmatprep.subr.bf16.mxu0 %v2144
        %2605 = vmatpush1.bf16.msra.mxu0 %v2143
        %2606 = vmatprep.subr.bf16.mxu0 %v2140
        %2607 = vmatpush1.bf16.msra.mxu0 %v2139
        %2608 = vmatprep.subr.bf16.mxu0 %v2136
        %2609 = vmatpush1.bf16.msra.mxu0 %v2135
        %2610 = vmatprep.subr.bf16.mxu0 %v2132
        %2611 = vmatpush1.bf16.msra.mxu0 %v2131
        %2612 = vmatprep.subr.bf16.mxu0 %v2128
        %2613 = vmatpush1.bf16.msra.mxu0 %v2127
        %2614 = vmatprep.subr.bf16.mxu0 %v2124
        %2615 = vmatpush1.bf16.msra.mxu0 %v2123
        %2616 = vmatprep.subr.bf16.mxu0 %v2120
        %2617 = vmatpush1.bf16.msra.mxu0 %v2119
        %2618 = vmatprep.subr.bf16.mxu0 %v2116
        %2619 = vmatpush1.bf16.msra.mxu0 %v2115
        %2620 = vmatprep.subr.bf16.mxu0 %v2176
        %2621 = vmatpush2.bf16.msra.mxu0 %v2175
        %2622 = vmatprep.subr.bf16.mxu0 %v2172
        %2623 = vmatpush2.bf16.msra.mxu0 %v2171
        %2624 = vmatprep.subr.bf16.mxu0 %v2168
        %2625 = vmatpush2.bf16.msra.mxu0 %v2167
        %2626 = vmatprep.subr.bf16.mxu0 %v2164
        %2627 = vmatpush2.bf16.msra.mxu0 %v2163
        %2628 = vmatprep.subr.bf16.mxu0 %v2160
        %2629 = vmatpush2.bf16.msra.mxu0 %v2159
        %2630 = vmatprep.subr.bf16.mxu0 %v2156
        %2631 = vmatpush2.bf16.msra.mxu0 %v2155
        %2632 = vmatprep.subr.bf16.mxu0 %v2152
        %2633 = vmatpush2.bf16.msra.mxu0 %v2151
        %2634 = vmatprep.subr.bf16.mxu0 %v2148
        %2635 = vmatpush2.bf16.msra.mxu0 %v2147
        %2636 = vmatprep.mubr.bf16.mxu0 %v1000
        %2637 = vmatmul.mubr.bf16.gmra.mxu0 %v999
        %v2638 = vpop.f32.mrf.mxu0
        %v2639 = vadd.f32 %v2598, %v2638
        %v2640 = vpop.f32.mrf.mxu0
        %v2641 = vadd.f32 %v2600, %v2640
        %v2642 = vpop.f32.mrf.mxu0
        %v2643 = vpop.f32.mrf.mxu0
        %2644 = vdwg.mxu0
        %2645 = vmatprep.subr.bf16.mxu0 %v2208
        %2646 = vmatpush1.bf16.msra.mxu0 %v2207
        %2647 = vmatprep.subr.bf16.mxu0 %v2204
        %2648 = vmatpush1.bf16.msra.mxu0 %v2203
        %2649 = vmatprep.subr.bf16.mxu0 %v2200
        %2650 = vmatpush1.bf16.msra.mxu0 %v2199
        %2651 = vmatprep.subr.bf16.mxu0 %v2196
        %2652 = vmatpush1.bf16.msra.mxu0 %v2195
        %2653 = vmatprep.subr.bf16.mxu0 %v2192
        %2654 = vmatpush1.bf16.msra.mxu0 %v2191
        %2655 = vmatprep.subr.bf16.mxu0 %v2188
        %2656 = vmatpush1.bf16.msra.mxu0 %v2187
        %2657 = vmatprep.subr.bf16.mxu0 %v2184
        %2658 = vmatpush1.bf16.msra.mxu0 %v2183
        %2659 = vmatprep.subr.bf16.mxu0 %v2180
        %2660 = vmatpush1.bf16.msra.mxu0 %v2179
        %2661 = vmatprep.subr.bf16.mxu0 %v2240
        %2662 = vmatpush2.bf16.msra.mxu0 %v2239
        %2663 = vmatprep.subr.bf16.mxu0 %v2236
        %2664 = vmatpush2.bf16.msra.mxu0 %v2235
        %2665 = vmatprep.subr.bf16.mxu0 %v2232
        %2666 = vmatpush2.bf16.msra.mxu0 %v2231
        %2667 = vmatprep.subr.bf16.mxu0 %v2228
        %2668 = vmatpush2.bf16.msra.mxu0 %v2227
        %2669 = vmatprep.subr.bf16.mxu0 %v2224
        %2670 = vmatpush2.bf16.msra.mxu0 %v2223
        %2671 = vmatprep.subr.bf16.mxu0 %v2220
        %2672 = vmatpush2.bf16.msra.mxu0 %v2219
        %2673 = vmatprep.subr.bf16.mxu0 %v2216
        %2674 = vmatpush2.bf16.msra.mxu0 %v2215
        %2675 = vmatprep.subr.bf16.mxu0 %v2212
        %2676 = vmatpush2.bf16.msra.mxu0 %v2211
        %2677 = vmatprep.mubr.bf16.mxu0 %v1002
        %2678 = vmatmul.mubr.bf16.gmra.mxu0 %v1001
        %v2679 = vpop.f32.mrf.mxu0
        %v2680 = vadd.f32 %v2639, %v2679
        %v2681 = vpop.f32.mrf.mxu0
        %v2682 = vadd.f32 %v2641, %v2681
        %v2683 = vpop.f32.mrf.mxu0
        %v2684 = vpop.f32.mrf.mxu0
        %2685 = vdwg.mxu0
        %2686 = vmatprep.subr.bf16.mxu0 %v2272
        %2687 = vmatpush1.bf16.msra.mxu0 %v2271
        %2688 = vmatprep.subr.bf16.mxu0 %v2268
        %2689 = vmatpush1.bf16.msra.mxu0 %v2267
        %2690 = vmatprep.subr.bf16.mxu0 %v2264
        %2691 = vmatpush1.bf16.msra.mxu0 %v2263
        %2692 = vmatprep.subr.bf16.mxu0 %v2260
        %2693 = vmatpush1.bf16.msra.mxu0 %v2259
        %2694 = vmatprep.subr.bf16.mxu0 %v2256
        %2695 = vmatpush1.bf16.msra.mxu0 %v2255
        %2696 = vmatprep.subr.bf16.mxu0 %v2252
        %2697 = vmatpush1.bf16.msra.mxu0 %v2251
        %2698 = vmatprep.subr.bf16.mxu0 %v2248
        %2699 = vmatpush1.bf16.msra.mxu0 %v2247
        %2700 = vmatprep.subr.bf16.mxu0 %v2244
        %2701 = vmatpush1.bf16.msra.mxu0 %v2243
        %2702 = vmatprep.subr.bf16.mxu0 %v2304
        %2703 = vmatpush2.bf16.msra.mxu0 %v2303
        %2704 = vmatprep.subr.bf16.mxu0 %v2300
        %2705 = vmatpush2.bf16.msra.mxu0 %v2299
        %2706 = vmatprep.subr.bf16.mxu0 %v2296
        %2707 = vmatpush2.bf16.msra.mxu0 %v2295
        %2708 = vmatprep.subr.bf16.mxu0 %v2292
        %2709 = vmatpush2.bf16.msra.mxu0 %v2291
        %2710 = vmatprep.subr.bf16.mxu0 %v2288
        %2711 = vmatpush2.bf16.msra.mxu0 %v2287
        %2712 = vmatprep.subr.bf16.mxu0 %v2284
        %2713 = vmatpush2.bf16.msra.mxu0 %v2283
        %2714 = vmatprep.subr.bf16.mxu0 %v2280
        %2715 = vmatpush2.bf16.msra.mxu0 %v2279
        %2716 = vmatprep.subr.bf16.mxu0 %v2276
        %2717 = vmatpush2.bf16.msra.mxu0 %v2275
        %2718 = vmatprep.mubr.bf16.mxu0 %v1004
        %2719 = vmatmul.mubr.bf16.gmra.mxu0 %v1003
        %v2720 = vpop.f32.mrf.mxu0
        %v2721 = vadd.f32 %v2680, %v2720
        %v2722 = vpop.f32.mrf.mxu0
        %v2723 = vadd.f32 %v2682, %v2722
        %v2724 = vpop.f32.mrf.mxu0
        %v2725 = vpop.f32.mrf.mxu0
        %2726 = vdwg.mxu0
        %2727 = vmatprep.subr.bf16.mxu0 %v2082
        %2728 = vmatpush1.bf16.msra.mxu0 %v2081
        %2729 = vmatprep.subr.bf16.mxu0 %v2078
        %2730 = vmatpush1.bf16.msra.mxu0 %v2077
        %2731 = vmatprep.subr.bf16.mxu0 %v2074
        %2732 = vmatpush1.bf16.msra.mxu0 %v2073
        %2733 = vmatprep.subr.bf16.mxu0 %v2070
        %2734 = vmatpush1.bf16.msra.mxu0 %v2069
        %2735 = vmatprep.subr.bf16.mxu0 %v2066
        %2736 = vmatpush1.bf16.msra.mxu0 %v2065
        %2737 = vmatprep.subr.bf16.mxu0 %v2062
        %2738 = vmatpush1.bf16.msra.mxu0 %v2061
        %2739 = vmatprep.subr.bf16.mxu0 %v2058
        %2740 = vmatpush1.bf16.msra.mxu0 %v2057
        %2741 = vmatprep.subr.bf16.mxu0 %v2054
        %2742 = vmatpush1.bf16.msra.mxu0 %v2053
        %2743 = vmatprep.subr.bf16.mxu0 %v2114
        %2744 = vmatpush2.bf16.msra.mxu0 %v2113
        %2745 = vmatprep.subr.bf16.mxu0 %v2110
        %2746 = vmatpush2.bf16.msra.mxu0 %v2109
        %2747 = vmatprep.subr.bf16.mxu0 %v2106
        %2748 = vmatpush2.bf16.msra.mxu0 %v2105
        %2749 = vmatprep.subr.bf16.mxu0 %v2102
        %2750 = vmatpush2.bf16.msra.mxu0 %v2101
        %2751 = vmatprep.subr.bf16.mxu0 %v2098
        %2752 = vmatpush2.bf16.msra.mxu0 %v2097
        %2753 = vmatprep.subr.bf16.mxu0 %v2094
        %2754 = vmatpush2.bf16.msra.mxu0 %v2093
        %2755 = vmatprep.subr.bf16.mxu0 %v2090
        %2756 = vmatpush2.bf16.msra.mxu0 %v2089
        %2757 = vmatprep.subr.bf16.mxu0 %v2086
        %2758 = vmatpush2.bf16.msra.mxu0 %v2085
        %2759 = vmatprep.mubr.bf16.mxu0 %v998
        %2760 = vmatmul.mubr.bf16.gmra.mxu0 %v997
        %v2761 = vpop.f32.mrf.mxu0
        %v2762 = vadd.f32 %v1274, %v2761
        %v2763 = vpop.f32.mrf.mxu0
        %v2764 = vadd.f32 %v1278, %v2763
        %v2765 = vpop.f32.mrf.mxu0
        %v2766 = vpop.f32.mrf.mxu0
        %2767 = vdwg.mxu0
        %2768 = vmatprep.subr.bf16.mxu0 %v2146
        %2769 = vmatpush1.bf16.msra.mxu0 %v2145
        %2770 = vmatprep.subr.bf16.mxu0 %v2142
        %2771 = vmatpush1.bf16.msra.mxu0 %v2141
        %2772 = vmatprep.subr.bf16.mxu0 %v2138
        %2773 = vmatpush1.bf16.msra.mxu0 %v2137
        %2774 = vmatprep.subr.bf16.mxu0 %v2134
        %2775 = vmatpush1.bf16.msra.mxu0 %v2133
        %2776 = vmatprep.subr.bf16.mxu0 %v2130
        %2777 = vmatpush1.bf16.msra.mxu0 %v2129
        %2778 = vmatprep.subr.bf16.mxu0 %v2126
        %2779 = vmatpush1.bf16.msra.mxu0 %v2125
        %2780 = vmatprep.subr.bf16.mxu0 %v2122
        %2781 = vmatpush1.bf16.msra.mxu0 %v2121
        %2782 = vmatprep.subr.bf16.mxu0 %v2118
        %2783 = vmatpush1.bf16.msra.mxu0 %v2117
        %2784 = vmatprep.subr.bf16.mxu0 %v2178
        %2785 = vmatpush2.bf16.msra.mxu0 %v2177
        %2786 = vmatprep.subr.bf16.mxu0 %v2174
        %2787 = vmatpush2.bf16.msra.mxu0 %v2173
        %2788 = vmatprep.subr.bf16.mxu0 %v2170
        %2789 = vmatpush2.bf16.msra.mxu0 %v2169
        %2790 = vmatprep.subr.bf16.mxu0 %v2166
        %2791 = vmatpush2.bf16.msra.mxu0 %v2165
        %2792 = vmatprep.subr.bf16.mxu0 %v2162
        %2793 = vmatpush2.bf16.msra.mxu0 %v2161
        %2794 = vmatprep.subr.bf16.mxu0 %v2158
        %2795 = vmatpush2.bf16.msra.mxu0 %v2157
        %2796 = vmatprep.subr.bf16.mxu0 %v2154
        %2797 = vmatpush2.bf16.msra.mxu0 %v2153
        %2798 = vmatprep.subr.bf16.mxu0 %v2150
        %2799 = vmatpush2.bf16.msra.mxu0 %v2149
        %2800 = vmatprep.mubr.bf16.mxu0 %v1000
        %2801 = vmatmul.mubr.bf16.gmra.mxu0 %v999
        %v2802 = vpop.f32.mrf.mxu0
        %v2803 = vadd.f32 %v2762, %v2802
        %v2804 = vpop.f32.mrf.mxu0
        %v2805 = vadd.f32 %v2764, %v2804
        %v2806 = vpop.f32.mrf.mxu0
        %v2807 = vpop.f32.mrf.mxu0
        %2808 = vdwg.mxu0
        %2809 = vmatprep.subr.bf16.mxu0 %v2210
        %2810 = vmatpush1.bf16.msra.mxu0 %v2209
        %2811 = vmatprep.subr.bf16.mxu0 %v2206
        %2812 = vmatpush1.bf16.msra.mxu0 %v2205
        %2813 = vmatprep.subr.bf16.mxu0 %v2202
        %2814 = vmatpush1.bf16.msra.mxu0 %v2201
        %2815 = vmatprep.subr.bf16.mxu0 %v2198
        %2816 = vmatpush1.bf16.msra.mxu0 %v2197
        %2817 = vmatprep.subr.bf16.mxu0 %v2194
        %2818 = vmatpush1.bf16.msra.mxu0 %v2193
        %2819 = vmatprep.subr.bf16.mxu0 %v2190
        %2820 = vmatpush1.bf16.msra.mxu0 %v2189
        %2821 = vmatprep.subr.bf16.mxu0 %v2186
        %2822 = vmatpush1.bf16.msra.mxu0 %v2185
        %2823 = vmatprep.subr.bf16.mxu0 %v2182
        %2824 = vmatpush1.bf16.msra.mxu0 %v2181
        %2825 = vmatprep.subr.bf16.mxu0 %v2242
        %2826 = vmatpush2.bf16.msra.mxu0 %v2241
        %2827 = vmatprep.subr.bf16.mxu0 %v2238
        %2828 = vmatpush2.bf16.msra.mxu0 %v2237
        %2829 = vmatprep.subr.bf16.mxu0 %v2234
        %2830 = vmatpush2.bf16.msra.mxu0 %v2233
        %2831 = vmatprep.subr.bf16.mxu0 %v2230
        %2832 = vmatpush2.bf16.msra.mxu0 %v2229
        %2833 = vmatprep.subr.bf16.mxu0 %v2226
        %2834 = vmatpush2.bf16.msra.mxu0 %v2225
        %2835 = vmatprep.subr.bf16.mxu0 %v2222
        %2836 = vmatpush2.bf16.msra.mxu0 %v2221
        %2837 = vmatprep.subr.bf16.mxu0 %v2218
        %2838 = vmatpush2.bf16.msra.mxu0 %v2217
        %2839 = vmatprep.subr.bf16.mxu0 %v2214
        %2840 = vmatpush2.bf16.msra.mxu0 %v2213
        %2841 = vmatprep.mubr.bf16.mxu0 %v1002
        %2842 = vmatmul.mubr.bf16.gmra.mxu0 %v1001
        %v2843 = vpop.f32.mrf.mxu0
        %v2844 = vadd.f32 %v2803, %v2843
        %v2845 = vpop.f32.mrf.mxu0
        %v2846 = vadd.f32 %v2805, %v2845
        %v2847 = vpop.f32.mrf.mxu0
        %v2848 = vpop.f32.mrf.mxu0
        %2849 = vdwg.mxu0
        %2850 = vmatprep.subr.bf16.mxu0 %v2274
        %2851 = vmatpush1.bf16.msra.mxu0 %v2273
        %2852 = vmatprep.subr.bf16.mxu0 %v2270
        %2853 = vmatpush1.bf16.msra.mxu0 %v2269
        %2854 = vmatprep.subr.bf16.mxu0 %v2266
        %2855 = vmatpush1.bf16.msra.mxu0 %v2265
        %2856 = vmatprep.subr.bf16.mxu0 %v2262
        %2857 = vmatpush1.bf16.msra.mxu0 %v2261
        %2858 = vmatprep.subr.bf16.mxu0 %v2258
        %2859 = vmatpush1.bf16.msra.mxu0 %v2257
        %2860 = vmatprep.subr.bf16.mxu0 %v2254
        %2861 = vmatpush1.bf16.msra.mxu0 %v2253
        %2862 = vmatprep.subr.bf16.mxu0 %v2250
        %2863 = vmatpush1.bf16.msra.mxu0 %v2249
        %2864 = vmatprep.subr.bf16.mxu0 %v2246
        %2865 = vmatpush1.bf16.msra.mxu0 %v2245
        %2866 = vmatprep.subr.bf16.mxu0 %v2306
        %2867 = vmatpush2.bf16.msra.mxu0 %v2305
        %2868 = vmatprep.subr.bf16.mxu0 %v2302
        %2869 = vmatpush2.bf16.msra.mxu0 %v2301
        %2870 = vmatprep.subr.bf16.mxu0 %v2298
        %2871 = vmatpush2.bf16.msra.mxu0 %v2297
        %2872 = vmatprep.subr.bf16.mxu0 %v2294
        %2873 = vmatpush2.bf16.msra.mxu0 %v2293
        %2874 = vmatprep.subr.bf16.mxu0 %v2290
        %2875 = vmatpush2.bf16.msra.mxu0 %v2289
        %2876 = vmatprep.subr.bf16.mxu0 %v2286
        %2877 = vmatpush2.bf16.msra.mxu0 %v2285
        %2878 = vmatprep.subr.bf16.mxu0 %v2282
        %2879 = vmatpush2.bf16.msra.mxu0 %v2281
        %2880 = vmatprep.subr.bf16.mxu0 %v2278
        %2881 = vmatpush2.bf16.msra.mxu0 %v2277
        %2882 = vmatprep.mubr.bf16.mxu0 %v1004
        %2883 = vmatmul.mubr.bf16.gmra.mxu0 %v1003
        %v2884 = vpop.f32.mrf.mxu0
        %v2885 = vadd.f32 %v2844, %v2884
        %v2886 = vpop.f32.mrf.mxu0
        %v2887 = vadd.f32 %v2846, %v2886
        %v2888 = vpop.f32.mrf.mxu0
        %v2889 = vpop.f32.mrf.mxu0
        %2890 = vdwg.mxu0
        %v2891 = vmax.f32 %v2721, 0.0
        %v2892 = vmax.f32 %v2723, 0.0
        %v2893 = vmax.f32 %v2885, 0.0
        %v2894 = vmax.f32 %v2887, 0.0
        %v2895 = vpack.c.bf16 %v2891, %v2891
        %v2896 = vpack.c.bf16 %v2892, %v2892
        %v2897 = vpack.c.bf16 %v2893, %v2893
        %v2898 = vpack.c.bf16 %v2894, %v2894
        %v2899 = vld [vmem:[%s5] sm:$0xff]
        %v2900 = vld [vmem:[%s5 + $0x8] sm:$0xff]
        %v2901 = vld [vmem:[%s5 + $0x10] sm:$0xff]
        %v2902 = vld [vmem:[%s5 + $0x18] sm:$0xff]
        %v2903 = vld [vmem:[%s5 + $0x20] sm:$0xff]
        %v2904 = vld [vmem:[%s5 + $0x28] sm:$0xff]
        %v2905 = vld [vmem:[%s5 + $0x30] sm:$0xff]
        %v2906 = vld [vmem:[%s5 + $0x38] sm:$0xff]
        %v2907 = vld [vmem:[%s5 + $0x40] sm:$0xff]
        %v2908 = vld [vmem:[%s5 + $0x48] sm:$0xff]
        %v2909 = vld [vmem:[%s5 + $0x50] sm:$0xff]
        %v2910 = vld [vmem:[%s5 + $0x58] sm:$0xff]
        %v2911 = vld [vmem:[%s5 + $0x60] sm:$0xff]
        %v2912 = vld [vmem:[%s5 + $0x68] sm:$0xff]
        %v2913 = vld [vmem:[%s5 + $0x70] sm:$0xff]
        %v2914 = vld [vmem:[%s5 + $0x78] sm:$0xff]
        %v2915 = vld [vmem:[%s5 + $0x80] sm:$0xff]
        %v2916 = vld [vmem:[%s5 + $0x88] sm:$0xff]
        %v2917 = vld [vmem:[%s5 + $0x90] sm:$0xff]
        %v2918 = vld [vmem:[%s5 + $0x98] sm:$0xff]
        %v2919 = vld [vmem:[%s5 + $0xa0] sm:$0xff]
        %v2920 = vld [vmem:[%s5 + $0xa8] sm:$0xff]
        %v2921 = vld [vmem:[%s5 + $0xb0] sm:$0xff]
        %v2922 = vld [vmem:[%s5 + $0xb8] sm:$0xff]
        %v2923 = vld [vmem:[%s5 + $0xc0] sm:$0xff]
        %v2924 = vld [vmem:[%s5 + $0xc8] sm:$0xff]
        %v2925 = vld [vmem:[%s5 + $0xd0] sm:$0xff]
        %v2926 = vld [vmem:[%s5 + $0xd8] sm:$0xff]
        %v2927 = vld [vmem:[%s5 + $0xe0] sm:$0xff]
        %v2928 = vld [vmem:[%s5 + $0xe8] sm:$0xff]
        %v2929 = vld [vmem:[%s5 + $0xf0] sm:$0xff]
        %v2930 = vld [vmem:[%s5 + $0xf8] sm:$0xff]
        %v2931 = vld [vmem:[%s5 + $0x100] sm:$0xff]
        %v2932 = vld [vmem:[%s5 + $0x108] sm:$0xff]
        %v2933 = vld [vmem:[%s5 + $0x110] sm:$0xff]
        %v2934 = vld [vmem:[%s5 + $0x118] sm:$0xff]
        %v2935 = vld [vmem:[%s5 + $0x120] sm:$0xff]
        %v2936 = vld [vmem:[%s5 + $0x128] sm:$0xff]
        %v2937 = vld [vmem:[%s5 + $0x130] sm:$0xff]
        %v2938 = vld [vmem:[%s5 + $0x138] sm:$0xff]
        %v2939 = vld [vmem:[%s5 + $0x140] sm:$0xff]
        %v2940 = vld [vmem:[%s5 + $0x148] sm:$0xff]
        %v2941 = vld [vmem:[%s5 + $0x150] sm:$0xff]
        %v2942 = vld [vmem:[%s5 + $0x158] sm:$0xff]
        %v2943 = vld [vmem:[%s5 + $0x160] sm:$0xff]
        %v2944 = vld [vmem:[%s5 + $0x168] sm:$0xff]
        %v2945 = vld [vmem:[%s5 + $0x170] sm:$0xff]
        %v2946 = vld [vmem:[%s5 + $0x178] sm:$0xff]
        %v2947 = vld [vmem:[%s5 + $0x180] sm:$0xff]
        %v2948 = vld [vmem:[%s5 + $0x188] sm:$0xff]
        %v2949 = vld [vmem:[%s5 + $0x190] sm:$0xff]
        %v2950 = vld [vmem:[%s5 + $0x198] sm:$0xff]
        %v2951 = vld [vmem:[%s5 + $0x1a0] sm:$0xff]
        %v2952 = vld [vmem:[%s5 + $0x1a8] sm:$0xff]
        %v2953 = vld [vmem:[%s5 + $0x1b0] sm:$0xff]
        %v2954 = vld [vmem:[%s5 + $0x1b8] sm:$0xff]
        %v2955 = vld [vmem:[%s5 + $0x1c0] sm:$0xff]
        %v2956 = vld [vmem:[%s5 + $0x1c8] sm:$0xff]
        %v2957 = vld [vmem:[%s5 + $0x1d0] sm:$0xff]
        %v2958 = vld [vmem:[%s5 + $0x1d8] sm:$0xff]
        %v2959 = vld [vmem:[%s5 + $0x1e0] sm:$0xff]
        %v2960 = vld [vmem:[%s5 + $0x1e8] sm:$0xff]
        %v2961 = vld [vmem:[%s5 + $0x1f0] sm:$0xff]
        %v2962 = vld [vmem:[%s5 + $0x1f8] sm:$0xff]
        %v2963 = vld [vmem:[%s6] sm:$0x3]
        %v2965 = vlaneseq
        %v2966 = vshrl.u32 %v2965, 7
        %v2967 = vsub.s32 0, %v2966
        %v2968 = vrot.slane %v2963, %v2967
        %v2969 = vlaneseq
        %v2970 = vshrl.u32 %v2969, 7
        %v2971 = vsub.s32 1, %v2970
        %v2972 = vrot.slane %v2963, %v2971
        %v3039 = vunpack.c.l.b16 %v2899
        %v3040 = vunpack.c.h.b16 %v2899
        %v3041 = vunpack.c.l.b16 %v2900
        %v3042 = vunpack.c.h.b16 %v2900
        %v3043 = vunpack.c.l.b16 %v2901
        %v3044 = vunpack.c.h.b16 %v2901
        %v3045 = vunpack.c.l.b16 %v2902
        %v3046 = vunpack.c.h.b16 %v2902
        %v3047 = vunpack.c.l.b16 %v2903
        %v3048 = vunpack.c.h.b16 %v2903
        %v3049 = vunpack.c.l.b16 %v2904
        %v3050 = vunpack.c.h.b16 %v2904
        %v3051 = vunpack.c.l.b16 %v2905
        %v3052 = vunpack.c.h.b16 %v2905
        %v3053 = vunpack.c.l.b16 %v2906
        %v3054 = vunpack.c.h.b16 %v2906
        %v3055 = vunpack.c.l.b16 %v2907
        %v3056 = vunpack.c.h.b16 %v2907
        %v3057 = vunpack.c.l.b16 %v2908
        %v3058 = vunpack.c.h.b16 %v2908
        %v3059 = vunpack.c.l.b16 %v2909
        %v3060 = vunpack.c.h.b16 %v2909
        %v3061 = vunpack.c.l.b16 %v2910
        %v3062 = vunpack.c.h.b16 %v2910
        %v3063 = vunpack.c.l.b16 %v2911
        %v3064 = vunpack.c.h.b16 %v2911
        %v3065 = vunpack.c.l.b16 %v2912
        %v3066 = vunpack.c.h.b16 %v2912
        %v3067 = vunpack.c.l.b16 %v2913
        %v3068 = vunpack.c.h.b16 %v2913
        %v3069 = vunpack.c.l.b16 %v2914
        %v3070 = vunpack.c.h.b16 %v2914
        %v3071 = vunpack.c.l.b16 %v2915
        %v3072 = vunpack.c.h.b16 %v2915
        %v3073 = vunpack.c.l.b16 %v2916
        %v3074 = vunpack.c.h.b16 %v2916
        %v3075 = vunpack.c.l.b16 %v2917
        %v3076 = vunpack.c.h.b16 %v2917
        %v3077 = vunpack.c.l.b16 %v2918
        %v3078 = vunpack.c.h.b16 %v2918
        %v3079 = vunpack.c.l.b16 %v2919
        %v3080 = vunpack.c.h.b16 %v2919
        %v3081 = vunpack.c.l.b16 %v2920
        %v3082 = vunpack.c.h.b16 %v2920
        %v3083 = vunpack.c.l.b16 %v2921
        %v3084 = vunpack.c.h.b16 %v2921
        %v3085 = vunpack.c.l.b16 %v2922
        %v3086 = vunpack.c.h.b16 %v2922
        %v3087 = vunpack.c.l.b16 %v2923
        %v3088 = vunpack.c.h.b16 %v2923
        %v3089 = vunpack.c.l.b16 %v2924
        %v3090 = vunpack.c.h.b16 %v2924
        %v3091 = vunpack.c.l.b16 %v2925
        %v3092 = vunpack.c.h.b16 %v2925
        %v3093 = vunpack.c.l.b16 %v2926
        %v3094 = vunpack.c.h.b16 %v2926
        %v3095 = vunpack.c.l.b16 %v2927
        %v3096 = vunpack.c.h.b16 %v2927
        %v3097 = vunpack.c.l.b16 %v2928
        %v3098 = vunpack.c.h.b16 %v2928
        %v3099 = vunpack.c.l.b16 %v2929
        %v3100 = vunpack.c.h.b16 %v2929
        %v3101 = vunpack.c.l.b16 %v2930
        %v3102 = vunpack.c.h.b16 %v2930
        %v3103 = vunpack.c.l.b16 %v2931
        %v3104 = vunpack.c.h.b16 %v2931
        %v3105 = vunpack.c.l.b16 %v2932
        %v3106 = vunpack.c.h.b16 %v2932
        %v3107 = vunpack.c.l.b16 %v2933
        %v3108 = vunpack.c.h.b16 %v2933
        %v3109 = vunpack.c.l.b16 %v2934
        %v3110 = vunpack.c.h.b16 %v2934
        %v3111 = vunpack.c.l.b16 %v2935
        %v3112 = vunpack.c.h.b16 %v2935
        %v3113 = vunpack.c.l.b16 %v2936
        %v3114 = vunpack.c.h.b16 %v2936
        %v3115 = vunpack.c.l.b16 %v2937
        %v3116 = vunpack.c.h.b16 %v2937
        %v3117 = vunpack.c.l.b16 %v2938
        %v3118 = vunpack.c.h.b16 %v2938
        %v3119 = vunpack.c.l.b16 %v2939
        %v3120 = vunpack.c.h.b16 %v2939
        %v3121 = vunpack.c.l.b16 %v2940
        %v3122 = vunpack.c.h.b16 %v2940
        %v3123 = vunpack.c.l.b16 %v2941
        %v3124 = vunpack.c.h.b16 %v2941
        %v3125 = vunpack.c.l.b16 %v2942
        %v3126 = vunpack.c.h.b16 %v2942
        %v3127 = vunpack.c.l.b16 %v2943
        %v3128 = vunpack.c.h.b16 %v2943
        %v3129 = vunpack.c.l.b16 %v2944
        %v3130 = vunpack.c.h.b16 %v2944
        %v3131 = vunpack.c.l.b16 %v2945
        %v3132 = vunpack.c.h.b16 %v2945
        %v3133 = vunpack.c.l.b16 %v2946
        %v3134 = vunpack.c.h.b16 %v2946
        %v3135 = vunpack.c.l.b16 %v2947
        %v3136 = vunpack.c.h.b16 %v2947
        %v3137 = vunpack.c.l.b16 %v2948
        %v3138 = vunpack.c.h.b16 %v2948
        %v3139 = vunpack.c.l.b16 %v2949
        %v3140 = vunpack.c.h.b16 %v2949
        %v3141 = vunpack.c.l.b16 %v2950
        %v3142 = vunpack.c.h.b16 %v2950
        %v3143 = vunpack.c.l.b16 %v2951
        %v3144 = vunpack.c.h.b16 %v2951
        %v3145 = vunpack.c.l.b16 %v2952
        %v3146 = vunpack.c.h.b16 %v2952
        %v3147 = vunpack.c.l.b16 %v2953
        %v3148 = vunpack.c.h.b16 %v2953
        %v3149 = vunpack.c.l.b16 %v2954
        %v3150 = vunpack.c.h.b16 %v2954
        %v3151 = vunpack.c.l.b16 %v2955
        %v3152 = vunpack.c.h.b16 %v2955
        %v3153 = vunpack.c.l.b16 %v2956
        %v3154 = vunpack.c.h.b16 %v2956
        %v3155 = vunpack.c.l.b16 %v2957
        %v3156 = vunpack.c.h.b16 %v2957
        %v3157 = vunpack.c.l.b16 %v2958
        %v3158 = vunpack.c.h.b16 %v2958
        %v3159 = vunpack.c.l.b16 %v2959
        %v3160 = vunpack.c.h.b16 %v2959
        %v3161 = vunpack.c.l.b16 %v2960
        %v3162 = vunpack.c.h.b16 %v2960
        %v3163 = vunpack.c.l.b16 %v2961
        %v3164 = vunpack.c.h.b16 %v2961
        %v3165 = vunpack.c.l.b16 %v2962
        %v3166 = vunpack.c.h.b16 %v2962
        %v3167 = vpack.c.b16 %v3041, %v3039
        %v3168 = vpack.c.b16 %v3042, %v3040
        %v3169 = vpack.c.b16 %v3045, %v3043
        %v3170 = vpack.c.b16 %v3046, %v3044
        %v3171 = vpack.c.b16 %v3049, %v3047
        %v3172 = vpack.c.b16 %v3050, %v3048
        %v3173 = vpack.c.b16 %v3053, %v3051
        %v3174 = vpack.c.b16 %v3054, %v3052
        %v3175 = vpack.c.b16 %v3057, %v3055
        %v3176 = vpack.c.b16 %v3058, %v3056
        %v3177 = vpack.c.b16 %v3061, %v3059
        %v3178 = vpack.c.b16 %v3062, %v3060
        %v3179 = vpack.c.b16 %v3065, %v3063
        %v3180 = vpack.c.b16 %v3066, %v3064
        %v3181 = vpack.c.b16 %v3069, %v3067
        %v3182 = vpack.c.b16 %v3070, %v3068
        %v3183 = vpack.c.b16 %v3073, %v3071
        %v3184 = vpack.c.b16 %v3074, %v3072
        %v3185 = vpack.c.b16 %v3077, %v3075
        %v3186 = vpack.c.b16 %v3078, %v3076
        %v3187 = vpack.c.b16 %v3081, %v3079
        %v3188 = vpack.c.b16 %v3082, %v3080
        %v3189 = vpack.c.b16 %v3085, %v3083
        %v3190 = vpack.c.b16 %v3086, %v3084
        %v3191 = vpack.c.b16 %v3089, %v3087
        %v3192 = vpack.c.b16 %v3090, %v3088
        %v3193 = vpack.c.b16 %v3093, %v3091
        %v3194 = vpack.c.b16 %v3094, %v3092
        %v3195 = vpack.c.b16 %v3097, %v3095
        %v3196 = vpack.c.b16 %v3098, %v3096
        %v3197 = vpack.c.b16 %v3101, %v3099
        %v3198 = vpack.c.b16 %v3102, %v3100
        %v3199 = vpack.c.b16 %v3105, %v3103
        %v3200 = vpack.c.b16 %v3106, %v3104
        %v3201 = vpack.c.b16 %v3109, %v3107
        %v3202 = vpack.c.b16 %v3110, %v3108
        %v3203 = vpack.c.b16 %v3113, %v3111
        %v3204 = vpack.c.b16 %v3114, %v3112
        %v3205 = vpack.c.b16 %v3117, %v3115
        %v3206 = vpack.c.b16 %v3118, %v3116
        %v3207 = vpack.c.b16 %v3121, %v3119
        %v3208 = vpack.c.b16 %v3122, %v3120
        %v3209 = vpack.c.b16 %v3125, %v3123
        %v3210 = vpack.c.b16 %v3126, %v3124
        %v3211 = vpack.c.b16 %v3129, %v3127
        %v3212 = vpack.c.b16 %v3130, %v3128
        %v3213 = vpack.c.b16 %v3133, %v3131
        %v3214 = vpack.c.b16 %v3134, %v3132
        %v3215 = vpack.c.b16 %v3137, %v3135
        %v3216 = vpack.c.b16 %v3138, %v3136
        %v3217 = vpack.c.b16 %v3141, %v3139
        %v3218 = vpack.c.b16 %v3142, %v3140
        %v3219 = vpack.c.b16 %v3145, %v3143
        %v3220 = vpack.c.b16 %v3146, %v3144
        %v3221 = vpack.c.b16 %v3149, %v3147
        %v3222 = vpack.c.b16 %v3150, %v3148
        %v3223 = vpack.c.b16 %v3153, %v3151
        %v3224 = vpack.c.b16 %v3154, %v3152
        %v3225 = vpack.c.b16 %v3157, %v3155
        %v3226 = vpack.c.b16 %v3158, %v3156
        %v3227 = vpack.c.b16 %v3161, %v3159
        %v3228 = vpack.c.b16 %v3162, %v3160
        %v3229 = vpack.c.b16 %v3165, %v3163
        %v3230 = vpack.c.b16 %v3166, %v3164
        %3295 = vmatprep.subr.bf16.mxu0 %v3182
        %3296 = vmatpush1.bf16.msra.mxu0 %v3181
        %3297 = vmatprep.subr.bf16.mxu0 %v3180
        %3298 = vmatpush1.bf16.msra.mxu0 %v3179
        %3299 = vmatprep.subr.bf16.mxu0 %v3178
        %3300 = vmatpush1.bf16.msra.mxu0 %v3177
        %3301 = vmatprep.subr.bf16.mxu0 %v3176
        %3302 = vmatpush1.bf16.msra.mxu0 %v3175
        %3303 = vmatprep.subr.bf16.mxu0 %v3174
        %3304 = vmatpush1.bf16.msra.mxu0 %v3173
        %3305 = vmatprep.subr.bf16.mxu0 %v3172
        %3306 = vmatpush1.bf16.msra.mxu0 %v3171
        %3307 = vmatprep.subr.bf16.mxu0 %v3170
        %3308 = vmatpush1.bf16.msra.mxu0 %v3169
        %3309 = vmatprep.subr.bf16.mxu0 %v3168
        %3310 = vmatpush1.bf16.msra.mxu0 %v3167
        %3311 = vmatprep.subr.bf16.mxu0 %v3198
        %3312 = vmatpush2.bf16.msra.mxu0 %v3197
        %3313 = vmatprep.subr.bf16.mxu0 %v3196
        %3314 = vmatpush2.bf16.msra.mxu0 %v3195
        %3315 = vmatprep.subr.bf16.mxu0 %v3194
        %3316 = vmatpush2.bf16.msra.mxu0 %v3193
        %3317 = vmatprep.subr.bf16.mxu0 %v3192
        %3318 = vmatpush2.bf16.msra.mxu0 %v3191
        %3319 = vmatprep.subr.bf16.mxu0 %v3190
        %3320 = vmatpush2.bf16.msra.mxu0 %v3189
        %3321 = vmatprep.subr.bf16.mxu0 %v3188
        %3322 = vmatpush2.bf16.msra.mxu0 %v3187
        %3323 = vmatprep.subr.bf16.mxu0 %v3186
        %3324 = vmatpush2.bf16.msra.mxu0 %v3185
        %3325 = vmatprep.subr.bf16.mxu0 %v3184
        %3326 = vmatpush2.bf16.msra.mxu0 %v3183
        %3327 = vmatprep.mubr.bf16.mxu0 %v2896
        %3328 = vmatmul.mubr.bf16.gmra.mxu0 %v2895
        %v3329 = vpop.f32.mrf.mxu0
        %v3330 = vadd.f32 %v2968, %v3329
        %v3331 = vpop.f32.mrf.mxu0
        %v3332 = vadd.f32 %v2972, %v3331
        %v3333 = vpop.f32.mrf.mxu0
        %v3334 = vpop.f32.mrf.mxu0
        %3335 = vdwg.mxu0
        %3336 = vmatprep.subr.bf16.mxu0 %v3214
        %3337 = vmatpush1.bf16.msra.mxu0 %v3213
        %3338 = vmatprep.subr.bf16.mxu0 %v3212
        %3339 = vmatpush1.bf16.msra.mxu0 %v3211
        %3340 = vmatprep.subr.bf16.mxu0 %v3210
        %3341 = vmatpush1.bf16.msra.mxu0 %v3209
        %3342 = vmatprep.subr.bf16.mxu0 %v3208
        %3343 = vmatpush1.bf16.msra.mxu0 %v3207
        %3344 = vmatprep.subr.bf16.mxu0 %v3206
        %3345 = vmatpush1.bf16.msra.mxu0 %v3205
        %3346 = vmatprep.subr.bf16.mxu0 %v3204
        %3347 = vmatpush1.bf16.msra.mxu0 %v3203
        %3348 = vmatprep.subr.bf16.mxu0 %v3202
        %3349 = vmatpush1.bf16.msra.mxu0 %v3201
        %3350 = vmatprep.subr.bf16.mxu0 %v3200
        %3351 = vmatpush1.bf16.msra.mxu0 %v3199
        %3352 = vmatprep.subr.bf16.mxu0 %v3230
        %3353 = vmatpush2.bf16.msra.mxu0 %v3229
        %3354 = vmatprep.subr.bf16.mxu0 %v3228
        %3355 = vmatpush2.bf16.msra.mxu0 %v3227
        %3356 = vmatprep.subr.bf16.mxu0 %v3226
        %3357 = vmatpush2.bf16.msra.mxu0 %v3225
        %3358 = vmatprep.subr.bf16.mxu0 %v3224
        %3359 = vmatpush2.bf16.msra.mxu0 %v3223
        %3360 = vmatprep.subr.bf16.mxu0 %v3222
        %3361 = vmatpush2.bf16.msra.mxu0 %v3221
        %3362 = vmatprep.subr.bf16.mxu0 %v3220
        %3363 = vmatpush2.bf16.msra.mxu0 %v3219
        %3364 = vmatprep.subr.bf16.mxu0 %v3218
        %3365 = vmatpush2.bf16.msra.mxu0 %v3217
        %3366 = vmatprep.subr.bf16.mxu0 %v3216
        %3367 = vmatpush2.bf16.msra.mxu0 %v3215
        %3368 = vmatprep.mubr.bf16.mxu0 %v2898
        %3369 = vmatmul.mubr.bf16.gmra.mxu0 %v2897
        %v3370 = vpop.f32.mrf.mxu0
        %v3371 = vadd.f32 %v3330, %v3370
        %v3372 = vpop.f32.mrf.mxu0
        %v3373 = vadd.f32 %v3332, %v3372
        %v3374 = vpop.f32.mrf.mxu0
        %v3375 = vpop.f32.mrf.mxu0
        %3376 = vdwg.mxu0
        %v3377 = vmax.f32 %v3371, 0.0
        %v3378 = vmax.f32 %v3373, 0.0
        %v3379 = vpack.c.bf16 %v3377, %v3377
        %v3380 = vpack.c.bf16 %v3378, %v3378
        %v3381 = vld [vmem:[%s7] sm:$0xf]
        %v3382 = vld [vmem:[%s7 + $0x4] sm:$0xf]
        %v3383 = vld [vmem:[%s7 + $0x8] sm:$0xf]
        %v3384 = vld [vmem:[%s7 + $0xc] sm:$0xf]
        %v3385 = vld [vmem:[%s7 + $0x10] sm:$0xf]
        %v3386 = vld [vmem:[%s7 + $0x14] sm:$0xf]
        %v3387 = vld [vmem:[%s7 + $0x18] sm:$0xf]
        %v3388 = vld [vmem:[%s7 + $0x1c] sm:$0xf]
        %v3389 = vld [vmem:[%s7 + $0x20] sm:$0xf]
        %v3390 = vld [vmem:[%s7 + $0x24] sm:$0xf]
        %v3391 = vld [vmem:[%s7 + $0x28] sm:$0xf]
        %v3392 = vld [vmem:[%s7 + $0x2c] sm:$0xf]
        %v3393 = vld [vmem:[%s7 + $0x30] sm:$0xf]
        %v3394 = vld [vmem:[%s7 + $0x34] sm:$0xf]
        %v3395 = vld [vmem:[%s7 + $0x38] sm:$0xf]
        %v3396 = vld [vmem:[%s7 + $0x3c] sm:$0xf]
        %v3397 = vld [vmem:[%s7 + $0x40] sm:$0xf]
        %v3398 = vld [vmem:[%s7 + $0x44] sm:$0xf]
        %v3399 = vld [vmem:[%s7 + $0x48] sm:$0xf]
        %v3400 = vld [vmem:[%s7 + $0x4c] sm:$0xf]
        %v3401 = vld [vmem:[%s7 + $0x50] sm:$0xf]
        %v3402 = vld [vmem:[%s7 + $0x54] sm:$0xf]
        %v3403 = vld [vmem:[%s7 + $0x58] sm:$0xf]
        %v3404 = vld [vmem:[%s7 + $0x5c] sm:$0xf]
        %v3405 = vld [vmem:[%s7 + $0x60] sm:$0xf]
        %v3406 = vld [vmem:[%s7 + $0x64] sm:$0xf]
        %v3407 = vld [vmem:[%s7 + $0x68] sm:$0xf]
        %v3408 = vld [vmem:[%s7 + $0x6c] sm:$0xf]
        %v3409 = vld [vmem:[%s7 + $0x70] sm:$0xf]
        %v3410 = vld [vmem:[%s7 + $0x74] sm:$0xf]
        %v3411 = vld [vmem:[%s7 + $0x78] sm:$0xf]
        %v3412 = vld [vmem:[%s7 + $0x7c] sm:$0xf]
        %v3413 = vld [vmem:[%s8] sm:$0x1]
        %v3415 = vlaneseq
        %v3416 = vshrl.u32 %v3415, 7
        %v3417 = vsub.s32 0, %v3416
        %v3418 = vrot.slane %v3413, %v3417
        %v3452 = vunpack.c.l.b16 %v3381
        %v3453 = vunpack.c.l.b16 %v3382
        %v3454 = vunpack.c.l.b16 %v3383
        %v3455 = vunpack.c.l.b16 %v3384
        %v3456 = vunpack.c.l.b16 %v3385
        %v3457 = vunpack.c.l.b16 %v3386
        %v3458 = vunpack.c.l.b16 %v3387
        %v3459 = vunpack.c.l.b16 %v3388
        %v3460 = vunpack.c.l.b16 %v3389
        %v3461 = vunpack.c.l.b16 %v3390
        %v3462 = vunpack.c.l.b16 %v3391
        %v3463 = vunpack.c.l.b16 %v3392
        %v3464 = vunpack.c.l.b16 %v3393
        %v3465 = vunpack.c.l.b16 %v3394
        %v3466 = vunpack.c.l.b16 %v3395
        %v3467 = vunpack.c.l.b16 %v3396
        %v3468 = vunpack.c.l.b16 %v3397
        %v3469 = vunpack.c.l.b16 %v3398
        %v3470 = vunpack.c.l.b16 %v3399
        %v3471 = vunpack.c.l.b16 %v3400
        %v3472 = vunpack.c.l.b16 %v3401
        %v3473 = vunpack.c.l.b16 %v3402
        %v3474 = vunpack.c.l.b16 %v3403
        %v3475 = vunpack.c.l.b16 %v3404
        %v3476 = vunpack.c.l.b16 %v3405
        %v3477 = vunpack.c.l.b16 %v3406
        %v3478 = vunpack.c.l.b16 %v3407
        %v3479 = vunpack.c.l.b16 %v3408
        %v3480 = vunpack.c.l.b16 %v3409
        %v3481 = vunpack.c.l.b16 %v3410
        %v3482 = vunpack.c.l.b16 %v3411
        %v3483 = vunpack.c.l.b16 %v3412
        %v3484 = vpack.c.b16 %v3453, %v3452
        %v3485 = vpack.c.b16 %v3455, %v3454
        %v3486 = vpack.c.b16 %v3457, %v3456
        %v3487 = vpack.c.b16 %v3459, %v3458
        %v3488 = vpack.c.b16 %v3461, %v3460
        %v3489 = vpack.c.b16 %v3463, %v3462
        %v3490 = vpack.c.b16 %v3465, %v3464
        %v3491 = vpack.c.b16 %v3467, %v3466
        %v3492 = vpack.c.b16 %v3469, %v3468
        %v3493 = vpack.c.b16 %v3471, %v3470
        %v3494 = vpack.c.b16 %v3473, %v3472
        %v3495 = vpack.c.b16 %v3475, %v3474
        %v3496 = vpack.c.b16 %v3477, %v3476
        %v3497 = vpack.c.b16 %v3479, %v3478
        %v3498 = vpack.c.b16 %v3481, %v3480
        %v3499 = vpack.c.b16 %v3483, %v3482
        %3516 = vmatprep.subr.bf16.mxu0 0
        %3517 = vmatpush1.bf16.msra.mxu0 %v3491
        %3518 = vmatprep.subr.bf16.mxu0 0
        %3519 = vmatpush1.bf16.msra.mxu0 %v3490
        %3520 = vmatprep.subr.bf16.mxu0 0
        %3521 = vmatpush1.bf16.msra.mxu0 %v3489
        %3522 = vmatprep.subr.bf16.mxu0 0
        %3523 = vmatpush1.bf16.msra.mxu0 %v3488
        %3524 = vmatprep.subr.bf16.mxu0 0
        %3525 = vmatpush1.bf16.msra.mxu0 %v3487
        %3526 = vmatprep.subr.bf16.mxu0 0
        %3527 = vmatpush1.bf16.msra.mxu0 %v3486
        %3528 = vmatprep.subr.bf16.mxu0 0
        %3529 = vmatpush1.bf16.msra.mxu0 %v3485
        %3530 = vmatprep.subr.bf16.mxu0 0
        %3531 = vmatpush1.bf16.msra.mxu0 %v3484
        %3532 = vmatprep.subr.bf16.mxu0 0
        %3533 = vmatpush2.bf16.msra.mxu0 %v3499
        %3534 = vmatprep.subr.bf16.mxu0 0
        %3535 = vmatpush2.bf16.msra.mxu0 %v3498
        %3536 = vmatprep.subr.bf16.mxu0 0
        %3537 = vmatpush2.bf16.msra.mxu0 %v3497
        %3538 = vmatprep.subr.bf16.mxu0 0
        %3539 = vmatpush2.bf16.msra.mxu0 %v3496
        %3540 = vmatprep.subr.bf16.mxu0 0
        %3541 = vmatpush2.bf16.msra.mxu0 %v3495
        %3542 = vmatprep.subr.bf16.mxu0 0
        %3543 = vmatpush2.bf16.msra.mxu0 %v3494
        %3544 = vmatprep.subr.bf16.mxu0 0
        %3545 = vmatpush2.bf16.msra.mxu0 %v3493
        %3546 = vmatprep.subr.bf16.mxu0 0
        %3547 = vmatpush2.bf16.msra.mxu0 %v3492
        %3548 = vmatprep.mubr.bf16.mxu0 %v3380
        %3549 = vmatmul.mubr.bf16.gmra.mxu0 %v3379
        %v3550 = vpop.f32.mrf.mxu0
        %v3551 = vadd.f32 %v3418, %v3550
        %v3552 = vpop.f32.mrf.mxu0
        %v3553 = vpop.f32.mrf.mxu0
        %v3554 = vpop.f32.mrf.mxu0
        %3555 = vdwg.mxu0
        %v3556 = vmax.f32 %v3551, 0.0
        %v3557 = vpack.c.bf16 %v3556, %v3556
        %v3558 = vld [vmem:[%s9] sm:$0xf]
        %v3559 = vld [vmem:[%s9 + $0x4] sm:$0xf]
        %v3560 = vld [vmem:[%s9 + $0x8] sm:$0xf]
        %v3561 = vld [vmem:[%s9 + $0xc] sm:$0xf]
        %v3562 = vld [vmem:[%s9 + $0x10] sm:$0xf]
        %v3563 = vld [vmem:[%s9 + $0x14] sm:$0xf]
        %v3564 = vld [vmem:[%s9 + $0x18] sm:$0xf]
        %v3565 = vld [vmem:[%s9 + $0x1c] sm:$0xf]
        %v3566 = vld [vmem:[%s9 + $0x20] sm:$0xf]
        %v3567 = vld [vmem:[%s9 + $0x24] sm:$0xf]
        %v3568 = vld [vmem:[%s9 + $0x28] sm:$0xf]
        %v3569 = vld [vmem:[%s9 + $0x2c] sm:$0xf]
        %v3570 = vld [vmem:[%s9 + $0x30] sm:$0xf]
        %v3571 = vld [vmem:[%s9 + $0x34] sm:$0xf]
        %v3572 = vld [vmem:[%s9 + $0x38] sm:$0xf]
        %v3573 = vld [vmem:[%s9 + $0x3c] sm:$0xf]
        %v3574 = vld [vmem:[%s10] sm:$0x1]
        %v3576 = vlaneseq
        %v3577 = vshrl.u32 %v3576, 7
        %v3578 = vsub.s32 0, %v3577
        %v3579 = vrot.slane %v3574, %v3578
        %v3597 = vunpack.c.l.b16 %v3558
        %v3598 = vunpack.c.l.b16 %v3559
        %v3599 = vunpack.c.l.b16 %v3560
        %v3600 = vunpack.c.l.b16 %v3561
        %v3601 = vunpack.c.l.b16 %v3562
        %v3602 = vunpack.c.l.b16 %v3563
        %v3603 = vunpack.c.l.b16 %v3564
        %v3604 = vunpack.c.l.b16 %v3565
        %v3605 = vunpack.c.l.b16 %v3566
        %v3606 = vunpack.c.l.b16 %v3567
        %v3607 = vunpack.c.l.b16 %v3568
        %v3608 = vunpack.c.l.b16 %v3569
        %v3609 = vunpack.c.l.b16 %v3570
        %v3610 = vunpack.c.l.b16 %v3571
        %v3611 = vunpack.c.l.b16 %v3572
        %v3612 = vunpack.c.l.b16 %v3573
        %v3613 = vpack.c.b16 %v3598, %v3597
        %v3614 = vpack.c.b16 %v3600, %v3599
        %v3615 = vpack.c.b16 %v3602, %v3601
        %v3616 = vpack.c.b16 %v3604, %v3603
        %v3617 = vpack.c.b16 %v3606, %v3605
        %v3618 = vpack.c.b16 %v3608, %v3607
        %v3619 = vpack.c.b16 %v3610, %v3609
        %v3620 = vpack.c.b16 %v3612, %v3611
        %3629 = vmatprep.subr.bf16.mxu0 0
        %3630 = vmatpush1.bf16.msra.mxu0 %v3620
        %3631 = vmatprep.subr.bf16.mxu0 0
        %3632 = vmatpush1.bf16.msra.mxu0 %v3619
        %3633 = vmatprep.subr.bf16.mxu0 0
        %3634 = vmatpush1.bf16.msra.mxu0 %v3618
        %3635 = vmatprep.subr.bf16.mxu0 0
        %3636 = vmatpush1.bf16.msra.mxu0 %v3617
        %3637 = vmatprep.subr.bf16.mxu0 0
        %3638 = vmatpush1.bf16.msra.mxu0 %v3616
        %3639 = vmatprep.subr.bf16.mxu0 0
        %3640 = vmatpush1.bf16.msra.mxu0 %v3615
        %3641 = vmatprep.subr.bf16.mxu0 0
        %3642 = vmatpush1.bf16.msra.mxu0 %v3614
        %3643 = vmatprep.subr.bf16.mxu0 0
        %3644 = vmatpush1.bf16.msra.mxu0 %v3613
        %3645 = vmatprep.subr.bf16.mxu0 0
        %3646 = vmatpush2.bf16.msra.mxu0 0
        %3647 = vmatprep.subr.bf16.mxu0 0
        %3648 = vmatpush2.bf16.msra.mxu0 0
        %3649 = vmatprep.subr.bf16.mxu0 0
        %3650 = vmatpush2.bf16.msra.mxu0 0
        %3651 = vmatprep.subr.bf16.mxu0 0
        %3652 = vmatpush2.bf16.msra.mxu0 0
        %3653 = vmatprep.subr.bf16.mxu0 0
        %3654 = vmatpush2.bf16.msra.mxu0 0
        %3655 = vmatprep.subr.bf16.mxu0 0
        %3656 = vmatpush2.bf16.msra.mxu0 0
        %3657 = vmatprep.subr.bf16.mxu0 0
        %3658 = vmatpush2.bf16.msra.mxu0 0
        %3659 = vmatprep.subr.bf16.mxu0 0
        %3660 = vmatpush2.bf16.msra.mxu0 0
        %3661 = vmatprep.mubr.bf16.mxu0 0
        %3662 = vmatmul.mubr.bf16.gmra.mxu0 %v3557
        %v3663 = vpop.f32.mrf.mxu0
        %v3664 = vadd.f32 %v3579, %v3663
        %v3665 = vpop.f32.mrf.mxu0
        %v3666 = vpop.f32.mrf.mxu0
        %v3667 = vpop.f32.mrf.mxu0
        %3668 = vdwg.mxu0
        %3669 = vst [vmem:[%s392] sm:$0xff] %v3664
        %s3670 = sand.u32 %s270, 1
        %s3671 = scalar_lea.sflag [#allocation4], %s3670
        %s3672 = sand.u32 %s270, 1
        %s3673 = smul.addr %s3672, 8
        %s3674 = scalar_lea.vmem [#allocation5], %s3673
        // Predicated region
        $region69: #{_mlp_forward_padded.1} parent=63 // pred_check
          %p3675 = pneg %p280
        $region70: #{_mlp_forward_padded.1} parent=63 // pred_check_branch
          %3677 = sbr.rel (%p3675) target = $region72
        $region71: #{_mlp_forward_padded.1} parent=63 // pred_region
          %s3679 = ssub.s32 128, 128
          %3680 = vsyncadd %s3671, %s3679
          %s3681 = smul.addr %s26, 128
          %s3682 = scalar_lea.hbm %s11, %s3681
          %s3684 = sshll.u32 %s3674, 4
          %s3685 = int_to_ptr.vmem [resolvable:$true] %s3684
          %3687 = dma.vmem_to_hbm [thread:$0]  %s3685, 128, %s3682, %s3671
        $region72: #{_mlp_forward_padded.1} parent=63 // pred_fallthru
          _
      $region64: #{_mlp_forward_padded.1} parent=5 // pred_fallthru
        _
      %p3688 = scmp.le.s32.totalorder 2, %s21
      // Predicated region
      $region73: #{_mlp_forward_padded.1} parent=5 // pred_check
        %p3689 = pneg %p3688
      $region74: #{_mlp_forward_padded.1} parent=5 // pred_check_branch
        %3691 = sbr.rel (%p3689) target = $region76
      $region75: #{_mlp_forward_padded.1} parent=5 // pred_region
        %s3692 = ssub.s32 %s21, 2
        // Predicated region
        $region77: #{_mlp_forward_padded.1} parent=75 // pred_check
          %p3693 = pneg %p286
        $region78: #{_mlp_forward_padded.1} parent=75 // pred_check_branch
          %3695 = sbr.rel (%p3693) target = $region80
        $region79: #{_mlp_forward_padded.1} parent=75 // pred_region
          %s3696 = sand.u32 %s271, 1
          %s3697 = scalar_lea.sflag [#allocation4], %s3696
          %s3698 = sand.u32 %s271, 1
          %s3699 = smul.addr %s3698, 8
          %s3700 = scalar_lea.vmem [#allocation5], %s3699
          %3701 = dma.done %s3697, 128
        $region80: #{_mlp_forward_padded.1} parent=75 // pred_fallthru
          _
      $region76: #{_mlp_forward_padded.1} parent=5 // pred_fallthru
        _
    $region6: #{_mlp_forward_padded.1} parent=1 // loop_footer
      %s25 = sadd.s32 1, %s21
    $region7: #{_mlp_forward_padded.1} parent=1 // loop_footer_branch
      %20 = sbr.rel target = $region3
    $region8: #{_mlp_forward_padded.1} parent=1 // loop_exit
      _
    %3702 = vsyncpa [#allocation3], 1
    %s3703 = scalar_lea.sflag [#allocation3], 1
    %3704 = vsyncpa %s3703, 1
    %3705 = vsyncpa [#allocation4], 1
    %s3706 = scalar_lea.sflag [#allocation4], 1
    %3707 = vsyncpa %s3706, 1

// kernel: _mlp_forward_padded.1
$region0: #{_mlp_forward_padded.1}
  #allocation0 [shape = 'u32[]', space=smem, size = 0x4, offset = 0x4, fixed_abs, tag = 'smem constant byte address 0x4 - core index']
  #allocation1 [shape = 'u32[144,128]{1,0:T(1,128)}', space=vmem, size = 0x12000, scoped, tag = 'internal scratch']
  %s0 = inlined_call_operand.vmem [shape: bf16[16,128], index: 0, kind: input, shape index: {}]
  %s1 = inlined_call_operand.vmem [shape: bf16[128,1024], index: 1, kind: input, shape index: {}]
  %s2 = inlined_call_operand.vmem [shape: f32[1,1024], index: 2, kind: input, shape index: {}]
  %s3 = inlined_call_operand.hbm [shape: bf16[1024,512], index: 3, kind: input, shape index: {}]
  %s4 = inlined_call_operand.vmem [shape: f32[1,512], index: 4, kind: input, shape index: {}]
  %s5 = inlined_call_operand.vmem [shape: bf16[512,256], index: 5, kind: input, shape index: {}]
  %s6 = inlined_call_operand.vmem [shape: f32[1,256], index: 6, kind: input, shape index: {}]
  %s7 = inlined_call_operand.vmem [shape: bf16[256,128], index: 7, kind: input, shape index: {}]
  %s8 = inlined_call_operand.vmem [shape: f32[1,128], index: 8, kind: input, shape index: {}]
  %s9 = inlined_call_operand.vmem [shape: bf16[128,128], index: 9, kind: input, shape index: {}]
  %s10 = inlined_call_operand.vmem [shape: f32[1,128], index: 10, kind: input, shape index: {}]
  %s11 = inlined_call_operand.hbm [shape: f32[16,128], index: 11, kind: output, shape index: {}]
  %s12 = sld [smem:[#allocation0]]
  $region81: #{_mlp_forward_padded.1} parent=0
    _
  %s14 = ssub.s32 1, %s12
  %s15 = scalar_select 0, %s14, %s12
  $region1: #{_mlp_forward_padded.1} parent=0
    #allocation2 [shape = 'u8[1048576]{0}', space=vmem, size = 0x100000, scoped, tag = 'input window, operand 3, single buffered']
    #allocation3 [shape = 's32[2]{0}', space=sflag, size = 0x8, scoped, tag = 'scoped memory for _mlp_forward_padded.1']
    #allocation4 [shape = 's32[2]{0}', space=sflag, size = 0x8, scoped, tag = 'scoped memory for _mlp_forward_padded.1']
    #allocation5 [shape = 'u8[8192]{0}', space=vmem, size = 0x2000, scoped, tag = 'output window, operand 0']
    %16 = vsyncpa [#allocation3], 0
    %17 = vsyncpa [#allocation4], 0
    %s18 = scalar_lea.sflag [#allocation4], 1
    %19 = vsyncpa %s18, 0
    loop: start=0, step=1, limit=4
    $region2: #{_mlp_forward_padded.1} parent=1 // loop_pre_header
      _
    $region3: #{_mlp_forward_padded.1} parent=1 // loop_header
      %s21 = sphi 0, %s25
      %p22 = scmp.ge.s32.totalorder %s21, 4
      %s31 = sphi 0, %s33
      %s34 = sphi 0, %s31
      %s35 = sphi 0, %s34
      %s51 = sphi 0, %s35
      %s55 = sphi 0, %s55
      %s57 = sphi 0, %s55
      %s58 = sphi 0, %s57
      %s72 = sphi 0, %s58
      %s76 = sphi 0, %s76
      %s78 = sphi 0, %s76
      %s79 = sphi 0, %s78
      %s93 = sphi 0, %s79
      %s97 = sphi 0, %s97
      %s99 = sphi 0, %s97
      %s100 = sphi 0, %s99
      %s114 = sphi 0, %s100
      %s118 = sphi 0, %s118
      %s120 = sphi 0, %s118
      %s121 = sphi 0, %s120
      %s135 = sphi 0, %s121
      %s139 = sphi 0, %s139
      %s141 = sphi 0, %s139
      %s142 = sphi 0, %s141
      %s156 = sphi 0, %s142
      %s160 = sphi 0, %s160
      %s162 = sphi 0, %s160
      %s163 = sphi 0, %s162
      %s177 = sphi 0, %s163
      %s181 = sphi 0, %s181
      %s183 = sphi 0, %s181
      %s184 = sphi 0, %s183
      %s198 = sphi 0, %s184
      %s202 = sphi 0, %s202
      %s204 = sphi 0, %s202
      %s205 = sphi 0, %s204
      %s219 = sphi 0, %s205
      %s223 = sphi 0, %s223
      %s225 = sphi 0, %s223
      %s226 = sphi 0, %s225
      %s240 = sphi 0, %s226
      %s244 = sphi 0, %s244
      %s246 = sphi 0, %s244
      %s247 = sphi 0, %s246
      %s261 = sphi 0, %s247
      %s267 = sphi 0, %s269
      %s270 = sphi 0, %s267
      %s271 = sphi 0, %s270
      %s287 = sphi 0, %s271
    $region4: #{_mlp_forward_padded.1} parent=1 // loop_header_branch
      %24 = sbr.rel (%p22) target = $region8
    $region5: #{_mlp_forward_padded.1} parent=1 // loop_body
      %s26 = ssub.s32 %s21, 1
      %s27 = ssub.s32 %s21, 2
      %s28 = sadd.s32 %s21, 1
      %s29 = ssub.s32 %s21, %s28
      %p30 = scmp.eq.s32.totalorder %s29, 0
      %s32 = sadd.s32 %s31, 1
      %s33 = scalar_select %p30, %s31, %s32
      %p36 = pneg %p30
      %p37 = scmp.eq.s32.totalorder %s21, 1
      %p38 = por %p36, %p37
      %p39 = scmp.ne.s32.totalorder %s31, %s34
      %p40 = scmp.eq.s32.totalorder %s21, 0
      %p41 = por %p39, %p40
      %p42 = scmp.ne.s32.totalorder %s31, %s34
      %p43 = scmp.eq.s32.totalorder %s26, 1
      %p44 = por %p42, %p43
      %p45 = scmp.ne.s32.totalorder %s34, %s35
      %p46 = scmp.eq.s32.totalorder %s26, 0
      %p47 = por %p45, %p46
      %p48 = scmp.ne.s32.totalorder %s34, %s35
      %p49 = scmp.eq.s32.totalorder %s27, 1
      %p50 = por %p48, %p49
      %p52 = scmp.ne.s32.totalorder %s35, %s51
      %p53 = scmp.eq.s32.totalorder %s27, 0
      %p54 = por %p52, %p53
      %s56 = sadd.s32 %s55, 1
      %p59 = scmp.eq.s32.totalorder %s21, 1
      %p60 = scmp.ne.s32.totalorder %s55, %s57
      %p61 = scmp.eq.s32.totalorder %s21, 0
      %p62 = por %p60, %p61
      %p63 = scmp.ne.s32.totalorder %s55, %s57
      %p64 = scmp.eq.s32.totalorder %s26, 1
      %p65 = por %p63, %p64
      %p66 = scmp.ne.s32.totalorder %s57, %s58
      %p67 = scmp.eq.s32.totalorder %s26, 0
      %p68 = por %p66, %p67
      %p69 = scmp.ne.s32.totalorder %s57, %s58
      %p70 = scmp.eq.s32.totalorder %s27, 1
      %p71 = por %p69, %p70
      %p73 = scmp.ne.s32.totalorder %s58, %s72
      %p74 = scmp.eq.s32.totalorder %s27, 0
      %p75 = por %p73, %p74
      %s77 = sadd.s32 %s76, 1
      %p80 = scmp.eq.s32.totalorder %s21, 1
      %p81 = scmp.ne.s32.totalorder %s76, %s78
      %p82 = scmp.eq.s32.totalorder %s21, 0
      %p83 = por %p81, %p82
      %p84 = scmp.ne.s32.totalorder %s76, %s78
      %p85 = scmp.eq.s32.totalorder %s26, 1
      %p86 = por %p84, %p85
      %p87 = scmp.ne.s32.totalorder %s78, %s79
      %p88 = scmp.eq.s32.totalorder %s26, 0
      %p89 = por %p87, %p88
      %p90 = scmp.ne.s32.totalorder %s78, %s79
      %p91 = scmp.eq.s32.totalorder %s27, 1
      %p92 = por %p90, %p91
      %p94 = scmp.ne.s32.totalorder %s79, %s93
      %p95 = scmp.eq.s32.totalorder %s27, 0
      %p96 = por %p94, %p95
      %s98 = sadd.s32 %s97, 1
      %p101 = scmp.eq.s32.totalorder %s21, 1
      %p102 = scmp.ne.s32.totalorder %s97, %s99
      %p103 = scmp.eq.s32.totalorder %s21, 0
      %p104 = por %p102, %p103
      %p105 = scmp.ne.s32.totalorder %s97, %s99
      %p106 = scmp.eq.s32.totalorder %s26, 1
      %p107 = por %p105, %p106
      %p108 = scmp.ne.s32.totalorder %s99, %s100
      %p109 = scmp.eq.s32.totalorder %s26, 0
      %p110 = por %p108, %p109
      %p111 = scmp.ne.s32.totalorder %s99, %s100
      %p112 = scmp.eq.s32.totalorder %s27, 1
      %p113 = por %p111, %p112
      %p115 = scmp.ne.s32.totalorder %s100, %s114
      %p116 = scmp.eq.s32.totalorder %s27, 0
      %p117 = por %p115, %p116
      %s119 = sadd.s32 %s118, 1
      %p122 = scmp.eq.s32.totalorder %s21, 1
      %p123 = scmp.ne.s32.totalorder %s118, %s120
      %p124 = scmp.eq.s32.totalorder %s21, 0
      %p125 = por %p123, %p124
      %p126 = scmp.ne.s32.totalorder %s118, %s120
      %p127 = scmp.eq.s32.totalorder %s26, 1
      %p128 = por %p126, %p127
      %p129 = scmp.ne.s32.totalorder %s120, %s121
      %p130 = scmp.eq.s32.totalorder %s26, 0
      %p131 = por %p129, %p130
      %p132 = scmp.ne.s32.totalorder %s120, %s121
      %p133 = scmp.eq.s32.totalorder %s27, 1
      %p134 = por %p132, %p133
      %p136 = scmp.ne.s32.totalorder %s121, %s135
      %p137 = scmp.eq.s32.totalorder %s27, 0
      %p138 = por %p136, %p137
      %s140 = sadd.s32 %s139, 1
      %p143 = scmp.eq.s32.totalorder %s21, 1
      %p144 = scmp.ne.s32.totalorder %s139, %s141
      %p145 = scmp.eq.s32.totalorder %s21, 0
      %p146 = por %p144, %p145
      %p147 = scmp.ne.s32.totalorder %s139, %s141
      %p148 = scmp.eq.s32.totalorder %s26, 1
      %p149 = por %p147, %p148
      %p150 = scmp.ne.s32.totalorder %s141, %s142
      %p151 = scmp.eq.s32.totalorder %s26, 0
      %p152 = por %p150, %p151
      %p153 = scmp.ne.s32.totalorder %s141, %s142
      %p154 = scmp.eq.s32.totalorder %s27, 1
      %p155 = por %p153, %p154
      %p157 = scmp.ne.s32.totalorder %s142, %s156
      %p158 = scmp.eq.s32.totalorder %s27, 0
      %p159 = por %p157, %p158
      %s161 = sadd.s32 %s160, 1
      %p164 = scmp.eq.s32.totalorder %s21, 1
      %p165 = scmp.ne.s32.totalorder %s160, %s162
      %p166 = scmp.eq.s32.totalorder %s21, 0
      %p167 = por %p165, %p166
      %p168 = scmp.ne.s32.totalorder %s160, %s162
      %p169 = scmp.eq.s32.totalorder %s26, 1
      %p170 = por %p168, %p169
      %p171 = scmp.ne.s32.totalorder %s162, %s163
      %p172 = scmp.eq.s32.totalorder %s26, 0
      %p173 = por %p171, %p172
      %p174 = scmp.ne.s32.totalorder %s162, %s163
      %p175 = scmp.eq.s32.totalorder %s27, 1
      %p176 = por %p174, %p175
      %p178 = scmp.ne.s32.totalorder %s163, %s177
      %p179 = scmp.eq.s32.totalorder %s27, 0
      %p180 = por %p178, %p179
      %s182 = sadd.s32 %s181, 1
      %p185 = scmp.eq.s32.totalorder %s21, 1
      %p186 = scmp.ne.s32.totalorder %s181, %s183
      %p187 = scmp.eq.s32.totalorder %s21, 0
      %p188 = por %p186, %p187
      %p189 = scmp.ne.s32.totalorder %s181, %s183
      %p190 = scmp.eq.s32.totalorder %s26, 1
      %p191 = por %p189, %p190
      %p192 = scmp.ne.s32.totalorder %s183, %s184
      %p193 = scmp.eq.s32.totalorder %s26, 0
      %p194 = por %p192, %p193
      %p195 = scmp.ne.s32.totalorder %s183, %s184
      %p196 = scmp.eq.s32.totalorder %s27, 1
      %p197 = por %p195, %p196
      %p199 = scmp.ne.s32.totalorder %s184, %s198
      %p200 = scmp.eq.s32.totalorder %s27, 0
      %p201 = por %p199, %p200
      %s203 = sadd.s32 %s202, 1
      %p206 = scmp.eq.s32.totalorder %s21, 1
      %p207 = scmp.ne.s32.totalorder %s202, %s204
      %p208 = scmp.eq.s32.totalorder %s21, 0
      %p209 = por %p207, %p208
      %p210 = scmp.ne.s32.totalorder %s202, %s204
      %p211 = scmp.eq.s32.totalorder %s26, 1
      %p212 = por %p210, %p211
      %p213 = scmp.ne.s32.totalorder %s204, %s205
      %p214 = scmp.eq.s32.totalorder %s26, 0
      %p215 = por %p213, %p214
      %p216 = scmp.ne.s32.totalorder %s204, %s205
      %p217 = scmp.eq.s32.totalorder %s27, 1
      %p218 = por %p216, %p217
      %p220 = scmp.ne.s32.totalorder %s205, %s219
      %p221 = scmp.eq.s32.totalorder %s27, 0
      %p222 = por %p220, %p221
      %s224 = sadd.s32 %s223, 1
      %p227 = scmp.eq.s32.totalorder %s21, 1
      %p228 = scmp.ne.s32.totalorder %s223, %s225
      %p229 = scmp.eq.s32.totalorder %s21, 0
      %p230 = por %p228, %p229
      %p231 = scmp.ne.s32.totalorder %s223, %s225
      %p232 = scmp.eq.s32.totalorder %s26, 1
      %p233 = por %p231, %p232
      %p234 = scmp.ne.s32.totalorder %s225, %s226
      %p235 = scmp.eq.s32.totalorder %s26, 0
      %p236 = por %p234, %p235
      %p237 = scmp.ne.s32.totalorder %s225, %s226
      %p238 = scmp.eq.s32.totalorder %s27, 1
      %p239 = por %p237, %p238
      %p241 = scmp.ne.s32.totalorder %s226, %s240
      %p242 = scmp.eq.s32.totalorder %s27, 0
      %p243 = por %p241, %p242
      %s245 = sadd.s32 %s244, 1
      %p248 = scmp.eq.s32.totalorder %s21, 1
      %p249 = scmp.ne.s32.totalorder %s244, %s246
      %p250 = scmp.eq.s32.totalorder %s21, 0
      %p251 = por %p249, %p250
      %p252 = scmp.ne.s32.totalorder %s244, %s246
      %p253 = scmp.eq.s32.totalorder %s26, 1
      %p254 = por %p252, %p253
      %p255 = scmp.ne.s32.totalorder %s246, %s247
      %p256 = scmp.eq.s32.totalorder %s26, 0
      %p257 = por %p255, %p256
      %p258 = scmp.ne.s32.totalorder %s246, %s247
      %p259 = scmp.eq.s32.totalorder %s27, 1
      %p260 = por %p258, %p259
      %p262 = scmp.ne.s32.totalorder %s247, %s261
      %p263 = scmp.eq.s32.totalorder %s27, 0
      %p264 = por %p262, %p263
      %s265 = ssub.s32 %s21, %s28
      %p266 = scmp.eq.s32.totalorder %s265, 0
      %s268 = sadd.s32 %s267, 1
      %s269 = scalar_select %p266, %s267, %s268
      %p272 = pneg %p266
      %p273 = scmp.eq.s32.totalorder %s21, 1
      %p274 = por %p272, %p273
      %p275 = scmp.ne.s32.totalorder %s267, %s270
      %p276 = scmp.eq.s32.totalorder %s21, 0
      %p277 = por %p275, %p276
      %p278 = scmp.ne.s32.totalorder %s267, %s270
      %p279 = scmp.eq.s32.totalorder %s26, 1
      %p280 = por %p278, %p279
      %p281 = scmp.ne.s32.totalorder %s270, %s271
      %p282 = scmp.eq.s32.totalorder %s26, 0
      %p283 = por %p281, %p282
      %p284 = scmp.ne.s32.totalorder %s270, %s271
      %p285 = scmp.eq.s32.totalorder %s27, 1
      %p286 = por %p284, %p285
      %p288 = scmp.ne.s32.totalorder %s271, %s287
      %p289 = scmp.eq.s32.totalorder %s27, 0
      %p290 = por %p288, %p289
      %p291 = scmp.le.s32.totalorder 1, %s21
      %p292 = scmp.lt.s32.totalorder %s21, 3
      %p293 = pnand %p291, %p292
      %p294 = pneg %p293
      // Predicated region
      $region9: #{_mlp_forward_padded.1} parent=5 // pred_check
        _
      $region10: #{_mlp_forward_padded.1} parent=5 // pred_check_branch
        %296 = sbr.rel (%p293) target = $region12
      $region11: #{_mlp_forward_padded.1} parent=5 // pred_region
        %s297 = ssub.s32 %s21, 1
        // Predicated region
        $region13: #{_mlp_forward_padded.1} parent=11 // pred_check
          %p298 = pneg %p68
        $region14: #{_mlp_forward_padded.1} parent=11 // pred_check_branch
          %300 = sbr.rel (%p298) target = $region16
        $region15: #{_mlp_forward_padded.1} parent=11 // pred_region
          _
        $region16: #{_mlp_forward_padded.1} parent=11 // pred_fallthru
          _
        // Predicated region
        $region17: #{_mlp_forward_padded.1} parent=11 // pred_check
          %p301 = pneg %p89
        $region18: #{_mlp_forward_padded.1} parent=11 // pred_check_branch
          %303 = sbr.rel (%p301) target = $region20
        $region19: #{_mlp_forward_padded.1} parent=11 // pred_region
          _
        $region20: #{_mlp_forward_padded.1} parent=11 // pred_fallthru
          _
        // Predicated region
        $region21: #{_mlp_forward_padded.1} parent=11 // pred_check
          %p304 = pneg %p110
        $region22: #{_mlp_forward_padded.1} parent=11 // pred_check_branch
          %306 = sbr.rel (%p304) target = $region24
        $region23: #{_mlp_forward_padded.1} parent=11 // pred_region
          %s308 = ssub.s32 32768, 32768
          %309 = vsyncadd [#allocation3], %s308
          %s310 = sshll.u32 [#allocation2], 4
          %s311 = int_to_ptr.vmem [resolvable:$true] %s310
          %316 = dma.hbm_to_vmem [thread:$0]  %s3, 32768, %s311, [#allocation3], 256, 256, 16
        $region24: #{_mlp_forward_padded.1} parent=11 // pred_fallthru
          _
        // Predicated region
        $region25: #{_mlp_forward_padded.1} parent=11 // pred_check
          %p317 = pneg %p131
        $region26: #{_mlp_forward_padded.1} parent=11 // pred_check_branch
          %319 = sbr.rel (%p317) target = $region28
        $region27: #{_mlp_forward_padded.1} parent=11 // pred_region
          _
        $region28: #{_mlp_forward_padded.1} parent=11 // pred_fallthru
          _
        // Predicated region
        $region29: #{_mlp_forward_padded.1} parent=11 // pred_check
          %p320 = pneg %p152
        $region30: #{_mlp_forward_padded.1} parent=11 // pred_check_branch
          %322 = sbr.rel (%p320) target = $region32
        $region31: #{_mlp_forward_padded.1} parent=11 // pred_region
          _
        $region32: #{_mlp_forward_padded.1} parent=11 // pred_fallthru
          _
        // Predicated region
        $region33: #{_mlp_forward_padded.1} parent=11 // pred_check
          %p323 = pneg %p173
        $region34: #{_mlp_forward_padded.1} parent=11 // pred_check_branch
          %325 = sbr.rel (%p323) target = $region36
        $region35: #{_mlp_forward_padded.1} parent=11 // pred_region
          _
        $region36: #{_mlp_forward_padded.1} parent=11 // pred_fallthru
          _
        // Predicated region
        $region37: #{_mlp_forward_padded.1} parent=11 // pred_check
          %p326 = pneg %p194
        $region38: #{_mlp_forward_padded.1} parent=11 // pred_check_branch
          %328 = sbr.rel (%p326) target = $region40
        $region39: #{_mlp_forward_padded.1} parent=11 // pred_region
          _
        $region40: #{_mlp_forward_padded.1} parent=11 // pred_fallthru
          _
        // Predicated region
        $region41: #{_mlp_forward_padded.1} parent=11 // pred_check
          %p329 = pneg %p215
        $region42: #{_mlp_forward_padded.1} parent=11 // pred_check_branch
          %331 = sbr.rel (%p329) target = $region44
        $region43: #{_mlp_forward_padded.1} parent=11 // pred_region
          _
        $region44: #{_mlp_forward_padded.1} parent=11 // pred_fallthru
          _
        // Predicated region
        $region45: #{_mlp_forward_padded.1} parent=11 // pred_check
          %p332 = pneg %p236
        $region46: #{_mlp_forward_padded.1} parent=11 // pred_check_branch
          %334 = sbr.rel (%p332) target = $region48
        $region47: #{_mlp_forward_padded.1} parent=11 // pred_region
          _
        $region48: #{_mlp_forward_padded.1} parent=11 // pred_fallthru
          _
        // Predicated region
        $region49: #{_mlp_forward_padded.1} parent=11 // pred_check
          %p335 = pneg %p257
        $region50: #{_mlp_forward_padded.1} parent=11 // pred_check_branch
          %337 = sbr.rel (%p335) target = $region52
        $region51: #{_mlp_forward_padded.1} parent=11 // pred_region
          _
        $region52: #{_mlp_forward_padded.1} parent=11 // pred_fallthru
          _
      $region12: #{_mlp_forward_padded.1} parent=5 // pred_fallthru
        _
      %p338 = scmp.lt.s32.totalorder %s21, 2
      // Predicated region
      $region53: #{_mlp_forward_padded.1} parent=5 // pred_check
        %p339 = pneg %p338
      $region54: #{_mlp_forward_padded.1} parent=5 // pred_check_branch
        %341 = sbr.rel (%p339) target = $region56
      $region55: #{_mlp_forward_padded.1} parent=5 // pred_region
        // Predicated region
        $region57: #{_mlp_forward_padded.1} parent=55 // pred_check
          %p342 = pneg %p41
        $region58: #{_mlp_forward_padded.1} parent=55 // pred_check_branch
          %344 = sbr.rel (%p342) target = $region60
        $region59: #{_mlp_forward_padded.1} parent=55 // pred_region
          %p345 = scmp.lt.s32.totalorder %s21, 1
          %s346 = scalar_select %p345, %s21, 1
          %s347 = smul.addr %s346, 4
          %s348 = scalar_lea.vmem %s0, %s347
        $region60: #{_mlp_forward_padded.1} parent=55 // pred_fallthru
          _
      $region56: #{_mlp_forward_padded.1} parent=5 // pred_fallthru
        _
      %p349 = scmp.le.s32.totalorder 1, %s21
      %p350 = scmp.lt.s32.totalorder %s21, 3
      %p351 = pnand %p349, %p350
      %p352 = pneg %p351
      // Predicated region
      $region61: #{_mlp_forward_padded.1} parent=5 // pred_check
        _
      $region62: #{_mlp_forward_padded.1} parent=5 // pred_check_branch
        %354 = sbr.rel (%p351) target = $region64
      $region63: #{_mlp_forward_padded.1} parent=5 // pred_region
        %s355 = ssub.s32 %s21, 1
        // Predicated region
        $region65: #{_mlp_forward_padded.1} parent=63 // pred_check
          %p356 = pneg %p110
        $region66: #{_mlp_forward_padded.1} parent=63 // pred_check_branch
          %358 = sbr.rel (%p356) target = $region68
        $region67: #{_mlp_forward_padded.1} parent=63 // pred_region
          %359 = dma.done [#allocation3], 32768
        $region68: #{_mlp_forward_padded.1} parent=63 // pred_fallthru
          _
        %p360 = scmp.lt.s32.totalorder %s26, 1
        %s361 = scalar_select %p360, %s26, 1
        %s362 = smul.addr %s361, 4
        %s363 = scalar_lea.vmem %s0, %s362
        %p364 = pneg %p47
        %p365 = pneg %p44
        %p366 = pneg %p68
        %p367 = pneg %p65
        %p368 = pneg %p89
        %p369 = pneg %p86
        %p370 = pneg %p110
        %p371 = pneg %p107
        %p372 = pneg %p131
        %p373 = pneg %p128
        %p374 = pneg %p152
        %p375 = pneg %p149
        %p376 = pneg %p173
        %p377 = pneg %p170
        %p378 = pneg %p194
        %p379 = pneg %p191
        %p380 = pneg %p215
        %p381 = pneg %p212
        %p382 = pneg %p236
        %p383 = pneg %p233
        %p384 = pneg %p257
        %p385 = pneg %p254
        %p386 = pneg %p283
        %p387 = pneg %p280
        %s388 = sand.u32 %s270, 1
        %s389 = scalar_lea.sflag [#allocation4], %s388
        %s390 = sand.u32 %s270, 1
        %s391 = smul.addr %s390, 8
        %s392 = scalar_lea.vmem [#allocation5], %s391
        %p393 = scmp.lt.s32.totalorder %s26, 1
        %s394 = scalar_select %p393, %s26, 1
        %s395 = smul.addr %s394, 4
        %s396 = scalar_lea.vmem %s0, %s395
        %v398 = vld [vmem:[%s396] sm:$0xf]
        %v399 = vld [vmem:[%s1] sm:$0xff]
        %v400 = vld [vmem:[%s1 + $0x8] sm:$0xff]
        %v401 = vld [vmem:[%s1 + $0x10] sm:$0xff]
        %v402 = vld [vmem:[%s1 + $0x18] sm:$0xff]
        %v403 = vld [vmem:[%s1 + $0x20] sm:$0xff]
        %v404 = vld [vmem:[%s1 + $0x28] sm:$0xff]
        %v405 = vld [vmem:[%s1 + $0x30] sm:$0xff]
        %v406 = vld [vmem:[%s1 + $0x38] sm:$0xff]
        %v407 = vld [vmem:[%s1 + $0x40] sm:$0xff]
        %v408 = vld [vmem:[%s1 + $0x48] sm:$0xff]
        %v409 = vld [vmem:[%s1 + $0x50] sm:$0xff]
        %v410 = vld [vmem:[%s1 + $0x58] sm:$0xff]
        %v411 = vld [vmem:[%s1 + $0x60] sm:$0xff]
        %v412 = vld [vmem:[%s1 + $0x68] sm:$0xff]
        %v413 = vld [vmem:[%s1 + $0x70] sm:$0xff]
        %v414 = vld [vmem:[%s1 + $0x78] sm:$0xff]
        %v415 = vld [vmem:[%s1 + $0x80] sm:$0xff]
        %v416 = vld [vmem:[%s1 + $0x88] sm:$0xff]
        %v417 = vld [vmem:[%s1 + $0x90] sm:$0xff]
        %v418 = vld [vmem:[%s1 + $0x98] sm:$0xff]
        %v419 = vld [vmem:[%s1 + $0xa0] sm:$0xff]
        %v420 = vld [vmem:[%s1 + $0xa8] sm:$0xff]
        %v421 = vld [vmem:[%s1 + $0xb0] sm:$0xff]
        %v422 = vld [vmem:[%s1 + $0xb8] sm:$0xff]
        %v423 = vld [vmem:[%s1 + $0xc0] sm:$0xff]
        %v424 = vld [vmem:[%s1 + $0xc8] sm:$0xff]
        %v425 = vld [vmem:[%s1 + $0xd0] sm:$0xff]
        %v426 = vld [vmem:[%s1 + $0xd8] sm:$0xff]
        %v427 = vld [vmem:[%s1 + $0xe0] sm:$0xff]
        %v428 = vld [vmem:[%s1 + $0xe8] sm:$0xff]
        %v429 = vld [vmem:[%s1 + $0xf0] sm:$0xff]
        %v430 = vld [vmem:[%s1 + $0xf8] sm:$0xff]
        %v431 = vld [vmem:[%s1 + $0x100] sm:$0xff]
        %v432 = vld [vmem:[%s1 + $0x108] sm:$0xff]
        %v433 = vld [vmem:[%s1 + $0x110] sm:$0xff]
        %v434 = vld [vmem:[%s1 + $0x118] sm:$0xff]
        %v435 = vld [vmem:[%s1 + $0x120] sm:$0xff]
        %v436 = vld [vmem:[%s1 + $0x128] sm:$0xff]
        %v437 = vld [vmem:[%s1 + $0x130] sm:$0xff]
        %v438 = vld [vmem:[%s1 + $0x138] sm:$0xff]
        %v439 = vld [vmem:[%s1 + $0x140] sm:$0xff]
        %v440 = vld [vmem:[%s1 + $0x148] sm:$0xff]
        %v441 = vld [vmem:[%s1 + $0x150] sm:$0xff]
        %v442 = vld [vmem:[%s1 + $0x158] sm:$0xff]
        %v443 = vld [vmem:[%s1 + $0x160] sm:$0xff]
        %v444 = vld [vmem:[%s1 + $0x168] sm:$0xff]
        %v445 = vld [vmem:[%s1 + $0x170] sm:$0xff]
        %v446 = vld [vmem:[%s1 + $0x178] sm:$0xff]
        %v447 = vld [vmem:[%s1 + $0x180] sm:$0xff]
        %v448 = vld [vmem:[%s1 + $0x188] sm:$0xff]
        %v449 = vld [vmem:[%s1 + $0x190] sm:$0xff]
        %v450 = vld [vmem:[%s1 + $0x198] sm:$0xff]
        %v451 = vld [vmem:[%s1 + $0x1a0] sm:$0xff]
        %v452 = vld [vmem:[%s1 + $0x1a8] sm:$0xff]
        %v453 = vld [vmem:[%s1 + $0x1b0] sm:$0xff]
        %v454 = vld [vmem:[%s1 + $0x1b8] sm:$0xff]
        %v455 = vld [vmem:[%s1 + $0x1c0] sm:$0xff]
        %v456 = vld [vmem:[%s1 + $0x1c8] sm:$0xff]
        %v457 = vld [vmem:[%s1 + $0x1d0] sm:$0xff]
        %v458 = vld [vmem:[%s1 + $0x1d8] sm:$0xff]
        %v459 = vld [vmem:[%s1 + $0x1e0] sm:$0xff]
        %v460 = vld [vmem:[%s1 + $0x1e8] sm:$0xff]
        %v461 = vld [vmem:[%s1 + $0x1f0] sm:$0xff]
        %v462 = vld [vmem:[%s1 + $0x1f8] sm:$0xff]
        %v463 = vld [vmem:[%s2] sm:$0xff]
        %v465 = vlaneseq
        %v466 = vshrl.u32 %v465, 7
        %v467 = vsub.s32 0, %v466
        %v468 = vrot.slane %v463, %v467
        %v469 = vlaneseq
        %v470 = vshrl.u32 %v469, 7
        %v471 = vsub.s32 1, %v470
        %v472 = vrot.slane %v463, %v471
        %v473 = vlaneseq
        %v474 = vshrl.u32 %v473, 7
        %v475 = vsub.s32 2, %v474
        %v476 = vrot.slane %v463, %v475
        %v477 = vlaneseq
        %v478 = vshrl.u32 %v477, 7
        %v479 = vsub.s32 3, %v478
        %v480 = vrot.slane %v463, %v479
        %v481 = vlaneseq
        %v482 = vshrl.u32 %v481, 7
        %v483 = vsub.s32 4, %v482
        %v484 = vrot.slane %v463, %v483
        %v485 = vlaneseq
        %v486 = vshrl.u32 %v485, 7
        %v487 = vsub.s32 5, %v486
        %v488 = vrot.slane %v463, %v487
        %v489 = vlaneseq
        %v490 = vshrl.u32 %v489, 7
        %v491 = vsub.s32 6, %v490
        %v492 = vrot.slane %v463, %v491
        %v493 = vlaneseq
        %v494 = vshrl.u32 %v493, 7
        %v495 = vsub.s32 7, %v494
        %v496 = vrot.slane %v463, %v495
        %v569 = vunpack.c.l.b16 %v399
        %v570 = vunpack.c.h.b16 %v399
        %v571 = vunpack.c.l.b16 %v400
        %v572 = vunpack.c.h.b16 %v400
        %v573 = vunpack.c.l.b16 %v401
        %v574 = vunpack.c.h.b16 %v401
        %v575 = vunpack.c.l.b16 %v402
        %v576 = vunpack.c.h.b16 %v402
        %v577 = vunpack.c.l.b16 %v403
        %v578 = vunpack.c.h.b16 %v403
        %v579 = vunpack.c.l.b16 %v404
        %v580 = vunpack.c.h.b16 %v404
        %v581 = vunpack.c.l.b16 %v405
        %v582 = vunpack.c.h.b16 %v405
        %v583 = vunpack.c.l.b16 %v406
        %v584 = vunpack.c.h.b16 %v406
        %v585 = vunpack.c.l.b16 %v407
        %v586 = vunpack.c.h.b16 %v407
        %v587 = vunpack.c.l.b16 %v408
        %v588 = vunpack.c.h.b16 %v408
        %v589 = vunpack.c.l.b16 %v409
        %v590 = vunpack.c.h.b16 %v409
        %v591 = vunpack.c.l.b16 %v410
        %v592 = vunpack.c.h.b16 %v410
        %v593 = vunpack.c.l.b16 %v411
        %v594 = vunpack.c.h.b16 %v411
        %v595 = vunpack.c.l.b16 %v412
        %v596 = vunpack.c.h.b16 %v412
        %v597 = vunpack.c.l.b16 %v413
        %v598 = vunpack.c.h.b16 %v413
        %v599 = vunpack.c.l.b16 %v414
        %v600 = vunpack.c.h.b16 %v414
        %v601 = vunpack.c.l.b16 %v415
        %v602 = vunpack.c.h.b16 %v415
        %v603 = vunpack.c.l.b16 %v416
        %v604 = vunpack.c.h.b16 %v416
        %v605 = vunpack.c.l.b16 %v417
        %v606 = vunpack.c.h.b16 %v417
        %v607 = vunpack.c.l.b16 %v418
        %v608 = vunpack.c.h.b16 %v418
        %v609 = vunpack.c.l.b16 %v419
        %v610 = vunpack.c.h.b16 %v419
        %v611 = vunpack.c.l.b16 %v420
        %v612 = vunpack.c.h.b16 %v420
        %v613 = vunpack.c.l.b16 %v421
        %v614 = vunpack.c.h.b16 %v421
        %v615 = vunpack.c.l.b16 %v422
        %v616 = vunpack.c.h.b16 %v422
        %v617 = vunpack.c.l.b16 %v423
        %v618 = vunpack.c.h.b16 %v423
        %v619 = vunpack.c.l.b16 %v424
        %v620 = vunpack.c.h.b16 %v424
        %v621 = vunpack.c.l.b16 %v425
        %v622 = vunpack.c.h.b16 %v425
        %v623 = vunpack.c.l.b16 %v426
        %v624 = vunpack.c.h.b16 %v426
        %v625 = vunpack.c.l.b16 %v427
        %v626 = vunpack.c.h.b16 %v427
        %v627 = vunpack.c.l.b16 %v428
        %v628 = vunpack.c.h.b16 %v428
        %v629 = vunpack.c.l.b16 %v429
        %v630 = vunpack.c.h.b16 %v429
        %v631 = vunpack.c.l.b16 %v430
        %v632 = vunpack.c.h.b16 %v430
        %v633 = vunpack.c.l.b16 %v431
        %v634 = vunpack.c.h.b16 %v431
        %v635 = vunpack.c.l.b16 %v432
        %v636 = vunpack.c.h.b16 %v432
        %v637 = vunpack.c.l.b16 %v433
        %v638 = vunpack.c.h.b16 %v433
        %v639 = vunpack.c.l.b16 %v434
        %v640 = vunpack.c.h.b16 %v434
        %v641 = vunpack.c.l.b16 %v435
        %v642 = vunpack.c.h.b16 %v435
        %v643 = vunpack.c.l.b16 %v436
        %v644 = vunpack.c.h.b16 %v436
        %v645 = vunpack.c.l.b16 %v437
        %v646 = vunpack.c.h.b16 %v437
        %v647 = vunpack.c.l.b16 %v438
        %v648 = vunpack.c.h.b16 %v438
        %v649 = vunpack.c.l.b16 %v439
        %v650 = vunpack.c.h.b16 %v439
        %v651 = vunpack.c.l.b16 %v440
        %v652 = vunpack.c.h.b16 %v440
        %v653 = vunpack.c.l.b16 %v441
        %v654 = vunpack.c.h.b16 %v441
        %v655 = vunpack.c.l.b16 %v442
        %v656 = vunpack.c.h.b16 %v442
        %v657 = vunpack.c.l.b16 %v443
        %v658 = vunpack.c.h.b16 %v443
        %v659 = vunpack.c.l.b16 %v444
        %v660 = vunpack.c.h.b16 %v444
        %v661 = vunpack.c.l.b16 %v445
        %v662 = vunpack.c.h.b16 %v445
        %v663 = vunpack.c.l.b16 %v446
        %v664 = vunpack.c.h.b16 %v446
        %v665 = vunpack.c.l.b16 %v447
        %v666 = vunpack.c.h.b16 %v447
        %v667 = vunpack.c.l.b16 %v448
        %v668 = vunpack.c.h.b16 %v448
        %v669 = vunpack.c.l.b16 %v449
        %v670 = vunpack.c.h.b16 %v449
        %v671 = vunpack.c.l.b16 %v450
        %v672 = vunpack.c.h.b16 %v450
        %v673 = vunpack.c.l.b16 %v451
        %v674 = vunpack.c.h.b16 %v451
        %v675 = vunpack.c.l.b16 %v452
        %v676 = vunpack.c.h.b16 %v452
        %v677 = vunpack.c.l.b16 %v453
        %v678 = vunpack.c.h.b16 %v453
        %v679 = vunpack.c.l.b16 %v454
        %v680 = vunpack.c.h.b16 %v454
        %v681 = vunpack.c.l.b16 %v455
        %v682 = vunpack.c.h.b16 %v455
        %v683 = vunpack.c.l.b16 %v456
        %v684 = vunpack.c.h.b16 %v456
        %v685 = vunpack.c.l.b16 %v457
        %v686 = vunpack.c.h.b16 %v457
        %v687 = vunpack.c.l.b16 %v458
        %v688 = vunpack.c.h.b16 %v458
        %v689 = vunpack.c.l.b16 %v459
        %v690 = vunpack.c.h.b16 %v459
        %v691 = vunpack.c.l.b16 %v460
        %v692 = vunpack.c.h.b16 %v460
        %v693 = vunpack.c.l.b16 %v461
        %v694 = vunpack.c.h.b16 %v461
        %v695 = vunpack.c.l.b16 %v462
        %v696 = vunpack.c.h.b16 %v462
        %v697 = vpack.c.b16 %v577, %v569
        %v698 = vpack.c.b16 %v578, %v570
        %v699 = vpack.c.b16 %v579, %v571
        %v700 = vpack.c.b16 %v580, %v572
        %v701 = vpack.c.b16 %v581, %v573
        %v702 = vpack.c.b16 %v582, %v574
        %v703 = vpack.c.b16 %v583, %v575
        %v704 = vpack.c.b16 %v584, %v576
        %v705 = vpack.c.b16 %v593, %v585
        %v706 = vpack.c.b16 %v594, %v586
        %v707 = vpack.c.b16 %v595, %v587
        %v708 = vpack.c.b16 %v596, %v588
        %v709 = vpack.c.b16 %v597, %v589
        %v710 = vpack.c.b16 %v598, %v590
        %v711 = vpack.c.b16 %v599, %v591
        %v712 = vpack.c.b16 %v600, %v592
        %v713 = vpack.c.b16 %v609, %v601
        %v714 = vpack.c.b16 %v610, %v602
        %v715 = vpack.c.b16 %v611, %v603
        %v716 = vpack.c.b16 %v612, %v604
        %v717 = vpack.c.b16 %v613, %v605
        %v718 = vpack.c.b16 %v614, %v606
        %v719 = vpack.c.b16 %v615, %v607
        %v720 = vpack.c.b16 %v616, %v608
        %v721 = vpack.c.b16 %v625, %v617
        %v722 = vpack.c.b16 %v626, %v618
        %v723 = vpack.c.b16 %v627, %v619
        %v724 = vpack.c.b16 %v628, %v620
        %v725 = vpack.c.b16 %v629, %v621
        %v726 = vpack.c.b16 %v630, %v622
        %v727 = vpack.c.b16 %v631, %v623
        %v728 = vpack.c.b16 %v632, %v624
        %v729 = vpack.c.b16 %v641, %v633
        %v730 = vpack.c.b16 %v642, %v634
        %v731 = vpack.c.b16 %v643, %v635
        %v732 = vpack.c.b16 %v644, %v636
        %v733 = vpack.c.b16 %v645, %v637
        %v734 = vpack.c.b16 %v646, %v638
        %v735 = vpack.c.b16 %v647, %v639
        %v736 = vpack.c.b16 %v648, %v640
        %v737 = vpack.c.b16 %v657, %v649
        %v738 = vpack.c.b16 %v658, %v650
        %v739 = vpack.c.b16 %v659, %v651
        %v740 = vpack.c.b16 %v660, %v652
        %v741 = vpack.c.b16 %v661, %v653
        %v742 = vpack.c.b16 %v662, %v654
        %v743 = vpack.c.b16 %v663, %v655
        %v744 = vpack.c.b16 %v664, %v656
        %v745 = vpack.c.b16 %v673, %v665
        %v746 = vpack.c.b16 %v674, %v666
        %v747 = vpack.c.b16 %v675, %v667
        %v748 = vpack.c.b16 %v676, %v668
        %v749 = vpack.c.b16 %v677, %v669
        %v750 = vpack.c.b16 %v678, %v670
        %v751 = vpack.c.b16 %v679, %v671
        %v752 = vpack.c.b16 %v680, %v672
        %v753 = vpack.c.b16 %v689, %v681
        %v754 = vpack.c.b16 %v690, %v682
        %v755 = vpack.c.b16 %v691, %v683
        %v756 = vpack.c.b16 %v692, %v684
        %v757 = vpack.c.b16 %v693, %v685
        %v758 = vpack.c.b16 %v694, %v686
        %v759 = vpack.c.b16 %v695, %v687
        %v760 = vpack.c.b16 %v696, %v688
        %825 = vmatprep.subr.bf16.mxu0 %v754
        %826 = vmatpush1.bf16.msra.mxu0 %v753
        %827 = vmatprep.subr.bf16.mxu0 %v746
        %828 = vmatpush1.bf16.msra.mxu0 %v745
        %829 = vmatprep.subr.bf16.mxu0 %v738
        %830 = vmatpush1.bf16.msra.mxu0 %v737
        %831 = vmatprep.subr.bf16.mxu0 %v730
        %832 = vmatpush1.bf16.msra.mxu0 %v729
        %833 = vmatprep.subr.bf16.mxu0 %v722
        %834 = vmatpush1.bf16.msra.mxu0 %v721
        %835 = vmatprep.subr.bf16.mxu0 %v714
        %836 = vmatpush1.bf16.msra.mxu0 %v713
        %837 = vmatprep.subr.bf16.mxu0 %v706
        %838 = vmatpush1.bf16.msra.mxu0 %v705
        %839 = vmatprep.subr.bf16.mxu0 %v698
        %840 = vmatpush1.bf16.msra.mxu0 %v697
        %841 = vmatprep.subr.bf16.mxu0 0
        %842 = vmatpush2.bf16.msra.mxu0 0
        %843 = vmatprep.subr.bf16.mxu0 0
        %844 = vmatpush2.bf16.msra.mxu0 0
        %845 = vmatprep.subr.bf16.mxu0 0
        %846 = vmatpush2.bf16.msra.mxu0 0
        %847 = vmatprep.subr.bf16.mxu0 0
        %848 = vmatpush2.bf16.msra.mxu0 0
        %849 = vmatprep.subr.bf16.mxu0 0
        %850 = vmatpush2.bf16.msra.mxu0 0
        %851 = vmatprep.subr.bf16.mxu0 0
        %852 = vmatpush2.bf16.msra.mxu0 0
        %853 = vmatprep.subr.bf16.mxu0 0
        %854 = vmatpush2.bf16.msra.mxu0 0
        %855 = vmatprep.subr.bf16.mxu0 0
        %856 = vmatpush2.bf16.msra.mxu0 0
        %857 = vmatprep.mubr.bf16.mxu0 0
        %858 = vmatmul.mubr.bf16.gmra.mxu0 %v398
        %v859 = vpop.f32.mrf.mxu0
        %v860 = vadd.f32 %v468, %v859
        %v861 = vpop.f32.mrf.mxu0
        %v862 = vadd.f32 %v472, %v861
        %v863 = vpop.f32.mrf.mxu0
        %v864 = vpop.f32.mrf.mxu0
        %865 = vdwg.mxu0
        %866 = vmatprep.subr.bf16.mxu0 %v756
        %867 = vmatpush1.bf16.msra.mxu0 %v755
        %868 = vmatprep.subr.bf16.mxu0 %v748
        %869 = vmatpush1.bf16.msra.mxu0 %v747
        %870 = vmatprep.subr.bf16.mxu0 %v740
        %871 = vmatpush1.bf16.msra.mxu0 %v739
        %872 = vmatprep.subr.bf16.mxu0 %v732
        %873 = vmatpush1.bf16.msra.mxu0 %v731
        %874 = vmatprep.subr.bf16.mxu0 %v724
        %875 = vmatpush1.bf16.msra.mxu0 %v723
        %876 = vmatprep.subr.bf16.mxu0 %v716
        %877 = vmatpush1.bf16.msra.mxu0 %v715
        %878 = vmatprep.subr.bf16.mxu0 %v708
        %879 = vmatpush1.bf16.msra.mxu0 %v707
        %880 = vmatprep.subr.bf16.mxu0 %v700
        %881 = vmatpush1.bf16.msra.mxu0 %v699
        %882 = vmatprep.subr.bf16.mxu0 0
        %883 = vmatpush2.bf16.msra.mxu0 0
        %884 = vmatprep.subr.bf16.mxu0 0
        %885 = vmatpush2.bf16.msra.mxu0 0
        %886 = vmatprep.subr.bf16.mxu0 0
        %887 = vmatpush2.bf16.msra.mxu0 0
        %888 = vmatprep.subr.bf16.mxu0 0
        %889 = vmatpush2.bf16.msra.mxu0 0
        %890 = vmatprep.subr.bf16.mxu0 0
        %891 = vmatpush2.bf16.msra.mxu0 0
        %892 = vmatprep.subr.bf16.mxu0 0
        %893 = vmatpush2.bf16.msra.mxu0 0
        %894 = vmatprep.subr.bf16.mxu0 0
        %895 = vmatpush2.bf16.msra.mxu0 0
        %896 = vmatprep.subr.bf16.mxu0 0
        %897 = vmatpush2.bf16.msra.mxu0 0
        %898 = vmatprep.mubr.bf16.mxu0 0
        %899 = vmatmul.mubr.bf16.gmra.mxu0 %v398
        %v900 = vpop.f32.mrf.mxu0
        %v901 = vadd.f32 %v476, %v900
        %v902 = vpop.f32.mrf.mxu0
        %v903 = vadd.f32 %v480, %v902
        %v904 = vpop.f32.mrf.mxu0
        %v905 = vpop.f32.mrf.mxu0
        %906 = vdwg.mxu0
        %907 = vmatprep.subr.bf16.mxu0 %v758
        %908 = vmatpush1.bf16.msra.mxu0 %v757
        %909 = vmatprep.subr.bf16.mxu0 %v750
        %910 = vmatpush1.bf16.msra.mxu0 %v749
        %911 = vmatprep.subr.bf16.mxu0 %v742
        %912 = vmatpush1.bf16.msra.mxu0 %v741
        %913 = vmatprep.subr.bf16.mxu0 %v734
        %914 = vmatpush1.bf16.msra.mxu0 %v733
        %915 = vmatprep.subr.bf16.mxu0 %v726
        %916 = vmatpush1.bf16.msra.mxu0 %v725
        %917 = vmatprep.subr.bf16.mxu0 %v718
        %918 = vmatpush1.bf16.msra.mxu0 %v717
        %919 = vmatprep.subr.bf16.mxu0 %v710
        %920 = vmatpush1.bf16.msra.mxu0 %v709
        %921 = vmatprep.subr.bf16.mxu0 %v702
        %922 = vmatpush1.bf16.msra.mxu0 %v701
        %923 = vmatprep.subr.bf16.mxu0 0
        %924 = vmatpush2.bf16.msra.mxu0 0
        %925 = vmatprep.subr.bf16.mxu0 0
        %926 = vmatpush2.bf16.msra.mxu0 0
        %927 = vmatprep.subr.bf16.mxu0 0
        %928 = vmatpush2.bf16.msra.mxu0 0
        %929 = vmatprep.subr.bf16.mxu0 0
        %930 = vmatpush2.bf16.msra.mxu0 0
        %931 = vmatprep.subr.bf16.mxu0 0
        %932 = vmatpush2.bf16.msra.mxu0 0
        %933 = vmatprep.subr.bf16.mxu0 0
        %934 = vmatpush2.bf16.msra.mxu0 0
        %935 = vmatprep.subr.bf16.mxu0 0
        %936 = vmatpush2.bf16.msra.mxu0 0
        %937 = vmatprep.subr.bf16.mxu0 0
        %938 = vmatpush2.bf16.msra.mxu0 0
        %939 = vmatprep.mubr.bf16.mxu0 0
        %940 = vmatmul.mubr.bf16.gmra.mxu0 %v398
        %v941 = vpop.f32.mrf.mxu0
        %v942 = vadd.f32 %v484, %v941
        %v943 = vpop.f32.mrf.mxu0
        %v944 = vadd.f32 %v488, %v943
        %v945 = vpop.f32.mrf.mxu0
        %v946 = vpop.f32.mrf.mxu0
        %947 = vdwg.mxu0
        %948 = vmatprep.subr.bf16.mxu0 %v760
        %949 = vmatpush1.bf16.msra.mxu0 %v759
        %950 = vmatprep.subr.bf16.mxu0 %v752
        %951 = vmatpush1.bf16.msra.mxu0 %v751
        %952 = vmatprep.subr.bf16.mxu0 %v744
        %953 = vmatpush1.bf16.msra.mxu0 %v743
        %954 = vmatprep.subr.bf16.mxu0 %v736
        %955 = vmatpush1.bf16.msra.mxu0 %v735
        %956 = vmatprep.subr.bf16.mxu0 %v728
        %957 = vmatpush1.bf16.msra.mxu0 %v727
        %958 = vmatprep.subr.bf16.mxu0 %v720
        %959 = vmatpush1.bf16.msra.mxu0 %v719
        %960 = vmatprep.subr.bf16.mxu0 %v712
        %961 = vmatpush1.bf16.msra.mxu0 %v711
        %962 = vmatprep.subr.bf16.mxu0 %v704
        %963 = vmatpush1.bf16.msra.mxu0 %v703
        %964 = vmatprep.subr.bf16.mxu0 0
        %965 = vmatpush2.bf16.msra.mxu0 0
        %966 = vmatprep.subr.bf16.mxu0 0
        %967 = vmatpush2.bf16.msra.mxu0 0
        %968 = vmatprep.subr.bf16.mxu0 0
        %969 = vmatpush2.bf16.msra.mxu0 0
        %970 = vmatprep.subr.bf16.mxu0 0
        %971 = vmatpush2.bf16.msra.mxu0 0
        %972 = vmatprep.subr.bf16.mxu0 0
        %973 = vmatpush2.bf16.msra.mxu0 0
        %974 = vmatprep.subr.bf16.mxu0 0
        %975 = vmatpush2.bf16.msra.mxu0 0
        %976 = vmatprep.subr.bf16.mxu0 0
        %977 = vmatpush2.bf16.msra.mxu0 0
        %978 = vmatprep.subr.bf16.mxu0 0
        %979 = vmatpush2.bf16.msra.mxu0 0
        %980 = vmatprep.mubr.bf16.mxu0 0
        %981 = vmatmul.mubr.bf16.gmra.mxu0 %v398
        %v982 = vpop.f32.mrf.mxu0
        %v983 = vadd.f32 %v492, %v982
        %v984 = vpop.f32.mrf.mxu0
        %v985 = vadd.f32 %v496, %v984
        %v986 = vpop.f32.mrf.mxu0
        %v987 = vpop.f32.mrf.mxu0
        %988 = vdwg.mxu0
        %v989 = vmax.f32 %v860, 0.0
        %v990 = vmax.f32 %v862, 0.0
        %v991 = vmax.f32 %v901, 0.0
        %v992 = vmax.f32 %v903, 0.0
        %v993 = vmax.f32 %v942, 0.0
        %v994 = vmax.f32 %v944, 0.0
        %v995 = vmax.f32 %v983, 0.0
        %v996 = vmax.f32 %v985, 0.0
        %v997 = vpack.c.bf16 %v989, %v989
        %v998 = vpack.c.bf16 %v990, %v990
        %v999 = vpack.c.bf16 %v991, %v991
        %v1000 = vpack.c.bf16 %v992, %v992
        %v1001 = vpack.c.bf16 %v993, %v993
        %v1002 = vpack.c.bf16 %v994, %v994
        %v1003 = vpack.c.bf16 %v995, %v995
        %v1004 = vpack.c.bf16 %v996, %v996
        %v1005 = vld [vmem:[#allocation2] sm:$0xff]
        %v1006 = vld [vmem:[#allocation2 + $0x8] sm:$0xff]
        %v1007 = vld [vmem:[#allocation2 + $0x10] sm:$0xff]
        %v1008 = vld [vmem:[#allocation2 + $0x18] sm:$0xff]
        %v1009 = vld [vmem:[#allocation2 + $0x20] sm:$0xff]
        %v1010 = vld [vmem:[#allocation2 + $0x28] sm:$0xff]
        %v1011 = vld [vmem:[#allocation2 + $0x30] sm:$0xff]
        %v1012 = vld [vmem:[#allocation2 + $0x38] sm:$0xff]
        %v1013 = vld [vmem:[#allocation2 + $0x40] sm:$0xff]
        %v1014 = vld [vmem:[#allocation2 + $0x48] sm:$0xff]
        %v1015 = vld [vmem:[#allocation2 + $0x50] sm:$0xff]
        %v1016 = vld [vmem:[#allocation2 + $0x58] sm:$0xff]
        %v1017 = vld [vmem:[#allocation2 + $0x60] sm:$0xff]
        %v1018 = vld [vmem:[#allocation2 + $0x68] sm:$0xff]
        %v1019 = vld [vmem:[#allocation2 + $0x70] sm:$0xff]
        %v1020 = vld [vmem:[#allocation2 + $0x78] sm:$0xff]
        %v1021 = vld [vmem:[#allocation2 + $0x80] sm:$0xff]
        %v1022 = vld [vmem:[#allocation2 + $0x88] sm:$0xff]
        %v1023 = vld [vmem:[#allocation2 + $0x90] sm:$0xff]
        %v1024 = vld [vmem:[#allocation2 + $0x98] sm:$0xff]
        %v1025 = vld [vmem:[#allocation2 + $0xa0] sm:$0xff]
        %v1026 = vld [vmem:[#allocation2 + $0xa8] sm:$0xff]
        %v1027 = vld [vmem:[#allocation2 + $0xb0] sm:$0xff]
        %v1028 = vld [vmem:[#allocation2 + $0xb8] sm:$0xff]
        %v1029 = vld [vmem:[#allocation2 + $0xc0] sm:$0xff]
        %v1030 = vld [vmem:[#allocation2 + $0xc8] sm:$0xff]
        %v1031 = vld [vmem:[#allocation2 + $0xd0] sm:$0xff]
        %v1032 = vld [vmem:[#allocation2 + $0xd8] sm:$0xff]
        %v1033 = vld [vmem:[#allocation2 + $0xe0] sm:$0xff]
        %v1034 = vld [vmem:[#allocation2 + $0xe8] sm:$0xff]
        %v1035 = vld [vmem:[#allocation2 + $0xf0] sm:$0xff]
        %v1036 = vld [vmem:[#allocation2 + $0xf8] sm:$0xff]
        %v1037 = vld [vmem:[#allocation2 + $0x100] sm:$0xff]
        %v1038 = vld [vmem:[#allocation2 + $0x108] sm:$0xff]
        %v1039 = vld [vmem:[#allocation2 + $0x110] sm:$0xff]
        %v1040 = vld [vmem:[#allocation2 + $0x118] sm:$0xff]
        %v1041 = vld [vmem:[#allocation2 + $0x120] sm:$0xff]
        %v1042 = vld [vmem:[#allocation2 + $0x128] sm:$0xff]
        %v1043 = vld [vmem:[#allocation2 + $0x130] sm:$0xff]
        %v1044 = vld [vmem:[#allocation2 + $0x138] sm:$0xff]
        %v1045 = vld [vmem:[#allocation2 + $0x140] sm:$0xff]
        %v1046 = vld [vmem:[#allocation2 + $0x148] sm:$0xff]
        %v1047 = vld [vmem:[#allocation2 + $0x150] sm:$0xff]
        %v1048 = vld [vmem:[#allocation2 + $0x158] sm:$0xff]
        %v1049 = vld [vmem:[#allocation2 + $0x160] sm:$0xff]
        %v1050 = vld [vmem:[#allocation2 + $0x168] sm:$0xff]
        %v1051 = vld [vmem:[#allocation2 + $0x170] sm:$0xff]
        %v1052 = vld [vmem:[#allocation2 + $0x178] sm:$0xff]
        %v1053 = vld [vmem:[#allocation2 + $0x180] sm:$0xff]
        %v1054 = vld [vmem:[#allocation2 + $0x188] sm:$0xff]
        %v1055 = vld [vmem:[#allocation2 + $0x190] sm:$0xff]
        %v1056 = vld [vmem:[#allocation2 + $0x198] sm:$0xff]
        %v1057 = vld [vmem:[#allocation2 + $0x1a0] sm:$0xff]
        %v1058 = vld [vmem:[#allocation2 + $0x1a8] sm:$0xff]
        %v1059 = vld [vmem:[#allocation2 + $0x1b0] sm:$0xff]
        %v1060 = vld [vmem:[#allocation2 + $0x1b8] sm:$0xff]
        %v1061 = vld [vmem:[#allocation2 + $0x1c0] sm:$0xff]
        %v1062 = vld [vmem:[#allocation2 + $0x1c8] sm:$0xff]
        %v1063 = vld [vmem:[#allocation2 + $0x1d0] sm:$0xff]
        %v1064 = vld [vmem:[#allocation2 + $0x1d8] sm:$0xff]
        %v1065 = vld [vmem:[#allocation2 + $0x1e0] sm:$0xff]
        %v1066 = vld [vmem:[#allocation2 + $0x1e8] sm:$0xff]
        %v1067 = vld [vmem:[#allocation2 + $0x1f0] sm:$0xff]
        %v1068 = vld [vmem:[#allocation2 + $0x1f8] sm:$0xff]
        %v1069 = vld [vmem:[#allocation2 + $0x200] sm:$0xff]
        %v1070 = vld [vmem:[#allocation2 + $0x208] sm:$0xff]
        %v1071 = vld [vmem:[#allocation2 + $0x210] sm:$0xff]
        %v1072 = vld [vmem:[#allocation2 + $0x218] sm:$0xff]
        %v1073 = vld [vmem:[#allocation2 + $0x220] sm:$0xff]
        %v1074 = vld [vmem:[#allocation2 + $0x228] sm:$0xff]
        %v1075 = vld [vmem:[#allocation2 + $0x230] sm:$0xff]
        %v1076 = vld [vmem:[#allocation2 + $0x238] sm:$0xff]
        %v1077 = vld [vmem:[#allocation2 + $0x240] sm:$0xff]
        %v1078 = vld [vmem:[#allocation2 + $0x248] sm:$0xff]
        %v1079 = vld [vmem:[#allocation2 + $0x250] sm:$0xff]
        %v1080 = vld [vmem:[#allocation2 + $0x258] sm:$0xff]
        %v1081 = vld [vmem:[#allocation2 + $0x260] sm:$0xff]
        %v1082 = vld [vmem:[#allocation2 + $0x268] sm:$0xff]
        %v1083 = vld [vmem:[#allocation2 + $0x270] sm:$0xff]
        %v1084 = vld [vmem:[#allocation2 + $0x278] sm:$0xff]
        %v1085 = vld [vmem:[#allocation2 + $0x280] sm:$0xff]
        %v1086 = vld [vmem:[#allocation2 + $0x288] sm:$0xff]
        %v1087 = vld [vmem:[#allocation2 + $0x290] sm:$0xff]
        %v1088 = vld [vmem:[#allocation2 + $0x298] sm:$0xff]
        %v1089 = vld [vmem:[#allocation2 + $0x2a0] sm:$0xff]
        %v1090 = vld [vmem:[#allocation2 + $0x2a8] sm:$0xff]
        %v1091 = vld [vmem:[#allocation2 + $0x2b0] sm:$0xff]
        %v1092 = vld [vmem:[#allocation2 + $0x2b8] sm:$0xff]
        %v1093 = vld [vmem:[#allocation2 + $0x2c0] sm:$0xff]
        %v1094 = vld [vmem:[#allocation2 + $0x2c8] sm:$0xff]
        %v1095 = vld [vmem:[#allocation2 + $0x2d0] sm:$0xff]
        %v1096 = vld [vmem:[#allocation2 + $0x2d8] sm:$0xff]
        %v1097 = vld [vmem:[#allocation2 + $0x2e0] sm:$0xff]
        %v1098 = vld [vmem:[#allocation2 + $0x2e8] sm:$0xff]
        %v1099 = vld [vmem:[#allocation2 + $0x2f0] sm:$0xff]
        %v1100 = vld [vmem:[#allocation2 + $0x2f8] sm:$0xff]
        %v1101 = vld [vmem:[#allocation2 + $0x300] sm:$0xff]
        %v1102 = vld [vmem:[#allocation2 + $0x308] sm:$0xff]
        %v1103 = vld [vmem:[#allocation2 + $0x310] sm:$0xff]
        %v1104 = vld [vmem:[#allocation2 + $0x318] sm:$0xff]
        %v1105 = vld [vmem:[#allocation2 + $0x320] sm:$0xff]
        %v1106 = vld [vmem:[#allocation2 + $0x328] sm:$0xff]
        %v1107 = vld [vmem:[#allocation2 + $0x330] sm:$0xff]
        %v1108 = vld [vmem:[#allocation2 + $0x338] sm:$0xff]
        %v1109 = vld [vmem:[#allocation2 + $0x340] sm:$0xff]
        %v1110 = vld [vmem:[#allocation2 + $0x348] sm:$0xff]
        %v1111 = vld [vmem:[#allocation2 + $0x350] sm:$0xff]
        %v1112 = vld [vmem:[#allocation2 + $0x358] sm:$0xff]
        %v1113 = vld [vmem:[#allocation2 + $0x360] sm:$0xff]
        %v1114 = vld [vmem:[#allocation2 + $0x368] sm:$0xff]
        %v1115 = vld [vmem:[#allocation2 + $0x370] sm:$0xff]
        %v1116 = vld [vmem:[#allocation2 + $0x378] sm:$0xff]
        %v1117 = vld [vmem:[#allocation2 + $0x380] sm:$0xff]
        %v1118 = vld [vmem:[#allocation2 + $0x388] sm:$0xff]
        %v1119 = vld [vmem:[#allocation2 + $0x390] sm:$0xff]
        %v1120 = vld [vmem:[#allocation2 + $0x398] sm:$0xff]
        %v1121 = vld [vmem:[#allocation2 + $0x3a0] sm:$0xff]
        %v1122 = vld [vmem:[#allocation2 + $0x3a8] sm:$0xff]
        %v1123 = vld [vmem:[#allocation2 + $0x3b0] sm:$0xff]
        %v1124 = vld [vmem:[#allocation2 + $0x3b8] sm:$0xff]
        %v1125 = vld [vmem:[#allocation2 + $0x3c0] sm:$0xff]
        %v1126 = vld [vmem:[#allocation2 + $0x3c8] sm:$0xff]
        %v1127 = vld [vmem:[#allocation2 + $0x3d0] sm:$0xff]
        %v1128 = vld [vmem:[#allocation2 + $0x3d8] sm:$0xff]
        %v1129 = vld [vmem:[#allocation2 + $0x3e0] sm:$0xff]
        %v1130 = vld [vmem:[#allocation2 + $0x3e8] sm:$0xff]
        %v1131 = vld [vmem:[#allocation2 + $0x3f0] sm:$0xff]
        %v1132 = vld [vmem:[#allocation2 + $0x3f8] sm:$0xff]
        %v1133 = vld [vmem:[#allocation2 + $0x400] sm:$0xff]
        %v1134 = vld [vmem:[#allocation2 + $0x408] sm:$0xff]
        %v1135 = vld [vmem:[#allocation2 + $0x410] sm:$0xff]
        %v1136 = vld [vmem:[#allocation2 + $0x418] sm:$0xff]
        %v1137 = vld [vmem:[#allocation2 + $0x420] sm:$0xff]
        %v1138 = vld [vmem:[#allocation2 + $0x428] sm:$0xff]
        %v1139 = vld [vmem:[#allocation2 + $0x430] sm:$0xff]
        %v1140 = vld [vmem:[#allocation2 + $0x438] sm:$0xff]
        %v1141 = vld [vmem:[#allocation2 + $0x440] sm:$0xff]
        %v1142 = vld [vmem:[#allocation2 + $0x448] sm:$0xff]
        %v1143 = vld [vmem:[#allocation2 + $0x450] sm:$0xff]
        %v1144 = vld [vmem:[#allocation2 + $0x458] sm:$0xff]
        %v1145 = vld [vmem:[#allocation2 + $0x460] sm:$0xff]
        %v1146 = vld [vmem:[#allocation2 + $0x468] sm:$0xff]
        %v1147 = vld [vmem:[#allocation2 + $0x470] sm:$0xff]
        %v1148 = vld [vmem:[#allocation2 + $0x478] sm:$0xff]
        %v1149 = vld [vmem:[#allocation2 + $0x480] sm:$0xff]
        %v1150 = vld [vmem:[#allocation2 + $0x488] sm:$0xff]
        %v1151 = vld [vmem:[#allocation2 + $0x490] sm:$0xff]
        %v1152 = vld [vmem:[#allocation2 + $0x498] sm:$0xff]
        %v1153 = vld [vmem:[#allocation2 + $0x4a0] sm:$0xff]
        %v1154 = vld [vmem:[#allocation2 + $0x4a8] sm:$0xff]
        %v1155 = vld [vmem:[#allocation2 + $0x4b0] sm:$0xff]
        %v1156 = vld [vmem:[#allocation2 + $0x4b8] sm:$0xff]
        %v1157 = vld [vmem:[#allocation2 + $0x4c0] sm:$0xff]
        %v1158 = vld [vmem:[#allocation2 + $0x4c8] sm:$0xff]
        %v1159 = vld [vmem:[#allocation2 + $0x4d0] sm:$0xff]
        %v1160 = vld [vmem:[#allocation2 + $0x4d8] sm:$0xff]
        %v1161 = vld [vmem:[#allocation2 + $0x4e0] sm:$0xff]
        %v1162 = vld [vmem:[#allocation2 + $0x4e8] sm:$0xff]
        %v1163 = vld [vmem:[#allocation2 + $0x4f0] sm:$0xff]
        %v1164 = vld [vmem:[#allocation2 + $0x4f8] sm:$0xff]
        %v1165 = vld [vmem:[#allocation2 + $0x500] sm:$0xff]
        %v1166 = vld [vmem:[#allocation2 + $0x508] sm:$0xff]
        %v1167 = vld [vmem:[#allocation2 + $0x510] sm:$0xff]
        %v1168 = vld [vmem:[#allocation2 + $0x518] sm:$0xff]
        %v1169 = vld [vmem:[#allocation2 + $0x520] sm:$0xff]
        %v1170 = vld [vmem:[#allocation2 + $0x528] sm:$0xff]
        %v1171 = vld [vmem:[#allocation2 + $0x530] sm:$0xff]
        %v1172 = vld [vmem:[#allocation2 + $0x538] sm:$0xff]
        %v1173 = vld [vmem:[#allocation2 + $0x540] sm:$0xff]
        %v1174 = vld [vmem:[#allocation2 + $0x548] sm:$0xff]
        %v1175 = vld [vmem:[#allocation2 + $0x550] sm:$0xff]
        %v1176 = vld [vmem:[#allocation2 + $0x558] sm:$0xff]
        %v1177 = vld [vmem:[#allocation2 + $0x560] sm:$0xff]
        %v1178 = vld [vmem:[#allocation2 + $0x568] sm:$0xff]
        %v1179 = vld [vmem:[#allocation2 + $0x570] sm:$0xff]
        %v1180 = vld [vmem:[#allocation2 + $0x578] sm:$0xff]
        %v1181 = vld [vmem:[#allocation2 + $0x580] sm:$0xff]
        %v1182 = vld [vmem:[#allocation2 + $0x588] sm:$0xff]
        %v1183 = vld [vmem:[#allocation2 + $0x590] sm:$0xff]
        %v1184 = vld [vmem:[#allocation2 + $0x598] sm:$0xff]
        %v1185 = vld [vmem:[#allocation2 + $0x5a0] sm:$0xff]
        %v1186 = vld [vmem:[#allocation2 + $0x5a8] sm:$0xff]
        %v1187 = vld [vmem:[#allocation2 + $0x5b0] sm:$0xff]
        %v1188 = vld [vmem:[#allocation2 + $0x5b8] sm:$0xff]
        %v1189 = vld [vmem:[#allocation2 + $0x5c0] sm:$0xff]
        %v1190 = vld [vmem:[#allocation2 + $0x5c8] sm:$0xff]
        %v1191 = vld [vmem:[#allocation2 + $0x5d0] sm:$0xff]
        %v1192 = vld [vmem:[#allocation2 + $0x5d8] sm:$0xff]
        %v1193 = vld [vmem:[#allocation2 + $0x5e0] sm:$0xff]
        %v1194 = vld [vmem:[#allocation2 + $0x5e8] sm:$0xff]
        %v1195 = vld [vmem:[#allocation2 + $0x5f0] sm:$0xff]
        %v1196 = vld [vmem:[#allocation2 + $0x5f8] sm:$0xff]
        %v1197 = vld [vmem:[#allocation2 + $0x600] sm:$0xff]
        %v1198 = vld [vmem:[#allocation2 + $0x608] sm:$0xff]
        %v1199 = vld [vmem:[#allocation2 + $0x610] sm:$0xff]
        %v1200 = vld [vmem:[#allocation2 + $0x618] sm:$0xff]
        %v1201 = vld [vmem:[#allocation2 + $0x620] sm:$0xff]
        %v1202 = vld [vmem:[#allocation2 + $0x628] sm:$0xff]
        %v1203 = vld [vmem:[#allocation2 + $0x630] sm:$0xff]
        %v1204 = vld [vmem:[#allocation2 + $0x638] sm:$0xff]
        %v1205 = vld [vmem:[#allocation2 + $0x640] sm:$0xff]
        %v1206 = vld [vmem:[#allocation2 + $0x648] sm:$0xff]
        %v1207 = vld [vmem:[#allocation2 + $0x650] sm:$0xff]
        %v1208 = vld [vmem:[#allocation2 + $0x658] sm:$0xff]
        %v1209 = vld [vmem:[#allocation2 + $0x660] sm:$0xff]
        %v1210 = vld [vmem:[#allocation2 + $0x668] sm:$0xff]
        %v1211 = vld [vmem:[#allocation2 + $0x670] sm:$0xff]
        %v1212 = vld [vmem:[#allocation2 + $0x678] sm:$0xff]
        %v1213 = vld [vmem:[#allocation2 + $0x680] sm:$0xff]
        %v1214 = vld [vmem:[#allocation2 + $0x688] sm:$0xff]
        %v1215 = vld [vmem:[#allocation2 + $0x690] sm:$0xff]
        %v1216 = vld [vmem:[#allocation2 + $0x698] sm:$0xff]
        %v1217 = vld [vmem:[#allocation2 + $0x6a0] sm:$0xff]
        %v1218 = vld [vmem:[#allocation2 + $0x6a8] sm:$0xff]
        %v1219 = vld [vmem:[#allocation2 + $0x6b0] sm:$0xff]
        %v1220 = vld [vmem:[#allocation2 + $0x6b8] sm:$0xff]
        %v1221 = vld [vmem:[#allocation2 + $0x6c0] sm:$0xff]
        %v1222 = vld [vmem:[#allocation2 + $0x6c8] sm:$0xff]
        %v1223 = vld [vmem:[#allocation2 + $0x6d0] sm:$0xff]
        %v1224 = vld [vmem:[#allocation2 + $0x6d8] sm:$0xff]
        %v1225 = vld [vmem:[#allocation2 + $0x6e0] sm:$0xff]
        %v1226 = vld [vmem:[#allocation2 + $0x6e8] sm:$0xff]
        %v1227 = vld [vmem:[#allocation2 + $0x6f0] sm:$0xff]
        %v1228 = vld [vmem:[#allocation2 + $0x6f8] sm:$0xff]
        %v1229 = vld [vmem:[#allocation2 + $0x700] sm:$0xff]
        %v1230 = vld [vmem:[#allocation2 + $0x708] sm:$0xff]
        %v1231 = vld [vmem:[#allocation2 + $0x710] sm:$0xff]
        %v1232 = vld [vmem:[#allocation2 + $0x718] sm:$0xff]
        %v1233 = vld [vmem:[#allocation2 + $0x720] sm:$0xff]
        %v1234 = vld [vmem:[#allocation2 + $0x728] sm:$0xff]
        %v1235 = vld [vmem:[#allocation2 + $0x730] sm:$0xff]
        %v1236 = vld [vmem:[#allocation2 + $0x738] sm:$0xff]
        %v1237 = vld [vmem:[#allocation2 + $0x740] sm:$0xff]
        %v1238 = vld [vmem:[#allocation2 + $0x748] sm:$0xff]
        %v1239 = vld [vmem:[#allocation2 + $0x750] sm:$0xff]
        %v1240 = vld [vmem:[#allocation2 + $0x758] sm:$0xff]
        %v1241 = vld [vmem:[#allocation2 + $0x760] sm:$0xff]
        %v1242 = vld [vmem:[#allocation2 + $0x768] sm:$0xff]
        %v1243 = vld [vmem:[#allocation2 + $0x770] sm:$0xff]
        %v1244 = vld [vmem:[#allocation2 + $0x778] sm:$0xff]
        %v1245 = vld [vmem:[#allocation2 + $0x780] sm:$0xff]
        %v1246 = vld [vmem:[#allocation2 + $0x788] sm:$0xff]
        %v1247 = vld [vmem:[#allocation2 + $0x790] sm:$0xff]
        %v1248 = vld [vmem:[#allocation2 + $0x798] sm:$0xff]
        %v1249 = vld [vmem:[#allocation2 + $0x7a0] sm:$0xff]
        %v1250 = vld [vmem:[#allocation2 + $0x7a8] sm:$0xff]
        %v1251 = vld [vmem:[#allocation2 + $0x7b0] sm:$0xff]
        %v1252 = vld [vmem:[#allocation2 + $0x7b8] sm:$0xff]
        %v1253 = vld [vmem:[#allocation2 + $0x7c0] sm:$0xff]
        %v1254 = vld [vmem:[#allocation2 + $0x7c8] sm:$0xff]
        %v1255 = vld [vmem:[#allocation2 + $0x7d0] sm:$0xff]
        %v1256 = vld [vmem:[#allocation2 + $0x7d8] sm:$0xff]
        %v1257 = vld [vmem:[#allocation2 + $0x7e0] sm:$0xff]
        %v1258 = vld [vmem:[#allocation2 + $0x7e8] sm:$0xff]
        %v1259 = vld [vmem:[#allocation2 + $0x7f0] sm:$0xff]
        %v1260 = vld [vmem:[#allocation2 + $0x7f8] sm:$0xff]
        %v1261 = vld [vmem:[%s4] sm:$0xf]
        %v1263 = vlaneseq
        %v1264 = vshrl.u32 %v1263, 7
        %v1265 = vsub.s32 0, %v1264
        %v1266 = vrot.slane %v1261, %v1265
        %v1267 = vlaneseq
        %v1268 = vshrl.u32 %v1267, 7
        %v1269 = vsub.s32 1, %v1268
        %v1270 = vrot.slane %v1261, %v1269
        %v1271 = vlaneseq
        %v1272 = vshrl.u32 %v1271, 7
        %v1273 = vsub.s32 2, %v1272
        %v1274 = vrot.slane %v1261, %v1273
        %v1275 = vlaneseq
        %v1276 = vshrl.u32 %v1275, 7
        %v1277 = vsub.s32 3, %v1276
        %v1278 = vrot.slane %v1261, %v1277
        %v1539 = vunpack.c.l.b16 %v1005
        %v1540 = vunpack.c.h.b16 %v1005
        %v1541 = vunpack.c.l.b16 %v1006
        %v1542 = vunpack.c.h.b16 %v1006
        %v1543 = vunpack.c.l.b16 %v1007
        %v1544 = vunpack.c.h.b16 %v1007
        %v1545 = vunpack.c.l.b16 %v1008
        %v1546 = vunpack.c.h.b16 %v1008
        %v1547 = vunpack.c.l.b16 %v1009
        %v1548 = vunpack.c.h.b16 %v1009
        %v1549 = vunpack.c.l.b16 %v1010
        %v1550 = vunpack.c.h.b16 %v1010
        %v1551 = vunpack.c.l.b16 %v1011
        %v1552 = vunpack.c.h.b16 %v1011
        %v1553 = vunpack.c.l.b16 %v1012
        %v1554 = vunpack.c.h.b16 %v1012
        %v1555 = vunpack.c.l.b16 %v1013
        %v1556 = vunpack.c.h.b16 %v1013
        %v1557 = vunpack.c.l.b16 %v1014
        %v1558 = vunpack.c.h.b16 %v1014
        %v1559 = vunpack.c.l.b16 %v1015
        %v1560 = vunpack.c.h.b16 %v1015
        %v1561 = vunpack.c.l.b16 %v1016
        %v1562 = vunpack.c.h.b16 %v1016
        %v1563 = vunpack.c.l.b16 %v1017
        %v1564 = vunpack.c.h.b16 %v1017
        %v1565 = vunpack.c.l.b16 %v1018
        %v1566 = vunpack.c.h.b16 %v1018
        %v1567 = vunpack.c.l.b16 %v1019
        %v1568 = vunpack.c.h.b16 %v1019
        %v1569 = vunpack.c.l.b16 %v1020
        %v1570 = vunpack.c.h.b16 %v1020
        %v1571 = vunpack.c.l.b16 %v1021
        %v1572 = vunpack.c.h.b16 %v1021
        %v1573 = vunpack.c.l.b16 %v1022
        %v1574 = vunpack.c.h.b16 %v1022
        %v1575 = vunpack.c.l.b16 %v1023
        %v1576 = vunpack.c.h.b16 %v1023
        %v1577 = vunpack.c.l.b16 %v1024
        %v1578 = vunpack.c.h.b16 %v1024
        %v1579 = vunpack.c.l.b16 %v1025
        %v1580 = vunpack.c.h.b16 %v1025
        %v1581 = vunpack.c.l.b16 %v1026
        %v1582 = vunpack.c.h.b16 %v1026
        %v1583 = vunpack.c.l.b16 %v1027
        %v1584 = vunpack.c.h.b16 %v1027
        %v1585 = vunpack.c.l.b16 %v1028
        %v1586 = vunpack.c.h.b16 %v1028
        %v1587 = vunpack.c.l.b16 %v1029
        %v1588 = vunpack.c.h.b16 %v1029
        %v1589 = vunpack.c.l.b16 %v1030
        %v1590 = vunpack.c.h.b16 %v1030
        %v1591 = vunpack.c.l.b16 %v1031
        %v1592 = vunpack.c.h.b16 %v1031
        %v1593 = vunpack.c.l.b16 %v1032
        %v1594 = vunpack.c.h.b16 %v1032
        %v1595 = vunpack.c.l.b16 %v1033
        %v1596 = vunpack.c.h.b16 %v1033
        %v1597 = vunpack.c.l.b16 %v1034
        %v1598 = vunpack.c.h.b16 %v1034
        %v1599 = vunpack.c.l.b16 %v1035
        %v1600 = vunpack.c.h.b16 %v1035
        %v1601 = vunpack.c.l.b16 %v1036
        %v1602 = vunpack.c.h.b16 %v1036
        %v1603 = vunpack.c.l.b16 %v1037
        %v1604 = vunpack.c.h.b16 %v1037
        %v1605 = vunpack.c.l.b16 %v1038
        %v1606 = vunpack.c.h.b16 %v1038
        %v1607 = vunpack.c.l.b16 %v1039
        %v1608 = vunpack.c.h.b16 %v1039
        %v1609 = vunpack.c.l.b16 %v1040
        %v1610 = vunpack.c.h.b16 %v1040
        %v1611 = vunpack.c.l.b16 %v1041
        %v1612 = vunpack.c.h.b16 %v1041
        %v1613 = vunpack.c.l.b16 %v1042
        %v1614 = vunpack.c.h.b16 %v1042
        %v1615 = vunpack.c.l.b16 %v1043
        %v1616 = vunpack.c.h.b16 %v1043
        %v1617 = vunpack.c.l.b16 %v1044
        %v1618 = vunpack.c.h.b16 %v1044
        %v1619 = vunpack.c.l.b16 %v1045
        %v1620 = vunpack.c.h.b16 %v1045
        %v1621 = vunpack.c.l.b16 %v1046
        %v1622 = vunpack.c.h.b16 %v1046
        %v1623 = vunpack.c.l.b16 %v1047
        %v1624 = vunpack.c.h.b16 %v1047
        %v1625 = vunpack.c.l.b16 %v1048
        %v1626 = vunpack.c.h.b16 %v1048
        %v1627 = vunpack.c.l.b16 %v1049
        %v1628 = vunpack.c.h.b16 %v1049
        %v1629 = vunpack.c.l.b16 %v1050
        %v1630 = vunpack.c.h.b16 %v1050
        %v1631 = vunpack.c.l.b16 %v1051
        %v1632 = vunpack.c.h.b16 %v1051
        %v1633 = vunpack.c.l.b16 %v1052
        %v1634 = vunpack.c.h.b16 %v1052
        %v1635 = vunpack.c.l.b16 %v1053
        %v1636 = vunpack.c.h.b16 %v1053
        %v1637 = vunpack.c.l.b16 %v1054
        %v1638 = vunpack.c.h.b16 %v1054
        %v1639 = vunpack.c.l.b16 %v1055
        %v1640 = vunpack.c.h.b16 %v1055
        %v1641 = vunpack.c.l.b16 %v1056
        %v1642 = vunpack.c.h.b16 %v1056
        %v1643 = vunpack.c.l.b16 %v1057
        %v1644 = vunpack.c.h.b16 %v1057
        %v1645 = vunpack.c.l.b16 %v1058
        %v1646 = vunpack.c.h.b16 %v1058
        %v1647 = vunpack.c.l.b16 %v1059
        %v1648 = vunpack.c.h.b16 %v1059
        %v1649 = vunpack.c.l.b16 %v1060
        %v1650 = vunpack.c.h.b16 %v1060
        %v1651 = vunpack.c.l.b16 %v1061
        %v1652 = vunpack.c.h.b16 %v1061
        %v1653 = vunpack.c.l.b16 %v1062
        %v1654 = vunpack.c.h.b16 %v1062
        %v1655 = vunpack.c.l.b16 %v1063
        %v1656 = vunpack.c.h.b16 %v1063
        %v1657 = vunpack.c.l.b16 %v1064
        %v1658 = vunpack.c.h.b16 %v1064
        %v1659 = vunpack.c.l.b16 %v1065
        %v1660 = vunpack.c.h.b16 %v1065
        %v1661 = vunpack.c.l.b16 %v1066
        %v1662 = vunpack.c.h.b16 %v1066
        %v1663 = vunpack.c.l.b16 %v1067
        %v1664 = vunpack.c.h.b16 %v1067
        %v1665 = vunpack.c.l.b16 %v1068
        %v1666 = vunpack.c.h.b16 %v1068
        %v1667 = vunpack.c.l.b16 %v1069
        %v1668 = vunpack.c.h.b16 %v1069
        %v1669 = vunpack.c.l.b16 %v1070
        %v1670 = vunpack.c.h.b16 %v1070
        %v1671 = vunpack.c.l.b16 %v1071
        %v1672 = vunpack.c.h.b16 %v1071
        %v1673 = vunpack.c.l.b16 %v1072
        %v1674 = vunpack.c.h.b16 %v1072
        %v1675 = vunpack.c.l.b16 %v1073
        %v1676 = vunpack.c.h.b16 %v1073
        %v1677 = vunpack.c.l.b16 %v1074
        %v1678 = vunpack.c.h.b16 %v1074
        %v1679 = vunpack.c.l.b16 %v1075
        %v1680 = vunpack.c.h.b16 %v1075
        %v1681 = vunpack.c.l.b16 %v1076
        %v1682 = vunpack.c.h.b16 %v1076
        %v1683 = vunpack.c.l.b16 %v1077
        %v1684 = vunpack.c.h.b16 %v1077
        %v1685 = vunpack.c.l.b16 %v1078
        %v1686 = vunpack.c.h.b16 %v1078
        %v1687 = vunpack.c.l.b16 %v1079
        %v1688 = vunpack.c.h.b16 %v1079
        %v1689 = vunpack.c.l.b16 %v1080
        %v1690 = vunpack.c.h.b16 %v1080
        %v1691 = vunpack.c.l.b16 %v1081
        %v1692 = vunpack.c.h.b16 %v1081
        %v1693 = vunpack.c.l.b16 %v1082
        %v1694 = vunpack.c.h.b16 %v1082
        %v1695 = vunpack.c.l.b16 %v1083
        %v1696 = vunpack.c.h.b16 %v1083
        %v1697 = vunpack.c.l.b16 %v1084
        %v1698 = vunpack.c.h.b16 %v1084
        %v1699 = vunpack.c.l.b16 %v1085
        %v1700 = vunpack.c.h.b16 %v1085
        %v1701 = vunpack.c.l.b16 %v1086
        %v1702 = vunpack.c.h.b16 %v1086
        %v1703 = vunpack.c.l.b16 %v1087
        %v1704 = vunpack.c.h.b16 %v1087
        %v1705 = vunpack.c.l.b16 %v1088
        %v1706 = vunpack.c.h.b16 %v1088
        %v1707 = vunpack.c.l.b16 %v1089
        %v1708 = vunpack.c.h.b16 %v1089
        %v1709 = vunpack.c.l.b16 %v1090
        %v1710 = vunpack.c.h.b16 %v1090
        %v1711 = vunpack.c.l.b16 %v1091
        %v1712 = vunpack.c.h.b16 %v1091
        %v1713 = vunpack.c.l.b16 %v1092
        %v1714 = vunpack.c.h.b16 %v1092
        %v1715 = vunpack.c.l.b16 %v1093
        %v1716 = vunpack.c.h.b16 %v1093
        %v1717 = vunpack.c.l.b16 %v1094
        %v1718 = vunpack.c.h.b16 %v1094
        %v1719 = vunpack.c.l.b16 %v1095
        %v1720 = vunpack.c.h.b16 %v1095
        %v1721 = vunpack.c.l.b16 %v1096
        %v1722 = vunpack.c.h.b16 %v1096
        %v1723 = vunpack.c.l.b16 %v1097
        %v1724 = vunpack.c.h.b16 %v1097
        %v1725 = vunpack.c.l.b16 %v1098
        %v1726 = vunpack.c.h.b16 %v1098
        %v1727 = vunpack.c.l.b16 %v1099
        %v1728 = vunpack.c.h.b16 %v1099
        %v1729 = vunpack.c.l.b16 %v1100
        %v1730 = vunpack.c.h.b16 %v1100
        %v1731 = vunpack.c.l.b16 %v1101
        %v1732 = vunpack.c.h.b16 %v1101
        %v1733 = vunpack.c.l.b16 %v1102
        %v1734 = vunpack.c.h.b16 %v1102
        %v1735 = vunpack.c.l.b16 %v1103
        %v1736 = vunpack.c.h.b16 %v1103
        %v1737 = vunpack.c.l.b16 %v1104
        %v1738 = vunpack.c.h.b16 %v1104
        %v1739 = vunpack.c.l.b16 %v1105
        %v1740 = vunpack.c.h.b16 %v1105
        %v1741 = vunpack.c.l.b16 %v1106
        %v1742 = vunpack.c.h.b16 %v1106
        %v1743 = vunpack.c.l.b16 %v1107
        %v1744 = vunpack.c.h.b16 %v1107
        %v1745 = vunpack.c.l.b16 %v1108
        %v1746 = vunpack.c.h.b16 %v1108
        %v1747 = vunpack.c.l.b16 %v1109
        %v1748 = vunpack.c.h.b16 %v1109
        %v1749 = vunpack.c.l.b16 %v1110
        %v1750 = vunpack.c.h.b16 %v1110
        %v1751 = vunpack.c.l.b16 %v1111
        %v1752 = vunpack.c.h.b16 %v1111
        %v1753 = vunpack.c.l.b16 %v1112
        %v1754 = vunpack.c.h.b16 %v1112
        %v1755 = vunpack.c.l.b16 %v1113
        %v1756 = vunpack.c.h.b16 %v1113
        %v1757 = vunpack.c.l.b16 %v1114
        %v1758 = vunpack.c.h.b16 %v1114
        %v1759 = vunpack.c.l.b16 %v1115
        %v1760 = vunpack.c.h.b16 %v1115
        %v1761 = vunpack.c.l.b16 %v1116
        %v1762 = vunpack.c.h.b16 %v1116
        %v1763 = vunpack.c.l.b16 %v1117
        %v1764 = vunpack.c.h.b16 %v1117
        %v1765 = vunpack.c.l.b16 %v1118
        %v1766 = vunpack.c.h.b16 %v1118
        %v1767 = vunpack.c.l.b16 %v1119
        %v1768 = vunpack.c.h.b16 %v1119
        %v1769 = vunpack.c.l.b16 %v1120
        %v1770 = vunpack.c.h.b16 %v1120
        %v1771 = vunpack.c.l.b16 %v1121
        %v1772 = vunpack.c.h.b16 %v1121
        %v1773 = vunpack.c.l.b16 %v1122
        %v1774 = vunpack.c.h.b16 %v1122
        %v1775 = vunpack.c.l.b16 %v1123
        %v1776 = vunpack.c.h.b16 %v1123
        %v1777 = vunpack.c.l.b16 %v1124
        %v1778 = vunpack.c.h.b16 %v1124
        %v1779 = vunpack.c.l.b16 %v1125
        %v1780 = vunpack.c.h.b16 %v1125
        %v1781 = vunpack.c.l.b16 %v1126
        %v1782 = vunpack.c.h.b16 %v1126
        %v1783 = vunpack.c.l.b16 %v1127
        %v1784 = vunpack.c.h.b16 %v1127
        %v1785 = vunpack.c.l.b16 %v1128
        %v1786 = vunpack.c.h.b16 %v1128
        %v1787 = vunpack.c.l.b16 %v1129
        %v1788 = vunpack.c.h.b16 %v1129
        %v1789 = vunpack.c.l.b16 %v1130
        %v1790 = vunpack.c.h.b16 %v1130
        %v1791 = vunpack.c.l.b16 %v1131
        %v1792 = vunpack.c.h.b16 %v1131
        %v1793 = vunpack.c.l.b16 %v1132
        %v1794 = vunpack.c.h.b16 %v1132
        %v1795 = vunpack.c.l.b16 %v1133
        %v1796 = vunpack.c.h.b16 %v1133
        %v1797 = vunpack.c.l.b16 %v1134
        %v1798 = vunpack.c.h.b16 %v1134
        %v1799 = vunpack.c.l.b16 %v1135
        %v1800 = vunpack.c.h.b16 %v1135
        %v1801 = vunpack.c.l.b16 %v1136
        %v1802 = vunpack.c.h.b16 %v1136
        %v1803 = vunpack.c.l.b16 %v1137
        %v1804 = vunpack.c.h.b16 %v1137
        %v1805 = vunpack.c.l.b16 %v1138
        %v1806 = vunpack.c.h.b16 %v1138
        %v1807 = vunpack.c.l.b16 %v1139
        %v1808 = vunpack.c.h.b16 %v1139
        %v1809 = vunpack.c.l.b16 %v1140
        %v1810 = vunpack.c.h.b16 %v1140
        %v1811 = vunpack.c.l.b16 %v1141
        %v1812 = vunpack.c.h.b16 %v1141
        %v1813 = vunpack.c.l.b16 %v1142
        %v1814 = vunpack.c.h.b16 %v1142
        %v1815 = vunpack.c.l.b16 %v1143
        %v1816 = vunpack.c.h.b16 %v1143
        %v1817 = vunpack.c.l.b16 %v1144
        %v1818 = vunpack.c.h.b16 %v1144
        %v1819 = vunpack.c.l.b16 %v1145
        %v1820 = vunpack.c.h.b16 %v1145
        %v1821 = vunpack.c.l.b16 %v1146
        %v1822 = vunpack.c.h.b16 %v1146
        %v1823 = vunpack.c.l.b16 %v1147
        %v1824 = vunpack.c.h.b16 %v1147
        %v1825 = vunpack.c.l.b16 %v1148
        %v1826 = vunpack.c.h.b16 %v1148
        %v1827 = vunpack.c.l.b16 %v1149
        %v1828 = vunpack.c.h.b16 %v1149
        %v1829 = vunpack.c.l.b16 %v1150
        %v1830 = vunpack.c.h.b16 %v1150
        %v1831 = vunpack.c.l.b16 %v1151
        %v1832 = vunpack.c.h.b16 %v1151
        %v1833 = vunpack.c.l.b16 %v1152
        %v1834 = vunpack.c.h.b16 %v1152
        %v1835 = vunpack.c.l.b16 %v1153
        %v1836 = vunpack.c.h.b16 %v1153
        %v1837 = vunpack.c.l.b16 %v1154
        %v1838 = vunpack.c.h.b16 %v1154
        %v1839 = vunpack.c.l.b16 %v1155
        %v1840 = vunpack.c.h.b16 %v1155
        %v1841 = vunpack.c.l.b16 %v1156
        %v1842 = vunpack.c.h.b16 %v1156
        %v1843 = vunpack.c.l.b16 %v1157
        %v1844 = vunpack.c.h.b16 %v1157
        %v1845 = vunpack.c.l.b16 %v1158
        %v1846 = vunpack.c.h.b16 %v1158
        %v1847 = vunpack.c.l.b16 %v1159
        %v1848 = vunpack.c.h.b16 %v1159
        %v1849 = vunpack.c.l.b16 %v1160
        %v1850 = vunpack.c.h.b16 %v1160
        %v1851 = vunpack.c.l.b16 %v1161
        %v1852 = vunpack.c.h.b16 %v1161
        %v1853 = vunpack.c.l.b16 %v1162
        %v1854 = vunpack.c.h.b16 %v1162
        %v1855 = vunpack.c.l.b16 %v1163
        %v1856 = vunpack.c.h.b16 %v1163
        %v1857 = vunpack.c.l.b16 %v1164
        %v1858 = vunpack.c.h.b16 %v1164
        %v1859 = vunpack.c.l.b16 %v1165
        %v1860 = vunpack.c.h.b16 %v1165
        %v1861 = vunpack.c.l.b16 %v1166
        %v1862 = vunpack.c.h.b16 %v1166
        %v1863 = vunpack.c.l.b16 %v1167
        %v1864 = vunpack.c.h.b16 %v1167
        %v1865 = vunpack.c.l.b16 %v1168
        %v1866 = vunpack.c.h.b16 %v1168
        %v1867 = vunpack.c.l.b16 %v1169
        %v1868 = vunpack.c.h.b16 %v1169
        %v1869 = vunpack.c.l.b16 %v1170
        %v1870 = vunpack.c.h.b16 %v1170
        %v1871 = vunpack.c.l.b16 %v1171
        %v1872 = vunpack.c.h.b16 %v1171
        %v1873 = vunpack.c.l.b16 %v1172
        %v1874 = vunpack.c.h.b16 %v1172
        %v1875 = vunpack.c.l.b16 %v1173
        %v1876 = vunpack.c.h.b16 %v1173
        %v1877 = vunpack.c.l.b16 %v1174
        %v1878 = vunpack.c.h.b16 %v1174
        %v1879 = vunpack.c.l.b16 %v1175
        %v1880 = vunpack.c.h.b16 %v1175
        %v1881 = vunpack.c.l.b16 %v1176
        %v1882 = vunpack.c.h.b16 %v1176
        %v1883 = vunpack.c.l.b16 %v1177
        %v1884 = vunpack.c.h.b16 %v1177
        %v1885 = vunpack.c.l.b16 %v1178
        %v1886 = vunpack.c.h.b16 %v1178
        %v1887 = vunpack.c.l.b16 %v1179
        %v1888 = vunpack.c.h.b16 %v1179
        %v1889 = vunpack.c.l.b16 %v1180
        %v1890 = vunpack.c.h.b16 %v1180
        %v1891 = vunpack.c.l.b16 %v1181
        %v1892 = vunpack.c.h.b16 %v1181
        %v1893 = vunpack.c.l.b16 %v1182
        %v1894 = vunpack.c.h.b16 %v1182
        %v1895 = vunpack.c.l.b16 %v1183
        %v1896 = vunpack.c.h.b16 %v1183
        %v1897 = vunpack.c.l.b16 %v1184
        %v1898 = vunpack.c.h.b16 %v1184
        %v1899 = vunpack.c.l.b16 %v1185
        %v1900 = vunpack.c.h.b16 %v1185
        %v1901 = vunpack.c.l.b16 %v1186
        %v1902 = vunpack.c.h.b16 %v1186
        %v1903 = vunpack.c.l.b16 %v1187
        %v1904 = vunpack.c.h.b16 %v1187
        %v1905 = vunpack.c.l.b16 %v1188
        %v1906 = vunpack.c.h.b16 %v1188
        %v1907 = vunpack.c.l.b16 %v1189
        %v1908 = vunpack.c.h.b16 %v1189
        %v1909 = vunpack.c.l.b16 %v1190
        %v1910 = vunpack.c.h.b16 %v1190
        %v1911 = vunpack.c.l.b16 %v1191
        %v1912 = vunpack.c.h.b16 %v1191
        %v1913 = vunpack.c.l.b16 %v1192
        %v1914 = vunpack.c.h.b16 %v1192
        %v1915 = vunpack.c.l.b16 %v1193
        %v1916 = vunpack.c.h.b16 %v1193
        %v1917 = vunpack.c.l.b16 %v1194
        %v1918 = vunpack.c.h.b16 %v1194
        %v1919 = vunpack.c.l.b16 %v1195
        %v1920 = vunpack.c.h.b16 %v1195
        %v1921 = vunpack.c.l.b16 %v1196
        %v1922 = vunpack.c.h.b16 %v1196
        %v1923 = vunpack.c.l.b16 %v1197
        %v1924 = vunpack.c.h.b16 %v1197
        %v1925 = vunpack.c.l.b16 %v1198
        %v1926 = vunpack.c.h.b16 %v1198
        %v1927 = vunpack.c.l.b16 %v1199
        %v1928 = vunpack.c.h.b16 %v1199
        %v1929 = vunpack.c.l.b16 %v1200
        %v1930 = vunpack.c.h.b16 %v1200
        %v1931 = vunpack.c.l.b16 %v1201
        %v1932 = vunpack.c.h.b16 %v1201
        %v1933 = vunpack.c.l.b16 %v1202
        %v1934 = vunpack.c.h.b16 %v1202
        %v1935 = vunpack.c.l.b16 %v1203
        %v1936 = vunpack.c.h.b16 %v1203
        %v1937 = vunpack.c.l.b16 %v1204
        %v1938 = vunpack.c.h.b16 %v1204
        %v1939 = vunpack.c.l.b16 %v1205
        %v1940 = vunpack.c.h.b16 %v1205
        %v1941 = vunpack.c.l.b16 %v1206
        %v1942 = vunpack.c.h.b16 %v1206
        %v1943 = vunpack.c.l.b16 %v1207
        %v1944 = vunpack.c.h.b16 %v1207
        %v1945 = vunpack.c.l.b16 %v1208
        %v1946 = vunpack.c.h.b16 %v1208
        %v1947 = vunpack.c.l.b16 %v1209
        %v1948 = vunpack.c.h.b16 %v1209
        %v1949 = vunpack.c.l.b16 %v1210
        %v1950 = vunpack.c.h.b16 %v1210
        %v1951 = vunpack.c.l.b16 %v1211
        %v1952 = vunpack.c.h.b16 %v1211
        %v1953 = vunpack.c.l.b16 %v1212
        %v1954 = vunpack.c.h.b16 %v1212
        %v1955 = vunpack.c.l.b16 %v1213
        %v1956 = vunpack.c.h.b16 %v1213
        %v1957 = vunpack.c.l.b16 %v1214
        %v1958 = vunpack.c.h.b16 %v1214
        %v1959 = vunpack.c.l.b16 %v1215
        %v1960 = vunpack.c.h.b16 %v1215
        %v1961 = vunpack.c.l.b16 %v1216
        %v1962 = vunpack.c.h.b16 %v1216
        %v1963 = vunpack.c.l.b16 %v1217
        %v1964 = vunpack.c.h.b16 %v1217
        %v1965 = vunpack.c.l.b16 %v1218
        %v1966 = vunpack.c.h.b16 %v1218
        %v1967 = vunpack.c.l.b16 %v1219
        %v1968 = vunpack.c.h.b16 %v1219
        %v1969 = vunpack.c.l.b16 %v1220
        %v1970 = vunpack.c.h.b16 %v1220
        %v1971 = vunpack.c.l.b16 %v1221
        %v1972 = vunpack.c.h.b16 %v1221
        %v1973 = vunpack.c.l.b16 %v1222
        %v1974 = vunpack.c.h.b16 %v1222
        %v1975 = vunpack.c.l.b16 %v1223
        %v1976 = vunpack.c.h.b16 %v1223
        %v1977 = vunpack.c.l.b16 %v1224
        %v1978 = vunpack.c.h.b16 %v1224
        %v1979 = vunpack.c.l.b16 %v1225
        %v1980 = vunpack.c.h.b16 %v1225
        %v1981 = vunpack.c.l.b16 %v1226
        %v1982 = vunpack.c.h.b16 %v1226
        %v1983 = vunpack.c.l.b16 %v1227
        %v1984 = vunpack.c.h.b16 %v1227
        %v1985 = vunpack.c.l.b16 %v1228
        %v1986 = vunpack.c.h.b16 %v1228
        %v1987 = vunpack.c.l.b16 %v1229
        %v1988 = vunpack.c.h.b16 %v1229
        %v1989 = vunpack.c.l.b16 %v1230
        %v1990 = vunpack.c.h.b16 %v1230
        %v1991 = vunpack.c.l.b16 %v1231
        %v1992 = vunpack.c.h.b16 %v1231
        %v1993 = vunpack.c.l.b16 %v1232
        %v1994 = vunpack.c.h.b16 %v1232
        %v1995 = vunpack.c.l.b16 %v1233
        %v1996 = vunpack.c.h.b16 %v1233
        %v1997 = vunpack.c.l.b16 %v1234
        %v1998 = vunpack.c.h.b16 %v1234
        %v1999 = vunpack.c.l.b16 %v1235
        %v2000 = vunpack.c.h.b16 %v1235
        %v2001 = vunpack.c.l.b16 %v1236
        %v2002 = vunpack.c.h.b16 %v1236
        %v2003 = vunpack.c.l.b16 %v1237
        %v2004 = vunpack.c.h.b16 %v1237
        %v2005 = vunpack.c.l.b16 %v1238
        %v2006 = vunpack.c.h.b16 %v1238
        %v2007 = vunpack.c.l.b16 %v1239
        %v2008 = vunpack.c.h.b16 %v1239
        %v2009 = vunpack.c.l.b16 %v1240
        %v2010 = vunpack.c.h.b16 %v1240
        %v2011 = vunpack.c.l.b16 %v1241
        %v2012 = vunpack.c.h.b16 %v1241
        %v2013 = vunpack.c.l.b16 %v1242
        %v2014 = vunpack.c.h.b16 %v1242
        %v2015 = vunpack.c.l.b16 %v1243
        %v2016 = vunpack.c.h.b16 %v1243
        %v2017 = vunpack.c.l.b16 %v1244
        %v2018 = vunpack.c.h.b16 %v1244
        %v2019 = vunpack.c.l.b16 %v1245
        %v2020 = vunpack.c.h.b16 %v1245
        %v2021 = vunpack.c.l.b16 %v1246
        %v2022 = vunpack.c.h.b16 %v1246
        %v2023 = vunpack.c.l.b16 %v1247
        %v2024 = vunpack.c.h.b16 %v1247
        %v2025 = vunpack.c.l.b16 %v1248
        %v2026 = vunpack.c.h.b16 %v1248
        %v2027 = vunpack.c.l.b16 %v1249
        %v2028 = vunpack.c.h.b16 %v1249
        %v2029 = vunpack.c.l.b16 %v1250
        %v2030 = vunpack.c.h.b16 %v1250
        %v2031 = vunpack.c.l.b16 %v1251
        %v2032 = vunpack.c.h.b16 %v1251
        %v2033 = vunpack.c.l.b16 %v1252
        %v2034 = vunpack.c.h.b16 %v1252
        %v2035 = vunpack.c.l.b16 %v1253
        %v2036 = vunpack.c.h.b16 %v1253
        %v2037 = vunpack.c.l.b16 %v1254
        %v2038 = vunpack.c.h.b16 %v1254
        %v2039 = vunpack.c.l.b16 %v1255
        %v2040 = vunpack.c.h.b16 %v1255
        %v2041 = vunpack.c.l.b16 %v1256
        %v2042 = vunpack.c.h.b16 %v1256
        %v2043 = vunpack.c.l.b16 %v1257
        %v2044 = vunpack.c.h.b16 %v1257
        %v2045 = vunpack.c.l.b16 %v1258
        %v2046 = vunpack.c.h.b16 %v1258
        %v2047 = vunpack.c.l.b16 %v1259
        %v2048 = vunpack.c.h.b16 %v1259
        %v2049 = vunpack.c.l.b16 %v1260
        %v2050 = vunpack.c.h.b16 %v1260
        %v2051 = vpack.c.b16 %v1543, %v1539
        %v2052 = vpack.c.b16 %v1544, %v1540
        %v2053 = vpack.c.b16 %v1545, %v1541
        %v2054 = vpack.c.b16 %v1546, %v1542
        %v2055 = vpack.c.b16 %v1551, %v1547
        %v2056 = vpack.c.b16 %v1552, %v1548
        %v2057 = vpack.c.b16 %v1553, %v1549
        %v2058 = vpack.c.b16 %v1554, %v1550
        %v2059 = vpack.c.b16 %v1559, %v1555
        %v2060 = vpack.c.b16 %v1560, %v1556
        %v2061 = vpack.c.b16 %v1561, %v1557
        %v2062 = vpack.c.b16 %v1562, %v1558
        %v2063 = vpack.c.b16 %v1567, %v1563
        %v2064 = vpack.c.b16 %v1568, %v1564
        %v2065 = vpack.c.b16 %v1569, %v1565
        %v2066 = vpack.c.b16 %v1570, %v1566
        %v2067 = vpack.c.b16 %v1575, %v1571
        %v2068 = vpack.c.b16 %v1576, %v1572
        %v2069 = vpack.c.b16 %v1577, %v1573
        %v2070 = vpack.c.b16 %v1578, %v1574
        %v2071 = vpack.c.b16 %v1583, %v1579
        %v2072 = vpack.c.b16 %v1584, %v1580
        %v2073 = vpack.c.b16 %v1585, %v1581
        %v2074 = vpack.c.b16 %v1586, %v1582
        %v2075 = vpack.c.b16 %v1591, %v1587
        %v2076 = vpack.c.b16 %v1592, %v1588
        %v2077 = vpack.c.b16 %v1593, %v1589
        %v2078 = vpack.c.b16 %v1594, %v1590
        %v2079 = vpack.c.b16 %v1599, %v1595
        %v2080 = vpack.c.b16 %v1600, %v1596
        %v2081 = vpack.c.b16 %v1601, %v1597
        %v2082 = vpack.c.b16 %v1602, %v1598
        %v2083 = vpack.c.b16 %v1607, %v1603
        %v2084 = vpack.c.b16 %v1608, %v1604
        %v2085 = vpack.c.b16 %v1609, %v1605
        %v2086 = vpack.c.b16 %v1610, %v1606
        %v2087 = vpack.c.b16 %v1615, %v1611
        %v2088 = vpack.c.b16 %v1616, %v1612
        %v2089 = vpack.c.b16 %v1617, %v1613
        %v2090 = vpack.c.b16 %v1618, %v1614
        %v2091 = vpack.c.b16 %v1623, %v1619
        %v2092 = vpack.c.b16 %v1624, %v1620
        %v2093 = vpack.c.b16 %v1625, %v1621
        %v2094 = vpack.c.b16 %v1626, %v1622
        %v2095 = vpack.c.b16 %v1631, %v1627
        %v2096 = vpack.c.b16 %v1632, %v1628
        %v2097 = vpack.c.b16 %v1633, %v1629
        %v2098 = vpack.c.b16 %v1634, %v1630
        %v2099 = vpack.c.b16 %v1639, %v1635
        %v2100 = vpack.c.b16 %v1640, %v1636
        %v2101 = vpack.c.b16 %v1641, %v1637
        %v2102 = vpack.c.b16 %v1642, %v1638
        %v2103 = vpack.c.b16 %v1647, %v1643
        %v2104 = vpack.c.b16 %v1648, %v1644
        %v2105 = vpack.c.b16 %v1649, %v1645
        %v2106 = vpack.c.b16 %v1650, %v1646
        %v2107 = vpack.c.b16 %v1655, %v1651
        %v2108 = vpack.c.b16 %v1656, %v1652
        %v2109 = vpack.c.b16 %v1657, %v1653
        %v2110 = vpack.c.b16 %v1658, %v1654
        %v2111 = vpack.c.b16 %v1663, %v1659
        %v2112 = vpack.c.b16 %v1664, %v1660
        %v2113 = vpack.c.b16 %v1665, %v1661
        %v2114 = vpack.c.b16 %v1666, %v1662
        %v2115 = vpack.c.b16 %v1671, %v1667
        %v2116 = vpack.c.b16 %v1672, %v1668
        %v2117 = vpack.c.b16 %v1673, %v1669
        %v2118 = vpack.c.b16 %v1674, %v1670
        %v2119 = vpack.c.b16 %v1679, %v1675
        %v2120 = vpack.c.b16 %v1680, %v1676
        %v2121 = vpack.c.b16 %v1681, %v1677
        %v2122 = vpack.c.b16 %v1682, %v1678
        %v2123 = vpack.c.b16 %v1687, %v1683
        %v2124 = vpack.c.b16 %v1688, %v1684
        %v2125 = vpack.c.b16 %v1689, %v1685
        %v2126 = vpack.c.b16 %v1690, %v1686
        %v2127 = vpack.c.b16 %v1695, %v1691
        %v2128 = vpack.c.b16 %v1696, %v1692
        %v2129 = vpack.c.b16 %v1697, %v1693
        %v2130 = vpack.c.b16 %v1698, %v1694
        %v2131 = vpack.c.b16 %v1703, %v1699
        %v2132 = vpack.c.b16 %v1704, %v1700
        %v2133 = vpack.c.b16 %v1705, %v1701
        %v2134 = vpack.c.b16 %v1706, %v1702
        %v2135 = vpack.c.b16 %v1711, %v1707
        %v2136 = vpack.c.b16 %v1712, %v1708
        %v2137 = vpack.c.b16 %v1713, %v1709
        %v2138 = vpack.c.b16 %v1714, %v1710
        %v2139 = vpack.c.b16 %v1719, %v1715
        %v2140 = vpack.c.b16 %v1720, %v1716
        %v2141 = vpack.c.b16 %v1721, %v1717
        %v2142 = vpack.c.b16 %v1722, %v1718
        %v2143 = vpack.c.b16 %v1727, %v1723
        %v2144 = vpack.c.b16 %v1728, %v1724
        %v2145 = vpack.c.b16 %v1729, %v1725
        %v2146 = vpack.c.b16 %v1730, %v1726
        %v2147 = vpack.c.b16 %v1735, %v1731
        %v2148 = vpack.c.b16 %v1736, %v1732
        %v2149 = vpack.c.b16 %v1737, %v1733
        %v2150 = vpack.c.b16 %v1738, %v1734
        %v2151 = vpack.c.b16 %v1743, %v1739
        %v2152 = vpack.c.b16 %v1744, %v1740
        %v2153 = vpack.c.b16 %v1745, %v1741
        %v2154 = vpack.c.b16 %v1746, %v1742
        %v2155 = vpack.c.b16 %v1751, %v1747
        %v2156 = vpack.c.b16 %v1752, %v1748
        %v2157 = vpack.c.b16 %v1753, %v1749
        %v2158 = vpack.c.b16 %v1754, %v1750
        %v2159 = vpack.c.b16 %v1759, %v1755
        %v2160 = vpack.c.b16 %v1760, %v1756
        %v2161 = vpack.c.b16 %v1761, %v1757
        %v2162 = vpack.c.b16 %v1762, %v1758
        %v2163 = vpack.c.b16 %v1767, %v1763
        %v2164 = vpack.c.b16 %v1768, %v1764
        %v2165 = vpack.c.b16 %v1769, %v1765
        %v2166 = vpack.c.b16 %v1770, %v1766
        %v2167 = vpack.c.b16 %v1775, %v1771
        %v2168 = vpack.c.b16 %v1776, %v1772
        %v2169 = vpack.c.b16 %v1777, %v1773
        %v2170 = vpack.c.b16 %v1778, %v1774
        %v2171 = vpack.c.b16 %v1783, %v1779
        %v2172 = vpack.c.b16 %v1784, %v1780
        %v2173 = vpack.c.b16 %v1785, %v1781
        %v2174 = vpack.c.b16 %v1786, %v1782
        %v2175 = vpack.c.b16 %v1791, %v1787
        %v2176 = vpack.c.b16 %v1792, %v1788
        %v2177 = vpack.c.b16 %v1793, %v1789
        %v2178 = vpack.c.b16 %v1794, %v1790
        %v2179 = vpack.c.b16 %v1799, %v1795
        %v2180 = vpack.c.b16 %v1800, %v1796
        %v2181 = vpack.c.b16 %v1801, %v1797
        %v2182 = vpack.c.b16 %v1802, %v1798
        %v2183 = vpack.c.b16 %v1807, %v1803
        %v2184 = vpack.c.b16 %v1808, %v1804
        %v2185 = vpack.c.b16 %v1809, %v1805
        %v2186 = vpack.c.b16 %v1810, %v1806
        %v2187 = vpack.c.b16 %v1815, %v1811
        %v2188 = vpack.c.b16 %v1816, %v1812
        %v2189 = vpack.c.b16 %v1817, %v1813
        %v2190 = vpack.c.b16 %v1818, %v1814
        %v2191 = vpack.c.b16 %v1823, %v1819
        %v2192 = vpack.c.b16 %v1824, %v1820
        %v2193 = vpack.c.b16 %v1825, %v1821
        %v2194 = vpack.c.b16 %v1826, %v1822
        %v2195 = vpack.c.b16 %v1831, %v1827
        %v2196 = vpack.c.b16 %v1832, %v1828
        %v2197 = vpack.c.b16 %v1833, %v1829
        %v2198 = vpack.c.b16 %v1834, %v1830
        %v2199 = vpack.c.b16 %v1839, %v1835
        %v2200 = vpack.c.b16 %v1840, %v1836
        %v2201 = vpack.c.b16 %v1841, %v1837
        %v2202 = vpack.c.b16 %v1842, %v1838
        %v2203 = vpack.c.b16 %v1847, %v1843
        %v2204 = vpack.c.b16 %v1848, %v1844
        %v2205 = vpack.c.b16 %v1849, %v1845
        %v2206 = vpack.c.b16 %v1850, %v1846
        %v2207 = vpack.c.b16 %v1855, %v1851
        %v2208 = vpack.c.b16 %v1856, %v1852
        %v2209 = vpack.c.b16 %v1857, %v1853
        %v2210 = vpack.c.b16 %v1858, %v1854
        %v2211 = vpack.c.b16 %v1863, %v1859
        %v2212 = vpack.c.b16 %v1864, %v1860
        %v2213 = vpack.c.b16 %v1865, %v1861
        %v2214 = vpack.c.b16 %v1866, %v1862
        %v2215 = vpack.c.b16 %v1871, %v1867
        %v2216 = vpack.c.b16 %v1872, %v1868
        %v2217 = vpack.c.b16 %v1873, %v1869
        %v2218 = vpack.c.b16 %v1874, %v1870
        %v2219 = vpack.c.b16 %v1879, %v1875
        %v2220 = vpack.c.b16 %v1880, %v1876
        %v2221 = vpack.c.b16 %v1881, %v1877
        %v2222 = vpack.c.b16 %v1882, %v1878
        %v2223 = vpack.c.b16 %v1887, %v1883
        %v2224 = vpack.c.b16 %v1888, %v1884
        %v2225 = vpack.c.b16 %v1889, %v1885
        %v2226 = vpack.c.b16 %v1890, %v1886
        %v2227 = vpack.c.b16 %v1895, %v1891
        %v2228 = vpack.c.b16 %v1896, %v1892
        %v2229 = vpack.c.b16 %v1897, %v1893
        %v2230 = vpack.c.b16 %v1898, %v1894
        %v2231 = vpack.c.b16 %v1903, %v1899
        %v2232 = vpack.c.b16 %v1904, %v1900
        %v2233 = vpack.c.b16 %v1905, %v1901
        %v2234 = vpack.c.b16 %v1906, %v1902
        %v2235 = vpack.c.b16 %v1911, %v1907
        %v2236 = vpack.c.b16 %v1912, %v1908
        %v2237 = vpack.c.b16 %v1913, %v1909
        %v2238 = vpack.c.b16 %v1914, %v1910
        %v2239 = vpack.c.b16 %v1919, %v1915
        %v2240 = vpack.c.b16 %v1920, %v1916
        %v2241 = vpack.c.b16 %v1921, %v1917
        %v2242 = vpack.c.b16 %v1922, %v1918
        %v2243 = vpack.c.b16 %v1927, %v1923
        %v2244 = vpack.c.b16 %v1928, %v1924
        %v2245 = vpack.c.b16 %v1929, %v1925
        %v2246 = vpack.c.b16 %v1930, %v1926
        %v2247 = vpack.c.b16 %v1935, %v1931
        %v2248 = vpack.c.b16 %v1936, %v1932
        %v2249 = vpack.c.b16 %v1937, %v1933
        %v2250 = vpack.c.b16 %v1938, %v1934
        %v2251 = vpack.c.b16 %v1943, %v1939
        %v2252 = vpack.c.b16 %v1944, %v1940
        %v2253 = vpack.c.b16 %v1945, %v1941
        %v2254 = vpack.c.b16 %v1946, %v1942
        %v2255 = vpack.c.b16 %v1951, %v1947
        %v2256 = vpack.c.b16 %v1952, %v1948
        %v2257 = vpack.c.b16 %v1953, %v1949
        %v2258 = vpack.c.b16 %v1954, %v1950
        %v2259 = vpack.c.b16 %v1959, %v1955
        %v2260 = vpack.c.b16 %v1960, %v1956
        %v2261 = vpack.c.b16 %v1961, %v1957
        %v2262 = vpack.c.b16 %v1962, %v1958
        %v2263 = vpack.c.b16 %v1967, %v1963
        %v2264 = vpack.c.b16 %v1968, %v1964
        %v2265 = vpack.c.b16 %v1969, %v1965
        %v2266 = vpack.c.b16 %v1970, %v1966
        %v2267 = vpack.c.b16 %v1975, %v1971
        %v2268 = vpack.c.b16 %v1976, %v1972
        %v2269 = vpack.c.b16 %v1977, %v1973
        %v2270 = vpack.c.b16 %v1978, %v1974
        %v2271 = vpack.c.b16 %v1983, %v1979
        %v2272 = vpack.c.b16 %v1984, %v1980
        %v2273 = vpack.c.b16 %v1985, %v1981
        %v2274 = vpack.c.b16 %v1986, %v1982
        %v2275 = vpack.c.b16 %v1991, %v1987
        %v2276 = vpack.c.b16 %v1992, %v1988
        %v2277 = vpack.c.b16 %v1993, %v1989
        %v2278 = vpack.c.b16 %v1994, %v1990
        %v2279 = vpack.c.b16 %v1999, %v1995
        %v2280 = vpack.c.b16 %v2000, %v1996
        %v2281 = vpack.c.b16 %v2001, %v1997
        %v2282 = vpack.c.b16 %v2002, %v1998
        %v2283 = vpack.c.b16 %v2007, %v2003
        %v2284 = vpack.c.b16 %v2008, %v2004
        %v2285 = vpack.c.b16 %v2009, %v2005
        %v2286 = vpack.c.b16 %v2010, %v2006
        %v2287 = vpack.c.b16 %v2015, %v2011
        %v2288 = vpack.c.b16 %v2016, %v2012
        %v2289 = vpack.c.b16 %v2017, %v2013
        %v2290 = vpack.c.b16 %v2018, %v2014
        %v2291 = vpack.c.b16 %v2023, %v2019
        %v2292 = vpack.c.b16 %v2024, %v2020
        %v2293 = vpack.c.b16 %v2025, %v2021
        %v2294 = vpack.c.b16 %v2026, %v2022
        %v2295 = vpack.c.b16 %v2031, %v2027
        %v2296 = vpack.c.b16 %v2032, %v2028
        %v2297 = vpack.c.b16 %v2033, %v2029
        %v2298 = vpack.c.b16 %v2034, %v2030
        %v2299 = vpack.c.b16 %v2039, %v2035
        %v2300 = vpack.c.b16 %v2040, %v2036
        %v2301 = vpack.c.b16 %v2041, %v2037
        %v2302 = vpack.c.b16 %v2042, %v2038
        %v2303 = vpack.c.b16 %v2047, %v2043
        %v2304 = vpack.c.b16 %v2048, %v2044
        %v2305 = vpack.c.b16 %v2049, %v2045
        %v2306 = vpack.c.b16 %v2050, %v2046
        %2563 = vmatprep.subr.bf16.mxu0 %v2080
        %2564 = vmatpush1.bf16.msra.mxu0 %v2079
        %2565 = vmatprep.subr.bf16.mxu0 %v2076
        %2566 = vmatpush1.bf16.msra.mxu0 %v2075
        %2567 = vmatprep.subr.bf16.mxu0 %v2072
        %2568 = vmatpush1.bf16.msra.mxu0 %v2071
        %2569 = vmatprep.subr.bf16.mxu0 %v2068
        %2570 = vmatpush1.bf16.msra.mxu0 %v2067
        %2571 = vmatprep.subr.bf16.mxu0 %v2064
        %2572 = vmatpush1.bf16.msra.mxu0 %v2063
        %2573 = vmatprep.subr.bf16.mxu0 %v2060
        %2574 = vmatpush1.bf16.msra.mxu0 %v2059
        %2575 = vmatprep.subr.bf16.mxu0 %v2056
        %2576 = vmatpush1.bf16.msra.mxu0 %v2055
        %2577 = vmatprep.subr.bf16.mxu0 %v2052
        %2578 = vmatpush1.bf16.msra.mxu0 %v2051
        %2579 = vmatprep.subr.bf16.mxu0 %v2112
        %2580 = vmatpush2.bf16.msra.mxu0 %v2111
        %2581 = vmatprep.subr.bf16.mxu0 %v2108
        %2582 = vmatpush2.bf16.msra.mxu0 %v2107
        %2583 = vmatprep.subr.bf16.mxu0 %v2104
        %2584 = vmatpush2.bf16.msra.mxu0 %v2103
        %2585 = vmatprep.subr.bf16.mxu0 %v2100
        %2586 = vmatpush2.bf16.msra.mxu0 %v2099
        %2587 = vmatprep.subr.bf16.mxu0 %v2096
        %2588 = vmatpush2.bf16.msra.mxu0 %v2095
        %2589 = vmatprep.subr.bf16.mxu0 %v2092
        %2590 = vmatpush2.bf16.msra.mxu0 %v2091
        %2591 = vmatprep.subr.bf16.mxu0 %v2088
        %2592 = vmatpush2.bf16.msra.mxu0 %v2087
        %2593 = vmatprep.subr.bf16.mxu0 %v2084
        %2594 = vmatpush2.bf16.msra.mxu0 %v2083
        %2595 = vmatprep.mubr.bf16.mxu0 %v998
        %2596 = vmatmul.mubr.bf16.gmra.mxu0 %v997
        %v2597 = vpop.f32.mrf.mxu0
        %v2598 = vadd.f32 %v1266, %v2597
        %v2599 = vpop.f32.mrf.mxu0
        %v2600 = vadd.f32 %v1270, %v2599
        %v2601 = vpop.f32.mrf.mxu0
        %v2602 = vpop.f32.mrf.mxu0
        %2603 = vdwg.mxu0
        %2604 = vmatprep.subr.bf16.mxu0 %v2144
        %2605 = vmatpush1.bf16.msra.mxu0 %v2143
        %2606 = vmatprep.subr.bf16.mxu0 %v2140
        %2607 = vmatpush1.bf16.msra.mxu0 %v2139
        %2608 = vmatprep.subr.bf16.mxu0 %v2136
        %2609 = vmatpush1.bf16.msra.mxu0 %v2135
        %2610 = vmatprep.subr.bf16.mxu0 %v2132
        %2611 = vmatpush1.bf16.msra.mxu0 %v2131
        %2612 = vmatprep.subr.bf16.mxu0 %v2128
        %2613 = vmatpush1.bf16.msra.mxu0 %v2127
        %2614 = vmatprep.subr.bf16.mxu0 %v2124
        %2615 = vmatpush1.bf16.msra.mxu0 %v2123
        %2616 = vmatprep.subr.bf16.mxu0 %v2120
        %2617 = vmatpush1.bf16.msra.mxu0 %v2119
        %2618 = vmatprep.subr.bf16.mxu0 %v2116
        %2619 = vmatpush1.bf16.msra.mxu0 %v2115
        %2620 = vmatprep.subr.bf16.mxu0 %v2176
        %2621 = vmatpush2.bf16.msra.mxu0 %v2175
        %2622 = vmatprep.subr.bf16.mxu0 %v2172
        %2623 = vmatpush2.bf16.msra.mxu0 %v2171
        %2624 = vmatprep.subr.bf16.mxu0 %v2168
        %2625 = vmatpush2.bf16.msra.mxu0 %v2167
        %2626 = vmatprep.subr.bf16.mxu0 %v2164
        %2627 = vmatpush2.bf16.msra.mxu0 %v2163
        %2628 = vmatprep.subr.bf16.mxu0 %v2160
        %2629 = vmatpush2.bf16.msra.mxu0 %v2159
        %2630 = vmatprep.subr.bf16.mxu0 %v2156
        %2631 = vmatpush2.bf16.msra.mxu0 %v2155
        %2632 = vmatprep.subr.bf16.mxu0 %v2152
        %2633 = vmatpush2.bf16.msra.mxu0 %v2151
        %2634 = vmatprep.subr.bf16.mxu0 %v2148
        %2635 = vmatpush2.bf16.msra.mxu0 %v2147
        %2636 = vmatprep.mubr.bf16.mxu0 %v1000
        %2637 = vmatmul.mubr.bf16.gmra.mxu0 %v999
        %v2638 = vpop.f32.mrf.mxu0
        %v2639 = vadd.f32 %v2598, %v2638
        %v2640 = vpop.f32.mrf.mxu0
        %v2641 = vadd.f32 %v2600, %v2640
        %v2642 = vpop.f32.mrf.mxu0
        %v2643 = vpop.f32.mrf.mxu0
        %2644 = vdwg.mxu0
        %2645 = vmatprep.subr.bf16.mxu0 %v2208
        %2646 = vmatpush1.bf16.msra.mxu0 %v2207
        %2647 = vmatprep.subr.bf16.mxu0 %v2204
        %2648 = vmatpush1.bf16.msra.mxu0 %v2203
        %2649 = vmatprep.subr.bf16.mxu0 %v2200
        %2650 = vmatpush1.bf16.msra.mxu0 %v2199
        %2651 = vmatprep.subr.bf16.mxu0 %v2196
        %2652 = vmatpush1.bf16.msra.mxu0 %v2195
        %2653 = vmatprep.subr.bf16.mxu0 %v2192
        %2654 = vmatpush1.bf16.msra.mxu0 %v2191
        %2655 = vmatprep.subr.bf16.mxu0 %v2188
        %2656 = vmatpush1.bf16.msra.mxu0 %v2187
        %2657 = vmatprep.subr.bf16.mxu0 %v2184
        %2658 = vmatpush1.bf16.msra.mxu0 %v2183
        %2659 = vmatprep.subr.bf16.mxu0 %v2180
        %2660 = vmatpush1.bf16.msra.mxu0 %v2179
        %2661 = vmatprep.subr.bf16.mxu0 %v2240
        %2662 = vmatpush2.bf16.msra.mxu0 %v2239
        %2663 = vmatprep.subr.bf16.mxu0 %v2236
        %2664 = vmatpush2.bf16.msra.mxu0 %v2235
        %2665 = vmatprep.subr.bf16.mxu0 %v2232
        %2666 = vmatpush2.bf16.msra.mxu0 %v2231
        %2667 = vmatprep.subr.bf16.mxu0 %v2228
        %2668 = vmatpush2.bf16.msra.mxu0 %v2227
        %2669 = vmatprep.subr.bf16.mxu0 %v2224
        %2670 = vmatpush2.bf16.msra.mxu0 %v2223
        %2671 = vmatprep.subr.bf16.mxu0 %v2220
        %2672 = vmatpush2.bf16.msra.mxu0 %v2219
        %2673 = vmatprep.subr.bf16.mxu0 %v2216
        %2674 = vmatpush2.bf16.msra.mxu0 %v2215
        %2675 = vmatprep.subr.bf16.mxu0 %v2212
        %2676 = vmatpush2.bf16.msra.mxu0 %v2211
        %2677 = vmatprep.mubr.bf16.mxu0 %v1002
        %2678 = vmatmul.mubr.bf16.gmra.mxu0 %v1001
        %v2679 = vpop.f32.mrf.mxu0
        %v2680 = vadd.f32 %v2639, %v2679
        %v2681 = vpop.f32.mrf.mxu0
        %v2682 = vadd.f32 %v2641, %v2681
        %v2683 = vpop.f32.mrf.mxu0
        %v2684 = vpop.f32.mrf.mxu0
        %2685 = vdwg.mxu0
        %2686 = vmatprep.subr.bf16.mxu0 %v2272
        %2687 = vmatpush1.bf16.msra.mxu0 %v2271
        %2688 = vmatprep.subr.bf16.mxu0 %v2268
        %2689 = vmatpush1.bf16.msra.mxu0 %v2267
        %2690 = vmatprep.subr.bf16.mxu0 %v2264
        %2691 = vmatpush1.bf16.msra.mxu0 %v2263
        %2692 = vmatprep.subr.bf16.mxu0 %v2260
        %2693 = vmatpush1.bf16.msra.mxu0 %v2259
        %2694 = vmatprep.subr.bf16.mxu0 %v2256
        %2695 = vmatpush1.bf16.msra.mxu0 %v2255
        %2696 = vmatprep.subr.bf16.mxu0 %v2252
        %2697 = vmatpush1.bf16.msra.mxu0 %v2251
        %2698 = vmatprep.subr.bf16.mxu0 %v2248
        %2699 = vmatpush1.bf16.msra.mxu0 %v2247
        %2700 = vmatprep.subr.bf16.mxu0 %v2244
        %2701 = vmatpush1.bf16.msra.mxu0 %v2243
        %2702 = vmatprep.subr.bf16.mxu0 %v2304
        %2703 = vmatpush2.bf16.msra.mxu0 %v2303
        %2704 = vmatprep.subr.bf16.mxu0 %v2300
        %2705 = vmatpush2.bf16.msra.mxu0 %v2299
        %2706 = vmatprep.subr.bf16.mxu0 %v2296
        %2707 = vmatpush2.bf16.msra.mxu0 %v2295
        %2708 = vmatprep.subr.bf16.mxu0 %v2292
        %2709 = vmatpush2.bf16.msra.mxu0 %v2291
        %2710 = vmatprep.subr.bf16.mxu0 %v2288
        %2711 = vmatpush2.bf16.msra.mxu0 %v2287
        %2712 = vmatprep.subr.bf16.mxu0 %v2284
        %2713 = vmatpush2.bf16.msra.mxu0 %v2283
        %2714 = vmatprep.subr.bf16.mxu0 %v2280
        %2715 = vmatpush2.bf16.msra.mxu0 %v2279
        %2716 = vmatprep.subr.bf16.mxu0 %v2276
        %2717 = vmatpush2.bf16.msra.mxu0 %v2275
        %2718 = vmatprep.mubr.bf16.mxu0 %v1004
        %2719 = vmatmul.mubr.bf16.gmra.mxu0 %v1003
        %v2720 = vpop.f32.mrf.mxu0
        %v2721 = vadd.f32 %v2680, %v2720
        %v2722 = vpop.f32.mrf.mxu0
        %v2723 = vadd.f32 %v2682, %v2722
        %v2724 = vpop.f32.mrf.mxu0
        %v2725 = vpop.f32.mrf.mxu0
        %2726 = vdwg.mxu0
        %2727 = vmatprep.subr.bf16.mxu0 %v2082
        %2728 = vmatpush1.bf16.msra.mxu0 %v2081
        %2729 = vmatprep.subr.bf16.mxu0 %v2078
        %2730 = vmatpush1.bf16.msra.mxu0 %v2077
        %2731 = vmatprep.subr.bf16.mxu0 %v2074
        %2732 = vmatpush1.bf16.msra.mxu0 %v2073
        %2733 = vmatprep.subr.bf16.mxu0 %v2070
        %2734 = vmatpush1.bf16.msra.mxu0 %v2069
        %2735 = vmatprep.subr.bf16.mxu0 %v2066
        %2736 = vmatpush1.bf16.msra.mxu0 %v2065
        %2737 = vmatprep.subr.bf16.mxu0 %v2062
        %2738 = vmatpush1.bf16.msra.mxu0 %v2061
        %2739 = vmatprep.subr.bf16.mxu0 %v2058
        %2740 = vmatpush1.bf16.msra.mxu0 %v2057
        %2741 = vmatprep.subr.bf16.mxu0 %v2054
        %2742 = vmatpush1.bf16.msra.mxu0 %v2053
        %2743 = vmatprep.subr.bf16.mxu0 %v2114
        %2744 = vmatpush2.bf16.msra.mxu0 %v2113
        %2745 = vmatprep.subr.bf16.mxu0 %v2110
        %2746 = vmatpush2.bf16.msra.mxu0 %v2109
        %2747 = vmatprep.subr.bf16.mxu0 %v2106
        %2748 = vmatpush2.bf16.msra.mxu0 %v2105
        %2749 = vmatprep.subr.bf16.mxu0 %v2102
        %2750 = vmatpush2.bf16.msra.mxu0 %v2101
        %2751 = vmatprep.subr.bf16.mxu0 %v2098
        %2752 = vmatpush2.bf16.msra.mxu0 %v2097
        %2753 = vmatprep.subr.bf16.mxu0 %v2094
        %2754 = vmatpush2.bf16.msra.mxu0 %v2093
        %2755 = vmatprep.subr.bf16.mxu0 %v2090
        %2756 = vmatpush2.bf16.msra.mxu0 %v2089
        %2757 = vmatprep.subr.bf16.mxu0 %v2086
        %2758 = vmatpush2.bf16.msra.mxu0 %v2085
        %2759 = vmatprep.mubr.bf16.mxu0 %v998
        %2760 = vmatmul.mubr.bf16.gmra.mxu0 %v997
        %v2761 = vpop.f32.mrf.mxu0
        %v2762 = vadd.f32 %v1274, %v2761
        %v2763 = vpop.f32.mrf.mxu0
        %v2764 = vadd.f32 %v1278, %v2763
        %v2765 = vpop.f32.mrf.mxu0
        %v2766 = vpop.f32.mrf.mxu0
        %2767 = vdwg.mxu0
        %2768 = vmatprep.subr.bf16.mxu0 %v2146
        %2769 = vmatpush1.bf16.msra.mxu0 %v2145
        %2770 = vmatprep.subr.bf16.mxu0 %v2142
        %2771 = vmatpush1.bf16.msra.mxu0 %v2141
        %2772 = vmatprep.subr.bf16.mxu0 %v2138
        %2773 = vmatpush1.bf16.msra.mxu0 %v2137
        %2774 = vmatprep.subr.bf16.mxu0 %v2134
        %2775 = vmatpush1.bf16.msra.mxu0 %v2133
        %2776 = vmatprep.subr.bf16.mxu0 %v2130
        %2777 = vmatpush1.bf16.msra.mxu0 %v2129
        %2778 = vmatprep.subr.bf16.mxu0 %v2126
        %2779 = vmatpush1.bf16.msra.mxu0 %v2125
        %2780 = vmatprep.subr.bf16.mxu0 %v2122
        %2781 = vmatpush1.bf16.msra.mxu0 %v2121
        %2782 = vmatprep.subr.bf16.mxu0 %v2118
        %2783 = vmatpush1.bf16.msra.mxu0 %v2117
        %2784 = vmatprep.subr.bf16.mxu0 %v2178
        %2785 = vmatpush2.bf16.msra.mxu0 %v2177
        %2786 = vmatprep.subr.bf16.mxu0 %v2174
        %2787 = vmatpush2.bf16.msra.mxu0 %v2173
        %2788 = vmatprep.subr.bf16.mxu0 %v2170
        %2789 = vmatpush2.bf16.msra.mxu0 %v2169
        %2790 = vmatprep.subr.bf16.mxu0 %v2166
        %2791 = vmatpush2.bf16.msra.mxu0 %v2165
        %2792 = vmatprep.subr.bf16.mxu0 %v2162
        %2793 = vmatpush2.bf16.msra.mxu0 %v2161
        %2794 = vmatprep.subr.bf16.mxu0 %v2158
        %2795 = vmatpush2.bf16.msra.mxu0 %v2157
        %2796 = vmatprep.subr.bf16.mxu0 %v2154
        %2797 = vmatpush2.bf16.msra.mxu0 %v2153
        %2798 = vmatprep.subr.bf16.mxu0 %v2150
        %2799 = vmatpush2.bf16.msra.mxu0 %v2149
        %2800 = vmatprep.mubr.bf16.mxu0 %v1000
        %2801 = vmatmul.mubr.bf16.gmra.mxu0 %v999
        %v2802 = vpop.f32.mrf.mxu0
        %v2803 = vadd.f32 %v2762, %v2802
        %v2804 = vpop.f32.mrf.mxu0
        %v2805 = vadd.f32 %v2764, %v2804
        %v2806 = vpop.f32.mrf.mxu0
        %v2807 = vpop.f32.mrf.mxu0
        %2808 = vdwg.mxu0
        %2809 = vmatprep.subr.bf16.mxu0 %v2210
        %2810 = vmatpush1.bf16.msra.mxu0 %v2209
        %2811 = vmatprep.subr.bf16.mxu0 %v2206
        %2812 = vmatpush1.bf16.msra.mxu0 %v2205
        %2813 = vmatprep.subr.bf16.mxu0 %v2202
        %2814 = vmatpush1.bf16.msra.mxu0 %v2201
        %2815 = vmatprep.subr.bf16.mxu0 %v2198
        %2816 = vmatpush1.bf16.msra.mxu0 %v2197
        %2817 = vmatprep.subr.bf16.mxu0 %v2194
        %2818 = vmatpush1.bf16.msra.mxu0 %v2193
        %2819 = vmatprep.subr.bf16.mxu0 %v2190
        %2820 = vmatpush1.bf16.msra.mxu0 %v2189
        %2821 = vmatprep.subr.bf16.mxu0 %v2186
        %2822 = vmatpush1.bf16.msra.mxu0 %v2185
        %2823 = vmatprep.subr.bf16.mxu0 %v2182
        %2824 = vmatpush1.bf16.msra.mxu0 %v2181
        %2825 = vmatprep.subr.bf16.mxu0 %v2242
        %2826 = vmatpush2.bf16.msra.mxu0 %v2241
        %2827 = vmatprep.subr.bf16.mxu0 %v2238
        %2828 = vmatpush2.bf16.msra.mxu0 %v2237
        %2829 = vmatprep.subr.bf16.mxu0 %v2234
        %2830 = vmatpush2.bf16.msra.mxu0 %v2233
        %2831 = vmatprep.subr.bf16.mxu0 %v2230
        %2832 = vmatpush2.bf16.msra.mxu0 %v2229
        %2833 = vmatprep.subr.bf16.mxu0 %v2226
        %2834 = vmatpush2.bf16.msra.mxu0 %v2225
        %2835 = vmatprep.subr.bf16.mxu0 %v2222
        %2836 = vmatpush2.bf16.msra.mxu0 %v2221
        %2837 = vmatprep.subr.bf16.mxu0 %v2218
        %2838 = vmatpush2.bf16.msra.mxu0 %v2217
        %2839 = vmatprep.subr.bf16.mxu0 %v2214
        %2840 = vmatpush2.bf16.msra.mxu0 %v2213
        %2841 = vmatprep.mubr.bf16.mxu0 %v1002
        %2842 = vmatmul.mubr.bf16.gmra.mxu0 %v1001
        %v2843 = vpop.f32.mrf.mxu0
        %v2844 = vadd.f32 %v2803, %v2843
        %v2845 = vpop.f32.mrf.mxu0
        %v2846 = vadd.f32 %v2805, %v2845
        %v2847 = vpop.f32.mrf.mxu0
        %v2848 = vpop.f32.mrf.mxu0
        %2849 = vdwg.mxu0
        %2850 = vmatprep.subr.bf16.mxu0 %v2274
        %2851 = vmatpush1.bf16.msra.mxu0 %v2273
        %2852 = vmatprep.subr.bf16.mxu0 %v2270
        %2853 = vmatpush1.bf16.msra.mxu0 %v2269
        %2854 = vmatprep.subr.bf16.mxu0 %v2266
        %2855 = vmatpush1.bf16.msra.mxu0 %v2265
        %2856 = vmatprep.subr.bf16.mxu0 %v2262
        %2857 = vmatpush1.bf16.msra.mxu0 %v2261
        %2858 = vmatprep.subr.bf16.mxu0 %v2258
        %2859 = vmatpush1.bf16.msra.mxu0 %v2257
        %2860 = vmatprep.subr.bf16.mxu0 %v2254
        %2861 = vmatpush1.bf16.msra.mxu0 %v2253
        %2862 = vmatprep.subr.bf16.mxu0 %v2250
        %2863 = vmatpush1.bf16.msra.mxu0 %v2249
        %2864 = vmatprep.subr.bf16.mxu0 %v2246
        %2865 = vmatpush1.bf16.msra.mxu0 %v2245
        %2866 = vmatprep.subr.bf16.mxu0 %v2306
        %2867 = vmatpush2.bf16.msra.mxu0 %v2305
        %2868 = vmatprep.subr.bf16.mxu0 %v2302
        %2869 = vmatpush2.bf16.msra.mxu0 %v2301
        %2870 = vmatprep.subr.bf16.mxu0 %v2298
        %2871 = vmatpush2.bf16.msra.mxu0 %v2297
        %2872 = vmatprep.subr.bf16.mxu0 %v2294
        %2873 = vmatpush2.bf16.msra.mxu0 %v2293
        %2874 = vmatprep.subr.bf16.mxu0 %v2290
        %2875 = vmatpush2.bf16.msra.mxu0 %v2289
        %2876 = vmatprep.subr.bf16.mxu0 %v2286
        %2877 = vmatpush2.bf16.msra.mxu0 %v2285
        %2878 = vmatprep.subr.bf16.mxu0 %v2282
        %2879 = vmatpush2.bf16.msra.mxu0 %v2281
        %2880 = vmatprep.subr.bf16.mxu0 %v2278
        %2881 = vmatpush2.bf16.msra.mxu0 %v2277
        %2882 = vmatprep.mubr.bf16.mxu0 %v1004
        %2883 = vmatmul.mubr.bf16.gmra.mxu0 %v1003
        %v2884 = vpop.f32.mrf.mxu0
        %v2885 = vadd.f32 %v2844, %v2884
        %v2886 = vpop.f32.mrf.mxu0
        %v2887 = vadd.f32 %v2846, %v2886
        %v2888 = vpop.f32.mrf.mxu0
        %v2889 = vpop.f32.mrf.mxu0
        %2890 = vdwg.mxu0
        %v2891 = vmax.f32 %v2721, 0.0
        %v2892 = vmax.f32 %v2723, 0.0
        %v2893 = vmax.f32 %v2885, 0.0
        %v2894 = vmax.f32 %v2887, 0.0
        %v2895 = vpack.c.bf16 %v2891, %v2891
        %v2896 = vpack.c.bf16 %v2892, %v2892
        %v2897 = vpack.c.bf16 %v2893, %v2893
        %v2898 = vpack.c.bf16 %v2894, %v2894
        %v2899 = vld [vmem:[%s5] sm:$0xff]
        %v2900 = vld [vmem:[%s5 + $0x8] sm:$0xff]
        %v2901 = vld [vmem:[%s5 + $0x10] sm:$0xff]
        %v2902 = vld [vmem:[%s5 + $0x18] sm:$0xff]
        %v2903 = vld [vmem:[%s5 + $0x20] sm:$0xff]
        %v2904 = vld [vmem:[%s5 + $0x28] sm:$0xff]
        %v2905 = vld [vmem:[%s5 + $0x30] sm:$0xff]
        %v2906 = vld [vmem:[%s5 + $0x38] sm:$0xff]
        %v2907 = vld [vmem:[%s5 + $0x40] sm:$0xff]
        %v2908 = vld [vmem:[%s5 + $0x48] sm:$0xff]
        %v2909 = vld [vmem:[%s5 + $0x50] sm:$0xff]
        %v2910 = vld [vmem:[%s5 + $0x58] sm:$0xff]
        %v2911 = vld [vmem:[%s5 + $0x60] sm:$0xff]
        %v2912 = vld [vmem:[%s5 + $0x68] sm:$0xff]
        %v2913 = vld [vmem:[%s5 + $0x70] sm:$0xff]
        %v2914 = vld [vmem:[%s5 + $0x78] sm:$0xff]
        %v2915 = vld [vmem:[%s5 + $0x80] sm:$0xff]
        %v2916 = vld [vmem:[%s5 + $0x88] sm:$0xff]
        %v2917 = vld [vmem:[%s5 + $0x90] sm:$0xff]
        %v2918 = vld [vmem:[%s5 + $0x98] sm:$0xff]
        %v2919 = vld [vmem:[%s5 + $0xa0] sm:$0xff]
        %v2920 = vld [vmem:[%s5 + $0xa8] sm:$0xff]
        %v2921 = vld [vmem:[%s5 + $0xb0] sm:$0xff]
        %v2922 = vld [vmem:[%s5 + $0xb8] sm:$0xff]
        %v2923 = vld [vmem:[%s5 + $0xc0] sm:$0xff]
        %v2924 = vld [vmem:[%s5 + $0xc8] sm:$0xff]
        %v2925 = vld [vmem:[%s5 + $0xd0] sm:$0xff]
        %v2926 = vld [vmem:[%s5 + $0xd8] sm:$0xff]
        %v2927 = vld [vmem:[%s5 + $0xe0] sm:$0xff]
        %v2928 = vld [vmem:[%s5 + $0xe8] sm:$0xff]
        %v2929 = vld [vmem:[%s5 + $0xf0] sm:$0xff]
        %v2930 = vld [vmem:[%s5 + $0xf8] sm:$0xff]
        %v2931 = vld [vmem:[%s5 + $0x100] sm:$0xff]
        %v2932 = vld [vmem:[%s5 + $0x108] sm:$0xff]
        %v2933 = vld [vmem:[%s5 + $0x110] sm:$0xff]
        %v2934 = vld [vmem:[%s5 + $0x118] sm:$0xff]
        %v2935 = vld [vmem:[%s5 + $0x120] sm:$0xff]
        %v2936 = vld [vmem:[%s5 + $0x128] sm:$0xff]
        %v2937 = vld [vmem:[%s5 + $0x130] sm:$0xff]
        %v2938 = vld [vmem:[%s5 + $0x138] sm:$0xff]
        %v2939 = vld [vmem:[%s5 + $0x140] sm:$0xff]
        %v2940 = vld [vmem:[%s5 + $0x148] sm:$0xff]
        %v2941 = vld [vmem:[%s5 + $0x150] sm:$0xff]
        %v2942 = vld [vmem:[%s5 + $0x158] sm:$0xff]
        %v2943 = vld [vmem:[%s5 + $0x160] sm:$0xff]
        %v2944 = vld [vmem:[%s5 + $0x168] sm:$0xff]
        %v2945 = vld [vmem:[%s5 + $0x170] sm:$0xff]
        %v2946 = vld [vmem:[%s5 + $0x178] sm:$0xff]
        %v2947 = vld [vmem:[%s5 + $0x180] sm:$0xff]
        %v2948 = vld [vmem:[%s5 + $0x188] sm:$0xff]
        %v2949 = vld [vmem:[%s5 + $0x190] sm:$0xff]
        %v2950 = vld [vmem:[%s5 + $0x198] sm:$0xff]
        %v2951 = vld [vmem:[%s5 + $0x1a0] sm:$0xff]
        %v2952 = vld [vmem:[%s5 + $0x1a8] sm:$0xff]
        %v2953 = vld [vmem:[%s5 + $0x1b0] sm:$0xff]
        %v2954 = vld [vmem:[%s5 + $0x1b8] sm:$0xff]
        %v2955 = vld [vmem:[%s5 + $0x1c0] sm:$0xff]
        %v2956 = vld [vmem:[%s5 + $0x1c8] sm:$0xff]
        %v2957 = vld [vmem:[%s5 + $0x1d0] sm:$0xff]
        %v2958 = vld [vmem:[%s5 + $0x1d8] sm:$0xff]
        %v2959 = vld [vmem:[%s5 + $0x1e0] sm:$0xff]
        %v2960 = vld [vmem:[%s5 + $0x1e8] sm:$0xff]
        %v2961 = vld [vmem:[%s5 + $0x1f0] sm:$0xff]
        %v2962 = vld [vmem:[%s5 + $0x1f8] sm:$0xff]
        %v2963 = vld [vmem:[%s6] sm:$0x3]
        %v2965 = vlaneseq
        %v2966 = vshrl.u32 %v2965, 7
        %v2967 = vsub.s32 0, %v2966
        %v2968 = vrot.slane %v2963, %v2967
        %v2969 = vlaneseq
        %v2970 = vshrl.u32 %v2969, 7
        %v2971 = vsub.s32 1, %v2970
        %v2972 = vrot.slane %v2963, %v2971
        %v3039 = vunpack.c.l.b16 %v2899
        %v3040 = vunpack.c.h.b16 %v2899
        %v3041 = vunpack.c.l.b16 %v2900
        %v3042 = vunpack.c.h.b16 %v2900
        %v3043 = vunpack.c.l.b16 %v2901
        %v3044 = vunpack.c.h.b16 %v2901
        %v3045 = vunpack.c.l.b16 %v2902
        %v3046 = vunpack.c.h.b16 %v2902
        %v3047 = vunpack.c.l.b16 %v2903
        %v3048 = vunpack.c.h.b16 %v2903
        %v3049 = vunpack.c.l.b16 %v2904
        %v3050 = vunpack.c.h.b16 %v2904
        %v3051 = vunpack.c.l.b16 %v2905
        %v3052 = vunpack.c.h.b16 %v2905
        %v3053 = vunpack.c.l.b16 %v2906
        %v3054 = vunpack.c.h.b16 %v2906
        %v3055 = vunpack.c.l.b16 %v2907
        %v3056 = vunpack.c.h.b16 %v2907
        %v3057 = vunpack.c.l.b16 %v2908
        %v3058 = vunpack.c.h.b16 %v2908
        %v3059 = vunpack.c.l.b16 %v2909
        %v3060 = vunpack.c.h.b16 %v2909
        %v3061 = vunpack.c.l.b16 %v2910
        %v3062 = vunpack.c.h.b16 %v2910
        %v3063 = vunpack.c.l.b16 %v2911
        %v3064 = vunpack.c.h.b16 %v2911
        %v3065 = vunpack.c.l.b16 %v2912
        %v3066 = vunpack.c.h.b16 %v2912
        %v3067 = vunpack.c.l.b16 %v2913
        %v3068 = vunpack.c.h.b16 %v2913
        %v3069 = vunpack.c.l.b16 %v2914
        %v3070 = vunpack.c.h.b16 %v2914
        %v3071 = vunpack.c.l.b16 %v2915
        %v3072 = vunpack.c.h.b16 %v2915
        %v3073 = vunpack.c.l.b16 %v2916
        %v3074 = vunpack.c.h.b16 %v2916
        %v3075 = vunpack.c.l.b16 %v2917
        %v3076 = vunpack.c.h.b16 %v2917
        %v3077 = vunpack.c.l.b16 %v2918
        %v3078 = vunpack.c.h.b16 %v2918
        %v3079 = vunpack.c.l.b16 %v2919
        %v3080 = vunpack.c.h.b16 %v2919
        %v3081 = vunpack.c.l.b16 %v2920
        %v3082 = vunpack.c.h.b16 %v2920
        %v3083 = vunpack.c.l.b16 %v2921
        %v3084 = vunpack.c.h.b16 %v2921
        %v3085 = vunpack.c.l.b16 %v2922
        %v3086 = vunpack.c.h.b16 %v2922
        %v3087 = vunpack.c.l.b16 %v2923
        %v3088 = vunpack.c.h.b16 %v2923
        %v3089 = vunpack.c.l.b16 %v2924
        %v3090 = vunpack.c.h.b16 %v2924
        %v3091 = vunpack.c.l.b16 %v2925
        %v3092 = vunpack.c.h.b16 %v2925
        %v3093 = vunpack.c.l.b16 %v2926
        %v3094 = vunpack.c.h.b16 %v2926
        %v3095 = vunpack.c.l.b16 %v2927
        %v3096 = vunpack.c.h.b16 %v2927
        %v3097 = vunpack.c.l.b16 %v2928
        %v3098 = vunpack.c.h.b16 %v2928
        %v3099 = vunpack.c.l.b16 %v2929
        %v3100 = vunpack.c.h.b16 %v2929
        %v3101 = vunpack.c.l.b16 %v2930
        %v3102 = vunpack.c.h.b16 %v2930
        %v3103 = vunpack.c.l.b16 %v2931
        %v3104 = vunpack.c.h.b16 %v2931
        %v3105 = vunpack.c.l.b16 %v2932
        %v3106 = vunpack.c.h.b16 %v2932
        %v3107 = vunpack.c.l.b16 %v2933
        %v3108 = vunpack.c.h.b16 %v2933
        %v3109 = vunpack.c.l.b16 %v2934
        %v3110 = vunpack.c.h.b16 %v2934
        %v3111 = vunpack.c.l.b16 %v2935
        %v3112 = vunpack.c.h.b16 %v2935
        %v3113 = vunpack.c.l.b16 %v2936
        %v3114 = vunpack.c.h.b16 %v2936
        %v3115 = vunpack.c.l.b16 %v2937
        %v3116 = vunpack.c.h.b16 %v2937
        %v3117 = vunpack.c.l.b16 %v2938
        %v3118 = vunpack.c.h.b16 %v2938
        %v3119 = vunpack.c.l.b16 %v2939
        %v3120 = vunpack.c.h.b16 %v2939
        %v3121 = vunpack.c.l.b16 %v2940
        %v3122 = vunpack.c.h.b16 %v2940
        %v3123 = vunpack.c.l.b16 %v2941
        %v3124 = vunpack.c.h.b16 %v2941
        %v3125 = vunpack.c.l.b16 %v2942
        %v3126 = vunpack.c.h.b16 %v2942
        %v3127 = vunpack.c.l.b16 %v2943
        %v3128 = vunpack.c.h.b16 %v2943
        %v3129 = vunpack.c.l.b16 %v2944
        %v3130 = vunpack.c.h.b16 %v2944
        %v3131 = vunpack.c.l.b16 %v2945
        %v3132 = vunpack.c.h.b16 %v2945
        %v3133 = vunpack.c.l.b16 %v2946
        %v3134 = vunpack.c.h.b16 %v2946
        %v3135 = vunpack.c.l.b16 %v2947
        %v3136 = vunpack.c.h.b16 %v2947
        %v3137 = vunpack.c.l.b16 %v2948
        %v3138 = vunpack.c.h.b16 %v2948
        %v3139 = vunpack.c.l.b16 %v2949
        %v3140 = vunpack.c.h.b16 %v2949
        %v3141 = vunpack.c.l.b16 %v2950
        %v3142 = vunpack.c.h.b16 %v2950
        %v3143 = vunpack.c.l.b16 %v2951
        %v3144 = vunpack.c.h.b16 %v2951
        %v3145 = vunpack.c.l.b16 %v2952
        %v3146 = vunpack.c.h.b16 %v2952
        %v3147 = vunpack.c.l.b16 %v2953
        %v3148 = vunpack.c.h.b16 %v2953
        %v3149 = vunpack.c.l.b16 %v2954
        %v3150 = vunpack.c.h.b16 %v2954
        %v3151 = vunpack.c.l.b16 %v2955
        %v3152 = vunpack.c.h.b16 %v2955
        %v3153 = vunpack.c.l.b16 %v2956
        %v3154 = vunpack.c.h.b16 %v2956
        %v3155 = vunpack.c.l.b16 %v2957
        %v3156 = vunpack.c.h.b16 %v2957
        %v3157 = vunpack.c.l.b16 %v2958
        %v3158 = vunpack.c.h.b16 %v2958
        %v3159 = vunpack.c.l.b16 %v2959
        %v3160 = vunpack.c.h.b16 %v2959
        %v3161 = vunpack.c.l.b16 %v2960
        %v3162 = vunpack.c.h.b16 %v2960
        %v3163 = vunpack.c.l.b16 %v2961
        %v3164 = vunpack.c.h.b16 %v2961
        %v3165 = vunpack.c.l.b16 %v2962
        %v3166 = vunpack.c.h.b16 %v2962
        %v3167 = vpack.c.b16 %v3041, %v3039
        %v3168 = vpack.c.b16 %v3042, %v3040
        %v3169 = vpack.c.b16 %v3045, %v3043
        %v3170 = vpack.c.b16 %v3046, %v3044
        %v3171 = vpack.c.b16 %v3049, %v3047
        %v3172 = vpack.c.b16 %v3050, %v3048
        %v3173 = vpack.c.b16 %v3053, %v3051
        %v3174 = vpack.c.b16 %v3054, %v3052
        %v3175 = vpack.c.b16 %v3057, %v3055
        %v3176 = vpack.c.b16 %v3058, %v3056
        %v3177 = vpack.c.b16 %v3061, %v3059
        %v3178 = vpack.c.b16 %v3062, %v3060
        %v3179 = vpack.c.b16 %v3065, %v3063
        %v3180 = vpack.c.b16 %v3066, %v3064
        %v3181 = vpack.c.b16 %v3069, %v3067
        %v3182 = vpack.c.b16 %v3070, %v3068
        %v3183 = vpack.c.b16 %v3073, %v3071
        %v3184 = vpack.c.b16 %v3074, %v3072
        %v3185 = vpack.c.b16 %v3077, %v3075
        %v3186 = vpack.c.b16 %v3078, %v3076
        %v3187 = vpack.c.b16 %v3081, %v3079
        %v3188 = vpack.c.b16 %v3082, %v3080
        %v3189 = vpack.c.b16 %v3085, %v3083
        %v3190 = vpack.c.b16 %v3086, %v3084
        %v3191 = vpack.c.b16 %v3089, %v3087
        %v3192 = vpack.c.b16 %v3090, %v3088
        %v3193 = vpack.c.b16 %v3093, %v3091
        %v3194 = vpack.c.b16 %v3094, %v3092
        %v3195 = vpack.c.b16 %v3097, %v3095
        %v3196 = vpack.c.b16 %v3098, %v3096
        %v3197 = vpack.c.b16 %v3101, %v3099
        %v3198 = vpack.c.b16 %v3102, %v3100
        %v3199 = vpack.c.b16 %v3105, %v3103
        %v3200 = vpack.c.b16 %v3106, %v3104
        %v3201 = vpack.c.b16 %v3109, %v3107
        %v3202 = vpack.c.b16 %v3110, %v3108
        %v3203 = vpack.c.b16 %v3113, %v3111
        %v3204 = vpack.c.b16 %v3114, %v3112
        %v3205 = vpack.c.b16 %v3117, %v3115
        %v3206 = vpack.c.b16 %v3118, %v3116
        %v3207 = vpack.c.b16 %v3121, %v3119
        %v3208 = vpack.c.b16 %v3122, %v3120
        %v3209 = vpack.c.b16 %v3125, %v3123
        %v3210 = vpack.c.b16 %v3126, %v3124
        %v3211 = vpack.c.b16 %v3129, %v3127
        %v3212 = vpack.c.b16 %v3130, %v3128
        %v3213 = vpack.c.b16 %v3133, %v3131
        %v3214 = vpack.c.b16 %v3134, %v3132
        %v3215 = vpack.c.b16 %v3137, %v3135
        %v3216 = vpack.c.b16 %v3138, %v3136
        %v3217 = vpack.c.b16 %v3141, %v3139
        %v3218 = vpack.c.b16 %v3142, %v3140
        %v3219 = vpack.c.b16 %v3145, %v3143
        %v3220 = vpack.c.b16 %v3146, %v3144
        %v3221 = vpack.c.b16 %v3149, %v3147
        %v3222 = vpack.c.b16 %v3150, %v3148
        %v3223 = vpack.c.b16 %v3153, %v3151
        %v3224 = vpack.c.b16 %v3154, %v3152
        %v3225 = vpack.c.b16 %v3157, %v3155
        %v3226 = vpack.c.b16 %v3158, %v3156
        %v3227 = vpack.c.b16 %v3161, %v3159
        %v3228 = vpack.c.b16 %v3162, %v3160
        %v3229 = vpack.c.b16 %v3165, %v3163
        %v3230 = vpack.c.b16 %v3166, %v3164
        %3295 = vmatprep.subr.bf16.mxu0 %v3182
        %3296 = vmatpush1.bf16.msra.mxu0 %v3181
        %3297 = vmatprep.subr.bf16.mxu0 %v3180
        %3298 = vmatpush1.bf16.msra.mxu0 %v3179
        %3299 = vmatprep.subr.bf16.mxu0 %v3178
        %3300 = vmatpush1.bf16.msra.mxu0 %v3177
        %3301 = vmatprep.subr.bf16.mxu0 %v3176
        %3302 = vmatpush1.bf16.msra.mxu0 %v3175
        %3303 = vmatprep.subr.bf16.mxu0 %v3174
        %3304 = vmatpush1.bf16.msra.mxu0 %v3173
        %3305 = vmatprep.subr.bf16.mxu0 %v3172
        %3306 = vmatpush1.bf16.msra.mxu0 %v3171
        %3307 = vmatprep.subr.bf16.mxu0 %v3170
        %3308 = vmatpush1.bf16.msra.mxu0 %v3169
        %3309 = vmatprep.subr.bf16.mxu0 %v3168
        %3310 = vmatpush1.bf16.msra.mxu0 %v3167
        %3311 = vmatprep.subr.bf16.mxu0 %v3198
        %3312 = vmatpush2.bf16.msra.mxu0 %v3197
        %3313 = vmatprep.subr.bf16.mxu0 %v3196
        %3314 = vmatpush2.bf16.msra.mxu0 %v3195
        %3315 = vmatprep.subr.bf16.mxu0 %v3194
        %3316 = vmatpush2.bf16.msra.mxu0 %v3193
        %3317 = vmatprep.subr.bf16.mxu0 %v3192
        %3318 = vmatpush2.bf16.msra.mxu0 %v3191
        %3319 = vmatprep.subr.bf16.mxu0 %v3190
        %3320 = vmatpush2.bf16.msra.mxu0 %v3189
        %3321 = vmatprep.subr.bf16.mxu0 %v3188
        %3322 = vmatpush2.bf16.msra.mxu0 %v3187
        %3323 = vmatprep.subr.bf16.mxu0 %v3186
        %3324 = vmatpush2.bf16.msra.mxu0 %v3185
        %3325 = vmatprep.subr.bf16.mxu0 %v3184
        %3326 = vmatpush2.bf16.msra.mxu0 %v3183
        %3327 = vmatprep.mubr.bf16.mxu0 %v2896
        %3328 = vmatmul.mubr.bf16.gmra.mxu0 %v2895
        %v3329 = vpop.f32.mrf.mxu0
        %v3330 = vadd.f32 %v2968, %v3329
        %v3331 = vpop.f32.mrf.mxu0
        %v3332 = vadd.f32 %v2972, %v3331
        %v3333 = vpop.f32.mrf.mxu0
        %v3334 = vpop.f32.mrf.mxu0
        %3335 = vdwg.mxu0
        %3336 = vmatprep.subr.bf16.mxu0 %v3214
        %3337 = vmatpush1.bf16.msra.mxu0 %v3213
        %3338 = vmatprep.subr.bf16.mxu0 %v3212
        %3339 = vmatpush1.bf16.msra.mxu0 %v3211
        %3340 = vmatprep.subr.bf16.mxu0 %v3210
        %3341 = vmatpush1.bf16.msra.mxu0 %v3209
        %3342 = vmatprep.subr.bf16.mxu0 %v3208
        %3343 = vmatpush1.bf16.msra.mxu0 %v3207
        %3344 = vmatprep.subr.bf16.mxu0 %v3206
        %3345 = vmatpush1.bf16.msra.mxu0 %v3205
        %3346 = vmatprep.subr.bf16.mxu0 %v3204
        %3347 = vmatpush1.bf16.msra.mxu0 %v3203
        %3348 = vmatprep.subr.bf16.mxu0 %v3202
        %3349 = vmatpush1.bf16.msra.mxu0 %v3201
        %3350 = vmatprep.subr.bf16.mxu0 %v3200
        %3351 = vmatpush1.bf16.msra.mxu0 %v3199
        %3352 = vmatprep.subr.bf16.mxu0 %v3230
        %3353 = vmatpush2.bf16.msra.mxu0 %v3229
        %3354 = vmatprep.subr.bf16.mxu0 %v3228
        %3355 = vmatpush2.bf16.msra.mxu0 %v3227
        %3356 = vmatprep.subr.bf16.mxu0 %v3226
        %3357 = vmatpush2.bf16.msra.mxu0 %v3225
        %3358 = vmatprep.subr.bf16.mxu0 %v3224
        %3359 = vmatpush2.bf16.msra.mxu0 %v3223
        %3360 = vmatprep.subr.bf16.mxu0 %v3222
        %3361 = vmatpush2.bf16.msra.mxu0 %v3221
        %3362 = vmatprep.subr.bf16.mxu0 %v3220
        %3363 = vmatpush2.bf16.msra.mxu0 %v3219
        %3364 = vmatprep.subr.bf16.mxu0 %v3218
        %3365 = vmatpush2.bf16.msra.mxu0 %v3217
        %3366 = vmatprep.subr.bf16.mxu0 %v3216
        %3367 = vmatpush2.bf16.msra.mxu0 %v3215
        %3368 = vmatprep.mubr.bf16.mxu0 %v2898
        %3369 = vmatmul.mubr.bf16.gmra.mxu0 %v2897
        %v3370 = vpop.f32.mrf.mxu0
        %v3371 = vadd.f32 %v3330, %v3370
        %v3372 = vpop.f32.mrf.mxu0
        %v3373 = vadd.f32 %v3332, %v3372
        %v3374 = vpop.f32.mrf.mxu0
        %v3375 = vpop.f32.mrf.mxu0
        %3376 = vdwg.mxu0
        %v3377 = vmax.f32 %v3371, 0.0
        %v3378 = vmax.f32 %v3373, 0.0
        %v3379 = vpack.c.bf16 %v3377, %v3377
        %v3380 = vpack.c.bf16 %v3378, %v3378
        %v3381 = vld [vmem:[%s7] sm:$0xf]
        %v3382 = vld [vmem:[%s7 + $0x4] sm:$0xf]
        %v3383 = vld [vmem:[%s7 + $0x8] sm:$0xf]
        %v3384 = vld [vmem:[%s7 + $0xc] sm:$0xf]
        %v3385 = vld [vmem:[%s7 + $0x10] sm:$0xf]
        %v3386 = vld [vmem:[%s7 + $0x14] sm:$0xf]
        %v3387 = vld [vmem:[%s7 + $0x18] sm:$0xf]
        %v3388 = vld [vmem:[%s7 + $0x1c] sm:$0xf]
        %v3389 = vld [vmem:[%s7 + $0x20] sm:$0xf]
        %v3390 = vld [vmem:[%s7 + $0x24] sm:$0xf]
        %v3391 = vld [vmem:[%s7 + $0x28] sm:$0xf]
        %v3392 = vld [vmem:[%s7 + $0x2c] sm:$0xf]
        %v3393 = vld [vmem:[%s7 + $0x30] sm:$0xf]
        %v3394 = vld [vmem:[%s7 + $0x34] sm:$0xf]
        %v3395 = vld [vmem:[%s7 + $0x38] sm:$0xf]
        %v3396 = vld [vmem:[%s7 + $0x3c] sm:$0xf]
        %v3397 = vld [vmem:[%s7 + $0x40] sm:$0xf]
        %v3398 = vld [vmem:[%s7 + $0x44] sm:$0xf]
        %v3399 = vld [vmem:[%s7 + $0x48] sm:$0xf]
        %v3400 = vld [vmem:[%s7 + $0x4c] sm:$0xf]
        %v3401 = vld [vmem:[%s7 + $0x50] sm:$0xf]
        %v3402 = vld [vmem:[%s7 + $0x54] sm:$0xf]
        %v3403 = vld [vmem:[%s7 + $0x58] sm:$0xf]
        %v3404 = vld [vmem:[%s7 + $0x5c] sm:$0xf]
        %v3405 = vld [vmem:[%s7 + $0x60] sm:$0xf]
        %v3406 = vld [vmem:[%s7 + $0x64] sm:$0xf]
        %v3407 = vld [vmem:[%s7 + $0x68] sm:$0xf]
        %v3408 = vld [vmem:[%s7 + $0x6c] sm:$0xf]
        %v3409 = vld [vmem:[%s7 + $0x70] sm:$0xf]
        %v3410 = vld [vmem:[%s7 + $0x74] sm:$0xf]
        %v3411 = vld [vmem:[%s7 + $0x78] sm:$0xf]
        %v3412 = vld [vmem:[%s7 + $0x7c] sm:$0xf]
        %v3413 = vld [vmem:[%s8] sm:$0x1]
        %v3415 = vlaneseq
        %v3416 = vshrl.u32 %v3415, 7
        %v3417 = vsub.s32 0, %v3416
        %v3418 = vrot.slane %v3413, %v3417
        %v3452 = vunpack.c.l.b16 %v3381
        %v3453 = vunpack.c.l.b16 %v3382
        %v3454 = vunpack.c.l.b16 %v3383
        %v3455 = vunpack.c.l.b16 %v3384
        %v3456 = vunpack.c.l.b16 %v3385
        %v3457 = vunpack.c.l.b16 %v3386
        %v3458 = vunpack.c.l.b16 %v3387
        %v3459 = vunpack.c.l.b16 %v3388
        %v3460 = vunpack.c.l.b16 %v3389
        %v3461 = vunpack.c.l.b16 %v3390
        %v3462 = vunpack.c.l.b16 %v3391
        %v3463 = vunpack.c.l.b16 %v3392
        %v3464 = vunpack.c.l.b16 %v3393
        %v3465 = vunpack.c.l.b16 %v3394
        %v3466 = vunpack.c.l.b16 %v3395
        %v3467 = vunpack.c.l.b16 %v3396
        %v3468 = vunpack.c.l.b16 %v3397
        %v3469 = vunpack.c.l.b16 %v3398
        %v3470 = vunpack.c.l.b16 %v3399
        %v3471 = vunpack.c.l.b16 %v3400
        %v3472 = vunpack.c.l.b16 %v3401
        %v3473 = vunpack.c.l.b16 %v3402
        %v3474 = vunpack.c.l.b16 %v3403
        %v3475 = vunpack.c.l.b16 %v3404
        %v3476 = vunpack.c.l.b16 %v3405
        %v3477 = vunpack.c.l.b16 %v3406
        %v3478 = vunpack.c.l.b16 %v3407
        %v3479 = vunpack.c.l.b16 %v3408
        %v3480 = vunpack.c.l.b16 %v3409
        %v3481 = vunpack.c.l.b16 %v3410
        %v3482 = vunpack.c.l.b16 %v3411
        %v3483 = vunpack.c.l.b16 %v3412
        %v3484 = vpack.c.b16 %v3453, %v3452
        %v3485 = vpack.c.b16 %v3455, %v3454
        %v3486 = vpack.c.b16 %v3457, %v3456
        %v3487 = vpack.c.b16 %v3459, %v3458
        %v3488 = vpack.c.b16 %v3461, %v3460
        %v3489 = vpack.c.b16 %v3463, %v3462
        %v3490 = vpack.c.b16 %v3465, %v3464
        %v3491 = vpack.c.b16 %v3467, %v3466
        %v3492 = vpack.c.b16 %v3469, %v3468
        %v3493 = vpack.c.b16 %v3471, %v3470
        %v3494 = vpack.c.b16 %v3473, %v3472
        %v3495 = vpack.c.b16 %v3475, %v3474
        %v3496 = vpack.c.b16 %v3477, %v3476
        %v3497 = vpack.c.b16 %v3479, %v3478
        %v3498 = vpack.c.b16 %v3481, %v3480
        %v3499 = vpack.c.b16 %v3483, %v3482
        %3516 = vmatprep.subr.bf16.mxu0 0
        %3517 = vmatpush1.bf16.msra.mxu0 %v3491
        %3518 = vmatprep.subr.bf16.mxu0 0
        %3519 = vmatpush1.bf16.msra.mxu0 %v3490
        %3520 = vmatprep.subr.bf16.mxu0 0
        %3521 = vmatpush1.bf16.msra.mxu0 %v3489
        %3522 = vmatprep.subr.bf16.mxu0 0
        %3523 = vmatpush1.bf16.msra.mxu0 %v3488
        %3524 = vmatprep.subr.bf16.mxu0 0
        %3525 = vmatpush1.bf16.msra.mxu0 %v3487
        %3526 = vmatprep.subr.bf16.mxu0 0
        %3527 = vmatpush1.bf16.msra.mxu0 %v3486
        %3528 = vmatprep.subr.bf16.mxu0 0
        %3529 = vmatpush1.bf16.msra.mxu0 %v3485
        %3530 = vmatprep.subr.bf16.mxu0 0
        %3531 = vmatpush1.bf16.msra.mxu0 %v3484
        %3532 = vmatprep.subr.bf16.mxu0 0
        %3533 = vmatpush2.bf16.msra.mxu0 %v3499
        %3534 = vmatprep.subr.bf16.mxu0 0
        %3535 = vmatpush2.bf16.msra.mxu0 %v3498
        %3536 = vmatprep.subr.bf16.mxu0 0
        %3537 = vmatpush2.bf16.msra.mxu0 %v3497
        %3538 = vmatprep.subr.bf16.mxu0 0
        %3539 = vmatpush2.bf16.msra.mxu0 %v3496
        %3540 = vmatprep.subr.bf16.mxu0 0
        %3541 = vmatpush2.bf16.msra.mxu0 %v3495
        %3542 = vmatprep.subr.bf16.mxu0 0
        %3543 = vmatpush2.bf16.msra.mxu0 %v3494
        %3544 = vmatprep.subr.bf16.mxu0 0
        %3545 = vmatpush2.bf16.msra.mxu0 %v3493
        %3546 = vmatprep.subr.bf16.mxu0 0
        %3547 = vmatpush2.bf16.msra.mxu0 %v3492
        %3548 = vmatprep.mubr.bf16.mxu0 %v3380
        %3549 = vmatmul.mubr.bf16.gmra.mxu0 %v3379
        %v3550 = vpop.f32.mrf.mxu0
        %v3551 = vadd.f32 %v3418, %v3550
        %v3552 = vpop.f32.mrf.mxu0
        %v3553 = vpop.f32.mrf.mxu0
        %v3554 = vpop.f32.mrf.mxu0
        %3555 = vdwg.mxu0
        %v3556 = vmax.f32 %v3551, 0.0
        %v3557 = vpack.c.bf16 %v3556, %v3556
        %v3558 = vld [vmem:[%s9] sm:$0xf]
        %v3559 = vld [vmem:[%s9 + $0x4] sm:$0xf]
        %v3560 = vld [vmem:[%s9 + $0x8] sm:$0xf]
        %v3561 = vld [vmem:[%s9 + $0xc] sm:$0xf]
        %v3562 = vld [vmem:[%s9 + $0x10] sm:$0xf]
        %v3563 = vld [vmem:[%s9 + $0x14] sm:$0xf]
        %v3564 = vld [vmem:[%s9 + $0x18] sm:$0xf]
        %v3565 = vld [vmem:[%s9 + $0x1c] sm:$0xf]
        %v3566 = vld [vmem:[%s9 + $0x20] sm:$0xf]
        %v3567 = vld [vmem:[%s9 + $0x24] sm:$0xf]
        %v3568 = vld [vmem:[%s9 + $0x28] sm:$0xf]
        %v3569 = vld [vmem:[%s9 + $0x2c] sm:$0xf]
        %v3570 = vld [vmem:[%s9 + $0x30] sm:$0xf]
        %v3571 = vld [vmem:[%s9 + $0x34] sm:$0xf]
        %v3572 = vld [vmem:[%s9 + $0x38] sm:$0xf]
        %v3573 = vld [vmem:[%s9 + $0x3c] sm:$0xf]
        %v3574 = vld [vmem:[%s10] sm:$0x1]
        %v3576 = vlaneseq
        %v3577 = vshrl.u32 %v3576, 7
        %v3578 = vsub.s32 0, %v3577
        %v3579 = vrot.slane %v3574, %v3578
        %v3597 = vunpack.c.l.b16 %v3558
        %v3598 = vunpack.c.l.b16 %v3559
        %v3599 = vunpack.c.l.b16 %v3560
        %v3600 = vunpack.c.l.b16 %v3561
        %v3601 = vunpack.c.l.b16 %v3562
        %v3602 = vunpack.c.l.b16 %v3563
        %v3603 = vunpack.c.l.b16 %v3564
        %v3604 = vunpack.c.l.b16 %v3565
        %v3605 = vunpack.c.l.b16 %v3566
        %v3606 = vunpack.c.l.b16 %v3567
        %v3607 = vunpack.c.l.b16 %v3568
        %v3608 = vunpack.c.l.b16 %v3569
        %v3609 = vunpack.c.l.b16 %v3570
        %v3610 = vunpack.c.l.b16 %v3571
        %v3611 = vunpack.c.l.b16 %v3572
        %v3612 = vunpack.c.l.b16 %v3573
        %v3613 = vpack.c.b16 %v3598, %v3597
        %v3614 = vpack.c.b16 %v3600, %v3599
        %v3615 = vpack.c.b16 %v3602, %v3601
        %v3616 = vpack.c.b16 %v3604, %v3603
        %v3617 = vpack.c.b16 %v3606, %v3605
        %v3618 = vpack.c.b16 %v3608, %v3607
        %v3619 = vpack.c.b16 %v3610, %v3609
        %v3620 = vpack.c.b16 %v3612, %v3611
        %3629 = vmatprep.subr.bf16.mxu0 0
        %3630 = vmatpush1.bf16.msra.mxu0 %v3620
        %3631 = vmatprep.subr.bf16.mxu0 0
        %3632 = vmatpush1.bf16.msra.mxu0 %v3619
        %3633 = vmatprep.subr.bf16.mxu0 0
        %3634 = vmatpush1.bf16.msra.mxu0 %v3618
        %3635 = vmatprep.subr.bf16.mxu0 0
        %3636 = vmatpush1.bf16.msra.mxu0 %v3617
        %3637 = vmatprep.subr.bf16.mxu0 0
        %3638 = vmatpush1.bf16.msra.mxu0 %v3616
        %3639 = vmatprep.subr.bf16.mxu0 0
        %3640 = vmatpush1.bf16.msra.mxu0 %v3615
        %3641 = vmatprep.subr.bf16.mxu0 0
        %3642 = vmatpush1.bf16.msra.mxu0 %v3614
        %3643 = vmatprep.subr.bf16.mxu0 0
        %3644 = vmatpush1.bf16.msra.mxu0 %v3613
        %3645 = vmatprep.subr.bf16.mxu0 0
        %3646 = vmatpush2.bf16.msra.mxu0 0
        %3647 = vmatprep.subr.bf16.mxu0 0
        %3648 = vmatpush2.bf16.msra.mxu0 0
        %3649 = vmatprep.subr.bf16.mxu0 0
        %3650 = vmatpush2.bf16.msra.mxu0 0
        %3651 = vmatprep.subr.bf16.mxu0 0
        %3652 = vmatpush2.bf16.msra.mxu0 0
        %3653 = vmatprep.subr.bf16.mxu0 0
        %3654 = vmatpush2.bf16.msra.mxu0 0
        %3655 = vmatprep.subr.bf16.mxu0 0
        %3656 = vmatpush2.bf16.msra.mxu0 0
        %3657 = vmatprep.subr.bf16.mxu0 0
        %3658 = vmatpush2.bf16.msra.mxu0 0
        %3659 = vmatprep.subr.bf16.mxu0 0
        %3660 = vmatpush2.bf16.msra.mxu0 0
        %3661 = vmatprep.mubr.bf16.mxu0 0
        %3662 = vmatmul.mubr.bf16.gmra.mxu0 %v3557
        %v3663 = vpop.f32.mrf.mxu0
        %v3664 = vadd.f32 %v3579, %v3663
        %v3665 = vpop.f32.mrf.mxu0
        %v3666 = vpop.f32.mrf.mxu0
        %v3667 = vpop.f32.mrf.mxu0
        %3668 = vdwg.mxu0
        %3669 = vst [vmem:[%s392] sm:$0xff] %v3664
        %s3670 = sand.u32 %s270, 1
        %s3671 = scalar_lea.sflag [#allocation4], %s3670
        %s3672 = sand.u32 %s270, 1
        %s3673 = smul.addr %s3672, 8
        %s3674 = scalar_lea.vmem [#allocation5], %s3673
        // Predicated region
        $region69: #{_mlp_forward_padded.1} parent=63 // pred_check
          %p3675 = pneg %p280
        $region70: #{_mlp_forward_padded.1} parent=63 // pred_check_branch
          %3677 = sbr.rel (%p3675) target = $region72
        $region71: #{_mlp_forward_padded.1} parent=63 // pred_region
          %s3679 = ssub.s32 128, 128
          %3680 = vsyncadd %s3671, %s3679
          %s3681 = smul.addr %s26, 128
          %s3682 = scalar_lea.hbm %s11, %s3681
          %s3684 = sshll.u32 %s3674, 4
          %s3685 = int_to_ptr.vmem [resolvable:$true] %s3684
          %3687 = dma.vmem_to_hbm [thread:$0]  %s3685, 128, %s3682, %s3671
        $region72: #{_mlp_forward_padded.1} parent=63 // pred_fallthru
          _
      $region64: #{_mlp_forward_padded.1} parent=5 // pred_fallthru
        _
      %p3688 = scmp.le.s32.totalorder 2, %s21
      // Predicated region
      $region73: #{_mlp_forward_padded.1} parent=5 // pred_check
        %p3689 = pneg %p3688
      $region74: #{_mlp_forward_padded.1} parent=5 // pred_check_branch
        %3691 = sbr.rel (%p3689) target = $region76
      $region75: #{_mlp_forward_padded.1} parent=5 // pred_region
        %s3692 = ssub.s32 %s21, 2
        // Predicated region
        $region77: #{_mlp_forward_padded.1} parent=75 // pred_check
          %p3693 = pneg %p286
        $region78: #{_mlp_forward_padded.1} parent=75 // pred_check_branch
          %3695 = sbr.rel (%p3693) target = $region80
        $region79: #{_mlp_forward_padded.1} parent=75 // pred_region
          %s3696 = sand.u32 %s271, 1
          %s3697 = scalar_lea.sflag [#allocation4], %s3696
          %s3698 = sand.u32 %s271, 1
          %s3699 = smul.addr %s3698, 8
          %s3700 = scalar_lea.vmem [#allocation5], %s3699
          %3701 = dma.done %s3697, 128
        $region80: #{_mlp_forward_padded.1} parent=75 // pred_fallthru
          _
      $region76: #{_mlp_forward_padded.1} parent=5 // pred_fallthru
        _
    $region6: #{_mlp_forward_padded.1} parent=1 // loop_footer
      %s25 = sadd.s32 1, %s21
    $region7: #{_mlp_forward_padded.1} parent=1 // loop_footer_branch
      %20 = sbr.rel target = $region3
    $region8: #{_mlp_forward_padded.1} parent=1 // loop_exit
      _
    %3702 = vsyncpa [#allocation3], 1
    %s3703 = scalar_lea.sflag [#allocation3], 1
    %3704 = vsyncpa %s3703, 1
    %3705 = vsyncpa [#allocation4], 1
    %s3706 = scalar_lea.sflag [#allocation4], 1
    %3707 = vsyncpa %s3706, 1

</llo_original>
